<compile_context>
chip_gen: v7x
topology: tpu7x:2x2x1
jax: 0.10.0
libtpu: 0.0.40
codegen_flags: <defaults>
</compile_context>

<pallas_src>
import math

import jax
import jax.numpy as jnp
from jax import lax
from jax.experimental import pallas as pl
from jax.experimental.pallas import tpu as pltpu

# ---------------- configuration (mirrors `args`) ----------------
FEATS_IN = 2
FEATS_OUT = 2
FEATS_HIDDEN = 32
OBS_LEN = 8
PRED_LEN = 8            # == OBS_LEN so traj / tar_y shapes match in the loss
HEADS = 4
HEAD_DIM = FEATS_HIDDEN // HEADS
FFN_DIM = 2048          # nn.TransformerEncoderLayer default dim_feedforward
NUM_ENC_LAYERS = 2      # hard-coded num_layers=2 in the PyTorch module
LN_EPS = 1e-5
N_AGENTS = 4            # "batch" dim (dim 1 of the seq-first tensor)
ROWS = OBS_LEN * N_AGENTS          # 32, row = t * N_AGENTS + n (natural flatten)

EMB_SCALE = math.sqrt(FEATS_HIDDEN)
ATTN_SCALE = 1.0 / math.sqrt(HEAD_DIM)
LANES = 128
NEG_INF = -1e30


# ---------------- packed f32 parameter-slab layout (static, shared by host + kernel) ----
def _make_p32_layout():
    layout = {}
    row = 0

    def add(name, nrows, ncols):
        nonlocal row
        layout[name] = (row, nrows, ncols)
        row += -(-nrows // 8) * 8          # 8-sublane align every field (clean slices)

    add("w_en1", FEATS_IN, FEATS_HIDDEN // 2)
    add("b_en1", 1, FEATS_HIDDEN // 2)
    add("w_en2", FEATS_HIDDEN // 2, FEATS_HIDDEN)
    add("b_en2", 1, FEATS_HIDDEN)
    add("emb", ROWS, FEATS_HIDDEN)         # pre-tiled over agents, (time, agent) rows
    add("mask", ROWS, ROWS)                # 0 / -1e30 same-agent attention mask
    add("w_fc", FEATS_HIDDEN, FEATS_OUT)
    add("b_fc", 1, FEATS_OUT)
    for li in range(NUM_ENC_LAYERS):
        add(f"b_in_{li}", 1, 3 * FEATS_HIDDEN)
        add(f"b_out_{li}", 1, FEATS_HIDDEN)
        add(f"ln1_g_{li}", 1, FEATS_HIDDEN)
        add(f"ln1_b_{li}", 1, FEATS_HIDDEN)
        add(f"ln2_g_{li}", 1, FEATS_HIDDEN)
        add(f"ln2_b_{li}", 1, FEATS_HIDDEN)
        add(f"b_ff2_{li}", 1, FEATS_HIDDEN)
    return layout, row


_P32_LAYOUT, _P32_ROWS = _make_p32_layout()


# ---------------- fused Pallas kernel ----------------
def _layernorm(x, g, b):
    mu = jnp.mean(x, axis=-1, keepdims=True)
    xc = x - mu
    var = jnp.mean(xc * xc, axis=-1, keepdims=True)
    return xc * lax.rsqrt(var + LN_EPS) * g + b


def _fused_trans_kernel(xt_ref, p32_ref, attn_w_ref, b_ff1_ref, w_ff1_ref, w_ff2_ref,
                        traj_ref, loss_ref):
    f32, bf16 = jnp.float32, jnp.bfloat16
    D = FEATS_HIDDEN

    def P(name):                            # static row/lane slice into the f32 slab
        r0, nr, nc = _P32_LAYOUT[name]
        return p32_ref[r0:r0 + nr, 0:nc]

    xt = xt_ref[...]                        # (ROWS, 4)
    xin = xt[:, 0:FEATS_IN]
    tar = xt[:, FEATS_IN:FEATS_IN + FEATS_OUT]

    # ---- input encoder MLP (sqrt(d_model) pre-folded into w_en2/b_en2) + pos-emb ----
    h = jnp.dot(xin, P("w_en1"), preferred_element_type=f32) + P("b_en1")
    h = jnp.maximum(h, 0.0)
    h = jnp.dot(h, P("w_en2"), preferred_element_type=f32) + P("b_en2")
    h = h + P("emb")

    mask = P("mask")                        # (ROWS, ROWS): 0 same agent, -1e30 otherwise

    # ---- transformer encoder layers (post-norm, relu FFN, dropout = identity) ----
    for li in range(NUM_ENC_LAYERS):
        aw = attn_w_ref[li]                 # (D, 128) bf16 = [w_in(q|k|v) | w_out]
        w_in16 = aw[:, 0:3 * D]
        w_out16 = aw[:, 3 * D:4 * D]

        h16 = h.astype(bf16)                # single cast per layer for the attention path
        qkv = jnp.dot(h16, w_in16, preferred_element_type=f32) + P(f"b_in_{li}")
        qkv16 = qkv.astype(bf16)            # (ROWS, 3D); q columns already * 1/sqrt(dh)

        # per-head attention batched over all agents via the additive same-agent mask
        heads = []
        for hh in range(HEADS):             # static unroll (4)
            c = hh * HEAD_DIM
            qh = qkv16[:, c:c + HEAD_DIM]                       # (ROWS, dh)
            kh = qkv16[:, D + c:D + c + HEAD_DIM]
            vh = qkv16[:, 2 * D + c:2 * D + c + HEAD_DIM]
            s = lax.dot_general(qh, kh, (((1,), (1,)), ((), ())),
                                preferred_element_type=f32)     # (ROWS, ROWS)
            s = s + mask
            s = s - jnp.max(s, axis=-1, keepdims=True)
            p = jnp.exp(s)
            p = p * pl.reciprocal(jnp.sum(p, axis=-1, keepdims=True), approx=True)
            heads.append(jnp.dot(p.astype(bf16), vh, preferred_element_type=f32))
        attn = jnp.concatenate(heads, axis=1)                   # (ROWS, D)
        attn = jnp.dot(attn.astype(bf16), w_out16,
                       preferred_element_type=f32) + P(f"b_out_{li}")

        # residual + LayerNorm 1 (post-norm), f32
        h = _layernorm(attn + h, P(f"ln1_g_{li}"), P(f"ln1_b_{li}"))

        # FFN: bf16 operands / f32 accumulation; bias+ReLU+downcast fused so the
        # (ROWS, FFN_DIM) intermediate only persists in bf16 before the second matmul.
        ff16 = jnp.maximum(
            jnp.dot(h.astype(bf16), w_ff1_ref[li], preferred_element_type=f32)
            + b_ff1_ref[li:li + 1, :], 0.0).astype(bf16)
        ff = jnp.dot(ff16, w_ff2_ref[li], preferred_element_type=f32) + P(f"b_ff2_{li}")
        h = _layernorm(ff + h, P(f"ln2_g_{li}"), P(f"ln2_b_{li}"))

    # ---- output head + loss epilogue ----
    out = jnp.dot(h, P("w_fc"), preferred_element_type=f32) + P("b_fc")
    traj_ref[...] = out

    # TODO(synk): Traj_loss is not defined in the provided source; implemented as the
    # mean Euclidean displacement error over all (time, agent) points.
    d = out - tar
    dist = jnp.sqrt(jnp.sum(d * d, axis=-1, keepdims=True))     # (ROWS, 1)
    loss_ref[...] = jnp.sum(dist, axis=0, keepdims=True) * (1.0 / ROWS)   # (1, 1)


# ---------------- wrapper (single pallas_call, grid=()) ----------------
def trans_forward(x, packed):
    """x: (OBS_LEN + PRED_LEN, N_AGENTS, FEATS_IN) f32, seq-first like the PyTorch module."""
    xin = x[:OBS_LEN, :, :FEATS_IN].reshape(ROWS, FEATS_IN)            # (time, agent) rows
    tar = x[OBS_LEN:OBS_LEN + PRED_LEN, :, :FEATS_OUT].reshape(ROWS, FEATS_OUT)
    xt = jnp.concatenate([xin, tar], axis=1)                           # (ROWS, 4)

    vmem = pl.BlockSpec(memory_space=pltpu.MemorySpace.VMEM)
    traj_flat, loss = pl.pallas_call(
        _fused_trans_kernel,
        in_specs=[vmem] * 6,
        out_specs=(vmem, vmem),
        out_shape=(jax.ShapeDtypeStruct((ROWS, FEATS_OUT), jnp.float32),
                   jax.ShapeDtypeStruct((1, 1), jnp.float32)),
    )(xt, packed["p32"], packed["attn_w"], packed["b_ff1"], packed["w_ff1"], packed["w_ff2"])

    traj = traj_flat.reshape(OBS_LEN, N_AGENTS, FEATS_OUT)             # back to (T, N, F)
    return traj, loss[0, 0]


# ---------------- host-side parameter packing (done once) ----------------
def pack_params(params):
    f32, bf16 = jnp.float32, jnp.bfloat16
    D = FEATS_HIDDEN

    slab = jnp.zeros((_P32_ROWS, LANES), f32)

    def put(s, name, val):
        r0, nr, nc = _P32_LAYOUT[name]
        return s.at[r0:r0 + nr, 0:nc].set(jnp.asarray(val, f32))

    slab = put(slab, "w_en1", params["w_en1"])
    slab = put(slab, "b_en1", params["b_en1"])
    slab = put(slab, "w_en2", params["w_en2"] * EMB_SCALE)     # fold * sqrt(d_model)
    slab = put(slab, "b_en2", params["b_en2"] * EMB_SCALE)
    emb_rows = jnp.repeat(params["emb"][:, 0, :], N_AGENTS, axis=0)    # (ROWS, D)
    slab = put(slab, "emb", emb_rows)
    rid = jnp.arange(ROWS) % N_AGENTS
    mask = jnp.where(rid[:, None] == rid[None, :], 0.0, NEG_INF)
    slab = put(slab, "mask", mask)
    slab = put(slab, "w_fc", params["w_fc"])
    slab = put(slab, "b_fc", params["b_fc"])

    attn_w = jnp.zeros((NUM_ENC_LAYERS, D, LANES), bf16)
    b_ff1_all, w_ff1_all, w_ff2_all = [], [], []
    for li, lp in enumerate(params["layers"]):
        # fold 1/sqrt(head_dim) into the q columns of the in_proj weight & bias
        w_in = jnp.concatenate([lp["w_in"][:, :D] * ATTN_SCALE, lp["w_in"][:, D:]], axis=1)
        b_in = jnp.concatenate([lp["b_in"][:, :D] * ATTN_SCALE, lp["b_in"][:, D:]], axis=1)
        slab = put(slab, f"b_in_{li}", b_in)
        slab = put(slab, f"b_out_{li}", lp["b_out"])
        slab = put(slab, f"ln1_g_{li}", lp["ln1_g"])
        slab = put(slab, f"ln1_b_{li}", lp["ln1_b"])
        slab = put(slab, f"ln2_g_{li}", lp["ln2_g"])
        slab = put(slab, f"ln2_b_{li}", lp["ln2_b"])
        slab = put(slab, f"b_ff2_{li}", lp["b_ff2"])
        attn_w = attn_w.at[li, :, 0:3 * D].set(w_in.astype(bf16))
        attn_w = attn_w.at[li, :, 3 * D:4 * D].set(lp["w_out"].astype(bf16))
        b_ff1_all.append(lp["b_ff1"][0])
        w_ff1_all.append(lp["w_ff1"].astype(bf16))
        w_ff2_all.append(lp["w_ff2"].astype(bf16))

    return dict(
        p32=slab,                                   # (256, 128) f32
        attn_w=attn_w,                              # (L, 32, 128) bf16
        b_ff1=jnp.stack(b_ff1_all),                 # (L, FFN_DIM) f32
        w_ff1=jnp.stack(w_ff1_all),                 # (L, D, FFN_DIM) bf16
        w_ff2=jnp.stack(w_ff2_all),                 # (L, FFN_DIM, D) bf16
    )


# ---------------- deterministic parameter init ----------------
def _dense(key, fan_in, fan_out):
    kw, kb = jax.random.split(key)
    bound = 1.0 / math.sqrt(fan_in)
    w = jax.random.uniform(kw, (fan_in, fan_out), jnp.float32, -bound, bound)
    b = jax.random.uniform(kb, (1, fan_out), jnp.float32, -bound, bound)
    return w, b


def init_params(key):
    keys = jax.random.split(key, 4 + NUM_ENC_LAYERS)
    p = {}
    p["w_en1"], p["b_en1"] = _dense(keys[0], FEATS_IN, FEATS_HIDDEN // 2)
    p["w_en2"], p["b_en2"] = _dense(keys[1], FEATS_HIDDEN // 2, FEATS_HIDDEN)
    p["w_fc"], p["b_fc"] = _dense(keys[2], FEATS_HIDDEN, FEATS_OUT)
    p["emb"] = jax.random.normal(keys[3], (OBS_LEN, 1, FEATS_HIDDEN), jnp.float32)
    layers = []
    for li in range(NUM_ENC_LAYERS):
        lk = jax.random.split(keys[4 + li], 4)
        lp = {}
        lp["w_in"], lp["b_in"] = _dense(lk[0], FEATS_HIDDEN, 3 * FEATS_HIDDEN)
        lp["w_out"], lp["b_out"] = _dense(lk[1], FEATS_HIDDEN, FEATS_HIDDEN)
        lp["w_ff1"], lp["b_ff1"] = _dense(lk[2], FEATS_HIDDEN, FFN_DIM)
        lp["w_ff2"], lp["b_ff2"] = _dense(lk[3], FFN_DIM, FEATS_HIDDEN)
        lp["ln1_g"] = jnp.ones((1, FEATS_HIDDEN), jnp.float32)
        lp["ln1_b"] = jnp.zeros((1, FEATS_HIDDEN), jnp.float32)
        lp["ln2_g"] = jnp.ones((1, FEATS_HIDDEN), jnp.float32)
        lp["ln2_b"] = jnp.zeros((1, FEATS_HIDDEN), jnp.float32)
        layers.append(lp)
    p["layers"] = layers
    return p


if __name__ == "__main__":
    key = jax.random.PRNGKey(0)
    kp, kx = jax.random.split(key)
    params = init_params(kp)
    packed = pack_params(params)          # one-time: weights -> lane-dense VMEM slabs
    x = jax.random.normal(kx, (OBS_LEN + PRED_LEN, N_AGENTS, FEATS_IN), jnp.float32)

    fwd = jax.jit(trans_forward)
    traj, loss = fwd(x, packed)
    jax.block_until_ready((traj, loss))

    assert traj.shape == (OBS_LEN, N_AGENTS, FEATS_OUT)
    assert loss.shape == ()
    assert bool(jnp.isfinite(loss))
    print("KERNEL_OK")
</pallas_src>

<mosaic_0001>
module attributes {stable_mosaic.version = 11 : i64} {
  func.func @_fused_trans_kernel(%arg0: memref<32x4xf32, #tpu.memory_space<vmem>>, %arg1: memref<256x128xf32, #tpu.memory_space<vmem>>, %arg2: memref<2x32x128xbf16, #tpu.memory_space<vmem>>, %arg3: memref<2x2048xf32, #tpu.memory_space<vmem>>, %arg4: memref<2x32x2048xbf16, #tpu.memory_space<vmem>>, %arg5: memref<2x2048x32xbf16, #tpu.memory_space<vmem>>, %arg6: memref<32x2xf32, #tpu.memory_space<vmem>>, %arg7: memref<1x1xf32, #tpu.memory_space<vmem>>) attributes {dimension_semantics = [], scalar_prefetch = 0 : i64, scratch_operands = 0 : i64, tpu.core_type = #tpu.core_type<tc>} {
    %c0 = arith.constant 0 : index
    %c0_0 = arith.constant 0 : index
    %0 = vector.load %arg0[%c0, %c0_0] : memref<32x4xf32, #tpu.memory_space<vmem>>, vector<32x4xf32>
    %1 = vector.extract_strided_slice %0 {offsets = [0, 0], sizes = [32, 2], strides = [1, 1]} : vector<32x4xf32> to vector<32x2xf32>
    %2 = vector.extract_strided_slice %0 {offsets = [0, 2], sizes = [32, 2], strides = [1, 1]} : vector<32x4xf32> to vector<32x2xf32>
    %c0_1 = arith.constant 0 : index
    %c0_2 = arith.constant 0 : index
    %3 = vector.load %arg1[%c0_1, %c0_2] : memref<256x128xf32, #tpu.memory_space<vmem>>, vector<2x16xf32>
    %cst = arith.constant dense<0.000000e+00> : vector<32x16xf32>
    %4 = tpu.matmul %1, %3, %cst {dimension_numbers = #tpu.dot_dimension_numbers<[1], [0], [0], [1], [0, 0, 1, 1], [], []>} : vector<32x2xf32>, vector<2x16xf32>, vector<32x16xf32> -> vector<32x16xf32>
    %c8 = arith.constant 8 : index
    %c0_3 = arith.constant 0 : index
    %5 = vector.load %arg1[%c8, %c0_3] : memref<256x128xf32, #tpu.memory_space<vmem>>, vector<1x16xf32>
    %6 = vector.broadcast %5 : vector<1x16xf32> to vector<32x16xf32>
    %7 = arith.addf %4, %6 : vector<32x16xf32>
    %cst_4 = arith.constant 0.000000e+00 : f32
    %8 = vector.broadcast %cst_4 : f32 to vector<32x16xf32>
    %9 = arith.maximumf %7, %8 : vector<32x16xf32>
    %c16 = arith.constant 16 : index
    %c0_5 = arith.constant 0 : index
    %10 = vector.load %arg1[%c16, %c0_5] : memref<256x128xf32, #tpu.memory_space<vmem>>, vector<16x32xf32>
    %cst_6 = arith.constant dense<0.000000e+00> : vector<32x32xf32>
    %11 = tpu.matmul %9, %10, %cst_6 {dimension_numbers = #tpu.dot_dimension_numbers<[1], [0], [0], [1], [0, 0, 1, 1], [], []>} : vector<32x16xf32>, vector<16x32xf32>, vector<32x32xf32> -> vector<32x32xf32>
    %c32 = arith.constant 32 : index
    %c0_7 = arith.constant 0 : index
    %12 = vector.load %arg1[%c32, %c0_7] : memref<256x128xf32, #tpu.memory_space<vmem>>, vector<1x32xf32>
    %13 = vector.broadcast %12 : vector<1x32xf32> to vector<32x32xf32>
    %14 = arith.addf %11, %13 : vector<32x32xf32>
    %c40 = arith.constant 40 : index
    %c0_8 = arith.constant 0 : index
    %15 = vector.load %arg1[%c40, %c0_8] : memref<256x128xf32, #tpu.memory_space<vmem>>, vector<32x32xf32>
    %16 = arith.addf %14, %15 : vector<32x32xf32>
    %c72 = arith.constant 72 : index
    %c0_9 = arith.constant 0 : index
    %17 = vector.load %arg1[%c72, %c0_9] : memref<256x128xf32, #tpu.memory_space<vmem>>, vector<32x32xf32>
    %c0_10 = arith.constant 0 : index
    %c0_11 = arith.constant 0 : index
    %c0_12 = arith.constant 0 : index
    %18 = vector.load %arg2[%c0_10, %c0_11, %c0_12] : memref<2x32x128xbf16, #tpu.memory_space<vmem>>, vector<1x32x128xbf16>
    %19 = vector.shape_cast %18 : vector<1x32x128xbf16> to vector<32x128xbf16>
    %20 = vector.extract_strided_slice %19 {offsets = [0, 0], sizes = [32, 96], strides = [1, 1]} : vector<32x128xbf16> to vector<32x96xbf16>
    %21 = vector.extract_strided_slice %19 {offsets = [0, 96], sizes = [32, 32], strides = [1, 1]} : vector<32x128xbf16> to vector<32x32xbf16>
    %22 = arith.truncf %16 : vector<32x32xf32> to vector<32x32xbf16>
    %cst_13 = arith.constant dense<0.000000e+00> : vector<32x96xf32>
    %23 = tpu.matmul %22, %20, %cst_13 {dimension_numbers = #tpu.dot_dimension_numbers<[1], [0], [0], [1], [0, 0, 1, 1], [], []>} : vector<32x32xbf16>, vector<32x96xbf16>, vector<32x96xf32> -> vector<32x96xf32>
    %c144 = arith.constant 144 : index
    %c0_14 = arith.constant 0 : index
    %24 = vector.load %arg1[%c144, %c0_14] : memref<256x128xf32, #tpu.memory_space<vmem>>, vector<1x96xf32>
    %25 = vector.broadcast %24 : vector<1x96xf32> to vector<32x96xf32>
    %26 = arith.addf %23, %25 : vector<32x96xf32>
    %27 = arith.truncf %26 : vector<32x96xf32> to vector<32x96xbf16>
    %28 = vector.extract_strided_slice %27 {offsets = [0, 0], sizes = [32, 8], strides = [1, 1]} : vector<32x96xbf16> to vector<32x8xbf16>
    %29 = vector.extract_strided_slice %27 {offsets = [0, 32], sizes = [32, 8], strides = [1, 1]} : vector<32x96xbf16> to vector<32x8xbf16>
    %30 = vector.extract_strided_slice %27 {offsets = [0, 64], sizes = [32, 8], strides = [1, 1]} : vector<32x96xbf16> to vector<32x8xbf16>
    %cst_15 = arith.constant dense<0.000000e+00> : vector<32x32xf32>
    %31 = tpu.matmul %28, %29, %cst_15 {dimension_numbers = #tpu.dot_dimension_numbers<[1], [1], [0], [0], [0, 0, 1, 0], [], []>} : vector<32x8xbf16>, vector<32x8xbf16>, vector<32x32xf32> -> vector<32x32xf32>
    %32 = arith.addf %31, %17 : vector<32x32xf32>
    %cst_16 = arith.constant dense<0xFF800000> : vector<32xf32>
    %33 = vector.multi_reduction <maximumf>, %32, %cst_16 [1] : vector<32x32xf32> to vector<32xf32>
    %34 = vector.shape_cast %33 : vector<32xf32> to vector<32x1xf32>
    %35 = vector.broadcast %34 : vector<32x1xf32> to vector<32x32xf32>
    %36 = arith.subf %32, %35 : vector<32x32xf32>
    %37 = math.exp %36 : vector<32x32xf32>
    %cst_17 = arith.constant dense<0.000000e+00> : vector<32xf32>
    %38 = vector.multi_reduction <add>, %37, %cst_17 [1] : vector<32x32xf32> to vector<32xf32>
    %39 = vector.shape_cast %38 : vector<32xf32> to vector<32x1xf32>
    %40 = tpu.reciprocal %39 {approx = true} : vector<32x1xf32> -> vector<32x1xf32>
    %41 = vector.broadcast %40 : vector<32x1xf32> to vector<32x32xf32>
    %42 = arith.mulf %37, %41 : vector<32x32xf32>
    %43 = arith.truncf %42 : vector<32x32xf32> to vector<32x32xbf16>
    %cst_18 = arith.constant dense<0.000000e+00> : vector<32x8xf32>
    %44 = tpu.matmul %43, %30, %cst_18 {dimension_numbers = #tpu.dot_dimension_numbers<[1], [0], [0], [1], [0, 0, 1, 1], [], []>} : vector<32x32xbf16>, vector<32x8xbf16>, vector<32x8xf32> -> vector<32x8xf32>
    %45 = vector.extract_strided_slice %27 {offsets = [0, 8], sizes = [32, 8], strides = [1, 1]} : vector<32x96xbf16> to vector<32x8xbf16>
    %46 = vector.extract_strided_slice %27 {offsets = [0, 40], sizes = [32, 8], strides = [1, 1]} : vector<32x96xbf16> to vector<32x8xbf16>
    %47 = vector.extract_strided_slice %27 {offsets = [0, 72], sizes = [32, 8], strides = [1, 1]} : vector<32x96xbf16> to vector<32x8xbf16>
    %cst_19 = arith.constant dense<0.000000e+00> : vector<32x32xf32>
    %48 = tpu.matmul %45, %46, %cst_19 {dimension_numbers = #tpu.dot_dimension_numbers<[1], [1], [0], [0], [0, 0, 1, 0], [], []>} : vector<32x8xbf16>, vector<32x8xbf16>, vector<32x32xf32> -> vector<32x32xf32>
    %49 = arith.addf %48, %17 : vector<32x32xf32>
    %cst_20 = arith.constant dense<0xFF800000> : vector<32xf32>
    %50 = vector.multi_reduction <maximumf>, %49, %cst_20 [1] : vector<32x32xf32> to vector<32xf32>
    %51 = vector.shape_cast %50 : vector<32xf32> to vector<32x1xf32>
    %52 = vector.broadcast %51 : vector<32x1xf32> to vector<32x32xf32>
    %53 = arith.subf %49, %52 : vector<32x32xf32>
    %54 = math.exp %53 : vector<32x32xf32>
    %cst_21 = arith.constant dense<0.000000e+00> : vector<32xf32>
    %55 = vector.multi_reduction <add>, %54, %cst_21 [1] : vector<32x32xf32> to vector<32xf32>
    %56 = vector.shape_cast %55 : vector<32xf32> to vector<32x1xf32>
    %57 = tpu.reciprocal %56 {approx = true} : vector<32x1xf32> -> vector<32x1xf32>
    %58 = vector.broadcast %57 : vector<32x1xf32> to vector<32x32xf32>
    %59 = arith.mulf %54, %58 : vector<32x32xf32>
    %60 = arith.truncf %59 : vector<32x32xf32> to vector<32x32xbf16>
    %cst_22 = arith.constant dense<0.000000e+00> : vector<32x8xf32>
    %61 = tpu.matmul %60, %47, %cst_22 {dimension_numbers = #tpu.dot_dimension_numbers<[1], [0], [0], [1], [0, 0, 1, 1], [], []>} : vector<32x32xbf16>, vector<32x8xbf16>, vector<32x8xf32> -> vector<32x8xf32>
    %62 = vector.extract_strided_slice %27 {offsets = [0, 16], sizes = [32, 8], strides = [1, 1]} : vector<32x96xbf16> to vector<32x8xbf16>
    %63 = vector.extract_strided_slice %27 {offsets = [0, 48], sizes = [32, 8], strides = [1, 1]} : vector<32x96xbf16> to vector<32x8xbf16>
    %64 = vector.extract_strided_slice %27 {offsets = [0, 80], sizes = [32, 8], strides = [1, 1]} : vector<32x96xbf16> to vector<32x8xbf16>
    %cst_23 = arith.constant dense<0.000000e+00> : vector<32x32xf32>
    %65 = tpu.matmul %62, %63, %cst_23 {dimension_numbers = #tpu.dot_dimension_numbers<[1], [1], [0], [0], [0, 0, 1, 0], [], []>} : vector<32x8xbf16>, vector<32x8xbf16>, vector<32x32xf32> -> vector<32x32xf32>
    %66 = arith.addf %65, %17 : vector<32x32xf32>
    %cst_24 = arith.constant dense<0xFF800000> : vector<32xf32>
    %67 = vector.multi_reduction <maximumf>, %66, %cst_24 [1] : vector<32x32xf32> to vector<32xf32>
    %68 = vector.shape_cast %67 : vector<32xf32> to vector<32x1xf32>
    %69 = vector.broadcast %68 : vector<32x1xf32> to vector<32x32xf32>
    %70 = arith.subf %66, %69 : vector<32x32xf32>
    %71 = math.exp %70 : vector<32x32xf32>
    %cst_25 = arith.constant dense<0.000000e+00> : vector<32xf32>
    %72 = vector.multi_reduction <add>, %71, %cst_25 [1] : vector<32x32xf32> to vector<32xf32>
    %73 = vector.shape_cast %72 : vector<32xf32> to vector<32x1xf32>
    %74 = tpu.reciprocal %73 {approx = true} : vector<32x1xf32> -> vector<32x1xf32>
    %75 = vector.broadcast %74 : vector<32x1xf32> to vector<32x32xf32>
    %76 = arith.mulf %71, %75 : vector<32x32xf32>
    %77 = arith.truncf %76 : vector<32x32xf32> to vector<32x32xbf16>
    %cst_26 = arith.constant dense<0.000000e+00> : vector<32x8xf32>
    %78 = tpu.matmul %77, %64, %cst_26 {dimension_numbers = #tpu.dot_dimension_numbers<[1], [0], [0], [1], [0, 0, 1, 1], [], []>} : vector<32x32xbf16>, vector<32x8xbf16>, vector<32x8xf32> -> vector<32x8xf32>
    %79 = vector.extract_strided_slice %27 {offsets = [0, 24], sizes = [32, 8], strides = [1, 1]} : vector<32x96xbf16> to vector<32x8xbf16>
    %80 = vector.extract_strided_slice %27 {offsets = [0, 56], sizes = [32, 8], strides = [1, 1]} : vector<32x96xbf16> to vector<32x8xbf16>
    %81 = vector.extract_strided_slice %27 {offsets = [0, 88], sizes = [32, 8], strides = [1, 1]} : vector<32x96xbf16> to vector<32x8xbf16>
    %cst_27 = arith.constant dense<0.000000e+00> : vector<32x32xf32>
    %82 = tpu.matmul %79, %80, %cst_27 {dimension_numbers = #tpu.dot_dimension_numbers<[1], [1], [0], [0], [0, 0, 1, 0], [], []>} : vector<32x8xbf16>, vector<32x8xbf16>, vector<32x32xf32> -> vector<32x32xf32>
    %83 = arith.addf %82, %17 : vector<32x32xf32>
    %cst_28 = arith.constant dense<0xFF800000> : vector<32xf32>
    %84 = vector.multi_reduction <maximumf>, %83, %cst_28 [1] : vector<32x32xf32> to vector<32xf32>
    %85 = vector.shape_cast %84 : vector<32xf32> to vector<32x1xf32>
    %86 = vector.broadcast %85 : vector<32x1xf32> to vector<32x32xf32>
    %87 = arith.subf %83, %86 : vector<32x32xf32>
    %88 = math.exp %87 : vector<32x32xf32>
    %cst_29 = arith.constant dense<0.000000e+00> : vector<32xf32>
    %89 = vector.multi_reduction <add>, %88, %cst_29 [1] : vector<32x32xf32> to vector<32xf32>
    %90 = vector.shape_cast %89 : vector<32xf32> to vector<32x1xf32>
    %91 = tpu.reciprocal %90 {approx = true} : vector<32x1xf32> -> vector<32x1xf32>
    %92 = vector.broadcast %91 : vector<32x1xf32> to vector<32x32xf32>
    %93 = arith.mulf %88, %92 : vector<32x32xf32>
    %94 = arith.truncf %93 : vector<32x32xf32> to vector<32x32xbf16>
    %cst_30 = arith.constant dense<0.000000e+00> : vector<32x8xf32>
    %95 = tpu.matmul %94, %81, %cst_30 {dimension_numbers = #tpu.dot_dimension_numbers<[1], [0], [0], [1], [0, 0, 1, 1], [], []>} : vector<32x32xbf16>, vector<32x8xbf16>, vector<32x8xf32> -> vector<32x8xf32>
    %96 = tpu.concatenate %44, %61, %78, %95 in 1 : vector<32x8xf32>, vector<32x8xf32>, vector<32x8xf32>, vector<32x8xf32> -> vector<32x32xf32>
    %97 = arith.truncf %96 : vector<32x32xf32> to vector<32x32xbf16>
    %cst_31 = arith.constant dense<0.000000e+00> : vector<32x32xf32>
    %98 = tpu.matmul %97, %21, %cst_31 {dimension_numbers = #tpu.dot_dimension_numbers<[1], [0], [0], [1], [0, 0, 1, 1], [], []>} : vector<32x32xbf16>, vector<32x32xbf16>, vector<32x32xf32> -> vector<32x32xf32>
    %c152 = arith.constant 152 : index
    %c0_32 = arith.constant 0 : index
    %99 = vector.load %arg1[%c152, %c0_32] : memref<256x128xf32, #tpu.memory_space<vmem>>, vector<1x32xf32>
    %100 = vector.broadcast %99 : vector<1x32xf32> to vector<32x32xf32>
    %101 = arith.addf %98, %100 : vector<32x32xf32>
    %102 = arith.addf %101, %16 : vector<32x32xf32>
    %c160 = arith.constant 160 : index
    %c0_33 = arith.constant 0 : index
    %103 = vector.load %arg1[%c160, %c0_33] : memref<256x128xf32, #tpu.memory_space<vmem>>, vector<1x32xf32>
    %c168 = arith.constant 168 : index
    %c0_34 = arith.constant 0 : index
    %104 = vector.load %arg1[%c168, %c0_34] : memref<256x128xf32, #tpu.memory_space<vmem>>, vector<1x32xf32>
    %cst_35 = arith.constant dense<0.000000e+00> : vector<32xf32>
    %105 = vector.multi_reduction <add>, %102, %cst_35 [1] : vector<32x32xf32> to vector<32xf32>
    %106 = vector.shape_cast %105 : vector<32xf32> to vector<32x1xf32>
    %cst_36 = arith.constant 3.200000e+01 : f32
    %107 = vector.broadcast %cst_36 : f32 to vector<32x1xf32>
    %108 = arith.divf %106, %107 : vector<32x1xf32>
    %109 = vector.broadcast %108 : vector<32x1xf32> to vector<32x32xf32>
    %110 = arith.subf %102, %109 : vector<32x32xf32>
    %111 = arith.mulf %110, %110 : vector<32x32xf32>
    %cst_37 = arith.constant dense<0.000000e+00> : vector<32xf32>
    %112 = vector.multi_reduction <add>, %111, %cst_37 [1] : vector<32x32xf32> to vector<32xf32>
    %113 = vector.shape_cast %112 : vector<32xf32> to vector<32x1xf32>
    %cst_38 = arith.constant 3.200000e+01 : f32
    %114 = vector.broadcast %cst_38 : f32 to vector<32x1xf32>
    %115 = arith.divf %113, %114 : vector<32x1xf32>
    %cst_39 = arith.constant 9.99999974E-6 : f32
    %116 = vector.broadcast %cst_39 : f32 to vector<32x1xf32>
    %117 = arith.addf %115, %116 : vector<32x1xf32>
    %118 = math.rsqrt %117 : vector<32x1xf32>
    %119 = vector.broadcast %118 : vector<32x1xf32> to vector<32x32xf32>
    %120 = arith.mulf %110, %119 : vector<32x32xf32>
    %121 = vector.broadcast %103 : vector<1x32xf32> to vector<32x32xf32>
    %122 = arith.mulf %120, %121 : vector<32x32xf32>
    %123 = vector.broadcast %104 : vector<1x32xf32> to vector<32x32xf32>
    %124 = arith.addf %122, %123 : vector<32x32xf32>
    %125 = arith.truncf %124 : vector<32x32xf32> to vector<32x32xbf16>
    %c0_40 = arith.constant 0 : index
    %c0_41 = arith.constant 0 : index
    %c0_42 = arith.constant 0 : index
    %126 = vector.load %arg4[%c0_40, %c0_41, %c0_42] : memref<2x32x2048xbf16, #tpu.memory_space<vmem>>, vector<1x32x2048xbf16>
    %127 = vector.shape_cast %126 : vector<1x32x2048xbf16> to vector<32x2048xbf16>
    %cst_43 = arith.constant dense<0.000000e+00> : vector<32x2048xf32>
    %128 = tpu.matmul %125, %127, %cst_43 {dimension_numbers = #tpu.dot_dimension_numbers<[1], [0], [0], [1], [0, 0, 1, 1], [], []>} : vector<32x32xbf16>, vector<32x2048xbf16>, vector<32x2048xf32> -> vector<32x2048xf32>
    %c0_44 = arith.constant 0 : index
    %c0_45 = arith.constant 0 : index
    %129 = vector.load %arg3[%c0_44, %c0_45] : memref<2x2048xf32, #tpu.memory_space<vmem>>, vector<1x2048xf32>
    %130 = vector.broadcast %129 : vector<1x2048xf32> to vector<32x2048xf32>
    %131 = arith.addf %128, %130 : vector<32x2048xf32>
    %cst_46 = arith.constant 0.000000e+00 : f32
    %132 = vector.broadcast %cst_46 : f32 to vector<32x2048xf32>
    %133 = arith.maximumf %131, %132 : vector<32x2048xf32>
    %134 = arith.truncf %133 : vector<32x2048xf32> to vector<32x2048xbf16>
    %c0_47 = arith.constant 0 : index
    %c0_48 = arith.constant 0 : index
    %c0_49 = arith.constant 0 : index
    %135 = vector.load %arg5[%c0_47, %c0_48, %c0_49] : memref<2x2048x32xbf16, #tpu.memory_space<vmem>>, vector<1x2048x32xbf16>
    %136 = vector.shape_cast %135 : vector<1x2048x32xbf16> to vector<2048x32xbf16>
    %cst_50 = arith.constant dense<0.000000e+00> : vector<32x32xf32>
    %137 = tpu.matmul %134, %136, %cst_50 {dimension_numbers = #tpu.dot_dimension_numbers<[1], [0], [0], [1], [0, 0, 1, 1], [], []>} : vector<32x2048xbf16>, vector<2048x32xbf16>, vector<32x32xf32> -> vector<32x32xf32>
    %c192 = arith.constant 192 : index
    %c0_51 = arith.constant 0 : index
    %138 = vector.load %arg1[%c192, %c0_51] : memref<256x128xf32, #tpu.memory_space<vmem>>, vector<1x32xf32>
    %139 = vector.broadcast %138 : vector<1x32xf32> to vector<32x32xf32>
    %140 = arith.addf %137, %139 : vector<32x32xf32>
    %141 = arith.addf %140, %124 : vector<32x32xf32>
    %c176 = arith.constant 176 : index
    %c0_52 = arith.constant 0 : index
    %142 = vector.load %arg1[%c176, %c0_52] : memref<256x128xf32, #tpu.memory_space<vmem>>, vector<1x32xf32>
    %c184 = arith.constant 184 : index
    %c0_53 = arith.constant 0 : index
    %143 = vector.load %arg1[%c184, %c0_53] : memref<256x128xf32, #tpu.memory_space<vmem>>, vector<1x32xf32>
    %cst_54 = arith.constant dense<0.000000e+00> : vector<32xf32>
    %144 = vector.multi_reduction <add>, %141, %cst_54 [1] : vector<32x32xf32> to vector<32xf32>
    %145 = vector.shape_cast %144 : vector<32xf32> to vector<32x1xf32>
    %cst_55 = arith.constant 3.200000e+01 : f32
    %146 = vector.broadcast %cst_55 : f32 to vector<32x1xf32>
    %147 = arith.divf %145, %146 : vector<32x1xf32>
    %148 = vector.broadcast %147 : vector<32x1xf32> to vector<32x32xf32>
    %149 = arith.subf %141, %148 : vector<32x32xf32>
    %150 = arith.mulf %149, %149 : vector<32x32xf32>
    %cst_56 = arith.constant dense<0.000000e+00> : vector<32xf32>
    %151 = vector.multi_reduction <add>, %150, %cst_56 [1] : vector<32x32xf32> to vector<32xf32>
    %152 = vector.shape_cast %151 : vector<32xf32> to vector<32x1xf32>
    %cst_57 = arith.constant 3.200000e+01 : f32
    %153 = vector.broadcast %cst_57 : f32 to vector<32x1xf32>
    %154 = arith.divf %152, %153 : vector<32x1xf32>
    %cst_58 = arith.constant 9.99999974E-6 : f32
    %155 = vector.broadcast %cst_58 : f32 to vector<32x1xf32>
    %156 = arith.addf %154, %155 : vector<32x1xf32>
    %157 = math.rsqrt %156 : vector<32x1xf32>
    %158 = vector.broadcast %157 : vector<32x1xf32> to vector<32x32xf32>
    %159 = arith.mulf %149, %158 : vector<32x32xf32>
    %160 = vector.broadcast %142 : vector<1x32xf32> to vector<32x32xf32>
    %161 = arith.mulf %159, %160 : vector<32x32xf32>
    %162 = vector.broadcast %143 : vector<1x32xf32> to vector<32x32xf32>
    %163 = arith.addf %161, %162 : vector<32x32xf32>
    %c1 = arith.constant 1 : index
    %c0_59 = arith.constant 0 : index
    %c0_60 = arith.constant 0 : index
    %164 = vector.load %arg2[%c1, %c0_59, %c0_60] : memref<2x32x128xbf16, #tpu.memory_space<vmem>>, vector<1x32x128xbf16>
    %165 = vector.shape_cast %164 : vector<1x32x128xbf16> to vector<32x128xbf16>
    %166 = vector.extract_strided_slice %165 {offsets = [0, 0], sizes = [32, 96], strides = [1, 1]} : vector<32x128xbf16> to vector<32x96xbf16>
    %167 = vector.extract_strided_slice %165 {offsets = [0, 96], sizes = [32, 32], strides = [1, 1]} : vector<32x128xbf16> to vector<32x32xbf16>
    %168 = arith.truncf %163 : vector<32x32xf32> to vector<32x32xbf16>
    %cst_61 = arith.constant dense<0.000000e+00> : vector<32x96xf32>
    %169 = tpu.matmul %168, %166, %cst_61 {dimension_numbers = #tpu.dot_dimension_numbers<[1], [0], [0], [1], [0, 0, 1, 1], [], []>} : vector<32x32xbf16>, vector<32x96xbf16>, vector<32x96xf32> -> vector<32x96xf32>
    %c200 = arith.constant 200 : index
    %c0_62 = arith.constant 0 : index
    %170 = vector.load %arg1[%c200, %c0_62] : memref<256x128xf32, #tpu.memory_space<vmem>>, vector<1x96xf32>
    %171 = vector.broadcast %170 : vector<1x96xf32> to vector<32x96xf32>
    %172 = arith.addf %169, %171 : vector<32x96xf32>
    %173 = arith.truncf %172 : vector<32x96xf32> to vector<32x96xbf16>
    %174 = vector.extract_strided_slice %173 {offsets = [0, 0], sizes = [32, 8], strides = [1, 1]} : vector<32x96xbf16> to vector<32x8xbf16>
    %175 = vector.extract_strided_slice %173 {offsets = [0, 32], sizes = [32, 8], strides = [1, 1]} : vector<32x96xbf16> to vector<32x8xbf16>
    %176 = vector.extract_strided_slice %173 {offsets = [0, 64], sizes = [32, 8], strides = [1, 1]} : vector<32x96xbf16> to vector<32x8xbf16>
    %cst_63 = arith.constant dense<0.000000e+00> : vector<32x32xf32>
    %177 = tpu.matmul %174, %175, %cst_63 {dimension_numbers = #tpu.dot_dimension_numbers<[1], [1], [0], [0], [0, 0, 1, 0], [], []>} : vector<32x8xbf16>, vector<32x8xbf16>, vector<32x32xf32> -> vector<32x32xf32>
    %178 = arith.addf %177, %17 : vector<32x32xf32>
    %cst_64 = arith.constant dense<0xFF800000> : vector<32xf32>
    %179 = vector.multi_reduction <maximumf>, %178, %cst_64 [1] : vector<32x32xf32> to vector<32xf32>
    %180 = vector.shape_cast %179 : vector<32xf32> to vector<32x1xf32>
    %181 = vector.broadcast %180 : vector<32x1xf32> to vector<32x32xf32>
    %182 = arith.subf %178, %181 : vector<32x32xf32>
    %183 = math.exp %182 : vector<32x32xf32>
    %cst_65 = arith.constant dense<0.000000e+00> : vector<32xf32>
    %184 = vector.multi_reduction <add>, %183, %cst_65 [1] : vector<32x32xf32> to vector<32xf32>
    %185 = vector.shape_cast %184 : vector<32xf32> to vector<32x1xf32>
    %186 = tpu.reciprocal %185 {approx = true} : vector<32x1xf32> -> vector<32x1xf32>
    %187 = vector.broadcast %186 : vector<32x1xf32> to vector<32x32xf32>
    %188 = arith.mulf %183, %187 : vector<32x32xf32>
    %189 = arith.truncf %188 : vector<32x32xf32> to vector<32x32xbf16>
    %cst_66 = arith.constant dense<0.000000e+00> : vector<32x8xf32>
    %190 = tpu.matmul %189, %176, %cst_66 {dimension_numbers = #tpu.dot_dimension_numbers<[1], [0], [0], [1], [0, 0, 1, 1], [], []>} : vector<32x32xbf16>, vector<32x8xbf16>, vector<32x8xf32> -> vector<32x8xf32>
    %191 = vector.extract_strided_slice %173 {offsets = [0, 8], sizes = [32, 8], strides = [1, 1]} : vector<32x96xbf16> to vector<32x8xbf16>
    %192 = vector.extract_strided_slice %173 {offsets = [0, 40], sizes = [32, 8], strides = [1, 1]} : vector<32x96xbf16> to vector<32x8xbf16>
    %193 = vector.extract_strided_slice %173 {offsets = [0, 72], sizes = [32, 8], strides = [1, 1]} : vector<32x96xbf16> to vector<32x8xbf16>
    %cst_67 = arith.constant dense<0.000000e+00> : vector<32x32xf32>
    %194 = tpu.matmul %191, %192, %cst_67 {dimension_numbers = #tpu.dot_dimension_numbers<[1], [1], [0], [0], [0, 0, 1, 0], [], []>} : vector<32x8xbf16>, vector<32x8xbf16>, vector<32x32xf32> -> vector<32x32xf32>
    %195 = arith.addf %194, %17 : vector<32x32xf32>
    %cst_68 = arith.constant dense<0xFF800000> : vector<32xf32>
    %196 = vector.multi_reduction <maximumf>, %195, %cst_68 [1] : vector<32x32xf32> to vector<32xf32>
    %197 = vector.shape_cast %196 : vector<32xf32> to vector<32x1xf32>
    %198 = vector.broadcast %197 : vector<32x1xf32> to vector<32x32xf32>
    %199 = arith.subf %195, %198 : vector<32x32xf32>
    %200 = math.exp %199 : vector<32x32xf32>
    %cst_69 = arith.constant dense<0.000000e+00> : vector<32xf32>
    %201 = vector.multi_reduction <add>, %200, %cst_69 [1] : vector<32x32xf32> to vector<32xf32>
    %202 = vector.shape_cast %201 : vector<32xf32> to vector<32x1xf32>
    %203 = tpu.reciprocal %202 {approx = true} : vector<32x1xf32> -> vector<32x1xf32>
    %204 = vector.broadcast %203 : vector<32x1xf32> to vector<32x32xf32>
    %205 = arith.mulf %200, %204 : vector<32x32xf32>
    %206 = arith.truncf %205 : vector<32x32xf32> to vector<32x32xbf16>
    %cst_70 = arith.constant dense<0.000000e+00> : vector<32x8xf32>
    %207 = tpu.matmul %206, %193, %cst_70 {dimension_numbers = #tpu.dot_dimension_numbers<[1], [0], [0], [1], [0, 0, 1, 1], [], []>} : vector<32x32xbf16>, vector<32x8xbf16>, vector<32x8xf32> -> vector<32x8xf32>
    %208 = vector.extract_strided_slice %173 {offsets = [0, 16], sizes = [32, 8], strides = [1, 1]} : vector<32x96xbf16> to vector<32x8xbf16>
    %209 = vector.extract_strided_slice %173 {offsets = [0, 48], sizes = [32, 8], strides = [1, 1]} : vector<32x96xbf16> to vector<32x8xbf16>
    %210 = vector.extract_strided_slice %173 {offsets = [0, 80], sizes = [32, 8], strides = [1, 1]} : vector<32x96xbf16> to vector<32x8xbf16>
    %cst_71 = arith.constant dense<0.000000e+00> : vector<32x32xf32>
    %211 = tpu.matmul %208, %209, %cst_71 {dimension_numbers = #tpu.dot_dimension_numbers<[1], [1], [0], [0], [0, 0, 1, 0], [], []>} : vector<32x8xbf16>, vector<32x8xbf16>, vector<32x32xf32> -> vector<32x32xf32>
    %212 = arith.addf %211, %17 : vector<32x32xf32>
    %cst_72 = arith.constant dense<0xFF800000> : vector<32xf32>
    %213 = vector.multi_reduction <maximumf>, %212, %cst_72 [1] : vector<32x32xf32> to vector<32xf32>
    %214 = vector.shape_cast %213 : vector<32xf32> to vector<32x1xf32>
    %215 = vector.broadcast %214 : vector<32x1xf32> to vector<32x32xf32>
    %216 = arith.subf %212, %215 : vector<32x32xf32>
    %217 = math.exp %216 : vector<32x32xf32>
    %cst_73 = arith.constant dense<0.000000e+00> : vector<32xf32>
    %218 = vector.multi_reduction <add>, %217, %cst_73 [1] : vector<32x32xf32> to vector<32xf32>
    %219 = vector.shape_cast %218 : vector<32xf32> to vector<32x1xf32>
    %220 = tpu.reciprocal %219 {approx = true} : vector<32x1xf32> -> vector<32x1xf32>
    %221 = vector.broadcast %220 : vector<32x1xf32> to vector<32x32xf32>
    %222 = arith.mulf %217, %221 : vector<32x32xf32>
    %223 = arith.truncf %222 : vector<32x32xf32> to vector<32x32xbf16>
    %cst_74 = arith.constant dense<0.000000e+00> : vector<32x8xf32>
    %224 = tpu.matmul %223, %210, %cst_74 {dimension_numbers = #tpu.dot_dimension_numbers<[1], [0], [0], [1], [0, 0, 1, 1], [], []>} : vector<32x32xbf16>, vector<32x8xbf16>, vector<32x8xf32> -> vector<32x8xf32>
    %225 = vector.extract_strided_slice %173 {offsets = [0, 24], sizes = [32, 8], strides = [1, 1]} : vector<32x96xbf16> to vector<32x8xbf16>
    %226 = vector.extract_strided_slice %173 {offsets = [0, 56], sizes = [32, 8], strides = [1, 1]} : vector<32x96xbf16> to vector<32x8xbf16>
    %227 = vector.extract_strided_slice %173 {offsets = [0, 88], sizes = [32, 8], strides = [1, 1]} : vector<32x96xbf16> to vector<32x8xbf16>
    %cst_75 = arith.constant dense<0.000000e+00> : vector<32x32xf32>
    %228 = tpu.matmul %225, %226, %cst_75 {dimension_numbers = #tpu.dot_dimension_numbers<[1], [1], [0], [0], [0, 0, 1, 0], [], []>} : vector<32x8xbf16>, vector<32x8xbf16>, vector<32x32xf32> -> vector<32x32xf32>
    %229 = arith.addf %228, %17 : vector<32x32xf32>
    %cst_76 = arith.constant dense<0xFF800000> : vector<32xf32>
    %230 = vector.multi_reduction <maximumf>, %229, %cst_76 [1] : vector<32x32xf32> to vector<32xf32>
    %231 = vector.shape_cast %230 : vector<32xf32> to vector<32x1xf32>
    %232 = vector.broadcast %231 : vector<32x1xf32> to vector<32x32xf32>
    %233 = arith.subf %229, %232 : vector<32x32xf32>
    %234 = math.exp %233 : vector<32x32xf32>
    %cst_77 = arith.constant dense<0.000000e+00> : vector<32xf32>
    %235 = vector.multi_reduction <add>, %234, %cst_77 [1] : vector<32x32xf32> to vector<32xf32>
    %236 = vector.shape_cast %235 : vector<32xf32> to vector<32x1xf32>
    %237 = tpu.reciprocal %236 {approx = true} : vector<32x1xf32> -> vector<32x1xf32>
    %238 = vector.broadcast %237 : vector<32x1xf32> to vector<32x32xf32>
    %239 = arith.mulf %234, %238 : vector<32x32xf32>
    %240 = arith.truncf %239 : vector<32x32xf32> to vector<32x32xbf16>
    %cst_78 = arith.constant dense<0.000000e+00> : vector<32x8xf32>
    %241 = tpu.matmul %240, %227, %cst_78 {dimension_numbers = #tpu.dot_dimension_numbers<[1], [0], [0], [1], [0, 0, 1, 1], [], []>} : vector<32x32xbf16>, vector<32x8xbf16>, vector<32x8xf32> -> vector<32x8xf32>
    %242 = tpu.concatenate %190, %207, %224, %241 in 1 : vector<32x8xf32>, vector<32x8xf32>, vector<32x8xf32>, vector<32x8xf32> -> vector<32x32xf32>
    %243 = arith.truncf %242 : vector<32x32xf32> to vector<32x32xbf16>
    %cst_79 = arith.constant dense<0.000000e+00> : vector<32x32xf32>
    %244 = tpu.matmul %243, %167, %cst_79 {dimension_numbers = #tpu.dot_dimension_numbers<[1], [0], [0], [1], [0, 0, 1, 1], [], []>} : vector<32x32xbf16>, vector<32x32xbf16>, vector<32x32xf32> -> vector<32x32xf32>
    %c208 = arith.constant 208 : index
    %c0_80 = arith.constant 0 : index
    %245 = vector.load %arg1[%c208, %c0_80] : memref<256x128xf32, #tpu.memory_space<vmem>>, vector<1x32xf32>
    %246 = vector.broadcast %245 : vector<1x32xf32> to vector<32x32xf32>
    %247 = arith.addf %244, %246 : vector<32x32xf32>
    %248 = arith.addf %247, %163 : vector<32x32xf32>
    %c216 = arith.constant 216 : index
    %c0_81 = arith.constant 0 : index
    %249 = vector.load %arg1[%c216, %c0_81] : memref<256x128xf32, #tpu.memory_space<vmem>>, vector<1x32xf32>
    %c224 = arith.constant 224 : index
    %c0_82 = arith.constant 0 : index
    %250 = vector.load %arg1[%c224, %c0_82] : memref<256x128xf32, #tpu.memory_space<vmem>>, vector<1x32xf32>
    %cst_83 = arith.constant dense<0.000000e+00> : vector<32xf32>
    %251 = vector.multi_reduction <add>, %248, %cst_83 [1] : vector<32x32xf32> to vector<32xf32>
    %252 = vector.shape_cast %251 : vector<32xf32> to vector<32x1xf32>
    %cst_84 = arith.constant 3.200000e+01 : f32
    %253 = vector.broadcast %cst_84 : f32 to vector<32x1xf32>
    %254 = arith.divf %252, %253 : vector<32x1xf32>
    %255 = vector.broadcast %254 : vector<32x1xf32> to vector<32x32xf32>
    %256 = arith.subf %248, %255 : vector<32x32xf32>
    %257 = arith.mulf %256, %256 : vector<32x32xf32>
    %cst_85 = arith.constant dense<0.000000e+00> : vector<32xf32>
    %258 = vector.multi_reduction <add>, %257, %cst_85 [1] : vector<32x32xf32> to vector<32xf32>
    %259 = vector.shape_cast %258 : vector<32xf32> to vector<32x1xf32>
    %cst_86 = arith.constant 3.200000e+01 : f32
    %260 = vector.broadcast %cst_86 : f32 to vector<32x1xf32>
    %261 = arith.divf %259, %260 : vector<32x1xf32>
    %cst_87 = arith.constant 9.99999974E-6 : f32
    %262 = vector.broadcast %cst_87 : f32 to vector<32x1xf32>
    %263 = arith.addf %261, %262 : vector<32x1xf32>
    %264 = math.rsqrt %263 : vector<32x1xf32>
    %265 = vector.broadcast %264 : vector<32x1xf32> to vector<32x32xf32>
    %266 = arith.mulf %256, %265 : vector<32x32xf32>
    %267 = vector.broadcast %249 : vector<1x32xf32> to vector<32x32xf32>
    %268 = arith.mulf %266, %267 : vector<32x32xf32>
    %269 = vector.broadcast %250 : vector<1x32xf32> to vector<32x32xf32>
    %270 = arith.addf %268, %269 : vector<32x32xf32>
    %271 = arith.truncf %270 : vector<32x32xf32> to vector<32x32xbf16>
    %c1_88 = arith.constant 1 : index
    %c0_89 = arith.constant 0 : index
    %c0_90 = arith.constant 0 : index
    %272 = vector.load %arg4[%c1_88, %c0_89, %c0_90] : memref<2x32x2048xbf16, #tpu.memory_space<vmem>>, vector<1x32x2048xbf16>
    %273 = vector.shape_cast %272 : vector<1x32x2048xbf16> to vector<32x2048xbf16>
    %cst_91 = arith.constant dense<0.000000e+00> : vector<32x2048xf32>
    %274 = tpu.matmul %271, %273, %cst_91 {dimension_numbers = #tpu.dot_dimension_numbers<[1], [0], [0], [1], [0, 0, 1, 1], [], []>} : vector<32x32xbf16>, vector<32x2048xbf16>, vector<32x2048xf32> -> vector<32x2048xf32>
    %c1_92 = arith.constant 1 : index
    %c0_93 = arith.constant 0 : index
    %275 = vector.load %arg3[%c1_92, %c0_93] : memref<2x2048xf32, #tpu.memory_space<vmem>>, vector<1x2048xf32>
    %276 = vector.broadcast %275 : vector<1x2048xf32> to vector<32x2048xf32>
    %277 = arith.addf %274, %276 : vector<32x2048xf32>
    %cst_94 = arith.constant 0.000000e+00 : f32
    %278 = vector.broadcast %cst_94 : f32 to vector<32x2048xf32>
    %279 = arith.maximumf %277, %278 : vector<32x2048xf32>
    %280 = arith.truncf %279 : vector<32x2048xf32> to vector<32x2048xbf16>
    %c1_95 = arith.constant 1 : index
    %c0_96 = arith.constant 0 : index
    %c0_97 = arith.constant 0 : index
    %281 = vector.load %arg5[%c1_95, %c0_96, %c0_97] : memref<2x2048x32xbf16, #tpu.memory_space<vmem>>, vector<1x2048x32xbf16>
    %282 = vector.shape_cast %281 : vector<1x2048x32xbf16> to vector<2048x32xbf16>
    %cst_98 = arith.constant dense<0.000000e+00> : vector<32x32xf32>
    %283 = tpu.matmul %280, %282, %cst_98 {dimension_numbers = #tpu.dot_dimension_numbers<[1], [0], [0], [1], [0, 0, 1, 1], [], []>} : vector<32x2048xbf16>, vector<2048x32xbf16>, vector<32x32xf32> -> vector<32x32xf32>
    %c248 = arith.constant 248 : index
    %c0_99 = arith.constant 0 : index
    %284 = vector.load %arg1[%c248, %c0_99] : memref<256x128xf32, #tpu.memory_space<vmem>>, vector<1x32xf32>
    %285 = vector.broadcast %284 : vector<1x32xf32> to vector<32x32xf32>
    %286 = arith.addf %283, %285 : vector<32x32xf32>
    %287 = arith.addf %286, %270 : vector<32x32xf32>
    %c232 = arith.constant 232 : index
    %c0_100 = arith.constant 0 : index
    %288 = vector.load %arg1[%c232, %c0_100] : memref<256x128xf32, #tpu.memory_space<vmem>>, vector<1x32xf32>
    %c240 = arith.constant 240 : index
    %c0_101 = arith.constant 0 : index
    %289 = vector.load %arg1[%c240, %c0_101] : memref<256x128xf32, #tpu.memory_space<vmem>>, vector<1x32xf32>
    %cst_102 = arith.constant dense<0.000000e+00> : vector<32xf32>
    %290 = vector.multi_reduction <add>, %287, %cst_102 [1] : vector<32x32xf32> to vector<32xf32>
    %291 = vector.shape_cast %290 : vector<32xf32> to vector<32x1xf32>
    %cst_103 = arith.constant 3.200000e+01 : f32
    %292 = vector.broadcast %cst_103 : f32 to vector<32x1xf32>
    %293 = arith.divf %291, %292 : vector<32x1xf32>
    %294 = vector.broadcast %293 : vector<32x1xf32> to vector<32x32xf32>
    %295 = arith.subf %287, %294 : vector<32x32xf32>
    %296 = arith.mulf %295, %295 : vector<32x32xf32>
    %cst_104 = arith.constant dense<0.000000e+00> : vector<32xf32>
    %297 = vector.multi_reduction <add>, %296, %cst_104 [1] : vector<32x32xf32> to vector<32xf32>
    %298 = vector.shape_cast %297 : vector<32xf32> to vector<32x1xf32>
    %cst_105 = arith.constant 3.200000e+01 : f32
    %299 = vector.broadcast %cst_105 : f32 to vector<32x1xf32>
    %300 = arith.divf %298, %299 : vector<32x1xf32>
    %cst_106 = arith.constant 9.99999974E-6 : f32
    %301 = vector.broadcast %cst_106 : f32 to vector<32x1xf32>
    %302 = arith.addf %300, %301 : vector<32x1xf32>
    %303 = math.rsqrt %302 : vector<32x1xf32>
    %304 = vector.broadcast %303 : vector<32x1xf32> to vector<32x32xf32>
    %305 = arith.mulf %295, %304 : vector<32x32xf32>
    %306 = vector.broadcast %288 : vector<1x32xf32> to vector<32x32xf32>
    %307 = arith.mulf %305, %306 : vector<32x32xf32>
    %308 = vector.broadcast %289 : vector<1x32xf32> to vector<32x32xf32>
    %309 = arith.addf %307, %308 : vector<32x32xf32>
    %c104 = arith.constant 104 : index
    %c0_107 = arith.constant 0 : index
    %310 = vector.load %arg1[%c104, %c0_107] : memref<256x128xf32, #tpu.memory_space<vmem>>, vector<32x2xf32>
    %cst_108 = arith.constant dense<0.000000e+00> : vector<32x2xf32>
    %311 = tpu.matmul %309, %310, %cst_108 {dimension_numbers = #tpu.dot_dimension_numbers<[1], [0], [0], [1], [0, 0, 1, 1], [], []>} : vector<32x32xf32>, vector<32x2xf32>, vector<32x2xf32> -> vector<32x2xf32>
    %c136 = arith.constant 136 : index
    %c0_109 = arith.constant 0 : index
    %312 = vector.load %arg1[%c136, %c0_109] : memref<256x128xf32, #tpu.memory_space<vmem>>, vector<1x2xf32>
    %313 = vector.broadcast %312 : vector<1x2xf32> to vector<32x2xf32>
    %314 = arith.addf %311, %313 : vector<32x2xf32>
    %c0_110 = arith.constant 0 : index
    %c0_111 = arith.constant 0 : index
    %315 = vector.load %arg6[%c0_110, %c0_111] : memref<32x2xf32, #tpu.memory_space<vmem>>, vector<32x2xf32>
    tpu.vector_store %arg6[%c0_110, %c0_111], %314 {strides = array<i32>} : memref<32x2xf32, #tpu.memory_space<vmem>>, vector<32x2xf32>,
    %316 = arith.subf %314, %2 : vector<32x2xf32>
    %317 = arith.mulf %316, %316 : vector<32x2xf32>
    %cst_112 = arith.constant dense<0.000000e+00> : vector<32xf32>
    %318 = vector.multi_reduction <add>, %317, %cst_112 [1] : vector<32x2xf32> to vector<32xf32>
    %319 = vector.shape_cast %318 : vector<32xf32> to vector<32x1xf32>
    %320 = math.sqrt %319 : vector<32x1xf32>
    %cst_113 = arith.constant dense<0.000000e+00> : vector<1xf32>
    %321 = vector.multi_reduction <add>, %320, %cst_113 [0] : vector<32x1xf32> to vector<1xf32>
    %322 = vector.shape_cast %321 : vector<1xf32> to vector<1x1xf32>
    %cst_114 = arith.constant 3.125000e-02 : f32
    %323 = vector.broadcast %cst_114 : f32 to vector<1x1xf32>
    %324 = arith.mulf %322, %323 : vector<1x1xf32>
    %c0_115 = arith.constant 0 : index
    %c0_116 = arith.constant 0 : index
    %325 = vector.load %arg7[%c0_115, %c0_116] : memref<1x1xf32, #tpu.memory_space<vmem>>, vector<1x1xf32>
    tpu.vector_store %arg7[%c0_115, %c0_116], %324 {strides = array<i32>} : memref<1x1xf32, #tpu.memory_space<vmem>>, vector<1x1xf32>,
    return
  }
}

</mosaic_0001>

<llo_original>
// kernel: trans_forward.1
$region0: #{trans_forward.1}
  #allocation0 [shape = 'u32[]', space=smem, size = 0x4, offset = 0x4, fixed_abs, tag = 'smem constant byte address 0x4 - core index']
  #allocation1 [shape = 'u32[144,128]{1,0:T(1,128)}', space=vmem, size = 0x12000, scoped, tag = 'internal scratch']
  %s0 = inlined_call_operand.vmem [shape: f32[32,4], index: 0, kind: input, shape index: {}]
  %s1 = inlined_call_operand.vmem [shape: f32[256,128], index: 1, kind: input, shape index: {}]
  %s2 = inlined_call_operand.vmem [shape: bf16[2,32,128], index: 2, kind: input, shape index: {}]
  %s3 = inlined_call_operand.vmem [shape: f32[2,2048], index: 3, kind: input, shape index: {}]
  %s4 = inlined_call_operand.vmem [shape: bf16[2,32,2048], index: 4, kind: input, shape index: {}]
  %s5 = inlined_call_operand.vmem [shape: bf16[2,2048,32], index: 5, kind: input, shape index: {}]
  %s6 = inlined_call_operand.vmem [shape: f32[32,2], index: 6, kind: output, shape index: {0}]
  %s7 = inlined_call_operand.hbm [shape: f32[1,1], index: 7, kind: output, shape index: {1}]
  %8 = xla_tuple %s6, %s7
  %s9 = sld [smem:[#allocation0]]
  $region42: #{trans_forward.1} parent=0
    _
  %s11 = ssub.s32 1, %s9
  %s12 = scalar_select 0, %s11, %s9
  $region1: #{trans_forward.1} parent=0
    #allocation2 [shape = 'u8[512]{0}', space=vmem, size = 0x400, scoped, tag = 'output window, operand 1, single buffered']
    #allocation3 [shape = 's32[1]{0}', space=sflag, size = 0x4, scoped, tag = 'scoped memory for trans_forward.1']
    %13 = vsyncpa [#allocation3], 0
    // Predicated region
    $region2: #{trans_forward.1} parent=1 // pred_check
      _
    $region3: #{trans_forward.1} parent=1 // pred_check_branch
      %15 = sbr.rel (0) target = $region5
    $region4: #{trans_forward.1} parent=1 // pred_region
      _
    $region5: #{trans_forward.1} parent=1 // pred_fallthru
      _
    // Predicated region
    $region6: #{trans_forward.1} parent=1 // pred_check
      _
    $region7: #{trans_forward.1} parent=1 // pred_check_branch
      %17 = sbr.rel (0) target = $region9
    $region8: #{trans_forward.1} parent=1 // pred_region
      _
    $region9: #{trans_forward.1} parent=1 // pred_fallthru
      _
    // Predicated region
    $region10: #{trans_forward.1} parent=1 // pred_check
      _
    $region11: #{trans_forward.1} parent=1 // pred_check_branch
      %19 = sbr.rel (0) target = $region13
    $region12: #{trans_forward.1} parent=1 // pred_region
      _
    $region13: #{trans_forward.1} parent=1 // pred_fallthru
      _
    // Predicated region
    $region14: #{trans_forward.1} parent=1 // pred_check
      _
    $region15: #{trans_forward.1} parent=1 // pred_check_branch
      %21 = sbr.rel (0) target = $region17
    $region16: #{trans_forward.1} parent=1 // pred_region
      _
    $region17: #{trans_forward.1} parent=1 // pred_fallthru
      _
    // Predicated region
    $region18: #{trans_forward.1} parent=1 // pred_check
      _
    $region19: #{trans_forward.1} parent=1 // pred_check_branch
      %23 = sbr.rel (0) target = $region21
    $region20: #{trans_forward.1} parent=1 // pred_region
      _
    $region21: #{trans_forward.1} parent=1 // pred_fallthru
      _
    // Predicated region
    $region22: #{trans_forward.1} parent=1 // pred_check
      _
    $region23: #{trans_forward.1} parent=1 // pred_check_branch
      %25 = sbr.rel (0) target = $region25
    $region24: #{trans_forward.1} parent=1 // pred_region
      _
    $region25: #{trans_forward.1} parent=1 // pred_fallthru
      _
    %v27 = vld [vmem:[%s0] sm:$0xff]
    %v28 = vld [vmem:[%s0 + $0x8] sm:$0xff]
    %v29 = vld [vmem:[%s0 + $0x10] sm:$0xff]
    %v30 = vld [vmem:[%s0 + $0x18] sm:$0xff]
    %v31 = vld [vmem:[%s1] sm:$0x3]
    %v32 = vld [vmem:[%s1 + $0x8] sm:$0x1]
    %v33 = vlaneseq
    %v34 = vshrl.u32 %v33, 7
    %v35 = vsub.s32 0, %v34
    %v36 = vrot.slane %v32, %v35
    %vm37 = vcmask 15360
    %v39 = vsel %vm37, %v27, 0
    %v42 = vsel %vm37, %v28, 0
    %v45 = vsel %vm37, %v29, 0
    %v48 = vsel %vm37, %v30, 0
    %vm50 = vcmask 1041408
    %v52 = vsel %vm50, %v31, 0
    %54 = vmatprep.subr.mxu0 0.0
    %55 = vmatpush1.msra.mxu0 %v52
    %56 = vmatprep.subr.mxu0 0.0
    %57 = vmatpush1.msra.mxu0 0.0
    %58 = vmatprep.subr.mxu0 0.0
    %59 = vmatpush1.msra.mxu0 0.0
    %60 = vmatprep.subr.mxu0 0.0
    %61 = vmatpush1.msra.mxu0 0.0
    %62 = vmatprep.subr.mxu0 0.0
    %63 = vmatpush1.msra.mxu0 0.0
    %64 = vmatprep.subr.mxu0 0.0
    %65 = vmatpush1.msra.mxu0 0.0
    %66 = vmatprep.subr.mxu0 0.0
    %67 = vmatpush1.msra.mxu0 0.0
    %68 = vmatprep.subr.mxu0 0.0
    %69 = vmatpush1.msra.mxu0 0.0
    %70 = vmatprep.subr.mxu0 0.0
    %71 = vmatpush1.msra.mxu0 0.0
    %72 = vmatprep.subr.mxu0 0.0
    %73 = vmatpush1.msra.mxu0 0.0
    %74 = vmatprep.subr.mxu0 0.0
    %75 = vmatpush1.msra.mxu0 0.0
    %76 = vmatprep.subr.mxu0 0.0
    %77 = vmatpush1.msra.mxu0 0.0
    %78 = vmatprep.subr.mxu0 0.0
    %79 = vmatpush1.msra.mxu0 0.0
    %80 = vmatprep.subr.mxu0 0.0
    %81 = vmatpush1.msra.mxu0 0.0
    %82 = vmatprep.subr.mxu0 0.0
    %83 = vmatpush1.msra.mxu0 0.0
    %84 = vmatprep.subr.mxu0 0.0
    %85 = vmatpush1.msra.mxu0 0.0
    %86 = vmatprep.subr.mxu0 0.0
    %87 = vmatpush1.msra.mxu0 0.0
    %88 = vmatprep.subr.mxu0 0.0
    %89 = vmatpush1.msra.mxu0 0.0
    %90 = vmatprep.subr.mxu0 0.0
    %91 = vmatpush1.msra.mxu0 0.0
    %92 = vmatprep.subr.mxu0 0.0
    %93 = vmatpush1.msra.mxu0 0.0
    %94 = vmatprep.subr.mxu0 0.0
    %95 = vmatpush1.msra.mxu0 0.0
    %96 = vmatprep.subr.mxu0 0.0
    %97 = vmatpush1.msra.mxu0 0.0
    %98 = vmatprep.subr.mxu0 0.0
    %99 = vmatpush1.msra.mxu0 0.0
    %100 = vmatprep.subr.mxu0 0.0
    %101 = vmatpush1.msra.mxu0 0.0
    %102 = vmatprep.subr.mxu0 0.0
    %103 = vmatpush1.msra.mxu0 0.0
    %104 = vmatprep.subr.mxu0 0.0
    %105 = vmatpush1.msra.mxu0 0.0
    %106 = vmatprep.subr.mxu0 0.0
    %107 = vmatpush1.msra.mxu0 0.0
    %108 = vmatprep.subr.mxu0 0.0
    %109 = vmatpush1.msra.mxu0 0.0
    %110 = vmatprep.subr.mxu0 0.0
    %111 = vmatpush1.msra.mxu0 0.0
    %112 = vmatprep.subr.mxu0 0.0
    %113 = vmatpush1.msra.mxu0 0.0
    %114 = vmatprep.subr.mxu0 0.0
    %115 = vmatpush1.msra.mxu0 0.0
    %116 = vmatprep.subr.mxu0 0.0
    %117 = vmatpush1.msra.mxu0 0.0
    %118 = vmatprep.mubr.f32.mxu0 0.0
    %119 = vmatmul.mubr.f32.gmra.mrb[0].mxu0 %v39
    %v120 = vpop.f32.mrb[0].mxu0
    %v121 = vadd.f32 %v36, %v120
    %v122 = vpop.f32.mrb[0].mxu0
    %123 = vmatprep.mubr.f32.mxu0 0.0
    %124 = vmatmul.mubr.f32.gmra.mrb[0].mxu0 %v42
    %v125 = vpop.f32.mrb[0].mxu0
    %v126 = vadd.f32 %v36, %v125
    %v127 = vpop.f32.mrb[0].mxu0
    %128 = vmatprep.mubr.f32.mxu0 0.0
    %129 = vmatmul.mubr.f32.gmra.mrb[0].mxu0 %v45
    %v130 = vpop.f32.mrb[0].mxu0
    %v131 = vadd.f32 %v36, %v130
    %v132 = vpop.f32.mrb[0].mxu0
    %133 = vmatprep.mubr.f32.mxu0 0.0
    %134 = vmatmul.mubr.f32.gmra.mrb[0].mxu0 %v48
    %v135 = vpop.f32.mrb[0].mxu0
    %v136 = vadd.f32 %v36, %v135
    %v137 = vpop.f32.mrb[0].mxu0
    %138 = vdwg.mxu0
    %v139 = vmax.f32 %v121, 0.0
    %v140 = vmax.f32 %v126, 0.0
    %v141 = vmax.f32 %v131, 0.0
    %v142 = vmax.f32 %v136, 0.0
    %v143 = vld [vmem:[%s1 + $0x10] sm:$0xff]
    %v144 = vld [vmem:[%s1 + $0x18] sm:$0xff]
    %v145 = vld [vmem:[%s1 + $0x20] sm:$0x1]
    %v146 = vlaneseq
    %v147 = vshrl.u32 %v146, 7
    %v148 = vsub.s32 0, %v147
    %v149 = vrot.slane %v145, %v148
    %vm150 = vcmask 130048
    %v152 = vsel %vm150, %v139, 0
    %v155 = vsel %vm150, %v140, 0
    %v158 = vsel %vm150, %v141, 0
    %v161 = vsel %vm150, %v142, 0
    %163 = vmatprep.subr.mxu0 0.0
    %164 = vmatpush1.msra.mxu0 %v143
    %165 = vmatprep.subr.mxu0 0.0
    %166 = vmatpush1.msra.mxu0 %v144
    %167 = vmatprep.subr.mxu0 0.0
    %168 = vmatpush1.msra.mxu0 0.0
    %169 = vmatprep.subr.mxu0 0.0
    %170 = vmatpush1.msra.mxu0 0.0
    %171 = vmatprep.subr.mxu0 0.0
    %172 = vmatpush1.msra.mxu0 0.0
    %173 = vmatprep.subr.mxu0 0.0
    %174 = vmatpush1.msra.mxu0 0.0
    %175 = vmatprep.subr.mxu0 0.0
    %176 = vmatpush1.msra.mxu0 0.0
    %177 = vmatprep.subr.mxu0 0.0
    %178 = vmatpush1.msra.mxu0 0.0
    %179 = vmatprep.subr.mxu0 0.0
    %180 = vmatpush1.msra.mxu0 0.0
    %181 = vmatprep.subr.mxu0 0.0
    %182 = vmatpush1.msra.mxu0 0.0
    %183 = vmatprep.subr.mxu0 0.0
    %184 = vmatpush1.msra.mxu0 0.0
    %185 = vmatprep.subr.mxu0 0.0
    %186 = vmatpush1.msra.mxu0 0.0
    %187 = vmatprep.subr.mxu0 0.0
    %188 = vmatpush1.msra.mxu0 0.0
    %189 = vmatprep.subr.mxu0 0.0
    %190 = vmatpush1.msra.mxu0 0.0
    %191 = vmatprep.subr.mxu0 0.0
    %192 = vmatpush1.msra.mxu0 0.0
    %193 = vmatprep.subr.mxu0 0.0
    %194 = vmatpush1.msra.mxu0 0.0
    %195 = vmatprep.subr.mxu0 0.0
    %196 = vmatpush1.msra.mxu0 0.0
    %197 = vmatprep.subr.mxu0 0.0
    %198 = vmatpush1.msra.mxu0 0.0
    %199 = vmatprep.subr.mxu0 0.0
    %200 = vmatpush1.msra.mxu0 0.0
    %201 = vmatprep.subr.mxu0 0.0
    %202 = vmatpush1.msra.mxu0 0.0
    %203 = vmatprep.subr.mxu0 0.0
    %204 = vmatpush1.msra.mxu0 0.0
    %205 = vmatprep.subr.mxu0 0.0
    %206 = vmatpush1.msra.mxu0 0.0
    %207 = vmatprep.subr.mxu0 0.0
    %208 = vmatpush1.msra.mxu0 0.0
    %209 = vmatprep.subr.mxu0 0.0
    %210 = vmatpush1.msra.mxu0 0.0
    %211 = vmatprep.subr.mxu0 0.0
    %212 = vmatpush1.msra.mxu0 0.0
    %213 = vmatprep.subr.mxu0 0.0
    %214 = vmatpush1.msra.mxu0 0.0
    %215 = vmatprep.subr.mxu0 0.0
    %216 = vmatpush1.msra.mxu0 0.0
    %217 = vmatprep.subr.mxu0 0.0
    %218 = vmatpush1.msra.mxu0 0.0
    %219 = vmatprep.subr.mxu0 0.0
    %220 = vmatpush1.msra.mxu0 0.0
    %221 = vmatprep.subr.mxu0 0.0
    %222 = vmatpush1.msra.mxu0 0.0
    %223 = vmatprep.subr.mxu0 0.0
    %224 = vmatpush1.msra.mxu0 0.0
    %225 = vmatprep.subr.mxu0 0.0
    %226 = vmatpush1.msra.mxu0 0.0
    %227 = vmatprep.mubr.f32.mxu0 0.0
    %228 = vmatmul.mubr.f32.gmra.mrb[0].mxu0 %v152
    %v229 = vpop.f32.mrb[0].mxu0
    %v230 = vadd.f32 %v149, %v229
    %v231 = vpop.f32.mrb[0].mxu0
    %232 = vmatprep.mubr.f32.mxu0 0.0
    %233 = vmatmul.mubr.f32.gmra.mrb[0].mxu0 %v155
    %v234 = vpop.f32.mrb[0].mxu0
    %v235 = vadd.f32 %v149, %v234
    %v236 = vpop.f32.mrb[0].mxu0
    %237 = vmatprep.mubr.f32.mxu0 0.0
    %238 = vmatmul.mubr.f32.gmra.mrb[0].mxu0 %v158
    %v239 = vpop.f32.mrb[0].mxu0
    %v240 = vadd.f32 %v149, %v239
    %v241 = vpop.f32.mrb[0].mxu0
    %242 = vmatprep.mubr.f32.mxu0 0.0
    %243 = vmatmul.mubr.f32.gmra.mrb[0].mxu0 %v161
    %v244 = vpop.f32.mrb[0].mxu0
    %v245 = vadd.f32 %v149, %v244
    %v246 = vpop.f32.mrb[0].mxu0
    %247 = vdwg.mxu0
    %v248 = vld [vmem:[%s1 + $0x28] sm:$0xff]
    %v249 = vld [vmem:[%s1 + $0x30] sm:$0xff]
    %v250 = vld [vmem:[%s1 + $0x38] sm:$0xff]
    %v251 = vld [vmem:[%s1 + $0x40] sm:$0xff]
    %v252 = vadd.f32 %v230, %v248
    %v253 = vadd.f32 %v235, %v249
    %v254 = vadd.f32 %v240, %v250
    %v255 = vadd.f32 %v245, %v251
    %v256 = vld [vmem:[%s1 + $0x48] sm:$0xff]
    %v257 = vld [vmem:[%s1 + $0x50] sm:$0xff]
    %v258 = vld [vmem:[%s1 + $0x58] sm:$0xff]
    %v259 = vld [vmem:[%s1 + $0x60] sm:$0xff]
    %v260 = vld [vmem:[%s2] sm:$0xf]
    %v261 = vld [vmem:[%s2 + $0x4] sm:$0xf]
    %v262 = vld [vmem:[%s2 + $0x8] sm:$0xf]
    %v263 = vld [vmem:[%s2 + $0xc] sm:$0xf]
    %v264 = vpack.c.bf16 %v253, %v252
    %v265 = vpack.c.bf16 %v255, %v254
    %v266 = vld [vmem:[%s1 + $0x90] sm:$0x1]
    %v267 = vlaneseq
    %v268 = vshrl.u32 %v267, 7
    %v269 = vsub.s32 0, %v268
    %v270 = vrot.slane %v266, %v269
    %v275 = vunpack.c.l.b16 %v260
    %v276 = vunpack.c.l.b16 %v261
    %v277 = vunpack.c.l.b16 %v262
    %v278 = vunpack.c.l.b16 %v263
    %v279 = vpack.c.b16 %v276, %v275
    %v280 = vpack.c.b16 %v278, %v277
    %vm283 = vcmask 261120
    %v285 = vsel %vm283, %v264, 0
    %v288 = vsel %vm283, %v265, 0
    %290 = vmatprep.subr.bf16.mxu0 0
    %291 = vmatpush1.bf16.msra.mxu0 %v279
    %292 = vmatprep.subr.bf16.mxu0 0
    %293 = vmatpush1.bf16.msra.mxu0 %v280
    %294 = vmatprep.subr.bf16.mxu0 0
    %295 = vmatpush1.bf16.msra.mxu0 0
    %296 = vmatprep.subr.bf16.mxu0 0
    %297 = vmatpush1.bf16.msra.mxu0 0
    %298 = vmatprep.subr.bf16.mxu0 0
    %299 = vmatpush1.bf16.msra.mxu0 0
    %300 = vmatprep.subr.bf16.mxu0 0
    %301 = vmatpush1.bf16.msra.mxu0 0
    %302 = vmatprep.subr.bf16.mxu0 0
    %303 = vmatpush1.bf16.msra.mxu0 0
    %304 = vmatprep.subr.bf16.mxu0 0
    %305 = vmatpush1.bf16.msra.mxu0 0
    %306 = vmatprep.subr.bf16.mxu0 0
    %307 = vmatpush1.bf16.msra.mxu0 0
    %308 = vmatprep.subr.bf16.mxu0 0
    %309 = vmatpush1.bf16.msra.mxu0 0
    %310 = vmatprep.subr.bf16.mxu0 0
    %311 = vmatpush1.bf16.msra.mxu0 0
    %312 = vmatprep.subr.bf16.mxu0 0
    %313 = vmatpush1.bf16.msra.mxu0 0
    %314 = vmatprep.subr.bf16.mxu0 0
    %315 = vmatpush1.bf16.msra.mxu0 0
    %316 = vmatprep.subr.bf16.mxu0 0
    %317 = vmatpush1.bf16.msra.mxu0 0
    %318 = vmatprep.subr.bf16.mxu0 0
    %319 = vmatpush1.bf16.msra.mxu0 0
    %320 = vmatprep.subr.bf16.mxu0 0
    %321 = vmatpush1.bf16.msra.mxu0 0
    %322 = vmatprep.mubr.bf16.mxu0 0
    %323 = vmatmul.mubr.bf16.gmra.mrb[0].mxu0 %v285
    %v324 = vpop.f32.mrb[0].mxu0
    %v325 = vadd.f32 %v270, %v324
    %v326 = vpop.f32.mrb[0].mxu0
    %v327 = vpop.f32.mrb[0].mxu0
    %v328 = vadd.f32 %v270, %v327
    %v329 = vpop.f32.mrb[0].mxu0
    %330 = vmatprep.mubr.bf16.mxu0 0
    %331 = vmatmul.mubr.bf16.gmra.mrb[0].mxu0 %v288
    %v332 = vpop.f32.mrb[0].mxu0
    %v333 = vadd.f32 %v270, %v332
    %v334 = vpop.f32.mrb[0].mxu0
    %v335 = vpop.f32.mrb[0].mxu0
    %v336 = vadd.f32 %v270, %v335
    %v337 = vpop.f32.mrb[0].mxu0
    %338 = vdwg.mxu0
    %v339 = vpack.c.bf16 %v328, %v325
    %v340 = vpack.c.bf16 %v336, %v333
    %343 = vrot.lane.b32.xlu0 %v339, 96
    %v344 = vpop.permute.xlu0 %343
    %345 = vrot.lane.b32.xlu0 %v340, 96
    %v346 = vpop.permute.xlu0 %345
    %vm347 = vcmask 64512
    %v349 = vsel %vm347, %v339, 0
    %v352 = vsel %vm347, %v340, 0
    %v355 = vsel %vm347, %v344, 0
    %v358 = vsel %vm347, %v346, 0
    %360 = vmatprep.subr.bf16.mxu0 0
    %361 = vmatpush1.bf16.xpose.msra.mxu0 %v355
    %362 = vmatprep.subr.bf16.mxu0 0
    %363 = vmatpush1.bf16.xpose.msra.mxu0 %v358
    %364 = vmatprep.subr.bf16.mxu0 0
    %365 = vmatpush1.bf16.xpose.msra.mxu0 0
    %366 = vmatprep.subr.bf16.mxu0 0
    %367 = vmatpush1.bf16.xpose.msra.mxu0 0
    %368 = vmatprep.subr.bf16.mxu0 0
    %369 = vmatpush1.bf16.xpose.msra.mxu0 0
    %370 = vmatprep.subr.bf16.mxu0 0
    %371 = vmatpush1.bf16.xpose.msra.mxu0 0
    %372 = vmatprep.subr.bf16.mxu0 0
    %373 = vmatpush1.bf16.xpose.msra.mxu0 0
    %374 = vmatprep.subr.bf16.mxu0 0
    %375 = vmatpush1.bf16.xpose.msra.mxu0 0
    %376 = vmatprep.subr.bf16.mxu0 0
    %377 = vmatpush1.bf16.xpose.msra.mxu0 0
    %378 = vmatprep.subr.bf16.mxu0 0
    %379 = vmatpush1.bf16.xpose.msra.mxu0 0
    %380 = vmatprep.subr.bf16.mxu0 0
    %381 = vmatpush1.bf16.xpose.msra.mxu0 0
    %382 = vmatprep.subr.bf16.mxu0 0
    %383 = vmatpush1.bf16.xpose.msra.mxu0 0
    %384 = vmatprep.subr.bf16.mxu0 0
    %385 = vmatpush1.bf16.xpose.msra.mxu0 0
    %386 = vmatprep.subr.bf16.mxu0 0
    %387 = vmatpush1.bf16.xpose.msra.mxu0 0
    %388 = vmatprep.subr.bf16.mxu0 0
    %389 = vmatpush1.bf16.xpose.msra.mxu0 0
    %390 = vmatprep.subr.bf16.mxu0 0
    %391 = vmatpush1.bf16.xpose.msra.mxu0 0
    %392 = vmatprep.mubr.bf16.mxu0 0
    %393 = vmatmul.mubr.bf16.gmra.mrb[0].mxu0 %v349
    %v394 = vpop.f32.mrb[0].mxu0
    %v395 = vadd.f32 %v256, %v394
    %v396 = vpop.f32.mrb[0].mxu0
    %v397 = vpop.f32.mrb[0].mxu0
    %v398 = vadd.f32 %v257, %v397
    %v399 = vpop.f32.mrb[0].mxu0
    %400 = vmatprep.mubr.bf16.mxu0 0
    %401 = vmatmul.mubr.bf16.gmra.mrb[0].mxu0 %v352
    %v402 = vpop.f32.mrb[0].mxu0
    %v403 = vadd.f32 %v258, %v402
    %v404 = vpop.f32.mrb[0].mxu0
    %v405 = vpop.f32.mrb[0].mxu0
    %v406 = vadd.f32 %v259, %v405
    %v407 = vpop.f32.mrb[0].mxu0
    %408 = vdwg.mxu0
    %v409 = vsel %vm283, %v395, -inf
    %410 = vmax.xlane.f32.xlu0 %v409
    %v411 = vpop.xlane.xlu0 %410
    %v412 = vsel %vm283, %v398, -inf
    %413 = vmax.xlane.f32.xlu0 %v412
    %v414 = vpop.xlane.xlu0 %413
    %v415 = vsel %vm283, %v403, -inf
    %416 = vmax.xlane.f32.xlu0 %v415
    %v417 = vpop.xlane.xlu0 %416
    %v418 = vsel %vm283, %v406, -inf
    %419 = vmax.xlane.f32.xlu0 %v418
    %v420 = vpop.xlane.xlu0 %419
    %v421 = vsub.f32 %v395, %v411
    %v422 = vsub.f32 %v398, %v414
    %v423 = vsub.f32 %v403, %v417
    %v424 = vsub.f32 %v406, %v420
    %v425 = vmul.f32 %v421, 1.442695
    %v426 = vpow.pop %v425
    %v427 = vmul.f32 %v422, 1.442695
    %v428 = vpow.pop %v427
    %v429 = vmul.f32 %v423, 1.442695
    %v430 = vpow.pop %v429
    %v431 = vmul.f32 %v424, 1.442695
    %v432 = vpow.pop %v431
    %v433 = vsel %vm283, %v426, 0.0
    %434 = vadd.xlane.f32.xlu0 %v433
    %v435 = vpop.xlane.xlu0 %434
    %v436 = vsel %vm283, %v428, 0.0
    %437 = vadd.xlane.f32.xlu0 %v436
    %v438 = vpop.xlane.xlu0 %437
    %v439 = vsel %vm283, %v430, 0.0
    %440 = vadd.xlane.f32.xlu0 %v439
    %v441 = vpop.xlane.xlu0 %440
    %v442 = vsel %vm283, %v432, 0.0
    %443 = vadd.xlane.f32.xlu0 %v442
    %v444 = vpop.xlane.xlu0 %443
    %v445 = vrcp.pop %v435
    %v446 = vrcp.pop %v438
    %v447 = vrcp.pop %v441
    %v448 = vrcp.pop %v444
    %v449 = vmul.f32 %v426, %v445
    %v450 = vmul.f32 %v428, %v446
    %v451 = vmul.f32 %v430, %v447
    %v452 = vmul.f32 %v432, %v448
    %v453 = vpack.c.bf16 %v450, %v449
    %v454 = vpack.c.bf16 %v452, %v451
    %455 = vrot.lane.b32.xlu0 %v339, 64
    %v456 = vpop.permute.xlu0 %455
    %457 = vrot.lane.b32.xlu0 %v340, 64
    %v458 = vpop.permute.xlu0 %457
    %v462 = vsel %vm283, %v453, 0
    %v465 = vsel %vm283, %v454, 0
    %467 = vmatprep.subr.bf16.mxu0 0
    %468 = vmatpush1.bf16.msra.mxu0 %v456
    %469 = vmatprep.subr.bf16.mxu0 0
    %470 = vmatpush1.bf16.msra.mxu0 %v458
    %471 = vmatprep.subr.bf16.mxu0 0
    %472 = vmatpush1.bf16.msra.mxu0 0
    %473 = vmatprep.subr.bf16.mxu0 0
    %474 = vmatpush1.bf16.msra.mxu0 0
    %475 = vmatprep.subr.bf16.mxu0 0
    %476 = vmatpush1.bf16.msra.mxu0 0
    %477 = vmatprep.subr.bf16.mxu0 0
    %478 = vmatpush1.bf16.msra.mxu0 0
    %479 = vmatprep.subr.bf16.mxu0 0
    %480 = vmatpush1.bf16.msra.mxu0 0
    %481 = vmatprep.subr.bf16.mxu0 0
    %482 = vmatpush1.bf16.msra.mxu0 0
    %483 = vmatprep.subr.bf16.mxu0 0
    %484 = vmatpush1.bf16.msra.mxu0 0
    %485 = vmatprep.subr.bf16.mxu0 0
    %486 = vmatpush1.bf16.msra.mxu0 0
    %487 = vmatprep.subr.bf16.mxu0 0
    %488 = vmatpush1.bf16.msra.mxu0 0
    %489 = vmatprep.subr.bf16.mxu0 0
    %490 = vmatpush1.bf16.msra.mxu0 0
    %491 = vmatprep.subr.bf16.mxu0 0
    %492 = vmatpush1.bf16.msra.mxu0 0
    %493 = vmatprep.subr.bf16.mxu0 0
    %494 = vmatpush1.bf16.msra.mxu0 0
    %495 = vmatprep.subr.bf16.mxu0 0
    %496 = vmatpush1.bf16.msra.mxu0 0
    %497 = vmatprep.subr.bf16.mxu0 0
    %498 = vmatpush1.bf16.msra.mxu0 0
    %499 = vmatprep.mubr.bf16.mxu0 0
    %500 = vmatmul.mubr.bf16.gmra.mrb[0].mxu0 %v462
    %v501 = vpop.f32.mrb[0].mxu0
    %v502 = vadd.f32 0.0, %v501
    %v503 = vpop.f32.mrb[0].mxu0
    %v504 = vpop.f32.mrb[0].mxu0
    %v505 = vadd.f32 0.0, %v504
    %v506 = vpop.f32.mrb[0].mxu0
    %507 = vmatprep.mubr.bf16.mxu0 0
    %508 = vmatmul.mubr.bf16.gmra.mrb[0].mxu0 %v465
    %v509 = vpop.f32.mrb[0].mxu0
    %v510 = vadd.f32 0.0, %v509
    %v511 = vpop.f32.mrb[0].mxu0
    %v512 = vpop.f32.mrb[0].mxu0
    %v513 = vadd.f32 0.0, %v512
    %v514 = vpop.f32.mrb[0].mxu0
    %515 = vdwg.mxu0
    %516 = vrot.lane.b32.xlu0 %v339, 120
    %v517 = vpop.permute.xlu0 %516
    %518 = vrot.lane.b32.xlu0 %v340, 120
    %v519 = vpop.permute.xlu0 %518
    %520 = vrot.lane.b32.xlu0 %v339, 88
    %v521 = vpop.permute.xlu0 %520
    %522 = vrot.lane.b32.xlu0 %v340, 88
    %v523 = vpop.permute.xlu0 %522
    %v525 = vsel %vm347, %v517, 0
    %v528 = vsel %vm347, %v519, 0
    %v531 = vsel %vm347, %v521, 0
    %v534 = vsel %vm347, %v523, 0
    %536 = vmatprep.subr.bf16.mxu0 0
    %537 = vmatpush1.bf16.xpose.msra.mxu0 %v531
    %538 = vmatprep.subr.bf16.mxu0 0
    %539 = vmatpush1.bf16.xpose.msra.mxu0 %v534
    %540 = vmatprep.subr.bf16.mxu0 0
    %541 = vmatpush1.bf16.xpose.msra.mxu0 0
    %542 = vmatprep.subr.bf16.mxu0 0
    %543 = vmatpush1.bf16.xpose.msra.mxu0 0
    %544 = vmatprep.subr.bf16.mxu0 0
    %545 = vmatpush1.bf16.xpose.msra.mxu0 0
    %546 = vmatprep.subr.bf16.mxu0 0
    %547 = vmatpush1.bf16.xpose.msra.mxu0 0
    %548 = vmatprep.subr.bf16.mxu0 0
    %549 = vmatpush1.bf16.xpose.msra.mxu0 0
    %550 = vmatprep.subr.bf16.mxu0 0
    %551 = vmatpush1.bf16.xpose.msra.mxu0 0
    %552 = vmatprep.subr.bf16.mxu0 0
    %553 = vmatpush1.bf16.xpose.msra.mxu0 0
    %554 = vmatprep.subr.bf16.mxu0 0
    %555 = vmatpush1.bf16.xpose.msra.mxu0 0
    %556 = vmatprep.subr.bf16.mxu0 0
    %557 = vmatpush1.bf16.xpose.msra.mxu0 0
    %558 = vmatprep.subr.bf16.mxu0 0
    %559 = vmatpush1.bf16.xpose.msra.mxu0 0
    %560 = vmatprep.subr.bf16.mxu0 0
    %561 = vmatpush1.bf16.xpose.msra.mxu0 0
    %562 = vmatprep.subr.bf16.mxu0 0
    %563 = vmatpush1.bf16.xpose.msra.mxu0 0
    %564 = vmatprep.subr.bf16.mxu0 0
    %565 = vmatpush1.bf16.xpose.msra.mxu0 0
    %566 = vmatprep.subr.bf16.mxu0 0
    %567 = vmatpush1.bf16.xpose.msra.mxu0 0
    %568 = vmatprep.mubr.bf16.mxu0 0
    %569 = vmatmul.mubr.bf16.gmra.mrb[0].mxu0 %v525
    %v570 = vpop.f32.mrb[0].mxu0
    %v571 = vadd.f32 %v256, %v570
    %v572 = vpop.f32.mrb[0].mxu0
    %v573 = vpop.f32.mrb[0].mxu0
    %v574 = vadd.f32 %v257, %v573
    %v575 = vpop.f32.mrb[0].mxu0
    %576 = vmatprep.mubr.bf16.mxu0 0
    %577 = vmatmul.mubr.bf16.gmra.mrb[0].mxu0 %v528
    %v578 = vpop.f32.mrb[0].mxu0
    %v579 = vadd.f32 %v258, %v578
    %v580 = vpop.f32.mrb[0].mxu0
    %v581 = vpop.f32.mrb[0].mxu0
    %v582 = vadd.f32 %v259, %v581
    %v583 = vpop.f32.mrb[0].mxu0
    %584 = vdwg.mxu0
    %v585 = vsel %vm283, %v571, -inf
    %586 = vmax.xlane.f32.xlu0 %v585
    %v587 = vpop.xlane.xlu0 %586
    %v588 = vsel %vm283, %v574, -inf
    %589 = vmax.xlane.f32.xlu0 %v588
    %v590 = vpop.xlane.xlu0 %589
    %v591 = vsel %vm283, %v579, -inf
    %592 = vmax.xlane.f32.xlu0 %v591
    %v593 = vpop.xlane.xlu0 %592
    %v594 = vsel %vm283, %v582, -inf
    %595 = vmax.xlane.f32.xlu0 %v594
    %v596 = vpop.xlane.xlu0 %595
    %v597 = vsub.f32 %v571, %v587
    %v598 = vsub.f32 %v574, %v590
    %v599 = vsub.f32 %v579, %v593
    %v600 = vsub.f32 %v582, %v596
    %v601 = vmul.f32 %v597, 1.442695
    %v602 = vpow.pop %v601
    %v603 = vmul.f32 %v598, 1.442695
    %v604 = vpow.pop %v603
    %v605 = vmul.f32 %v599, 1.442695
    %v606 = vpow.pop %v605
    %v607 = vmul.f32 %v600, 1.442695
    %v608 = vpow.pop %v607
    %v609 = vsel %vm283, %v602, 0.0
    %610 = vadd.xlane.f32.xlu0 %v609
    %v611 = vpop.xlane.xlu0 %610
    %v612 = vsel %vm283, %v604, 0.0
    %613 = vadd.xlane.f32.xlu0 %v612
    %v614 = vpop.xlane.xlu0 %613
    %v615 = vsel %vm283, %v606, 0.0
    %616 = vadd.xlane.f32.xlu0 %v615
    %v617 = vpop.xlane.xlu0 %616
    %v618 = vsel %vm283, %v608, 0.0
    %619 = vadd.xlane.f32.xlu0 %v618
    %v620 = vpop.xlane.xlu0 %619
    %v621 = vrcp.pop %v611
    %v622 = vrcp.pop %v614
    %v623 = vrcp.pop %v617
    %v624 = vrcp.pop %v620
    %v625 = vmul.f32 %v602, %v621
    %v626 = vmul.f32 %v604, %v622
    %v627 = vmul.f32 %v606, %v623
    %v628 = vmul.f32 %v608, %v624
    %v629 = vpack.c.bf16 %v626, %v625
    %v630 = vpack.c.bf16 %v628, %v627
    %631 = vrot.lane.b32.xlu0 %v339, 56
    %v632 = vpop.permute.xlu0 %631
    %633 = vrot.lane.b32.xlu0 %v340, 56
    %v634 = vpop.permute.xlu0 %633
    %v638 = vsel %vm283, %v629, 0
    %v641 = vsel %vm283, %v630, 0
    %643 = vmatprep.subr.bf16.mxu0 0
    %644 = vmatpush1.bf16.msra.mxu0 %v632
    %645 = vmatprep.subr.bf16.mxu0 0
    %646 = vmatpush1.bf16.msra.mxu0 %v634
    %647 = vmatprep.subr.bf16.mxu0 0
    %648 = vmatpush1.bf16.msra.mxu0 0
    %649 = vmatprep.subr.bf16.mxu0 0
    %650 = vmatpush1.bf16.msra.mxu0 0
    %651 = vmatprep.subr.bf16.mxu0 0
    %652 = vmatpush1.bf16.msra.mxu0 0
    %653 = vmatprep.subr.bf16.mxu0 0
    %654 = vmatpush1.bf16.msra.mxu0 0
    %655 = vmatprep.subr.bf16.mxu0 0
    %656 = vmatpush1.bf16.msra.mxu0 0
    %657 = vmatprep.subr.bf16.mxu0 0
    %658 = vmatpush1.bf16.msra.mxu0 0
    %659 = vmatprep.subr.bf16.mxu0 0
    %660 = vmatpush1.bf16.msra.mxu0 0
    %661 = vmatprep.subr.bf16.mxu0 0
    %662 = vmatpush1.bf16.msra.mxu0 0
    %663 = vmatprep.subr.bf16.mxu0 0
    %664 = vmatpush1.bf16.msra.mxu0 0
    %665 = vmatprep.subr.bf16.mxu0 0
    %666 = vmatpush1.bf16.msra.mxu0 0
    %667 = vmatprep.subr.bf16.mxu0 0
    %668 = vmatpush1.bf16.msra.mxu0 0
    %669 = vmatprep.subr.bf16.mxu0 0
    %670 = vmatpush1.bf16.msra.mxu0 0
    %671 = vmatprep.subr.bf16.mxu0 0
    %672 = vmatpush1.bf16.msra.mxu0 0
    %673 = vmatprep.subr.bf16.mxu0 0
    %674 = vmatpush1.bf16.msra.mxu0 0
    %675 = vmatprep.mubr.bf16.mxu0 0
    %676 = vmatmul.mubr.bf16.gmra.mrb[0].mxu0 %v638
    %v677 = vpop.f32.mrb[0].mxu0
    %v678 = vadd.f32 0.0, %v677
    %v679 = vpop.f32.mrb[0].mxu0
    %v680 = vpop.f32.mrb[0].mxu0
    %v681 = vadd.f32 0.0, %v680
    %v682 = vpop.f32.mrb[0].mxu0
    %683 = vmatprep.mubr.bf16.mxu0 0
    %684 = vmatmul.mubr.bf16.gmra.mrb[0].mxu0 %v641
    %v685 = vpop.f32.mrb[0].mxu0
    %v686 = vadd.f32 0.0, %v685
    %v687 = vpop.f32.mrb[0].mxu0
    %v688 = vpop.f32.mrb[0].mxu0
    %v689 = vadd.f32 0.0, %v688
    %v690 = vpop.f32.mrb[0].mxu0
    %691 = vdwg.mxu0
    %692 = vrot.lane.b32.xlu0 %v339, 112
    %v693 = vpop.permute.xlu0 %692
    %694 = vrot.lane.b32.xlu0 %v340, 112
    %v695 = vpop.permute.xlu0 %694
    %696 = vrot.lane.b32.xlu0 %v339, 80
    %v697 = vpop.permute.xlu0 %696
    %698 = vrot.lane.b32.xlu0 %v340, 80
    %v699 = vpop.permute.xlu0 %698
    %v701 = vsel %vm347, %v693, 0
    %v704 = vsel %vm347, %v695, 0
    %v707 = vsel %vm347, %v697, 0
    %v710 = vsel %vm347, %v699, 0
    %712 = vmatprep.subr.bf16.mxu0 0
    %713 = vmatpush1.bf16.xpose.msra.mxu0 %v707
    %714 = vmatprep.subr.bf16.mxu0 0
    %715 = vmatpush1.bf16.xpose.msra.mxu0 %v710
    %716 = vmatprep.subr.bf16.mxu0 0
    %717 = vmatpush1.bf16.xpose.msra.mxu0 0
    %718 = vmatprep.subr.bf16.mxu0 0
    %719 = vmatpush1.bf16.xpose.msra.mxu0 0
    %720 = vmatprep.subr.bf16.mxu0 0
    %721 = vmatpush1.bf16.xpose.msra.mxu0 0
    %722 = vmatprep.subr.bf16.mxu0 0
    %723 = vmatpush1.bf16.xpose.msra.mxu0 0
    %724 = vmatprep.subr.bf16.mxu0 0
    %725 = vmatpush1.bf16.xpose.msra.mxu0 0
    %726 = vmatprep.subr.bf16.mxu0 0
    %727 = vmatpush1.bf16.xpose.msra.mxu0 0
    %728 = vmatprep.subr.bf16.mxu0 0
    %729 = vmatpush1.bf16.xpose.msra.mxu0 0
    %730 = vmatprep.subr.bf16.mxu0 0
    %731 = vmatpush1.bf16.xpose.msra.mxu0 0
    %732 = vmatprep.subr.bf16.mxu0 0
    %733 = vmatpush1.bf16.xpose.msra.mxu0 0
    %734 = vmatprep.subr.bf16.mxu0 0
    %735 = vmatpush1.bf16.xpose.msra.mxu0 0
    %736 = vmatprep.subr.bf16.mxu0 0
    %737 = vmatpush1.bf16.xpose.msra.mxu0 0
    %738 = vmatprep.subr.bf16.mxu0 0
    %739 = vmatpush1.bf16.xpose.msra.mxu0 0
    %740 = vmatprep.subr.bf16.mxu0 0
    %741 = vmatpush1.bf16.xpose.msra.mxu0 0
    %742 = vmatprep.subr.bf16.mxu0 0
    %743 = vmatpush1.bf16.xpose.msra.mxu0 0
    %744 = vmatprep.mubr.bf16.mxu0 0
    %745 = vmatmul.mubr.bf16.gmra.mrb[0].mxu0 %v701
    %v746 = vpop.f32.mrb[0].mxu0
    %v747 = vadd.f32 %v256, %v746
    %v748 = vpop.f32.mrb[0].mxu0
    %v749 = vpop.f32.mrb[0].mxu0
    %v750 = vadd.f32 %v257, %v749
    %v751 = vpop.f32.mrb[0].mxu0
    %752 = vmatprep.mubr.bf16.mxu0 0
    %753 = vmatmul.mubr.bf16.gmra.mrb[0].mxu0 %v704
    %v754 = vpop.f32.mrb[0].mxu0
    %v755 = vadd.f32 %v258, %v754
    %v756 = vpop.f32.mrb[0].mxu0
    %v757 = vpop.f32.mrb[0].mxu0
    %v758 = vadd.f32 %v259, %v757
    %v759 = vpop.f32.mrb[0].mxu0
    %760 = vdwg.mxu0
    %v761 = vsel %vm283, %v747, -inf
    %762 = vmax.xlane.f32.xlu0 %v761
    %v763 = vpop.xlane.xlu0 %762
    %v764 = vsel %vm283, %v750, -inf
    %765 = vmax.xlane.f32.xlu0 %v764
    %v766 = vpop.xlane.xlu0 %765
    %v767 = vsel %vm283, %v755, -inf
    %768 = vmax.xlane.f32.xlu0 %v767
    %v769 = vpop.xlane.xlu0 %768
    %v770 = vsel %vm283, %v758, -inf
    %771 = vmax.xlane.f32.xlu0 %v770
    %v772 = vpop.xlane.xlu0 %771
    %v773 = vsub.f32 %v747, %v763
    %v774 = vsub.f32 %v750, %v766
    %v775 = vsub.f32 %v755, %v769
    %v776 = vsub.f32 %v758, %v772
    %v777 = vmul.f32 %v773, 1.442695
    %v778 = vpow.pop %v777
    %v779 = vmul.f32 %v774, 1.442695
    %v780 = vpow.pop %v779
    %v781 = vmul.f32 %v775, 1.442695
    %v782 = vpow.pop %v781
    %v783 = vmul.f32 %v776, 1.442695
    %v784 = vpow.pop %v783
    %v785 = vsel %vm283, %v778, 0.0
    %786 = vadd.xlane.f32.xlu0 %v785
    %v787 = vpop.xlane.xlu0 %786
    %v788 = vsel %vm283, %v780, 0.0
    %789 = vadd.xlane.f32.xlu0 %v788
    %v790 = vpop.xlane.xlu0 %789
    %v791 = vsel %vm283, %v782, 0.0
    %792 = vadd.xlane.f32.xlu0 %v791
    %v793 = vpop.xlane.xlu0 %792
    %v794 = vsel %vm283, %v784, 0.0
    %795 = vadd.xlane.f32.xlu0 %v794
    %v796 = vpop.xlane.xlu0 %795
    %v797 = vrcp.pop %v787
    %v798 = vrcp.pop %v790
    %v799 = vrcp.pop %v793
    %v800 = vrcp.pop %v796
    %v801 = vmul.f32 %v778, %v797
    %v802 = vmul.f32 %v780, %v798
    %v803 = vmul.f32 %v782, %v799
    %v804 = vmul.f32 %v784, %v800
    %v805 = vpack.c.bf16 %v802, %v801
    %v806 = vpack.c.bf16 %v804, %v803
    %807 = vrot.lane.b32.xlu0 %v339, 48
    %v808 = vpop.permute.xlu0 %807
    %809 = vrot.lane.b32.xlu0 %v340, 48
    %v810 = vpop.permute.xlu0 %809
    %v814 = vsel %vm283, %v805, 0
    %v817 = vsel %vm283, %v806, 0
    %819 = vmatprep.subr.bf16.mxu0 0
    %820 = vmatpush1.bf16.msra.mxu0 %v808
    %821 = vmatprep.subr.bf16.mxu0 0
    %822 = vmatpush1.bf16.msra.mxu0 %v810
    %823 = vmatprep.subr.bf16.mxu0 0
    %824 = vmatpush1.bf16.msra.mxu0 0
    %825 = vmatprep.subr.bf16.mxu0 0
    %826 = vmatpush1.bf16.msra.mxu0 0
    %827 = vmatprep.subr.bf16.mxu0 0
    %828 = vmatpush1.bf16.msra.mxu0 0
    %829 = vmatprep.subr.bf16.mxu0 0
    %830 = vmatpush1.bf16.msra.mxu0 0
    %831 = vmatprep.subr.bf16.mxu0 0
    %832 = vmatpush1.bf16.msra.mxu0 0
    %833 = vmatprep.subr.bf16.mxu0 0
    %834 = vmatpush1.bf16.msra.mxu0 0
    %835 = vmatprep.subr.bf16.mxu0 0
    %836 = vmatpush1.bf16.msra.mxu0 0
    %837 = vmatprep.subr.bf16.mxu0 0
    %838 = vmatpush1.bf16.msra.mxu0 0
    %839 = vmatprep.subr.bf16.mxu0 0
    %840 = vmatpush1.bf16.msra.mxu0 0
    %841 = vmatprep.subr.bf16.mxu0 0
    %842 = vmatpush1.bf16.msra.mxu0 0
    %843 = vmatprep.subr.bf16.mxu0 0
    %844 = vmatpush1.bf16.msra.mxu0 0
    %845 = vmatprep.subr.bf16.mxu0 0
    %846 = vmatpush1.bf16.msra.mxu0 0
    %847 = vmatprep.subr.bf16.mxu0 0
    %848 = vmatpush1.bf16.msra.mxu0 0
    %849 = vmatprep.subr.bf16.mxu0 0
    %850 = vmatpush1.bf16.msra.mxu0 0
    %851 = vmatprep.mubr.bf16.mxu0 0
    %852 = vmatmul.mubr.bf16.gmra.mrb[0].mxu0 %v814
    %v853 = vpop.f32.mrb[0].mxu0
    %v854 = vadd.f32 0.0, %v853
    %v855 = vpop.f32.mrb[0].mxu0
    %v856 = vpop.f32.mrb[0].mxu0
    %v857 = vadd.f32 0.0, %v856
    %v858 = vpop.f32.mrb[0].mxu0
    %859 = vmatprep.mubr.bf16.mxu0 0
    %860 = vmatmul.mubr.bf16.gmra.mrb[0].mxu0 %v817
    %v861 = vpop.f32.mrb[0].mxu0
    %v862 = vadd.f32 0.0, %v861
    %v863 = vpop.f32.mrb[0].mxu0
    %v864 = vpop.f32.mrb[0].mxu0
    %v865 = vadd.f32 0.0, %v864
    %v866 = vpop.f32.mrb[0].mxu0
    %867 = vdwg.mxu0
    %868 = vrot.lane.b32.xlu0 %v339, 104
    %v869 = vpop.permute.xlu0 %868
    %870 = vrot.lane.b32.xlu0 %v340, 104
    %v871 = vpop.permute.xlu0 %870
    %872 = vrot.lane.b32.xlu0 %v339, 72
    %v873 = vpop.permute.xlu0 %872
    %874 = vrot.lane.b32.xlu0 %v340, 72
    %v875 = vpop.permute.xlu0 %874
    %v877 = vsel %vm347, %v869, 0
    %v880 = vsel %vm347, %v871, 0
    %v883 = vsel %vm347, %v873, 0
    %v886 = vsel %vm347, %v875, 0
    %888 = vmatprep.subr.bf16.mxu0 0
    %889 = vmatpush1.bf16.xpose.msra.mxu0 %v883
    %890 = vmatprep.subr.bf16.mxu0 0
    %891 = vmatpush1.bf16.xpose.msra.mxu0 %v886
    %892 = vmatprep.subr.bf16.mxu0 0
    %893 = vmatpush1.bf16.xpose.msra.mxu0 0
    %894 = vmatprep.subr.bf16.mxu0 0
    %895 = vmatpush1.bf16.xpose.msra.mxu0 0
    %896 = vmatprep.subr.bf16.mxu0 0
    %897 = vmatpush1.bf16.xpose.msra.mxu0 0
    %898 = vmatprep.subr.bf16.mxu0 0
    %899 = vmatpush1.bf16.xpose.msra.mxu0 0
    %900 = vmatprep.subr.bf16.mxu0 0
    %901 = vmatpush1.bf16.xpose.msra.mxu0 0
    %902 = vmatprep.subr.bf16.mxu0 0
    %903 = vmatpush1.bf16.xpose.msra.mxu0 0
    %904 = vmatprep.subr.bf16.mxu0 0
    %905 = vmatpush1.bf16.xpose.msra.mxu0 0
    %906 = vmatprep.subr.bf16.mxu0 0
    %907 = vmatpush1.bf16.xpose.msra.mxu0 0
    %908 = vmatprep.subr.bf16.mxu0 0
    %909 = vmatpush1.bf16.xpose.msra.mxu0 0
    %910 = vmatprep.subr.bf16.mxu0 0
    %911 = vmatpush1.bf16.xpose.msra.mxu0 0
    %912 = vmatprep.subr.bf16.mxu0 0
    %913 = vmatpush1.bf16.xpose.msra.mxu0 0
    %914 = vmatprep.subr.bf16.mxu0 0
    %915 = vmatpush1.bf16.xpose.msra.mxu0 0
    %916 = vmatprep.subr.bf16.mxu0 0
    %917 = vmatpush1.bf16.xpose.msra.mxu0 0
    %918 = vmatprep.subr.bf16.mxu0 0
    %919 = vmatpush1.bf16.xpose.msra.mxu0 0
    %920 = vmatprep.mubr.bf16.mxu0 0
    %921 = vmatmul.mubr.bf16.gmra.mrb[0].mxu0 %v877
    %v922 = vpop.f32.mrb[0].mxu0
    %v923 = vadd.f32 %v256, %v922
    %v924 = vpop.f32.mrb[0].mxu0
    %v925 = vpop.f32.mrb[0].mxu0
    %v926 = vadd.f32 %v257, %v925
    %v927 = vpop.f32.mrb[0].mxu0
    %928 = vmatprep.mubr.bf16.mxu0 0
    %929 = vmatmul.mubr.bf16.gmra.mrb[0].mxu0 %v880
    %v930 = vpop.f32.mrb[0].mxu0
    %v931 = vadd.f32 %v258, %v930
    %v932 = vpop.f32.mrb[0].mxu0
    %v933 = vpop.f32.mrb[0].mxu0
    %v934 = vadd.f32 %v259, %v933
    %v935 = vpop.f32.mrb[0].mxu0
    %936 = vdwg.mxu0
    %v937 = vsel %vm283, %v923, -inf
    %938 = vmax.xlane.f32.xlu0 %v937
    %v939 = vpop.xlane.xlu0 %938
    %v940 = vsel %vm283, %v926, -inf
    %941 = vmax.xlane.f32.xlu0 %v940
    %v942 = vpop.xlane.xlu0 %941
    %v943 = vsel %vm283, %v931, -inf
    %944 = vmax.xlane.f32.xlu0 %v943
    %v945 = vpop.xlane.xlu0 %944
    %v946 = vsel %vm283, %v934, -inf
    %947 = vmax.xlane.f32.xlu0 %v946
    %v948 = vpop.xlane.xlu0 %947
    %v949 = vsub.f32 %v923, %v939
    %v950 = vsub.f32 %v926, %v942
    %v951 = vsub.f32 %v931, %v945
    %v952 = vsub.f32 %v934, %v948
    %v953 = vmul.f32 %v949, 1.442695
    %v954 = vpow.pop %v953
    %v955 = vmul.f32 %v950, 1.442695
    %v956 = vpow.pop %v955
    %v957 = vmul.f32 %v951, 1.442695
    %v958 = vpow.pop %v957
    %v959 = vmul.f32 %v952, 1.442695
    %v960 = vpow.pop %v959
    %v961 = vsel %vm283, %v954, 0.0
    %962 = vadd.xlane.f32.xlu0 %v961
    %v963 = vpop.xlane.xlu0 %962
    %v964 = vsel %vm283, %v956, 0.0
    %965 = vadd.xlane.f32.xlu0 %v964
    %v966 = vpop.xlane.xlu0 %965
    %v967 = vsel %vm283, %v958, 0.0
    %968 = vadd.xlane.f32.xlu0 %v967
    %v969 = vpop.xlane.xlu0 %968
    %v970 = vsel %vm283, %v960, 0.0
    %971 = vadd.xlane.f32.xlu0 %v970
    %v972 = vpop.xlane.xlu0 %971
    %v973 = vrcp.pop %v963
    %v974 = vrcp.pop %v966
    %v975 = vrcp.pop %v969
    %v976 = vrcp.pop %v972
    %v977 = vmul.f32 %v954, %v973
    %v978 = vmul.f32 %v956, %v974
    %v979 = vmul.f32 %v958, %v975
    %v980 = vmul.f32 %v960, %v976
    %v981 = vpack.c.bf16 %v978, %v977
    %v982 = vpack.c.bf16 %v980, %v979
    %983 = vrot.lane.b32.xlu0 %v339, 40
    %v984 = vpop.permute.xlu0 %983
    %985 = vrot.lane.b32.xlu0 %v340, 40
    %v986 = vpop.permute.xlu0 %985
    %v990 = vsel %vm283, %v981, 0
    %v993 = vsel %vm283, %v982, 0
    %995 = vmatprep.subr.bf16.mxu0 0
    %996 = vmatpush1.bf16.msra.mxu0 %v984
    %997 = vmatprep.subr.bf16.mxu0 0
    %998 = vmatpush1.bf16.msra.mxu0 %v986
    %999 = vmatprep.subr.bf16.mxu0 0
    %1000 = vmatpush1.bf16.msra.mxu0 0
    %1001 = vmatprep.subr.bf16.mxu0 0
    %1002 = vmatpush1.bf16.msra.mxu0 0
    %1003 = vmatprep.subr.bf16.mxu0 0
    %1004 = vmatpush1.bf16.msra.mxu0 0
    %1005 = vmatprep.subr.bf16.mxu0 0
    %1006 = vmatpush1.bf16.msra.mxu0 0
    %1007 = vmatprep.subr.bf16.mxu0 0
    %1008 = vmatpush1.bf16.msra.mxu0 0
    %1009 = vmatprep.subr.bf16.mxu0 0
    %1010 = vmatpush1.bf16.msra.mxu0 0
    %1011 = vmatprep.subr.bf16.mxu0 0
    %1012 = vmatpush1.bf16.msra.mxu0 0
    %1013 = vmatprep.subr.bf16.mxu0 0
    %1014 = vmatpush1.bf16.msra.mxu0 0
    %1015 = vmatprep.subr.bf16.mxu0 0
    %1016 = vmatpush1.bf16.msra.mxu0 0
    %1017 = vmatprep.subr.bf16.mxu0 0
    %1018 = vmatpush1.bf16.msra.mxu0 0
    %1019 = vmatprep.subr.bf16.mxu0 0
    %1020 = vmatpush1.bf16.msra.mxu0 0
    %1021 = vmatprep.subr.bf16.mxu0 0
    %1022 = vmatpush1.bf16.msra.mxu0 0
    %1023 = vmatprep.subr.bf16.mxu0 0
    %1024 = vmatpush1.bf16.msra.mxu0 0
    %1025 = vmatprep.subr.bf16.mxu0 0
    %1026 = vmatpush1.bf16.msra.mxu0 0
    %1027 = vmatprep.mubr.bf16.mxu0 0
    %1028 = vmatmul.mubr.bf16.gmra.mrb[0].mxu0 %v990
    %v1029 = vpop.f32.mrb[0].mxu0
    %v1030 = vadd.f32 0.0, %v1029
    %v1031 = vpop.f32.mrb[0].mxu0
    %v1032 = vpop.f32.mrb[0].mxu0
    %v1033 = vadd.f32 0.0, %v1032
    %v1034 = vpop.f32.mrb[0].mxu0
    %1035 = vmatprep.mubr.bf16.mxu0 0
    %1036 = vmatmul.mubr.bf16.gmra.mrb[0].mxu0 %v993
    %v1037 = vpop.f32.mrb[0].mxu0
    %v1038 = vadd.f32 0.0, %v1037
    %v1039 = vpop.f32.mrb[0].mxu0
    %v1040 = vpop.f32.mrb[0].mxu0
    %v1041 = vadd.f32 0.0, %v1040
    %v1042 = vpop.f32.mrb[0].mxu0
    %1043 = vdwg.mxu0
    %1048 = vrot.lane.b32.xlu0 %v678, 8
    %v1049 = vpop.permute.xlu0 %1048
    %1050 = vrot.lane.b32.xlu0 %v681, 8
    %v1051 = vpop.permute.xlu0 %1050
    %1052 = vrot.lane.b32.xlu0 %v686, 8
    %v1053 = vpop.permute.xlu0 %1052
    %1054 = vrot.lane.b32.xlu0 %v689, 8
    %v1055 = vpop.permute.xlu0 %1054
    %1064 = vrot.lane.b32.xlu0 %v854, 16
    %v1065 = vpop.permute.xlu0 %1064
    %1066 = vrot.lane.b32.xlu0 %v857, 16
    %v1067 = vpop.permute.xlu0 %1066
    %1068 = vrot.lane.b32.xlu0 %v862, 16
    %v1069 = vpop.permute.xlu0 %1068
    %1070 = vrot.lane.b32.xlu0 %v865, 16
    %v1071 = vpop.permute.xlu0 %1070
    %1080 = vrot.lane.b32.xlu0 %v1030, 24
    %v1081 = vpop.permute.xlu0 %1080
    %1082 = vrot.lane.b32.xlu0 %v1033, 24
    %v1083 = vpop.permute.xlu0 %1082
    %1084 = vrot.lane.b32.xlu0 %v1038, 24
    %v1085 = vpop.permute.xlu0 %1084
    %1086 = vrot.lane.b32.xlu0 %v1041, 24
    %v1087 = vpop.permute.xlu0 %1086
    %v1092 = vsel %vm347, %v502, %v1049
    %v1093 = vsel %vm347, %v505, %v1051
    %v1094 = vsel %vm347, %v510, %v1053
    %v1095 = vsel %vm347, %v513, %v1055
    %v1096 = vsel %vm150, %v1092, %v1065
    %v1097 = vsel %vm150, %v1093, %v1067
    %v1098 = vsel %vm150, %v1094, %v1069
    %v1099 = vsel %vm150, %v1095, %v1071
    %vm1100 = vcmask 195584
    %v1101 = vsel %vm1100, %v1096, %v1081
    %v1102 = vsel %vm1100, %v1097, %v1083
    %v1103 = vsel %vm1100, %v1098, %v1085
    %v1104 = vsel %vm1100, %v1099, %v1087
    %v1105 = vpack.c.bf16 %v1102, %v1101
    %v1106 = vpack.c.bf16 %v1104, %v1103
    %v1107 = vld [vmem:[%s1 + $0x98] sm:$0x1]
    %v1108 = vlaneseq
    %v1109 = vshrl.u32 %v1108, 7
    %v1110 = vsub.s32 0, %v1109
    %v1111 = vrot.slane %v1107, %v1110
    %1112 = vrot.lane.b32.xlu0 %v279, 32
    %v1113 = vpop.permute.xlu0 %1112
    %1114 = vrot.lane.b32.xlu0 %v280, 32
    %v1115 = vpop.permute.xlu0 %1114
    %v1119 = vsel %vm283, %v1105, 0
    %v1122 = vsel %vm283, %v1106, 0
    %1124 = vmatprep.subr.bf16.mxu0 0
    %1125 = vmatpush1.bf16.msra.mxu0 %v1113
    %1126 = vmatprep.subr.bf16.mxu0 0
    %1127 = vmatpush1.bf16.msra.mxu0 %v1115
    %1128 = vmatprep.subr.bf16.mxu0 0
    %1129 = vmatpush1.bf16.msra.mxu0 0
    %1130 = vmatprep.subr.bf16.mxu0 0
    %1131 = vmatpush1.bf16.msra.mxu0 0
    %1132 = vmatprep.subr.bf16.mxu0 0
    %1133 = vmatpush1.bf16.msra.mxu0 0
    %1134 = vmatprep.subr.bf16.mxu0 0
    %1135 = vmatpush1.bf16.msra.mxu0 0
    %1136 = vmatprep.subr.bf16.mxu0 0
    %1137 = vmatpush1.bf16.msra.mxu0 0
    %1138 = vmatprep.subr.bf16.mxu0 0
    %1139 = vmatpush1.bf16.msra.mxu0 0
    %1140 = vmatprep.subr.bf16.mxu0 0
    %1141 = vmatpush1.bf16.msra.mxu0 0
    %1142 = vmatprep.subr.bf16.mxu0 0
    %1143 = vmatpush1.bf16.msra.mxu0 0
    %1144 = vmatprep.subr.bf16.mxu0 0
    %1145 = vmatpush1.bf16.msra.mxu0 0
    %1146 = vmatprep.subr.bf16.mxu0 0
    %1147 = vmatpush1.bf16.msra.mxu0 0
    %1148 = vmatprep.subr.bf16.mxu0 0
    %1149 = vmatpush1.bf16.msra.mxu0 0
    %1150 = vmatprep.subr.bf16.mxu0 0
    %1151 = vmatpush1.bf16.msra.mxu0 0
    %1152 = vmatprep.subr.bf16.mxu0 0
    %1153 = vmatpush1.bf16.msra.mxu0 0
    %1154 = vmatprep.subr.bf16.mxu0 0
    %1155 = vmatpush1.bf16.msra.mxu0 0
    %1156 = vmatprep.mubr.bf16.mxu0 0
    %1157 = vmatmul.mubr.bf16.gmra.mrb[0].mxu0 %v1119
    %v1158 = vpop.f32.mrb[0].mxu0
    %v1159 = vadd.f32 %v1111, %v1158
    %v1160 = vpop.f32.mrb[0].mxu0
    %v1161 = vpop.f32.mrb[0].mxu0
    %v1162 = vadd.f32 %v1111, %v1161
    %v1163 = vpop.f32.mrb[0].mxu0
    %1164 = vmatprep.mubr.bf16.mxu0 0
    %1165 = vmatmul.mubr.bf16.gmra.mrb[0].mxu0 %v1122
    %v1166 = vpop.f32.mrb[0].mxu0
    %v1167 = vadd.f32 %v1111, %v1166
    %v1168 = vpop.f32.mrb[0].mxu0
    %v1169 = vpop.f32.mrb[0].mxu0
    %v1170 = vadd.f32 %v1111, %v1169
    %v1171 = vpop.f32.mrb[0].mxu0
    %1172 = vdwg.mxu0
    %v1173 = vadd.f32 %v1159, %v252
    %v1174 = vadd.f32 %v1162, %v253
    %v1175 = vadd.f32 %v1167, %v254
    %v1176 = vadd.f32 %v1170, %v255
    %v1177 = vld [vmem:[%s1 + $0xa0] sm:$0x1]
    %v1178 = vld [vmem:[%s1 + $0xa8] sm:$0x1]
    %v1179 = vsel %vm283, %v1173, 0.0
    %1180 = vadd.xlane.f32.xlu0 %v1179
    %v1181 = vpop.xlane.xlu0 %1180
    %v1182 = vsel %vm283, %v1174, 0.0
    %1183 = vadd.xlane.f32.xlu0 %v1182
    %v1184 = vpop.xlane.xlu0 %1183
    %v1185 = vsel %vm283, %v1175, 0.0
    %1186 = vadd.xlane.f32.xlu0 %v1185
    %v1187 = vpop.xlane.xlu0 %1186
    %v1188 = vsel %vm283, %v1176, 0.0
    %1189 = vadd.xlane.f32.xlu0 %v1188
    %v1190 = vpop.xlane.xlu0 %1189
    %v1191 = vrcp.pop 32.0
    %v1192 = vmul.f32 %v1181, %v1191
    %v1193 = vmul.f32 %v1184, %v1191
    %v1194 = vmul.f32 %v1187, %v1191
    %v1195 = vmul.f32 %v1190, %v1191
    %v1196 = vsub.f32 %v1173, %v1192
    %v1197 = vsub.f32 %v1174, %v1193
    %v1198 = vsub.f32 %v1175, %v1194
    %v1199 = vsub.f32 %v1176, %v1195
    %v1200 = vmul.f32 %v1196, %v1196
    %v1201 = vmul.f32 %v1197, %v1197
    %v1202 = vmul.f32 %v1198, %v1198
    %v1203 = vmul.f32 %v1199, %v1199
    %v1204 = vsel %vm283, %v1200, 0.0
    %1205 = vadd.xlane.f32.xlu0 %v1204
    %v1206 = vpop.xlane.xlu0 %1205
    %v1207 = vsel %vm283, %v1201, 0.0
    %1208 = vadd.xlane.f32.xlu0 %v1207
    %v1209 = vpop.xlane.xlu0 %1208
    %v1210 = vsel %vm283, %v1202, 0.0
    %1211 = vadd.xlane.f32.xlu0 %v1210
    %v1212 = vpop.xlane.xlu0 %1211
    %v1213 = vsel %vm283, %v1203, 0.0
    %1214 = vadd.xlane.f32.xlu0 %v1213
    %v1215 = vpop.xlane.xlu0 %1214
    %v1216 = vmul.f32 %v1206, %v1191
    %v1217 = vmul.f32 %v1209, %v1191
    %v1218 = vmul.f32 %v1212, %v1191
    %v1219 = vmul.f32 %v1215, %v1191
    %v1220 = vadd.f32 %v1216, 1e-05
    %v1221 = vadd.f32 %v1217, 1e-05
    %v1222 = vadd.f32 %v1218, 1e-05
    %v1223 = vadd.f32 %v1219, 1e-05
    %v1224 = vrsqrt.pop %v1220
    %v1225 = vrsqrt.pop %v1221
    %v1226 = vrsqrt.pop %v1222
    %v1227 = vrsqrt.pop %v1223
    %v1228 = vmul.f32 %v1196, %v1224
    %v1229 = vmul.f32 %v1197, %v1225
    %v1230 = vmul.f32 %v1198, %v1226
    %v1231 = vmul.f32 %v1199, %v1227
    %v1232 = vlaneseq
    %v1233 = vshrl.u32 %v1232, 7
    %v1234 = vsub.s32 0, %v1233
    %v1235 = vrot.slane %v1177, %v1234
    %v1236 = vmul.f32 %v1228, %v1235
    %v1237 = vmul.f32 %v1229, %v1235
    %v1238 = vmul.f32 %v1230, %v1235
    %v1239 = vmul.f32 %v1231, %v1235
    %v1240 = vlaneseq
    %v1241 = vshrl.u32 %v1240, 7
    %v1242 = vsub.s32 0, %v1241
    %v1243 = vrot.slane %v1178, %v1242
    %v1244 = vadd.f32 %v1236, %v1243
    %v1245 = vadd.f32 %v1237, %v1243
    %v1246 = vadd.f32 %v1238, %v1243
    %v1247 = vadd.f32 %v1239, %v1243
    %v1248 = vpack.c.bf16 %v1245, %v1244
    %v1249 = vpack.c.bf16 %v1247, %v1246
    %v1250 = vld [vmem:[%s4] sm:$0xff]
    %v1251 = vld [vmem:[%s4 + $0x8] sm:$0xff]
    %v1252 = vld [vmem:[%s4 + $0x10] sm:$0xff]
    %v1253 = vld [vmem:[%s4 + $0x18] sm:$0xff]
    %v1254 = vld [vmem:[%s4 + $0x20] sm:$0xff]
    %v1255 = vld [vmem:[%s4 + $0x28] sm:$0xff]
    %v1256 = vld [vmem:[%s4 + $0x30] sm:$0xff]
    %v1257 = vld [vmem:[%s4 + $0x38] sm:$0xff]
    %v1258 = vld [vmem:[%s4 + $0x40] sm:$0xff]
    %v1259 = vld [vmem:[%s4 + $0x48] sm:$0xff]
    %v1260 = vld [vmem:[%s4 + $0x50] sm:$0xff]
    %v1261 = vld [vmem:[%s4 + $0x58] sm:$0xff]
    %v1262 = vld [vmem:[%s4 + $0x60] sm:$0xff]
    %v1263 = vld [vmem:[%s4 + $0x68] sm:$0xff]
    %v1264 = vld [vmem:[%s4 + $0x70] sm:$0xff]
    %v1265 = vld [vmem:[%s4 + $0x78] sm:$0xff]
    %v1266 = vld [vmem:[%s4 + $0x80] sm:$0xff]
    %v1267 = vld [vmem:[%s4 + $0x88] sm:$0xff]
    %v1268 = vld [vmem:[%s4 + $0x90] sm:$0xff]
    %v1269 = vld [vmem:[%s4 + $0x98] sm:$0xff]
    %v1270 = vld [vmem:[%s4 + $0xa0] sm:$0xff]
    %v1271 = vld [vmem:[%s4 + $0xa8] sm:$0xff]
    %v1272 = vld [vmem:[%s4 + $0xb0] sm:$0xff]
    %v1273 = vld [vmem:[%s4 + $0xb8] sm:$0xff]
    %v1274 = vld [vmem:[%s4 + $0xc0] sm:$0xff]
    %v1275 = vld [vmem:[%s4 + $0xc8] sm:$0xff]
    %v1276 = vld [vmem:[%s4 + $0xd0] sm:$0xff]
    %v1277 = vld [vmem:[%s4 + $0xd8] sm:$0xff]
    %v1278 = vld [vmem:[%s4 + $0xe0] sm:$0xff]
    %v1279 = vld [vmem:[%s4 + $0xe8] sm:$0xff]
    %v1280 = vld [vmem:[%s4 + $0xf0] sm:$0xff]
    %v1281 = vld [vmem:[%s4 + $0xf8] sm:$0xff]
    %v1282 = vld [vmem:[%s3] ss:$2 sm:$0xff]
    %s1283 = scalar_lea.vmem %s3, 16
    %v1284 = vld [vmem:[%s1283] ss:$2 sm:$0xff]
    %v1287 = vlaneseq
    %v1288 = vshrl.u32 %v1287, 7
    %v1289 = vsub.s32 0, %v1288
    %v1290 = vrot.slane %v1282, %v1289
    %v1291 = vlaneseq
    %v1292 = vshrl.u32 %v1291, 7
    %v1293 = vsub.s32 1, %v1292
    %v1294 = vrot.slane %v1282, %v1293
    %v1295 = vlaneseq
    %v1296 = vshrl.u32 %v1295, 7
    %v1297 = vsub.s32 2, %v1296
    %v1298 = vrot.slane %v1282, %v1297
    %v1299 = vlaneseq
    %v1300 = vshrl.u32 %v1299, 7
    %v1301 = vsub.s32 3, %v1300
    %v1302 = vrot.slane %v1282, %v1301
    %v1303 = vlaneseq
    %v1304 = vshrl.u32 %v1303, 7
    %v1305 = vsub.s32 4, %v1304
    %v1306 = vrot.slane %v1282, %v1305
    %v1307 = vlaneseq
    %v1308 = vshrl.u32 %v1307, 7
    %v1309 = vsub.s32 5, %v1308
    %v1310 = vrot.slane %v1282, %v1309
    %v1311 = vlaneseq
    %v1312 = vshrl.u32 %v1311, 7
    %v1313 = vsub.s32 6, %v1312
    %v1314 = vrot.slane %v1282, %v1313
    %v1315 = vlaneseq
    %v1316 = vshrl.u32 %v1315, 7
    %v1317 = vsub.s32 7, %v1316
    %v1318 = vrot.slane %v1282, %v1317
    %v1319 = vlaneseq
    %v1320 = vshrl.u32 %v1319, 7
    %v1321 = vsub.s32 0, %v1320
    %v1322 = vrot.slane %v1284, %v1321
    %v1323 = vlaneseq
    %v1324 = vshrl.u32 %v1323, 7
    %v1325 = vsub.s32 1, %v1324
    %v1326 = vrot.slane %v1284, %v1325
    %v1327 = vlaneseq
    %v1328 = vshrl.u32 %v1327, 7
    %v1329 = vsub.s32 2, %v1328
    %v1330 = vrot.slane %v1284, %v1329
    %v1331 = vlaneseq
    %v1332 = vshrl.u32 %v1331, 7
    %v1333 = vsub.s32 3, %v1332
    %v1334 = vrot.slane %v1284, %v1333
    %v1335 = vlaneseq
    %v1336 = vshrl.u32 %v1335, 7
    %v1337 = vsub.s32 4, %v1336
    %v1338 = vrot.slane %v1284, %v1337
    %v1339 = vlaneseq
    %v1340 = vshrl.u32 %v1339, 7
    %v1341 = vsub.s32 5, %v1340
    %v1342 = vrot.slane %v1284, %v1341
    %v1343 = vlaneseq
    %v1344 = vshrl.u32 %v1343, 7
    %v1345 = vsub.s32 6, %v1344
    %v1346 = vrot.slane %v1284, %v1345
    %v1347 = vlaneseq
    %v1348 = vshrl.u32 %v1347, 7
    %v1349 = vsub.s32 7, %v1348
    %v1350 = vrot.slane %v1284, %v1349
    %v1399 = vunpack.c.l.b16 %v1250
    %v1400 = vunpack.c.h.b16 %v1250
    %v1401 = vunpack.c.l.b16 %v1251
    %v1402 = vunpack.c.h.b16 %v1251
    %v1403 = vunpack.c.l.b16 %v1252
    %v1404 = vunpack.c.h.b16 %v1252
    %v1405 = vunpack.c.l.b16 %v1253
    %v1406 = vunpack.c.h.b16 %v1253
    %v1407 = vunpack.c.l.b16 %v1254
    %v1408 = vunpack.c.h.b16 %v1254
    %v1409 = vunpack.c.l.b16 %v1255
    %v1410 = vunpack.c.h.b16 %v1255
    %v1411 = vunpack.c.l.b16 %v1256
    %v1412 = vunpack.c.h.b16 %v1256
    %v1413 = vunpack.c.l.b16 %v1257
    %v1414 = vunpack.c.h.b16 %v1257
    %v1415 = vunpack.c.l.b16 %v1258
    %v1416 = vunpack.c.h.b16 %v1258
    %v1417 = vunpack.c.l.b16 %v1259
    %v1418 = vunpack.c.h.b16 %v1259
    %v1419 = vunpack.c.l.b16 %v1260
    %v1420 = vunpack.c.h.b16 %v1260
    %v1421 = vunpack.c.l.b16 %v1261
    %v1422 = vunpack.c.h.b16 %v1261
    %v1423 = vunpack.c.l.b16 %v1262
    %v1424 = vunpack.c.h.b16 %v1262
    %v1425 = vunpack.c.l.b16 %v1263
    %v1426 = vunpack.c.h.b16 %v1263
    %v1427 = vunpack.c.l.b16 %v1264
    %v1428 = vunpack.c.h.b16 %v1264
    %v1429 = vunpack.c.l.b16 %v1265
    %v1430 = vunpack.c.h.b16 %v1265
    %v1431 = vunpack.c.l.b16 %v1266
    %v1432 = vunpack.c.h.b16 %v1266
    %v1433 = vunpack.c.l.b16 %v1267
    %v1434 = vunpack.c.h.b16 %v1267
    %v1435 = vunpack.c.l.b16 %v1268
    %v1436 = vunpack.c.h.b16 %v1268
    %v1437 = vunpack.c.l.b16 %v1269
    %v1438 = vunpack.c.h.b16 %v1269
    %v1439 = vunpack.c.l.b16 %v1270
    %v1440 = vunpack.c.h.b16 %v1270
    %v1441 = vunpack.c.l.b16 %v1271
    %v1442 = vunpack.c.h.b16 %v1271
    %v1443 = vunpack.c.l.b16 %v1272
    %v1444 = vunpack.c.h.b16 %v1272
    %v1445 = vunpack.c.l.b16 %v1273
    %v1446 = vunpack.c.h.b16 %v1273
    %v1447 = vunpack.c.l.b16 %v1274
    %v1448 = vunpack.c.h.b16 %v1274
    %v1449 = vunpack.c.l.b16 %v1275
    %v1450 = vunpack.c.h.b16 %v1275
    %v1451 = vunpack.c.l.b16 %v1276
    %v1452 = vunpack.c.h.b16 %v1276
    %v1453 = vunpack.c.l.b16 %v1277
    %v1454 = vunpack.c.h.b16 %v1277
    %v1455 = vunpack.c.l.b16 %v1278
    %v1456 = vunpack.c.h.b16 %v1278
    %v1457 = vunpack.c.l.b16 %v1279
    %v1458 = vunpack.c.h.b16 %v1279
    %v1459 = vunpack.c.l.b16 %v1280
    %v1460 = vunpack.c.h.b16 %v1280
    %v1461 = vunpack.c.l.b16 %v1281
    %v1462 = vunpack.c.h.b16 %v1281
    %v1463 = vpack.c.b16 %v1415, %v1399
    %v1464 = vpack.c.b16 %v1416, %v1400
    %v1465 = vpack.c.b16 %v1417, %v1401
    %v1466 = vpack.c.b16 %v1418, %v1402
    %v1467 = vpack.c.b16 %v1419, %v1403
    %v1468 = vpack.c.b16 %v1420, %v1404
    %v1469 = vpack.c.b16 %v1421, %v1405
    %v1470 = vpack.c.b16 %v1422, %v1406
    %v1471 = vpack.c.b16 %v1423, %v1407
    %v1472 = vpack.c.b16 %v1424, %v1408
    %v1473 = vpack.c.b16 %v1425, %v1409
    %v1474 = vpack.c.b16 %v1426, %v1410
    %v1475 = vpack.c.b16 %v1427, %v1411
    %v1476 = vpack.c.b16 %v1428, %v1412
    %v1477 = vpack.c.b16 %v1429, %v1413
    %v1478 = vpack.c.b16 %v1430, %v1414
    %v1479 = vpack.c.b16 %v1447, %v1431
    %v1480 = vpack.c.b16 %v1448, %v1432
    %v1481 = vpack.c.b16 %v1449, %v1433
    %v1482 = vpack.c.b16 %v1450, %v1434
    %v1483 = vpack.c.b16 %v1451, %v1435
    %v1484 = vpack.c.b16 %v1452, %v1436
    %v1485 = vpack.c.b16 %v1453, %v1437
    %v1486 = vpack.c.b16 %v1454, %v1438
    %v1487 = vpack.c.b16 %v1455, %v1439
    %v1488 = vpack.c.b16 %v1456, %v1440
    %v1489 = vpack.c.b16 %v1457, %v1441
    %v1490 = vpack.c.b16 %v1458, %v1442
    %v1491 = vpack.c.b16 %v1459, %v1443
    %v1492 = vpack.c.b16 %v1460, %v1444
    %v1493 = vpack.c.b16 %v1461, %v1445
    %v1494 = vpack.c.b16 %v1462, %v1446
    %v1528 = vsel %vm283, %v1248, 0
    %v1531 = vsel %vm283, %v1249, 0
    %1533 = vmatprep.subr.bf16.mxu0 %v1464
    %1534 = vmatpush1.bf16.msra.mxu0 %v1463
    %1535 = vmatprep.subr.bf16.mxu0 %v1480
    %1536 = vmatpush1.bf16.msra.mxu0 %v1479
    %1537 = vmatprep.subr.bf16.mxu0 0
    %1538 = vmatpush1.bf16.msra.mxu0 0
    %1539 = vmatprep.subr.bf16.mxu0 0
    %1540 = vmatpush1.bf16.msra.mxu0 0
    %1541 = vmatprep.subr.bf16.mxu0 0
    %1542 = vmatpush1.bf16.msra.mxu0 0
    %1543 = vmatprep.subr.bf16.mxu0 0
    %1544 = vmatpush1.bf16.msra.mxu0 0
    %1545 = vmatprep.subr.bf16.mxu0 0
    %1546 = vmatpush1.bf16.msra.mxu0 0
    %1547 = vmatprep.subr.bf16.mxu0 0
    %1548 = vmatpush1.bf16.msra.mxu0 0
    %1549 = vmatprep.subr.bf16.mxu0 0
    %1550 = vmatpush1.bf16.msra.mxu0 0
    %1551 = vmatprep.subr.bf16.mxu0 0
    %1552 = vmatpush1.bf16.msra.mxu0 0
    %1553 = vmatprep.subr.bf16.mxu0 0
    %1554 = vmatpush1.bf16.msra.mxu0 0
    %1555 = vmatprep.subr.bf16.mxu0 0
    %1556 = vmatpush1.bf16.msra.mxu0 0
    %1557 = vmatprep.subr.bf16.mxu0 0
    %1558 = vmatpush1.bf16.msra.mxu0 0
    %1559 = vmatprep.subr.bf16.mxu0 0
    %1560 = vmatpush1.bf16.msra.mxu0 0
    %1561 = vmatprep.subr.bf16.mxu0 0
    %1562 = vmatpush1.bf16.msra.mxu0 0
    %1563 = vmatprep.subr.bf16.mxu0 0
    %1564 = vmatpush1.bf16.msra.mxu0 0
    %1565 = vmatprep.mubr.bf16.mxu0 0
    %1566 = vmatmul.mubr.bf16.gmra.mrb[0].mxu0 %v1528
    %v1567 = vpop.f32.mrb[0].mxu0
    %v1568 = vadd.f32 %v1290, %v1567
    %v1569 = vpop.f32.mrb[0].mxu0
    %v1570 = vadd.f32 %v1294, %v1569
    %v1571 = vpop.f32.mrb[0].mxu0
    %v1572 = vadd.f32 %v1290, %v1571
    %v1573 = vpop.f32.mrb[0].mxu0
    %v1574 = vadd.f32 %v1294, %v1573
    %1575 = vmatprep.mubr.bf16.mxu0 0
    %1576 = vmatmul.mubr.bf16.gmra.mrb[0].mxu0 %v1531
    %v1577 = vpop.f32.mrb[0].mxu0
    %v1578 = vadd.f32 %v1290, %v1577
    %v1579 = vpop.f32.mrb[0].mxu0
    %v1580 = vadd.f32 %v1294, %v1579
    %v1581 = vpop.f32.mrb[0].mxu0
    %v1582 = vadd.f32 %v1290, %v1581
    %v1583 = vpop.f32.mrb[0].mxu0
    %v1584 = vadd.f32 %v1294, %v1583
    %1585 = vdwg.mxu0
    %1586 = vmatprep.subr.bf16.mxu0 %v1466
    %1587 = vmatpush1.bf16.msra.mxu0 %v1465
    %1588 = vmatprep.subr.bf16.mxu0 %v1482
    %1589 = vmatpush1.bf16.msra.mxu0 %v1481
    %1590 = vmatprep.subr.bf16.mxu0 0
    %1591 = vmatpush1.bf16.msra.mxu0 0
    %1592 = vmatprep.subr.bf16.mxu0 0
    %1593 = vmatpush1.bf16.msra.mxu0 0
    %1594 = vmatprep.subr.bf16.mxu0 0
    %1595 = vmatpush1.bf16.msra.mxu0 0
    %1596 = vmatprep.subr.bf16.mxu0 0
    %1597 = vmatpush1.bf16.msra.mxu0 0
    %1598 = vmatprep.subr.bf16.mxu0 0
    %1599 = vmatpush1.bf16.msra.mxu0 0
    %1600 = vmatprep.subr.bf16.mxu0 0
    %1601 = vmatpush1.bf16.msra.mxu0 0
    %1602 = vmatprep.subr.bf16.mxu0 0
    %1603 = vmatpush1.bf16.msra.mxu0 0
    %1604 = vmatprep.subr.bf16.mxu0 0
    %1605 = vmatpush1.bf16.msra.mxu0 0
    %1606 = vmatprep.subr.bf16.mxu0 0
    %1607 = vmatpush1.bf16.msra.mxu0 0
    %1608 = vmatprep.subr.bf16.mxu0 0
    %1609 = vmatpush1.bf16.msra.mxu0 0
    %1610 = vmatprep.subr.bf16.mxu0 0
    %1611 = vmatpush1.bf16.msra.mxu0 0
    %1612 = vmatprep.subr.bf16.mxu0 0
    %1613 = vmatpush1.bf16.msra.mxu0 0
    %1614 = vmatprep.subr.bf16.mxu0 0
    %1615 = vmatpush1.bf16.msra.mxu0 0
    %1616 = vmatprep.subr.bf16.mxu0 0
    %1617 = vmatpush1.bf16.msra.mxu0 0
    %1618 = vmatprep.mubr.bf16.mxu0 0
    %1619 = vmatmul.mubr.bf16.gmra.mrb[0].mxu0 %v1528
    %v1620 = vpop.f32.mrb[0].mxu0
    %v1621 = vadd.f32 %v1298, %v1620
    %v1622 = vpop.f32.mrb[0].mxu0
    %v1623 = vadd.f32 %v1302, %v1622
    %v1624 = vpop.f32.mrb[0].mxu0
    %v1625 = vadd.f32 %v1298, %v1624
    %v1626 = vpop.f32.mrb[0].mxu0
    %v1627 = vadd.f32 %v1302, %v1626
    %1628 = vmatprep.mubr.bf16.mxu0 0
    %1629 = vmatmul.mubr.bf16.gmra.mrb[0].mxu0 %v1531
    %v1630 = vpop.f32.mrb[0].mxu0
    %v1631 = vadd.f32 %v1298, %v1630
    %v1632 = vpop.f32.mrb[0].mxu0
    %v1633 = vadd.f32 %v1302, %v1632
    %v1634 = vpop.f32.mrb[0].mxu0
    %v1635 = vadd.f32 %v1298, %v1634
    %v1636 = vpop.f32.mrb[0].mxu0
    %v1637 = vadd.f32 %v1302, %v1636
    %1638 = vdwg.mxu0
    %1639 = vmatprep.subr.bf16.mxu0 %v1468
    %1640 = vmatpush1.bf16.msra.mxu0 %v1467
    %1641 = vmatprep.subr.bf16.mxu0 %v1484
    %1642 = vmatpush1.bf16.msra.mxu0 %v1483
    %1643 = vmatprep.subr.bf16.mxu0 0
    %1644 = vmatpush1.bf16.msra.mxu0 0
    %1645 = vmatprep.subr.bf16.mxu0 0
    %1646 = vmatpush1.bf16.msra.mxu0 0
    %1647 = vmatprep.subr.bf16.mxu0 0
    %1648 = vmatpush1.bf16.msra.mxu0 0
    %1649 = vmatprep.subr.bf16.mxu0 0
    %1650 = vmatpush1.bf16.msra.mxu0 0
    %1651 = vmatprep.subr.bf16.mxu0 0
    %1652 = vmatpush1.bf16.msra.mxu0 0
    %1653 = vmatprep.subr.bf16.mxu0 0
    %1654 = vmatpush1.bf16.msra.mxu0 0
    %1655 = vmatprep.subr.bf16.mxu0 0
    %1656 = vmatpush1.bf16.msra.mxu0 0
    %1657 = vmatprep.subr.bf16.mxu0 0
    %1658 = vmatpush1.bf16.msra.mxu0 0
    %1659 = vmatprep.subr.bf16.mxu0 0
    %1660 = vmatpush1.bf16.msra.mxu0 0
    %1661 = vmatprep.subr.bf16.mxu0 0
    %1662 = vmatpush1.bf16.msra.mxu0 0
    %1663 = vmatprep.subr.bf16.mxu0 0
    %1664 = vmatpush1.bf16.msra.mxu0 0
    %1665 = vmatprep.subr.bf16.mxu0 0
    %1666 = vmatpush1.bf16.msra.mxu0 0
    %1667 = vmatprep.subr.bf16.mxu0 0
    %1668 = vmatpush1.bf16.msra.mxu0 0
    %1669 = vmatprep.subr.bf16.mxu0 0
    %1670 = vmatpush1.bf16.msra.mxu0 0
    %1671 = vmatprep.mubr.bf16.mxu0 0
    %1672 = vmatmul.mubr.bf16.gmra.mrb[0].mxu0 %v1528
    %v1673 = vpop.f32.mrb[0].mxu0
    %v1674 = vadd.f32 %v1306, %v1673
    %v1675 = vpop.f32.mrb[0].mxu0
    %v1676 = vadd.f32 %v1310, %v1675
    %v1677 = vpop.f32.mrb[0].mxu0
    %v1678 = vadd.f32 %v1306, %v1677
    %v1679 = vpop.f32.mrb[0].mxu0
    %v1680 = vadd.f32 %v1310, %v1679
    %1681 = vmatprep.mubr.bf16.mxu0 0
    %1682 = vmatmul.mubr.bf16.gmra.mrb[0].mxu0 %v1531
    %v1683 = vpop.f32.mrb[0].mxu0
    %v1684 = vadd.f32 %v1306, %v1683
    %v1685 = vpop.f32.mrb[0].mxu0
    %v1686 = vadd.f32 %v1310, %v1685
    %v1687 = vpop.f32.mrb[0].mxu0
    %v1688 = vadd.f32 %v1306, %v1687
    %v1689 = vpop.f32.mrb[0].mxu0
    %v1690 = vadd.f32 %v1310, %v1689
    %1691 = vdwg.mxu0
    %1692 = vmatprep.subr.bf16.mxu0 %v1470
    %1693 = vmatpush1.bf16.msra.mxu0 %v1469
    %1694 = vmatprep.subr.bf16.mxu0 %v1486
    %1695 = vmatpush1.bf16.msra.mxu0 %v1485
    %1696 = vmatprep.subr.bf16.mxu0 0
    %1697 = vmatpush1.bf16.msra.mxu0 0
    %1698 = vmatprep.subr.bf16.mxu0 0
    %1699 = vmatpush1.bf16.msra.mxu0 0
    %1700 = vmatprep.subr.bf16.mxu0 0
    %1701 = vmatpush1.bf16.msra.mxu0 0
    %1702 = vmatprep.subr.bf16.mxu0 0
    %1703 = vmatpush1.bf16.msra.mxu0 0
    %1704 = vmatprep.subr.bf16.mxu0 0
    %1705 = vmatpush1.bf16.msra.mxu0 0
    %1706 = vmatprep.subr.bf16.mxu0 0
    %1707 = vmatpush1.bf16.msra.mxu0 0
    %1708 = vmatprep.subr.bf16.mxu0 0
    %1709 = vmatpush1.bf16.msra.mxu0 0
    %1710 = vmatprep.subr.bf16.mxu0 0
    %1711 = vmatpush1.bf16.msra.mxu0 0
    %1712 = vmatprep.subr.bf16.mxu0 0
    %1713 = vmatpush1.bf16.msra.mxu0 0
    %1714 = vmatprep.subr.bf16.mxu0 0
    %1715 = vmatpush1.bf16.msra.mxu0 0
    %1716 = vmatprep.subr.bf16.mxu0 0
    %1717 = vmatpush1.bf16.msra.mxu0 0
    %1718 = vmatprep.subr.bf16.mxu0 0
    %1719 = vmatpush1.bf16.msra.mxu0 0
    %1720 = vmatprep.subr.bf16.mxu0 0
    %1721 = vmatpush1.bf16.msra.mxu0 0
    %1722 = vmatprep.subr.bf16.mxu0 0
    %1723 = vmatpush1.bf16.msra.mxu0 0
    %1724 = vmatprep.mubr.bf16.mxu0 0
    %1725 = vmatmul.mubr.bf16.gmra.mrb[0].mxu0 %v1528
    %v1726 = vpop.f32.mrb[0].mxu0
    %v1727 = vadd.f32 %v1314, %v1726
    %v1728 = vpop.f32.mrb[0].mxu0
    %v1729 = vadd.f32 %v1318, %v1728
    %v1730 = vpop.f32.mrb[0].mxu0
    %v1731 = vadd.f32 %v1314, %v1730
    %v1732 = vpop.f32.mrb[0].mxu0
    %v1733 = vadd.f32 %v1318, %v1732
    %1734 = vmatprep.mubr.bf16.mxu0 0
    %1735 = vmatmul.mubr.bf16.gmra.mrb[0].mxu0 %v1531
    %v1736 = vpop.f32.mrb[0].mxu0
    %v1737 = vadd.f32 %v1314, %v1736
    %v1738 = vpop.f32.mrb[0].mxu0
    %v1739 = vadd.f32 %v1318, %v1738
    %v1740 = vpop.f32.mrb[0].mxu0
    %v1741 = vadd.f32 %v1314, %v1740
    %v1742 = vpop.f32.mrb[0].mxu0
    %v1743 = vadd.f32 %v1318, %v1742
    %1744 = vdwg.mxu0
    %1745 = vmatprep.subr.bf16.mxu0 %v1472
    %1746 = vmatpush1.bf16.msra.mxu0 %v1471
    %1747 = vmatprep.subr.bf16.mxu0 %v1488
    %1748 = vmatpush1.bf16.msra.mxu0 %v1487
    %1749 = vmatprep.subr.bf16.mxu0 0
    %1750 = vmatpush1.bf16.msra.mxu0 0
    %1751 = vmatprep.subr.bf16.mxu0 0
    %1752 = vmatpush1.bf16.msra.mxu0 0
    %1753 = vmatprep.subr.bf16.mxu0 0
    %1754 = vmatpush1.bf16.msra.mxu0 0
    %1755 = vmatprep.subr.bf16.mxu0 0
    %1756 = vmatpush1.bf16.msra.mxu0 0
    %1757 = vmatprep.subr.bf16.mxu0 0
    %1758 = vmatpush1.bf16.msra.mxu0 0
    %1759 = vmatprep.subr.bf16.mxu0 0
    %1760 = vmatpush1.bf16.msra.mxu0 0
    %1761 = vmatprep.subr.bf16.mxu0 0
    %1762 = vmatpush1.bf16.msra.mxu0 0
    %1763 = vmatprep.subr.bf16.mxu0 0
    %1764 = vmatpush1.bf16.msra.mxu0 0
    %1765 = vmatprep.subr.bf16.mxu0 0
    %1766 = vmatpush1.bf16.msra.mxu0 0
    %1767 = vmatprep.subr.bf16.mxu0 0
    %1768 = vmatpush1.bf16.msra.mxu0 0
    %1769 = vmatprep.subr.bf16.mxu0 0
    %1770 = vmatpush1.bf16.msra.mxu0 0
    %1771 = vmatprep.subr.bf16.mxu0 0
    %1772 = vmatpush1.bf16.msra.mxu0 0
    %1773 = vmatprep.subr.bf16.mxu0 0
    %1774 = vmatpush1.bf16.msra.mxu0 0
    %1775 = vmatprep.subr.bf16.mxu0 0
    %1776 = vmatpush1.bf16.msra.mxu0 0
    %1777 = vmatprep.mubr.bf16.mxu0 0
    %1778 = vmatmul.mubr.bf16.gmra.mrb[0].mxu0 %v1528
    %v1779 = vpop.f32.mrb[0].mxu0
    %v1780 = vadd.f32 %v1322, %v1779
    %v1781 = vpop.f32.mrb[0].mxu0
    %v1782 = vadd.f32 %v1326, %v1781
    %v1783 = vpop.f32.mrb[0].mxu0
    %v1784 = vadd.f32 %v1322, %v1783
    %v1785 = vpop.f32.mrb[0].mxu0
    %v1786 = vadd.f32 %v1326, %v1785
    %1787 = vmatprep.mubr.bf16.mxu0 0
    %1788 = vmatmul.mubr.bf16.gmra.mrb[0].mxu0 %v1531
    %v1789 = vpop.f32.mrb[0].mxu0
    %v1790 = vadd.f32 %v1322, %v1789
    %v1791 = vpop.f32.mrb[0].mxu0
    %v1792 = vadd.f32 %v1326, %v1791
    %v1793 = vpop.f32.mrb[0].mxu0
    %v1794 = vadd.f32 %v1322, %v1793
    %v1795 = vpop.f32.mrb[0].mxu0
    %v1796 = vadd.f32 %v1326, %v1795
    %1797 = vdwg.mxu0
    %1798 = vmatprep.subr.bf16.mxu0 %v1474
    %1799 = vmatpush1.bf16.msra.mxu0 %v1473
    %1800 = vmatprep.subr.bf16.mxu0 %v1490
    %1801 = vmatpush1.bf16.msra.mxu0 %v1489
    %1802 = vmatprep.subr.bf16.mxu0 0
    %1803 = vmatpush1.bf16.msra.mxu0 0
    %1804 = vmatprep.subr.bf16.mxu0 0
    %1805 = vmatpush1.bf16.msra.mxu0 0
    %1806 = vmatprep.subr.bf16.mxu0 0
    %1807 = vmatpush1.bf16.msra.mxu0 0
    %1808 = vmatprep.subr.bf16.mxu0 0
    %1809 = vmatpush1.bf16.msra.mxu0 0
    %1810 = vmatprep.subr.bf16.mxu0 0
    %1811 = vmatpush1.bf16.msra.mxu0 0
    %1812 = vmatprep.subr.bf16.mxu0 0
    %1813 = vmatpush1.bf16.msra.mxu0 0
    %1814 = vmatprep.subr.bf16.mxu0 0
    %1815 = vmatpush1.bf16.msra.mxu0 0
    %1816 = vmatprep.subr.bf16.mxu0 0
    %1817 = vmatpush1.bf16.msra.mxu0 0
    %1818 = vmatprep.subr.bf16.mxu0 0
    %1819 = vmatpush1.bf16.msra.mxu0 0
    %1820 = vmatprep.subr.bf16.mxu0 0
    %1821 = vmatpush1.bf16.msra.mxu0 0
    %1822 = vmatprep.subr.bf16.mxu0 0
    %1823 = vmatpush1.bf16.msra.mxu0 0
    %1824 = vmatprep.subr.bf16.mxu0 0
    %1825 = vmatpush1.bf16.msra.mxu0 0
    %1826 = vmatprep.subr.bf16.mxu0 0
    %1827 = vmatpush1.bf16.msra.mxu0 0
    %1828 = vmatprep.subr.bf16.mxu0 0
    %1829 = vmatpush1.bf16.msra.mxu0 0
    %1830 = vmatprep.mubr.bf16.mxu0 0
    %1831 = vmatmul.mubr.bf16.gmra.mrb[0].mxu0 %v1528
    %v1832 = vpop.f32.mrb[0].mxu0
    %v1833 = vadd.f32 %v1330, %v1832
    %v1834 = vpop.f32.mrb[0].mxu0
    %v1835 = vadd.f32 %v1334, %v1834
    %v1836 = vpop.f32.mrb[0].mxu0
    %v1837 = vadd.f32 %v1330, %v1836
    %v1838 = vpop.f32.mrb[0].mxu0
    %v1839 = vadd.f32 %v1334, %v1838
    %1840 = vmatprep.mubr.bf16.mxu0 0
    %1841 = vmatmul.mubr.bf16.gmra.mrb[0].mxu0 %v1531
    %v1842 = vpop.f32.mrb[0].mxu0
    %v1843 = vadd.f32 %v1330, %v1842
    %v1844 = vpop.f32.mrb[0].mxu0
    %v1845 = vadd.f32 %v1334, %v1844
    %v1846 = vpop.f32.mrb[0].mxu0
    %v1847 = vadd.f32 %v1330, %v1846
    %v1848 = vpop.f32.mrb[0].mxu0
    %v1849 = vadd.f32 %v1334, %v1848
    %1850 = vdwg.mxu0
    %1851 = vmatprep.subr.bf16.mxu0 %v1476
    %1852 = vmatpush1.bf16.msra.mxu0 %v1475
    %1853 = vmatprep.subr.bf16.mxu0 %v1492
    %1854 = vmatpush1.bf16.msra.mxu0 %v1491
    %1855 = vmatprep.subr.bf16.mxu0 0
    %1856 = vmatpush1.bf16.msra.mxu0 0
    %1857 = vmatprep.subr.bf16.mxu0 0
    %1858 = vmatpush1.bf16.msra.mxu0 0
    %1859 = vmatprep.subr.bf16.mxu0 0
    %1860 = vmatpush1.bf16.msra.mxu0 0
    %1861 = vmatprep.subr.bf16.mxu0 0
    %1862 = vmatpush1.bf16.msra.mxu0 0
    %1863 = vmatprep.subr.bf16.mxu0 0
    %1864 = vmatpush1.bf16.msra.mxu0 0
    %1865 = vmatprep.subr.bf16.mxu0 0
    %1866 = vmatpush1.bf16.msra.mxu0 0
    %1867 = vmatprep.subr.bf16.mxu0 0
    %1868 = vmatpush1.bf16.msra.mxu0 0
    %1869 = vmatprep.subr.bf16.mxu0 0
    %1870 = vmatpush1.bf16.msra.mxu0 0
    %1871 = vmatprep.subr.bf16.mxu0 0
    %1872 = vmatpush1.bf16.msra.mxu0 0
    %1873 = vmatprep.subr.bf16.mxu0 0
    %1874 = vmatpush1.bf16.msra.mxu0 0
    %1875 = vmatprep.subr.bf16.mxu0 0
    %1876 = vmatpush1.bf16.msra.mxu0 0
    %1877 = vmatprep.subr.bf16.mxu0 0
    %1878 = vmatpush1.bf16.msra.mxu0 0
    %1879 = vmatprep.subr.bf16.mxu0 0
    %1880 = vmatpush1.bf16.msra.mxu0 0
    %1881 = vmatprep.subr.bf16.mxu0 0
    %1882 = vmatpush1.bf16.msra.mxu0 0
    %1883 = vmatprep.mubr.bf16.mxu0 0
    %1884 = vmatmul.mubr.bf16.gmra.mrb[0].mxu0 %v1528
    %v1885 = vpop.f32.mrb[0].mxu0
    %v1886 = vadd.f32 %v1338, %v1885
    %v1887 = vpop.f32.mrb[0].mxu0
    %v1888 = vadd.f32 %v1342, %v1887
    %v1889 = vpop.f32.mrb[0].mxu0
    %v1890 = vadd.f32 %v1338, %v1889
    %v1891 = vpop.f32.mrb[0].mxu0
    %v1892 = vadd.f32 %v1342, %v1891
    %1893 = vmatprep.mubr.bf16.mxu0 0
    %1894 = vmatmul.mubr.bf16.gmra.mrb[0].mxu0 %v1531
    %v1895 = vpop.f32.mrb[0].mxu0
    %v1896 = vadd.f32 %v1338, %v1895
    %v1897 = vpop.f32.mrb[0].mxu0
    %v1898 = vadd.f32 %v1342, %v1897
    %v1899 = vpop.f32.mrb[0].mxu0
    %v1900 = vadd.f32 %v1338, %v1899
    %v1901 = vpop.f32.mrb[0].mxu0
    %v1902 = vadd.f32 %v1342, %v1901
    %1903 = vdwg.mxu0
    %1904 = vmatprep.subr.bf16.mxu0 %v1478
    %1905 = vmatpush1.bf16.msra.mxu0 %v1477
    %1906 = vmatprep.subr.bf16.mxu0 %v1494
    %1907 = vmatpush1.bf16.msra.mxu0 %v1493
    %1908 = vmatprep.subr.bf16.mxu0 0
    %1909 = vmatpush1.bf16.msra.mxu0 0
    %1910 = vmatprep.subr.bf16.mxu0 0
    %1911 = vmatpush1.bf16.msra.mxu0 0
    %1912 = vmatprep.subr.bf16.mxu0 0
    %1913 = vmatpush1.bf16.msra.mxu0 0
    %1914 = vmatprep.subr.bf16.mxu0 0
    %1915 = vmatpush1.bf16.msra.mxu0 0
    %1916 = vmatprep.subr.bf16.mxu0 0
    %1917 = vmatpush1.bf16.msra.mxu0 0
    %1918 = vmatprep.subr.bf16.mxu0 0
    %1919 = vmatpush1.bf16.msra.mxu0 0
    %1920 = vmatprep.subr.bf16.mxu0 0
    %1921 = vmatpush1.bf16.msra.mxu0 0
    %1922 = vmatprep.subr.bf16.mxu0 0
    %1923 = vmatpush1.bf16.msra.mxu0 0
    %1924 = vmatprep.subr.bf16.mxu0 0
    %1925 = vmatpush1.bf16.msra.mxu0 0
    %1926 = vmatprep.subr.bf16.mxu0 0
    %1927 = vmatpush1.bf16.msra.mxu0 0
    %1928 = vmatprep.subr.bf16.mxu0 0
    %1929 = vmatpush1.bf16.msra.mxu0 0
    %1930 = vmatprep.subr.bf16.mxu0 0
    %1931 = vmatpush1.bf16.msra.mxu0 0
    %1932 = vmatprep.subr.bf16.mxu0 0
    %1933 = vmatpush1.bf16.msra.mxu0 0
    %1934 = vmatprep.subr.bf16.mxu0 0
    %1935 = vmatpush1.bf16.msra.mxu0 0
    %1936 = vmatprep.mubr.bf16.mxu0 0
    %1937 = vmatmul.mubr.bf16.gmra.mrb[0].mxu0 %v1528
    %v1938 = vpop.f32.mrb[0].mxu0
    %v1939 = vadd.f32 %v1346, %v1938
    %v1940 = vpop.f32.mrb[0].mxu0
    %v1941 = vadd.f32 %v1350, %v1940
    %v1942 = vpop.f32.mrb[0].mxu0
    %v1943 = vadd.f32 %v1346, %v1942
    %v1944 = vpop.f32.mrb[0].mxu0
    %v1945 = vadd.f32 %v1350, %v1944
    %1946 = vmatprep.mubr.bf16.mxu0 0
    %1947 = vmatmul.mubr.bf16.gmra.mrb[0].mxu0 %v1531
    %v1948 = vpop.f32.mrb[0].mxu0
    %v1949 = vadd.f32 %v1346, %v1948
    %v1950 = vpop.f32.mrb[0].mxu0
    %v1951 = vadd.f32 %v1350, %v1950
    %v1952 = vpop.f32.mrb[0].mxu0
    %v1953 = vadd.f32 %v1346, %v1952
    %v1954 = vpop.f32.mrb[0].mxu0
    %v1955 = vadd.f32 %v1350, %v1954
    %1956 = vdwg.mxu0
    %v1957 = vmax.f32 %v1568, 0.0
    %v1958 = vmax.f32 %v1570, 0.0
    %v1959 = vmax.f32 %v1621, 0.0
    %v1960 = vmax.f32 %v1623, 0.0
    %v1961 = vmax.f32 %v1674, 0.0
    %v1962 = vmax.f32 %v1676, 0.0
    %v1963 = vmax.f32 %v1727, 0.0
    %v1964 = vmax.f32 %v1729, 0.0
    %v1965 = vmax.f32 %v1780, 0.0
    %v1966 = vmax.f32 %v1782, 0.0
    %v1967 = vmax.f32 %v1833, 0.0
    %v1968 = vmax.f32 %v1835, 0.0
    %v1969 = vmax.f32 %v1886, 0.0
    %v1970 = vmax.f32 %v1888, 0.0
    %v1971 = vmax.f32 %v1939, 0.0
    %v1972 = vmax.f32 %v1941, 0.0
    %v1973 = vmax.f32 %v1572, 0.0
    %v1974 = vmax.f32 %v1574, 0.0
    %v1975 = vmax.f32 %v1625, 0.0
    %v1976 = vmax.f32 %v1627, 0.0
    %v1977 = vmax.f32 %v1678, 0.0
    %v1978 = vmax.f32 %v1680, 0.0
    %v1979 = vmax.f32 %v1731, 0.0
    %v1980 = vmax.f32 %v1733, 0.0
    %v1981 = vmax.f32 %v1784, 0.0
    %v1982 = vmax.f32 %v1786, 0.0
    %v1983 = vmax.f32 %v1837, 0.0
    %v1984 = vmax.f32 %v1839, 0.0
    %v1985 = vmax.f32 %v1890, 0.0
    %v1986 = vmax.f32 %v1892, 0.0
    %v1987 = vmax.f32 %v1943, 0.0
    %v1988 = vmax.f32 %v1945, 0.0
    %v1989 = vmax.f32 %v1578, 0.0
    %v1990 = vmax.f32 %v1580, 0.0
    %v1991 = vmax.f32 %v1631, 0.0
    %v1992 = vmax.f32 %v1633, 0.0
    %v1993 = vmax.f32 %v1684, 0.0
    %v1994 = vmax.f32 %v1686, 0.0
    %v1995 = vmax.f32 %v1737, 0.0
    %v1996 = vmax.f32 %v1739, 0.0
    %v1997 = vmax.f32 %v1790, 0.0
    %v1998 = vmax.f32 %v1792, 0.0
    %v1999 = vmax.f32 %v1843, 0.0
    %v2000 = vmax.f32 %v1845, 0.0
    %v2001 = vmax.f32 %v1896, 0.0
    %v2002 = vmax.f32 %v1898, 0.0
    %v2003 = vmax.f32 %v1949, 0.0
    %v2004 = vmax.f32 %v1951, 0.0
    %v2005 = vmax.f32 %v1582, 0.0
    %v2006 = vmax.f32 %v1584, 0.0
    %v2007 = vmax.f32 %v1635, 0.0
    %v2008 = vmax.f32 %v1637, 0.0
    %v2009 = vmax.f32 %v1688, 0.0
    %v2010 = vmax.f32 %v1690, 0.0
    %v2011 = vmax.f32 %v1741, 0.0
    %v2012 = vmax.f32 %v1743, 0.0
    %v2013 = vmax.f32 %v1794, 0.0
    %v2014 = vmax.f32 %v1796, 0.0
    %v2015 = vmax.f32 %v1847, 0.0
    %v2016 = vmax.f32 %v1849, 0.0
    %v2017 = vmax.f32 %v1900, 0.0
    %v2018 = vmax.f32 %v1902, 0.0
    %v2019 = vmax.f32 %v1953, 0.0
    %v2020 = vmax.f32 %v1955, 0.0
    %v2021 = vpack.c.bf16 %v1973, %v1957
    %v2022 = vpack.c.bf16 %v1974, %v1958
    %v2023 = vpack.c.bf16 %v1975, %v1959
    %v2024 = vpack.c.bf16 %v1976, %v1960
    %v2025 = vpack.c.bf16 %v1977, %v1961
    %v2026 = vpack.c.bf16 %v1978, %v1962
    %v2027 = vpack.c.bf16 %v1979, %v1963
    %v2028 = vpack.c.bf16 %v1980, %v1964
    %v2029 = vpack.c.bf16 %v1981, %v1965
    %v2030 = vpack.c.bf16 %v1982, %v1966
    %v2031 = vpack.c.bf16 %v1983, %v1967
    %v2032 = vpack.c.bf16 %v1984, %v1968
    %v2033 = vpack.c.bf16 %v1985, %v1969
    %v2034 = vpack.c.bf16 %v1986, %v1970
    %v2035 = vpack.c.bf16 %v1987, %v1971
    %v2036 = vpack.c.bf16 %v1988, %v1972
    %v2037 = vpack.c.bf16 %v2005, %v1989
    %v2038 = vpack.c.bf16 %v2006, %v1990
    %v2039 = vpack.c.bf16 %v2007, %v1991
    %v2040 = vpack.c.bf16 %v2008, %v1992
    %v2041 = vpack.c.bf16 %v2009, %v1993
    %v2042 = vpack.c.bf16 %v2010, %v1994
    %v2043 = vpack.c.bf16 %v2011, %v1995
    %v2044 = vpack.c.bf16 %v2012, %v1996
    %v2045 = vpack.c.bf16 %v2013, %v1997
    %v2046 = vpack.c.bf16 %v2014, %v1998
    %v2047 = vpack.c.bf16 %v2015, %v1999
    %v2048 = vpack.c.bf16 %v2016, %v2000
    %v2049 = vpack.c.bf16 %v2017, %v2001
    %v2050 = vpack.c.bf16 %v2018, %v2002
    %v2051 = vpack.c.bf16 %v2019, %v2003
    %v2052 = vpack.c.bf16 %v2020, %v2004
    %v2053 = vld [vmem:[%s5] sm:$0xf]
    %v2054 = vld [vmem:[%s5 + $0x4] sm:$0xf]
    %v2055 = vld [vmem:[%s5 + $0x8] sm:$0xf]
    %v2056 = vld [vmem:[%s5 + $0xc] sm:$0xf]
    %v2057 = vld [vmem:[%s5 + $0x10] sm:$0xf]
    %v2058 = vld [vmem:[%s5 + $0x14] sm:$0xf]
    %v2059 = vld [vmem:[%s5 + $0x18] sm:$0xf]
    %v2060 = vld [vmem:[%s5 + $0x1c] sm:$0xf]
    %v2061 = vld [vmem:[%s5 + $0x20] sm:$0xf]
    %v2062 = vld [vmem:[%s5 + $0x24] sm:$0xf]
    %v2063 = vld [vmem:[%s5 + $0x28] sm:$0xf]
    %v2064 = vld [vmem:[%s5 + $0x2c] sm:$0xf]
    %v2065 = vld [vmem:[%s5 + $0x30] sm:$0xf]
    %v2066 = vld [vmem:[%s5 + $0x34] sm:$0xf]
    %v2067 = vld [vmem:[%s5 + $0x38] sm:$0xf]
    %v2068 = vld [vmem:[%s5 + $0x3c] sm:$0xf]
    %v2069 = vld [vmem:[%s5 + $0x40] sm:$0xf]
    %v2070 = vld [vmem:[%s5 + $0x44] sm:$0xf]
    %v2071 = vld [vmem:[%s5 + $0x48] sm:$0xf]
    %v2072 = vld [vmem:[%s5 + $0x4c] sm:$0xf]
    %v2073 = vld [vmem:[%s5 + $0x50] sm:$0xf]
    %v2074 = vld [vmem:[%s5 + $0x54] sm:$0xf]
    %v2075 = vld [vmem:[%s5 + $0x58] sm:$0xf]
    %v2076 = vld [vmem:[%s5 + $0x5c] sm:$0xf]
    %v2077 = vld [vmem:[%s5 + $0x60] sm:$0xf]
    %v2078 = vld [vmem:[%s5 + $0x64] sm:$0xf]
    %v2079 = vld [vmem:[%s5 + $0x68] sm:$0xf]
    %v2080 = vld [vmem:[%s5 + $0x6c] sm:$0xf]
    %v2081 = vld [vmem:[%s5 + $0x70] sm:$0xf]
    %v2082 = vld [vmem:[%s5 + $0x74] sm:$0xf]
    %v2083 = vld [vmem:[%s5 + $0x78] sm:$0xf]
    %v2084 = vld [vmem:[%s5 + $0x7c] sm:$0xf]
    %v2085 = vld [vmem:[%s5 + $0x80] sm:$0xf]
    %v2086 = vld [vmem:[%s5 + $0x84] sm:$0xf]
    %v2087 = vld [vmem:[%s5 + $0x88] sm:$0xf]
    %v2088 = vld [vmem:[%s5 + $0x8c] sm:$0xf]
    %v2089 = vld [vmem:[%s5 + $0x90] sm:$0xf]
    %v2090 = vld [vmem:[%s5 + $0x94] sm:$0xf]
    %v2091 = vld [vmem:[%s5 + $0x98] sm:$0xf]
    %v2092 = vld [vmem:[%s5 + $0x9c] sm:$0xf]
    %v2093 = vld [vmem:[%s5 + $0xa0] sm:$0xf]
    %v2094 = vld [vmem:[%s5 + $0xa4] sm:$0xf]
    %v2095 = vld [vmem:[%s5 + $0xa8] sm:$0xf]
    %v2096 = vld [vmem:[%s5 + $0xac] sm:$0xf]
    %v2097 = vld [vmem:[%s5 + $0xb0] sm:$0xf]
    %v2098 = vld [vmem:[%s5 + $0xb4] sm:$0xf]
    %v2099 = vld [vmem:[%s5 + $0xb8] sm:$0xf]
    %v2100 = vld [vmem:[%s5 + $0xbc] sm:$0xf]
    %v2101 = vld [vmem:[%s5 + $0xc0] sm:$0xf]
    %v2102 = vld [vmem:[%s5 + $0xc4] sm:$0xf]
    %v2103 = vld [vmem:[%s5 + $0xc8] sm:$0xf]
    %v2104 = vld [vmem:[%s5 + $0xcc] sm:$0xf]
    %v2105 = vld [vmem:[%s5 + $0xd0] sm:$0xf]
    %v2106 = vld [vmem:[%s5 + $0xd4] sm:$0xf]
    %v2107 = vld [vmem:[%s5 + $0xd8] sm:$0xf]
    %v2108 = vld [vmem:[%s5 + $0xdc] sm:$0xf]
    %v2109 = vld [vmem:[%s5 + $0xe0] sm:$0xf]
    %v2110 = vld [vmem:[%s5 + $0xe4] sm:$0xf]
    %v2111 = vld [vmem:[%s5 + $0xe8] sm:$0xf]
    %v2112 = vld [vmem:[%s5 + $0xec] sm:$0xf]
    %v2113 = vld [vmem:[%s5 + $0xf0] sm:$0xf]
    %v2114 = vld [vmem:[%s5 + $0xf4] sm:$0xf]
    %v2115 = vld [vmem:[%s5 + $0xf8] sm:$0xf]
    %v2116 = vld [vmem:[%s5 + $0xfc] sm:$0xf]
    %v2117 = vld [vmem:[%s5 + $0x100] sm:$0xf]
    %v2118 = vld [vmem:[%s5 + $0x104] sm:$0xf]
    %v2119 = vld [vmem:[%s5 + $0x108] sm:$0xf]
    %v2120 = vld [vmem:[%s5 + $0x10c] sm:$0xf]
    %v2121 = vld [vmem:[%s5 + $0x110] sm:$0xf]
    %v2122 = vld [vmem:[%s5 + $0x114] sm:$0xf]
    %v2123 = vld [vmem:[%s5 + $0x118] sm:$0xf]
    %v2124 = vld [vmem:[%s5 + $0x11c] sm:$0xf]
    %v2125 = vld [vmem:[%s5 + $0x120] sm:$0xf]
    %v2126 = vld [vmem:[%s5 + $0x124] sm:$0xf]
    %v2127 = vld [vmem:[%s5 + $0x128] sm:$0xf]
    %v2128 = vld [vmem:[%s5 + $0x12c] sm:$0xf]
    %v2129 = vld [vmem:[%s5 + $0x130] sm:$0xf]
    %v2130 = vld [vmem:[%s5 + $0x134] sm:$0xf]
    %v2131 = vld [vmem:[%s5 + $0x138] sm:$0xf]
    %v2132 = vld [vmem:[%s5 + $0x13c] sm:$0xf]
    %v2133 = vld [vmem:[%s5 + $0x140] sm:$0xf]
    %v2134 = vld [vmem:[%s5 + $0x144] sm:$0xf]
    %v2135 = vld [vmem:[%s5 + $0x148] sm:$0xf]
    %v2136 = vld [vmem:[%s5 + $0x14c] sm:$0xf]
    %v2137 = vld [vmem:[%s5 + $0x150] sm:$0xf]
    %v2138 = vld [vmem:[%s5 + $0x154] sm:$0xf]
    %v2139 = vld [vmem:[%s5 + $0x158] sm:$0xf]
    %v2140 = vld [vmem:[%s5 + $0x15c] sm:$0xf]
    %v2141 = vld [vmem:[%s5 + $0x160] sm:$0xf]
    %v2142 = vld [vmem:[%s5 + $0x164] sm:$0xf]
    %v2143 = vld [vmem:[%s5 + $0x168] sm:$0xf]
    %v2144 = vld [vmem:[%s5 + $0x16c] sm:$0xf]
    %v2145 = vld [vmem:[%s5 + $0x170] sm:$0xf]
    %v2146 = vld [vmem:[%s5 + $0x174] sm:$0xf]
    %v2147 = vld [vmem:[%s5 + $0x178] sm:$0xf]
    %v2148 = vld [vmem:[%s5 + $0x17c] sm:$0xf]
    %v2149 = vld [vmem:[%s5 + $0x180] sm:$0xf]
    %v2150 = vld [vmem:[%s5 + $0x184] sm:$0xf]
    %v2151 = vld [vmem:[%s5 + $0x188] sm:$0xf]
    %v2152 = vld [vmem:[%s5 + $0x18c] sm:$0xf]
    %v2153 = vld [vmem:[%s5 + $0x190] sm:$0xf]
    %v2154 = vld [vmem:[%s5 + $0x194] sm:$0xf]
    %v2155 = vld [vmem:[%s5 + $0x198] sm:$0xf]
    %v2156 = vld [vmem:[%s5 + $0x19c] sm:$0xf]
    %v2157 = vld [vmem:[%s5 + $0x1a0] sm:$0xf]
    %v2158 = vld [vmem:[%s5 + $0x1a4] sm:$0xf]
    %v2159 = vld [vmem:[%s5 + $0x1a8] sm:$0xf]
    %v2160 = vld [vmem:[%s5 + $0x1ac] sm:$0xf]
    %v2161 = vld [vmem:[%s5 + $0x1b0] sm:$0xf]
    %v2162 = vld [vmem:[%s5 + $0x1b4] sm:$0xf]
    %v2163 = vld [vmem:[%s5 + $0x1b8] sm:$0xf]
    %v2164 = vld [vmem:[%s5 + $0x1bc] sm:$0xf]
    %v2165 = vld [vmem:[%s5 + $0x1c0] sm:$0xf]
    %v2166 = vld [vmem:[%s5 + $0x1c4] sm:$0xf]
    %v2167 = vld [vmem:[%s5 + $0x1c8] sm:$0xf]
    %v2168 = vld [vmem:[%s5 + $0x1cc] sm:$0xf]
    %v2169 = vld [vmem:[%s5 + $0x1d0] sm:$0xf]
    %v2170 = vld [vmem:[%s5 + $0x1d4] sm:$0xf]
    %v2171 = vld [vmem:[%s5 + $0x1d8] sm:$0xf]
    %v2172 = vld [vmem:[%s5 + $0x1dc] sm:$0xf]
    %v2173 = vld [vmem:[%s5 + $0x1e0] sm:$0xf]
    %v2174 = vld [vmem:[%s5 + $0x1e4] sm:$0xf]
    %v2175 = vld [vmem:[%s5 + $0x1e8] sm:$0xf]
    %v2176 = vld [vmem:[%s5 + $0x1ec] sm:$0xf]
    %v2177 = vld [vmem:[%s5 + $0x1f0] sm:$0xf]
    %v2178 = vld [vmem:[%s5 + $0x1f4] sm:$0xf]
    %v2179 = vld [vmem:[%s5 + $0x1f8] sm:$0xf]
    %v2180 = vld [vmem:[%s5 + $0x1fc] sm:$0xf]
    %v2181 = vld [vmem:[%s5 + $0x200] sm:$0xf]
    %v2182 = vld [vmem:[%s5 + $0x204] sm:$0xf]
    %v2183 = vld [vmem:[%s5 + $0x208] sm:$0xf]
    %v2184 = vld [vmem:[%s5 + $0x20c] sm:$0xf]
    %v2185 = vld [vmem:[%s5 + $0x210] sm:$0xf]
    %v2186 = vld [vmem:[%s5 + $0x214] sm:$0xf]
    %v2187 = vld [vmem:[%s5 + $0x218] sm:$0xf]
    %v2188 = vld [vmem:[%s5 + $0x21c] sm:$0xf]
    %v2189 = vld [vmem:[%s5 + $0x220] sm:$0xf]
    %v2190 = vld [vmem:[%s5 + $0x224] sm:$0xf]
    %v2191 = vld [vmem:[%s5 + $0x228] sm:$0xf]
    %v2192 = vld [vmem:[%s5 + $0x22c] sm:$0xf]
    %v2193 = vld [vmem:[%s5 + $0x230] sm:$0xf]
    %v2194 = vld [vmem:[%s5 + $0x234] sm:$0xf]
    %v2195 = vld [vmem:[%s5 + $0x238] sm:$0xf]
    %v2196 = vld [vmem:[%s5 + $0x23c] sm:$0xf]
    %v2197 = vld [vmem:[%s5 + $0x240] sm:$0xf]
    %v2198 = vld [vmem:[%s5 + $0x244] sm:$0xf]
    %v2199 = vld [vmem:[%s5 + $0x248] sm:$0xf]
    %v2200 = vld [vmem:[%s5 + $0x24c] sm:$0xf]
    %v2201 = vld [vmem:[%s5 + $0x250] sm:$0xf]
    %v2202 = vld [vmem:[%s5 + $0x254] sm:$0xf]
    %v2203 = vld [vmem:[%s5 + $0x258] sm:$0xf]
    %v2204 = vld [vmem:[%s5 + $0x25c] sm:$0xf]
    %v2205 = vld [vmem:[%s5 + $0x260] sm:$0xf]
    %v2206 = vld [vmem:[%s5 + $0x264] sm:$0xf]
    %v2207 = vld [vmem:[%s5 + $0x268] sm:$0xf]
    %v2208 = vld [vmem:[%s5 + $0x26c] sm:$0xf]
    %v2209 = vld [vmem:[%s5 + $0x270] sm:$0xf]
    %v2210 = vld [vmem:[%s5 + $0x274] sm:$0xf]
    %v2211 = vld [vmem:[%s5 + $0x278] sm:$0xf]
    %v2212 = vld [vmem:[%s5 + $0x27c] sm:$0xf]
    %v2213 = vld [vmem:[%s5 + $0x280] sm:$0xf]
    %v2214 = vld [vmem:[%s5 + $0x284] sm:$0xf]
    %v2215 = vld [vmem:[%s5 + $0x288] sm:$0xf]
    %v2216 = vld [vmem:[%s5 + $0x28c] sm:$0xf]
    %v2217 = vld [vmem:[%s5 + $0x290] sm:$0xf]
    %v2218 = vld [vmem:[%s5 + $0x294] sm:$0xf]
    %v2219 = vld [vmem:[%s5 + $0x298] sm:$0xf]
    %v2220 = vld [vmem:[%s5 + $0x29c] sm:$0xf]
    %v2221 = vld [vmem:[%s5 + $0x2a0] sm:$0xf]
    %v2222 = vld [vmem:[%s5 + $0x2a4] sm:$0xf]
    %v2223 = vld [vmem:[%s5 + $0x2a8] sm:$0xf]
    %v2224 = vld [vmem:[%s5 + $0x2ac] sm:$0xf]
    %v2225 = vld [vmem:[%s5 + $0x2b0] sm:$0xf]
    %v2226 = vld [vmem:[%s5 + $0x2b4] sm:$0xf]
    %v2227 = vld [vmem:[%s5 + $0x2b8] sm:$0xf]
    %v2228 = vld [vmem:[%s5 + $0x2bc] sm:$0xf]
    %v2229 = vld [vmem:[%s5 + $0x2c0] sm:$0xf]
    %v2230 = vld [vmem:[%s5 + $0x2c4] sm:$0xf]
    %v2231 = vld [vmem:[%s5 + $0x2c8] sm:$0xf]
    %v2232 = vld [vmem:[%s5 + $0x2cc] sm:$0xf]
    %v2233 = vld [vmem:[%s5 + $0x2d0] sm:$0xf]
    %v2234 = vld [vmem:[%s5 + $0x2d4] sm:$0xf]
    %v2235 = vld [vmem:[%s5 + $0x2d8] sm:$0xf]
    %v2236 = vld [vmem:[%s5 + $0x2dc] sm:$0xf]
    %v2237 = vld [vmem:[%s5 + $0x2e0] sm:$0xf]
    %v2238 = vld [vmem:[%s5 + $0x2e4] sm:$0xf]
    %v2239 = vld [vmem:[%s5 + $0x2e8] sm:$0xf]
    %v2240 = vld [vmem:[%s5 + $0x2ec] sm:$0xf]
    %v2241 = vld [vmem:[%s5 + $0x2f0] sm:$0xf]
    %v2242 = vld [vmem:[%s5 + $0x2f4] sm:$0xf]
    %v2243 = vld [vmem:[%s5 + $0x2f8] sm:$0xf]
    %v2244 = vld [vmem:[%s5 + $0x2fc] sm:$0xf]
    %v2245 = vld [vmem:[%s5 + $0x300] sm:$0xf]
    %v2246 = vld [vmem:[%s5 + $0x304] sm:$0xf]
    %v2247 = vld [vmem:[%s5 + $0x308] sm:$0xf]
    %v2248 = vld [vmem:[%s5 + $0x30c] sm:$0xf]
    %v2249 = vld [vmem:[%s5 + $0x310] sm:$0xf]
    %v2250 = vld [vmem:[%s5 + $0x314] sm:$0xf]
    %v2251 = vld [vmem:[%s5 + $0x318] sm:$0xf]
    %v2252 = vld [vmem:[%s5 + $0x31c] sm:$0xf]
    %v2253 = vld [vmem:[%s5 + $0x320] sm:$0xf]
    %v2254 = vld [vmem:[%s5 + $0x324] sm:$0xf]
    %v2255 = vld [vmem:[%s5 + $0x328] sm:$0xf]
    %v2256 = vld [vmem:[%s5 + $0x32c] sm:$0xf]
    %v2257 = vld [vmem:[%s5 + $0x330] sm:$0xf]
    %v2258 = vld [vmem:[%s5 + $0x334] sm:$0xf]
    %v2259 = vld [vmem:[%s5 + $0x338] sm:$0xf]
    %v2260 = vld [vmem:[%s5 + $0x33c] sm:$0xf]
    %v2261 = vld [vmem:[%s5 + $0x340] sm:$0xf]
    %v2262 = vld [vmem:[%s5 + $0x344] sm:$0xf]
    %v2263 = vld [vmem:[%s5 + $0x348] sm:$0xf]
    %v2264 = vld [vmem:[%s5 + $0x34c] sm:$0xf]
    %v2265 = vld [vmem:[%s5 + $0x350] sm:$0xf]
    %v2266 = vld [vmem:[%s5 + $0x354] sm:$0xf]
    %v2267 = vld [vmem:[%s5 + $0x358] sm:$0xf]
    %v2268 = vld [vmem:[%s5 + $0x35c] sm:$0xf]
    %v2269 = vld [vmem:[%s5 + $0x360] sm:$0xf]
    %v2270 = vld [vmem:[%s5 + $0x364] sm:$0xf]
    %v2271 = vld [vmem:[%s5 + $0x368] sm:$0xf]
    %v2272 = vld [vmem:[%s5 + $0x36c] sm:$0xf]
    %v2273 = vld [vmem:[%s5 + $0x370] sm:$0xf]
    %v2274 = vld [vmem:[%s5 + $0x374] sm:$0xf]
    %v2275 = vld [vmem:[%s5 + $0x378] sm:$0xf]
    %v2276 = vld [vmem:[%s5 + $0x37c] sm:$0xf]
    %v2277 = vld [vmem:[%s5 + $0x380] sm:$0xf]
    %v2278 = vld [vmem:[%s5 + $0x384] sm:$0xf]
    %v2279 = vld [vmem:[%s5 + $0x388] sm:$0xf]
    %v2280 = vld [vmem:[%s5 + $0x38c] sm:$0xf]
    %v2281 = vld [vmem:[%s5 + $0x390] sm:$0xf]
    %v2282 = vld [vmem:[%s5 + $0x394] sm:$0xf]
    %v2283 = vld [vmem:[%s5 + $0x398] sm:$0xf]
    %v2284 = vld [vmem:[%s5 + $0x39c] sm:$0xf]
    %v2285 = vld [vmem:[%s5 + $0x3a0] sm:$0xf]
    %v2286 = vld [vmem:[%s5 + $0x3a4] sm:$0xf]
    %v2287 = vld [vmem:[%s5 + $0x3a8] sm:$0xf]
    %v2288 = vld [vmem:[%s5 + $0x3ac] sm:$0xf]
    %v2289 = vld [vmem:[%s5 + $0x3b0] sm:$0xf]
    %v2290 = vld [vmem:[%s5 + $0x3b4] sm:$0xf]
    %v2291 = vld [vmem:[%s5 + $0x3b8] sm:$0xf]
    %v2292 = vld [vmem:[%s5 + $0x3bc] sm:$0xf]
    %v2293 = vld [vmem:[%s5 + $0x3c0] sm:$0xf]
    %v2294 = vld [vmem:[%s5 + $0x3c4] sm:$0xf]
    %v2295 = vld [vmem:[%s5 + $0x3c8] sm:$0xf]
    %v2296 = vld [vmem:[%s5 + $0x3cc] sm:$0xf]
    %v2297 = vld [vmem:[%s5 + $0x3d0] sm:$0xf]
    %v2298 = vld [vmem:[%s5 + $0x3d4] sm:$0xf]
    %v2299 = vld [vmem:[%s5 + $0x3d8] sm:$0xf]
    %v2300 = vld [vmem:[%s5 + $0x3dc] sm:$0xf]
    %v2301 = vld [vmem:[%s5 + $0x3e0] sm:$0xf]
    %v2302 = vld [vmem:[%s5 + $0x3e4] sm:$0xf]
    %v2303 = vld [vmem:[%s5 + $0x3e8] sm:$0xf]
    %v2304 = vld [vmem:[%s5 + $0x3ec] sm:$0xf]
    %v2305 = vld [vmem:[%s5 + $0x3f0] sm:$0xf]
    %v2306 = vld [vmem:[%s5 + $0x3f4] sm:$0xf]
    %v2307 = vld [vmem:[%s5 + $0x3f8] sm:$0xf]
    %v2308 = vld [vmem:[%s5 + $0x3fc] sm:$0xf]
    %v2309 = vld [vmem:[%s1 + $0xc0] sm:$0x1]
    %v2310 = vlaneseq
    %v2311 = vshrl.u32 %v2310, 7
    %v2312 = vsub.s32 0, %v2311
    %v2313 = vrot.slane %v2309, %v2312
    %v2570 = vunpack.c.l.b16 %v2053
    %v2571 = vunpack.c.l.b16 %v2054
    %v2572 = vunpack.c.l.b16 %v2055
    %v2573 = vunpack.c.l.b16 %v2056
    %v2574 = vunpack.c.l.b16 %v2057
    %v2575 = vunpack.c.l.b16 %v2058
    %v2576 = vunpack.c.l.b16 %v2059
    %v2577 = vunpack.c.l.b16 %v2060
    %v2578 = vunpack.c.l.b16 %v2061
    %v2579 = vunpack.c.l.b16 %v2062
    %v2580 = vunpack.c.l.b16 %v2063
    %v2581 = vunpack.c.l.b16 %v2064
    %v2582 = vunpack.c.l.b16 %v2065
    %v2583 = vunpack.c.l.b16 %v2066
    %v2584 = vunpack.c.l.b16 %v2067
    %v2585 = vunpack.c.l.b16 %v2068
    %v2586 = vunpack.c.l.b16 %v2069
    %v2587 = vunpack.c.l.b16 %v2070
    %v2588 = vunpack.c.l.b16 %v2071
    %v2589 = vunpack.c.l.b16 %v2072
    %v2590 = vunpack.c.l.b16 %v2073
    %v2591 = vunpack.c.l.b16 %v2074
    %v2592 = vunpack.c.l.b16 %v2075
    %v2593 = vunpack.c.l.b16 %v2076
    %v2594 = vunpack.c.l.b16 %v2077
    %v2595 = vunpack.c.l.b16 %v2078
    %v2596 = vunpack.c.l.b16 %v2079
    %v2597 = vunpack.c.l.b16 %v2080
    %v2598 = vunpack.c.l.b16 %v2081
    %v2599 = vunpack.c.l.b16 %v2082
    %v2600 = vunpack.c.l.b16 %v2083
    %v2601 = vunpack.c.l.b16 %v2084
    %v2602 = vunpack.c.l.b16 %v2085
    %v2603 = vunpack.c.l.b16 %v2086
    %v2604 = vunpack.c.l.b16 %v2087
    %v2605 = vunpack.c.l.b16 %v2088
    %v2606 = vunpack.c.l.b16 %v2089
    %v2607 = vunpack.c.l.b16 %v2090
    %v2608 = vunpack.c.l.b16 %v2091
    %v2609 = vunpack.c.l.b16 %v2092
    %v2610 = vunpack.c.l.b16 %v2093
    %v2611 = vunpack.c.l.b16 %v2094
    %v2612 = vunpack.c.l.b16 %v2095
    %v2613 = vunpack.c.l.b16 %v2096
    %v2614 = vunpack.c.l.b16 %v2097
    %v2615 = vunpack.c.l.b16 %v2098
    %v2616 = vunpack.c.l.b16 %v2099
    %v2617 = vunpack.c.l.b16 %v2100
    %v2618 = vunpack.c.l.b16 %v2101
    %v2619 = vunpack.c.l.b16 %v2102
    %v2620 = vunpack.c.l.b16 %v2103
    %v2621 = vunpack.c.l.b16 %v2104
    %v2622 = vunpack.c.l.b16 %v2105
    %v2623 = vunpack.c.l.b16 %v2106
    %v2624 = vunpack.c.l.b16 %v2107
    %v2625 = vunpack.c.l.b16 %v2108
    %v2626 = vunpack.c.l.b16 %v2109
    %v2627 = vunpack.c.l.b16 %v2110
    %v2628 = vunpack.c.l.b16 %v2111
    %v2629 = vunpack.c.l.b16 %v2112
    %v2630 = vunpack.c.l.b16 %v2113
    %v2631 = vunpack.c.l.b16 %v2114
    %v2632 = vunpack.c.l.b16 %v2115
    %v2633 = vunpack.c.l.b16 %v2116
    %v2634 = vunpack.c.l.b16 %v2117
    %v2635 = vunpack.c.l.b16 %v2118
    %v2636 = vunpack.c.l.b16 %v2119
    %v2637 = vunpack.c.l.b16 %v2120
    %v2638 = vunpack.c.l.b16 %v2121
    %v2639 = vunpack.c.l.b16 %v2122
    %v2640 = vunpack.c.l.b16 %v2123
    %v2641 = vunpack.c.l.b16 %v2124
    %v2642 = vunpack.c.l.b16 %v2125
    %v2643 = vunpack.c.l.b16 %v2126
    %v2644 = vunpack.c.l.b16 %v2127
    %v2645 = vunpack.c.l.b16 %v2128
    %v2646 = vunpack.c.l.b16 %v2129
    %v2647 = vunpack.c.l.b16 %v2130
    %v2648 = vunpack.c.l.b16 %v2131
    %v2649 = vunpack.c.l.b16 %v2132
    %v2650 = vunpack.c.l.b16 %v2133
    %v2651 = vunpack.c.l.b16 %v2134
    %v2652 = vunpack.c.l.b16 %v2135
    %v2653 = vunpack.c.l.b16 %v2136
    %v2654 = vunpack.c.l.b16 %v2137
    %v2655 = vunpack.c.l.b16 %v2138
    %v2656 = vunpack.c.l.b16 %v2139
    %v2657 = vunpack.c.l.b16 %v2140
    %v2658 = vunpack.c.l.b16 %v2141
    %v2659 = vunpack.c.l.b16 %v2142
    %v2660 = vunpack.c.l.b16 %v2143
    %v2661 = vunpack.c.l.b16 %v2144
    %v2662 = vunpack.c.l.b16 %v2145
    %v2663 = vunpack.c.l.b16 %v2146
    %v2664 = vunpack.c.l.b16 %v2147
    %v2665 = vunpack.c.l.b16 %v2148
    %v2666 = vunpack.c.l.b16 %v2149
    %v2667 = vunpack.c.l.b16 %v2150
    %v2668 = vunpack.c.l.b16 %v2151
    %v2669 = vunpack.c.l.b16 %v2152
    %v2670 = vunpack.c.l.b16 %v2153
    %v2671 = vunpack.c.l.b16 %v2154
    %v2672 = vunpack.c.l.b16 %v2155
    %v2673 = vunpack.c.l.b16 %v2156
    %v2674 = vunpack.c.l.b16 %v2157
    %v2675 = vunpack.c.l.b16 %v2158
    %v2676 = vunpack.c.l.b16 %v2159
    %v2677 = vunpack.c.l.b16 %v2160
    %v2678 = vunpack.c.l.b16 %v2161
    %v2679 = vunpack.c.l.b16 %v2162
    %v2680 = vunpack.c.l.b16 %v2163
    %v2681 = vunpack.c.l.b16 %v2164
    %v2682 = vunpack.c.l.b16 %v2165
    %v2683 = vunpack.c.l.b16 %v2166
    %v2684 = vunpack.c.l.b16 %v2167
    %v2685 = vunpack.c.l.b16 %v2168
    %v2686 = vunpack.c.l.b16 %v2169
    %v2687 = vunpack.c.l.b16 %v2170
    %v2688 = vunpack.c.l.b16 %v2171
    %v2689 = vunpack.c.l.b16 %v2172
    %v2690 = vunpack.c.l.b16 %v2173
    %v2691 = vunpack.c.l.b16 %v2174
    %v2692 = vunpack.c.l.b16 %v2175
    %v2693 = vunpack.c.l.b16 %v2176
    %v2694 = vunpack.c.l.b16 %v2177
    %v2695 = vunpack.c.l.b16 %v2178
    %v2696 = vunpack.c.l.b16 %v2179
    %v2697 = vunpack.c.l.b16 %v2180
    %v2698 = vunpack.c.l.b16 %v2181
    %v2699 = vunpack.c.l.b16 %v2182
    %v2700 = vunpack.c.l.b16 %v2183
    %v2701 = vunpack.c.l.b16 %v2184
    %v2702 = vunpack.c.l.b16 %v2185
    %v2703 = vunpack.c.l.b16 %v2186
    %v2704 = vunpack.c.l.b16 %v2187
    %v2705 = vunpack.c.l.b16 %v2188
    %v2706 = vunpack.c.l.b16 %v2189
    %v2707 = vunpack.c.l.b16 %v2190
    %v2708 = vunpack.c.l.b16 %v2191
    %v2709 = vunpack.c.l.b16 %v2192
    %v2710 = vunpack.c.l.b16 %v2193
    %v2711 = vunpack.c.l.b16 %v2194
    %v2712 = vunpack.c.l.b16 %v2195
    %v2713 = vunpack.c.l.b16 %v2196
    %v2714 = vunpack.c.l.b16 %v2197
    %v2715 = vunpack.c.l.b16 %v2198
    %v2716 = vunpack.c.l.b16 %v2199
    %v2717 = vunpack.c.l.b16 %v2200
    %v2718 = vunpack.c.l.b16 %v2201
    %v2719 = vunpack.c.l.b16 %v2202
    %v2720 = vunpack.c.l.b16 %v2203
    %v2721 = vunpack.c.l.b16 %v2204
    %v2722 = vunpack.c.l.b16 %v2205
    %v2723 = vunpack.c.l.b16 %v2206
    %v2724 = vunpack.c.l.b16 %v2207
    %v2725 = vunpack.c.l.b16 %v2208
    %v2726 = vunpack.c.l.b16 %v2209
    %v2727 = vunpack.c.l.b16 %v2210
    %v2728 = vunpack.c.l.b16 %v2211
    %v2729 = vunpack.c.l.b16 %v2212
    %v2730 = vunpack.c.l.b16 %v2213
    %v2731 = vunpack.c.l.b16 %v2214
    %v2732 = vunpack.c.l.b16 %v2215
    %v2733 = vunpack.c.l.b16 %v2216
    %v2734 = vunpack.c.l.b16 %v2217
    %v2735 = vunpack.c.l.b16 %v2218
    %v2736 = vunpack.c.l.b16 %v2219
    %v2737 = vunpack.c.l.b16 %v2220
    %v2738 = vunpack.c.l.b16 %v2221
    %v2739 = vunpack.c.l.b16 %v2222
    %v2740 = vunpack.c.l.b16 %v2223
    %v2741 = vunpack.c.l.b16 %v2224
    %v2742 = vunpack.c.l.b16 %v2225
    %v2743 = vunpack.c.l.b16 %v2226
    %v2744 = vunpack.c.l.b16 %v2227
    %v2745 = vunpack.c.l.b16 %v2228
    %v2746 = vunpack.c.l.b16 %v2229
    %v2747 = vunpack.c.l.b16 %v2230
    %v2748 = vunpack.c.l.b16 %v2231
    %v2749 = vunpack.c.l.b16 %v2232
    %v2750 = vunpack.c.l.b16 %v2233
    %v2751 = vunpack.c.l.b16 %v2234
    %v2752 = vunpack.c.l.b16 %v2235
    %v2753 = vunpack.c.l.b16 %v2236
    %v2754 = vunpack.c.l.b16 %v2237
    %v2755 = vunpack.c.l.b16 %v2238
    %v2756 = vunpack.c.l.b16 %v2239
    %v2757 = vunpack.c.l.b16 %v2240
    %v2758 = vunpack.c.l.b16 %v2241
    %v2759 = vunpack.c.l.b16 %v2242
    %v2760 = vunpack.c.l.b16 %v2243
    %v2761 = vunpack.c.l.b16 %v2244
    %v2762 = vunpack.c.l.b16 %v2245
    %v2763 = vunpack.c.l.b16 %v2246
    %v2764 = vunpack.c.l.b16 %v2247
    %v2765 = vunpack.c.l.b16 %v2248
    %v2766 = vunpack.c.l.b16 %v2249
    %v2767 = vunpack.c.l.b16 %v2250
    %v2768 = vunpack.c.l.b16 %v2251
    %v2769 = vunpack.c.l.b16 %v2252
    %v2770 = vunpack.c.l.b16 %v2253
    %v2771 = vunpack.c.l.b16 %v2254
    %v2772 = vunpack.c.l.b16 %v2255
    %v2773 = vunpack.c.l.b16 %v2256
    %v2774 = vunpack.c.l.b16 %v2257
    %v2775 = vunpack.c.l.b16 %v2258
    %v2776 = vunpack.c.l.b16 %v2259
    %v2777 = vunpack.c.l.b16 %v2260
    %v2778 = vunpack.c.l.b16 %v2261
    %v2779 = vunpack.c.l.b16 %v2262
    %v2780 = vunpack.c.l.b16 %v2263
    %v2781 = vunpack.c.l.b16 %v2264
    %v2782 = vunpack.c.l.b16 %v2265
    %v2783 = vunpack.c.l.b16 %v2266
    %v2784 = vunpack.c.l.b16 %v2267
    %v2785 = vunpack.c.l.b16 %v2268
    %v2786 = vunpack.c.l.b16 %v2269
    %v2787 = vunpack.c.l.b16 %v2270
    %v2788 = vunpack.c.l.b16 %v2271
    %v2789 = vunpack.c.l.b16 %v2272
    %v2790 = vunpack.c.l.b16 %v2273
    %v2791 = vunpack.c.l.b16 %v2274
    %v2792 = vunpack.c.l.b16 %v2275
    %v2793 = vunpack.c.l.b16 %v2276
    %v2794 = vunpack.c.l.b16 %v2277
    %v2795 = vunpack.c.l.b16 %v2278
    %v2796 = vunpack.c.l.b16 %v2279
    %v2797 = vunpack.c.l.b16 %v2280
    %v2798 = vunpack.c.l.b16 %v2281
    %v2799 = vunpack.c.l.b16 %v2282
    %v2800 = vunpack.c.l.b16 %v2283
    %v2801 = vunpack.c.l.b16 %v2284
    %v2802 = vunpack.c.l.b16 %v2285
    %v2803 = vunpack.c.l.b16 %v2286
    %v2804 = vunpack.c.l.b16 %v2287
    %v2805 = vunpack.c.l.b16 %v2288
    %v2806 = vunpack.c.l.b16 %v2289
    %v2807 = vunpack.c.l.b16 %v2290
    %v2808 = vunpack.c.l.b16 %v2291
    %v2809 = vunpack.c.l.b16 %v2292
    %v2810 = vunpack.c.l.b16 %v2293
    %v2811 = vunpack.c.l.b16 %v2294
    %v2812 = vunpack.c.l.b16 %v2295
    %v2813 = vunpack.c.l.b16 %v2296
    %v2814 = vunpack.c.l.b16 %v2297
    %v2815 = vunpack.c.l.b16 %v2298
    %v2816 = vunpack.c.l.b16 %v2299
    %v2817 = vunpack.c.l.b16 %v2300
    %v2818 = vunpack.c.l.b16 %v2301
    %v2819 = vunpack.c.l.b16 %v2302
    %v2820 = vunpack.c.l.b16 %v2303
    %v2821 = vunpack.c.l.b16 %v2304
    %v2822 = vunpack.c.l.b16 %v2305
    %v2823 = vunpack.c.l.b16 %v2306
    %v2824 = vunpack.c.l.b16 %v2307
    %v2825 = vunpack.c.l.b16 %v2308
    %v2826 = vpack.c.b16 %v2571, %v2570
    %v2827 = vpack.c.b16 %v2573, %v2572
    %v2828 = vpack.c.b16 %v2575, %v2574
    %v2829 = vpack.c.b16 %v2577, %v2576
    %v2830 = vpack.c.b16 %v2579, %v2578
    %v2831 = vpack.c.b16 %v2581, %v2580
    %v2832 = vpack.c.b16 %v2583, %v2582
    %v2833 = vpack.c.b16 %v2585, %v2584
    %v2834 = vpack.c.b16 %v2587, %v2586
    %v2835 = vpack.c.b16 %v2589, %v2588
    %v2836 = vpack.c.b16 %v2591, %v2590
    %v2837 = vpack.c.b16 %v2593, %v2592
    %v2838 = vpack.c.b16 %v2595, %v2594
    %v2839 = vpack.c.b16 %v2597, %v2596
    %v2840 = vpack.c.b16 %v2599, %v2598
    %v2841 = vpack.c.b16 %v2601, %v2600
    %v2842 = vpack.c.b16 %v2603, %v2602
    %v2843 = vpack.c.b16 %v2605, %v2604
    %v2844 = vpack.c.b16 %v2607, %v2606
    %v2845 = vpack.c.b16 %v2609, %v2608
    %v2846 = vpack.c.b16 %v2611, %v2610
    %v2847 = vpack.c.b16 %v2613, %v2612
    %v2848 = vpack.c.b16 %v2615, %v2614
    %v2849 = vpack.c.b16 %v2617, %v2616
    %v2850 = vpack.c.b16 %v2619, %v2618
    %v2851 = vpack.c.b16 %v2621, %v2620
    %v2852 = vpack.c.b16 %v2623, %v2622
    %v2853 = vpack.c.b16 %v2625, %v2624
    %v2854 = vpack.c.b16 %v2627, %v2626
    %v2855 = vpack.c.b16 %v2629, %v2628
    %v2856 = vpack.c.b16 %v2631, %v2630
    %v2857 = vpack.c.b16 %v2633, %v2632
    %v2858 = vpack.c.b16 %v2635, %v2634
    %v2859 = vpack.c.b16 %v2637, %v2636
    %v2860 = vpack.c.b16 %v2639, %v2638
    %v2861 = vpack.c.b16 %v2641, %v2640
    %v2862 = vpack.c.b16 %v2643, %v2642
    %v2863 = vpack.c.b16 %v2645, %v2644
    %v2864 = vpack.c.b16 %v2647, %v2646
    %v2865 = vpack.c.b16 %v2649, %v2648
    %v2866 = vpack.c.b16 %v2651, %v2650
    %v2867 = vpack.c.b16 %v2653, %v2652
    %v2868 = vpack.c.b16 %v2655, %v2654
    %v2869 = vpack.c.b16 %v2657, %v2656
    %v2870 = vpack.c.b16 %v2659, %v2658
    %v2871 = vpack.c.b16 %v2661, %v2660
    %v2872 = vpack.c.b16 %v2663, %v2662
    %v2873 = vpack.c.b16 %v2665, %v2664
    %v2874 = vpack.c.b16 %v2667, %v2666
    %v2875 = vpack.c.b16 %v2669, %v2668
    %v2876 = vpack.c.b16 %v2671, %v2670
    %v2877 = vpack.c.b16 %v2673, %v2672
    %v2878 = vpack.c.b16 %v2675, %v2674
    %v2879 = vpack.c.b16 %v2677, %v2676
    %v2880 = vpack.c.b16 %v2679, %v2678
    %v2881 = vpack.c.b16 %v2681, %v2680
    %v2882 = vpack.c.b16 %v2683, %v2682
    %v2883 = vpack.c.b16 %v2685, %v2684
    %v2884 = vpack.c.b16 %v2687, %v2686
    %v2885 = vpack.c.b16 %v2689, %v2688
    %v2886 = vpack.c.b16 %v2691, %v2690
    %v2887 = vpack.c.b16 %v2693, %v2692
    %v2888 = vpack.c.b16 %v2695, %v2694
    %v2889 = vpack.c.b16 %v2697, %v2696
    %v2890 = vpack.c.b16 %v2699, %v2698
    %v2891 = vpack.c.b16 %v2701, %v2700
    %v2892 = vpack.c.b16 %v2703, %v2702
    %v2893 = vpack.c.b16 %v2705, %v2704
    %v2894 = vpack.c.b16 %v2707, %v2706
    %v2895 = vpack.c.b16 %v2709, %v2708
    %v2896 = vpack.c.b16 %v2711, %v2710
    %v2897 = vpack.c.b16 %v2713, %v2712
    %v2898 = vpack.c.b16 %v2715, %v2714
    %v2899 = vpack.c.b16 %v2717, %v2716
    %v2900 = vpack.c.b16 %v2719, %v2718
    %v2901 = vpack.c.b16 %v2721, %v2720
    %v2902 = vpack.c.b16 %v2723, %v2722
    %v2903 = vpack.c.b16 %v2725, %v2724
    %v2904 = vpack.c.b16 %v2727, %v2726
    %v2905 = vpack.c.b16 %v2729, %v2728
    %v2906 = vpack.c.b16 %v2731, %v2730
    %v2907 = vpack.c.b16 %v2733, %v2732
    %v2908 = vpack.c.b16 %v2735, %v2734
    %v2909 = vpack.c.b16 %v2737, %v2736
    %v2910 = vpack.c.b16 %v2739, %v2738
    %v2911 = vpack.c.b16 %v2741, %v2740
    %v2912 = vpack.c.b16 %v2743, %v2742
    %v2913 = vpack.c.b16 %v2745, %v2744
    %v2914 = vpack.c.b16 %v2747, %v2746
    %v2915 = vpack.c.b16 %v2749, %v2748
    %v2916 = vpack.c.b16 %v2751, %v2750
    %v2917 = vpack.c.b16 %v2753, %v2752
    %v2918 = vpack.c.b16 %v2755, %v2754
    %v2919 = vpack.c.b16 %v2757, %v2756
    %v2920 = vpack.c.b16 %v2759, %v2758
    %v2921 = vpack.c.b16 %v2761, %v2760
    %v2922 = vpack.c.b16 %v2763, %v2762
    %v2923 = vpack.c.b16 %v2765, %v2764
    %v2924 = vpack.c.b16 %v2767, %v2766
    %v2925 = vpack.c.b16 %v2769, %v2768
    %v2926 = vpack.c.b16 %v2771, %v2770
    %v2927 = vpack.c.b16 %v2773, %v2772
    %v2928 = vpack.c.b16 %v2775, %v2774
    %v2929 = vpack.c.b16 %v2777, %v2776
    %v2930 = vpack.c.b16 %v2779, %v2778
    %v2931 = vpack.c.b16 %v2781, %v2780
    %v2932 = vpack.c.b16 %v2783, %v2782
    %v2933 = vpack.c.b16 %v2785, %v2784
    %v2934 = vpack.c.b16 %v2787, %v2786
    %v2935 = vpack.c.b16 %v2789, %v2788
    %v2936 = vpack.c.b16 %v2791, %v2790
    %v2937 = vpack.c.b16 %v2793, %v2792
    %v2938 = vpack.c.b16 %v2795, %v2794
    %v2939 = vpack.c.b16 %v2797, %v2796
    %v2940 = vpack.c.b16 %v2799, %v2798
    %v2941 = vpack.c.b16 %v2801, %v2800
    %v2942 = vpack.c.b16 %v2803, %v2802
    %v2943 = vpack.c.b16 %v2805, %v2804
    %v2944 = vpack.c.b16 %v2807, %v2806
    %v2945 = vpack.c.b16 %v2809, %v2808
    %v2946 = vpack.c.b16 %v2811, %v2810
    %v2947 = vpack.c.b16 %v2813, %v2812
    %v2948 = vpack.c.b16 %v2815, %v2814
    %v2949 = vpack.c.b16 %v2817, %v2816
    %v2950 = vpack.c.b16 %v2819, %v2818
    %v2951 = vpack.c.b16 %v2821, %v2820
    %v2952 = vpack.c.b16 %v2823, %v2822
    %v2953 = vpack.c.b16 %v2825, %v2824
    %3082 = vmatprep.subr.bf16.mxu0 0
    %3083 = vmatpush1.bf16.msra.mxu0 %v2826
    %3084 = vmatprep.subr.bf16.mxu0 0
    %3085 = vmatpush1.bf16.msra.mxu0 %v2827
    %3086 = vmatprep.subr.bf16.mxu0 0
    %3087 = vmatpush1.bf16.msra.mxu0 %v2828
    %3088 = vmatprep.subr.bf16.mxu0 0
    %3089 = vmatpush1.bf16.msra.mxu0 %v2829
    %3090 = vmatprep.subr.bf16.mxu0 0
    %3091 = vmatpush1.bf16.msra.mxu0 %v2830
    %3092 = vmatprep.subr.bf16.mxu0 0
    %3093 = vmatpush1.bf16.msra.mxu0 %v2831
    %3094 = vmatprep.subr.bf16.mxu0 0
    %3095 = vmatpush1.bf16.msra.mxu0 %v2832
    %3096 = vmatprep.subr.bf16.mxu0 0
    %3097 = vmatpush1.bf16.msra.mxu0 %v2833
    %3098 = vmatprep.subr.bf16.mxu0 0
    %3099 = vmatpush1.bf16.msra.mxu0 %v2834
    %3100 = vmatprep.subr.bf16.mxu0 0
    %3101 = vmatpush1.bf16.msra.mxu0 %v2835
    %3102 = vmatprep.subr.bf16.mxu0 0
    %3103 = vmatpush1.bf16.msra.mxu0 %v2836
    %3104 = vmatprep.subr.bf16.mxu0 0
    %3105 = vmatpush1.bf16.msra.mxu0 %v2837
    %3106 = vmatprep.subr.bf16.mxu0 0
    %3107 = vmatpush1.bf16.msra.mxu0 %v2838
    %3108 = vmatprep.subr.bf16.mxu0 0
    %3109 = vmatpush1.bf16.msra.mxu0 %v2839
    %3110 = vmatprep.subr.bf16.mxu0 0
    %3111 = vmatpush1.bf16.msra.mxu0 %v2840
    %3112 = vmatprep.subr.bf16.mxu0 0
    %3113 = vmatpush1.bf16.msra.mxu0 %v2841
    %3114 = vmatprep.mubr.bf16.mxu0 %v2022
    %3115 = vmatmul.mubr.bf16.gmra.mrb[0].mxu0 %v2021
    %v3116 = vpop.f32.mrb[0].mxu0
    %v3117 = vadd.f32 %v2313, %v3116
    %v3118 = vpop.f32.mrb[0].mxu0
    %v3119 = vpop.f32.mrb[0].mxu0
    %v3120 = vadd.f32 %v2313, %v3119
    %v3121 = vpop.f32.mrb[0].mxu0
    %3122 = vmatprep.mubr.bf16.mxu0 %v2038
    %3123 = vmatmul.mubr.bf16.gmra.mrb[0].mxu0 %v2037
    %v3124 = vpop.f32.mrb[0].mxu0
    %v3125 = vadd.f32 %v2313, %v3124
    %v3126 = vpop.f32.mrb[0].mxu0
    %v3127 = vpop.f32.mrb[0].mxu0
    %v3128 = vadd.f32 %v2313, %v3127
    %v3129 = vpop.f32.mrb[0].mxu0
    %3130 = vdwg.mxu0
    %3131 = vmatprep.subr.bf16.mxu0 0
    %3132 = vmatpush1.bf16.msra.mxu0 %v2842
    %3133 = vmatprep.subr.bf16.mxu0 0
    %3134 = vmatpush1.bf16.msra.mxu0 %v2843
    %3135 = vmatprep.subr.bf16.mxu0 0
    %3136 = vmatpush1.bf16.msra.mxu0 %v2844
    %3137 = vmatprep.subr.bf16.mxu0 0
    %3138 = vmatpush1.bf16.msra.mxu0 %v2845
    %3139 = vmatprep.subr.bf16.mxu0 0
    %3140 = vmatpush1.bf16.msra.mxu0 %v2846
    %3141 = vmatprep.subr.bf16.mxu0 0
    %3142 = vmatpush1.bf16.msra.mxu0 %v2847
    %3143 = vmatprep.subr.bf16.mxu0 0
    %3144 = vmatpush1.bf16.msra.mxu0 %v2848
    %3145 = vmatprep.subr.bf16.mxu0 0
    %3146 = vmatpush1.bf16.msra.mxu0 %v2849
    %3147 = vmatprep.subr.bf16.mxu0 0
    %3148 = vmatpush1.bf16.msra.mxu0 %v2850
    %3149 = vmatprep.subr.bf16.mxu0 0
    %3150 = vmatpush1.bf16.msra.mxu0 %v2851
    %3151 = vmatprep.subr.bf16.mxu0 0
    %3152 = vmatpush1.bf16.msra.mxu0 %v2852
    %3153 = vmatprep.subr.bf16.mxu0 0
    %3154 = vmatpush1.bf16.msra.mxu0 %v2853
    %3155 = vmatprep.subr.bf16.mxu0 0
    %3156 = vmatpush1.bf16.msra.mxu0 %v2854
    %3157 = vmatprep.subr.bf16.mxu0 0
    %3158 = vmatpush1.bf16.msra.mxu0 %v2855
    %3159 = vmatprep.subr.bf16.mxu0 0
    %3160 = vmatpush1.bf16.msra.mxu0 %v2856
    %3161 = vmatprep.subr.bf16.mxu0 0
    %3162 = vmatpush1.bf16.msra.mxu0 %v2857
    %3163 = vmatprep.mubr.bf16.mxu0 %v2024
    %3164 = vmatmul.mubr.bf16.gmra.mrb[0].mxu0 %v2023
    %v3165 = vpop.f32.mrb[0].mxu0
    %v3166 = vadd.f32 %v3117, %v3165
    %v3167 = vpop.f32.mrb[0].mxu0
    %v3168 = vpop.f32.mrb[0].mxu0
    %v3169 = vadd.f32 %v3120, %v3168
    %v3170 = vpop.f32.mrb[0].mxu0
    %3171 = vmatprep.mubr.bf16.mxu0 %v2040
    %3172 = vmatmul.mubr.bf16.gmra.mrb[0].mxu0 %v2039
    %v3173 = vpop.f32.mrb[0].mxu0
    %v3174 = vadd.f32 %v3125, %v3173
    %v3175 = vpop.f32.mrb[0].mxu0
    %v3176 = vpop.f32.mrb[0].mxu0
    %v3177 = vadd.f32 %v3128, %v3176
    %v3178 = vpop.f32.mrb[0].mxu0
    %3179 = vdwg.mxu0
    %3180 = vmatprep.subr.bf16.mxu0 0
    %3181 = vmatpush1.bf16.msra.mxu0 %v2858
    %3182 = vmatprep.subr.bf16.mxu0 0
    %3183 = vmatpush1.bf16.msra.mxu0 %v2859
    %3184 = vmatprep.subr.bf16.mxu0 0
    %3185 = vmatpush1.bf16.msra.mxu0 %v2860
    %3186 = vmatprep.subr.bf16.mxu0 0
    %3187 = vmatpush1.bf16.msra.mxu0 %v2861
    %3188 = vmatprep.subr.bf16.mxu0 0
    %3189 = vmatpush1.bf16.msra.mxu0 %v2862
    %3190 = vmatprep.subr.bf16.mxu0 0
    %3191 = vmatpush1.bf16.msra.mxu0 %v2863
    %3192 = vmatprep.subr.bf16.mxu0 0
    %3193 = vmatpush1.bf16.msra.mxu0 %v2864
    %3194 = vmatprep.subr.bf16.mxu0 0
    %3195 = vmatpush1.bf16.msra.mxu0 %v2865
    %3196 = vmatprep.subr.bf16.mxu0 0
    %3197 = vmatpush1.bf16.msra.mxu0 %v2866
    %3198 = vmatprep.subr.bf16.mxu0 0
    %3199 = vmatpush1.bf16.msra.mxu0 %v2867
    %3200 = vmatprep.subr.bf16.mxu0 0
    %3201 = vmatpush1.bf16.msra.mxu0 %v2868
    %3202 = vmatprep.subr.bf16.mxu0 0
    %3203 = vmatpush1.bf16.msra.mxu0 %v2869
    %3204 = vmatprep.subr.bf16.mxu0 0
    %3205 = vmatpush1.bf16.msra.mxu0 %v2870
    %3206 = vmatprep.subr.bf16.mxu0 0
    %3207 = vmatpush1.bf16.msra.mxu0 %v2871
    %3208 = vmatprep.subr.bf16.mxu0 0
    %3209 = vmatpush1.bf16.msra.mxu0 %v2872
    %3210 = vmatprep.subr.bf16.mxu0 0
    %3211 = vmatpush1.bf16.msra.mxu0 %v2873
    %3212 = vmatprep.mubr.bf16.mxu0 %v2026
    %3213 = vmatmul.mubr.bf16.gmra.mrb[0].mxu0 %v2025
    %v3214 = vpop.f32.mrb[0].mxu0
    %v3215 = vadd.f32 %v3166, %v3214
    %v3216 = vpop.f32.mrb[0].mxu0
    %v3217 = vpop.f32.mrb[0].mxu0
    %v3218 = vadd.f32 %v3169, %v3217
    %v3219 = vpop.f32.mrb[0].mxu0
    %3220 = vmatprep.mubr.bf16.mxu0 %v2042
    %3221 = vmatmul.mubr.bf16.gmra.mrb[0].mxu0 %v2041
    %v3222 = vpop.f32.mrb[0].mxu0
    %v3223 = vadd.f32 %v3174, %v3222
    %v3224 = vpop.f32.mrb[0].mxu0
    %v3225 = vpop.f32.mrb[0].mxu0
    %v3226 = vadd.f32 %v3177, %v3225
    %v3227 = vpop.f32.mrb[0].mxu0
    %3228 = vdwg.mxu0
    %3229 = vmatprep.subr.bf16.mxu0 0
    %3230 = vmatpush1.bf16.msra.mxu0 %v2874
    %3231 = vmatprep.subr.bf16.mxu0 0
    %3232 = vmatpush1.bf16.msra.mxu0 %v2875
    %3233 = vmatprep.subr.bf16.mxu0 0
    %3234 = vmatpush1.bf16.msra.mxu0 %v2876
    %3235 = vmatprep.subr.bf16.mxu0 0
    %3236 = vmatpush1.bf16.msra.mxu0 %v2877
    %3237 = vmatprep.subr.bf16.mxu0 0
    %3238 = vmatpush1.bf16.msra.mxu0 %v2878
    %3239 = vmatprep.subr.bf16.mxu0 0
    %3240 = vmatpush1.bf16.msra.mxu0 %v2879
    %3241 = vmatprep.subr.bf16.mxu0 0
    %3242 = vmatpush1.bf16.msra.mxu0 %v2880
    %3243 = vmatprep.subr.bf16.mxu0 0
    %3244 = vmatpush1.bf16.msra.mxu0 %v2881
    %3245 = vmatprep.subr.bf16.mxu0 0
    %3246 = vmatpush1.bf16.msra.mxu0 %v2882
    %3247 = vmatprep.subr.bf16.mxu0 0
    %3248 = vmatpush1.bf16.msra.mxu0 %v2883
    %3249 = vmatprep.subr.bf16.mxu0 0
    %3250 = vmatpush1.bf16.msra.mxu0 %v2884
    %3251 = vmatprep.subr.bf16.mxu0 0
    %3252 = vmatpush1.bf16.msra.mxu0 %v2885
    %3253 = vmatprep.subr.bf16.mxu0 0
    %3254 = vmatpush1.bf16.msra.mxu0 %v2886
    %3255 = vmatprep.subr.bf16.mxu0 0
    %3256 = vmatpush1.bf16.msra.mxu0 %v2887
    %3257 = vmatprep.subr.bf16.mxu0 0
    %3258 = vmatpush1.bf16.msra.mxu0 %v2888
    %3259 = vmatprep.subr.bf16.mxu0 0
    %3260 = vmatpush1.bf16.msra.mxu0 %v2889
    %3261 = vmatprep.mubr.bf16.mxu0 %v2028
    %3262 = vmatmul.mubr.bf16.gmra.mrb[0].mxu0 %v2027
    %v3263 = vpop.f32.mrb[0].mxu0
    %v3264 = vadd.f32 %v3215, %v3263
    %v3265 = vpop.f32.mrb[0].mxu0
    %v3266 = vpop.f32.mrb[0].mxu0
    %v3267 = vadd.f32 %v3218, %v3266
    %v3268 = vpop.f32.mrb[0].mxu0
    %3269 = vmatprep.mubr.bf16.mxu0 %v2044
    %3270 = vmatmul.mubr.bf16.gmra.mrb[0].mxu0 %v2043
    %v3271 = vpop.f32.mrb[0].mxu0
    %v3272 = vadd.f32 %v3223, %v3271
    %v3273 = vpop.f32.mrb[0].mxu0
    %v3274 = vpop.f32.mrb[0].mxu0
    %v3275 = vadd.f32 %v3226, %v3274
    %v3276 = vpop.f32.mrb[0].mxu0
    %3277 = vdwg.mxu0
    %3278 = vmatprep.subr.bf16.mxu0 0
    %3279 = vmatpush1.bf16.msra.mxu0 %v2890
    %3280 = vmatprep.subr.bf16.mxu0 0
    %3281 = vmatpush1.bf16.msra.mxu0 %v2891
    %3282 = vmatprep.subr.bf16.mxu0 0
    %3283 = vmatpush1.bf16.msra.mxu0 %v2892
    %3284 = vmatprep.subr.bf16.mxu0 0
    %3285 = vmatpush1.bf16.msra.mxu0 %v2893
    %3286 = vmatprep.subr.bf16.mxu0 0
    %3287 = vmatpush1.bf16.msra.mxu0 %v2894
    %3288 = vmatprep.subr.bf16.mxu0 0
    %3289 = vmatpush1.bf16.msra.mxu0 %v2895
    %3290 = vmatprep.subr.bf16.mxu0 0
    %3291 = vmatpush1.bf16.msra.mxu0 %v2896
    %3292 = vmatprep.subr.bf16.mxu0 0
    %3293 = vmatpush1.bf16.msra.mxu0 %v2897
    %3294 = vmatprep.subr.bf16.mxu0 0
    %3295 = vmatpush1.bf16.msra.mxu0 %v2898
    %3296 = vmatprep.subr.bf16.mxu0 0
    %3297 = vmatpush1.bf16.msra.mxu0 %v2899
    %3298 = vmatprep.subr.bf16.mxu0 0
    %3299 = vmatpush1.bf16.msra.mxu0 %v2900
    %3300 = vmatprep.subr.bf16.mxu0 0
    %3301 = vmatpush1.bf16.msra.mxu0 %v2901
    %3302 = vmatprep.subr.bf16.mxu0 0
    %3303 = vmatpush1.bf16.msra.mxu0 %v2902
    %3304 = vmatprep.subr.bf16.mxu0 0
    %3305 = vmatpush1.bf16.msra.mxu0 %v2903
    %3306 = vmatprep.subr.bf16.mxu0 0
    %3307 = vmatpush1.bf16.msra.mxu0 %v2904
    %3308 = vmatprep.subr.bf16.mxu0 0
    %3309 = vmatpush1.bf16.msra.mxu0 %v2905
    %3310 = vmatprep.mubr.bf16.mxu0 %v2030
    %3311 = vmatmul.mubr.bf16.gmra.mrb[0].mxu0 %v2029
    %v3312 = vpop.f32.mrb[0].mxu0
    %v3313 = vadd.f32 %v3264, %v3312
    %v3314 = vpop.f32.mrb[0].mxu0
    %v3315 = vpop.f32.mrb[0].mxu0
    %v3316 = vadd.f32 %v3267, %v3315
    %v3317 = vpop.f32.mrb[0].mxu0
    %3318 = vmatprep.mubr.bf16.mxu0 %v2046
    %3319 = vmatmul.mubr.bf16.gmra.mrb[0].mxu0 %v2045
    %v3320 = vpop.f32.mrb[0].mxu0
    %v3321 = vadd.f32 %v3272, %v3320
    %v3322 = vpop.f32.mrb[0].mxu0
    %v3323 = vpop.f32.mrb[0].mxu0
    %v3324 = vadd.f32 %v3275, %v3323
    %v3325 = vpop.f32.mrb[0].mxu0
    %3326 = vdwg.mxu0
    %3327 = vmatprep.subr.bf16.mxu0 0
    %3328 = vmatpush1.bf16.msra.mxu0 %v2906
    %3329 = vmatprep.subr.bf16.mxu0 0
    %3330 = vmatpush1.bf16.msra.mxu0 %v2907
    %3331 = vmatprep.subr.bf16.mxu0 0
    %3332 = vmatpush1.bf16.msra.mxu0 %v2908
    %3333 = vmatprep.subr.bf16.mxu0 0
    %3334 = vmatpush1.bf16.msra.mxu0 %v2909
    %3335 = vmatprep.subr.bf16.mxu0 0
    %3336 = vmatpush1.bf16.msra.mxu0 %v2910
    %3337 = vmatprep.subr.bf16.mxu0 0
    %3338 = vmatpush1.bf16.msra.mxu0 %v2911
    %3339 = vmatprep.subr.bf16.mxu0 0
    %3340 = vmatpush1.bf16.msra.mxu0 %v2912
    %3341 = vmatprep.subr.bf16.mxu0 0
    %3342 = vmatpush1.bf16.msra.mxu0 %v2913
    %3343 = vmatprep.subr.bf16.mxu0 0
    %3344 = vmatpush1.bf16.msra.mxu0 %v2914
    %3345 = vmatprep.subr.bf16.mxu0 0
    %3346 = vmatpush1.bf16.msra.mxu0 %v2915
    %3347 = vmatprep.subr.bf16.mxu0 0
    %3348 = vmatpush1.bf16.msra.mxu0 %v2916
    %3349 = vmatprep.subr.bf16.mxu0 0
    %3350 = vmatpush1.bf16.msra.mxu0 %v2917
    %3351 = vmatprep.subr.bf16.mxu0 0
    %3352 = vmatpush1.bf16.msra.mxu0 %v2918
    %3353 = vmatprep.subr.bf16.mxu0 0
    %3354 = vmatpush1.bf16.msra.mxu0 %v2919
    %3355 = vmatprep.subr.bf16.mxu0 0
    %3356 = vmatpush1.bf16.msra.mxu0 %v2920
    %3357 = vmatprep.subr.bf16.mxu0 0
    %3358 = vmatpush1.bf16.msra.mxu0 %v2921
    %3359 = vmatprep.mubr.bf16.mxu0 %v2032
    %3360 = vmatmul.mubr.bf16.gmra.mrb[0].mxu0 %v2031
    %v3361 = vpop.f32.mrb[0].mxu0
    %v3362 = vadd.f32 %v3313, %v3361
    %v3363 = vpop.f32.mrb[0].mxu0
    %v3364 = vpop.f32.mrb[0].mxu0
    %v3365 = vadd.f32 %v3316, %v3364
    %v3366 = vpop.f32.mrb[0].mxu0
    %3367 = vmatprep.mubr.bf16.mxu0 %v2048
    %3368 = vmatmul.mubr.bf16.gmra.mrb[0].mxu0 %v2047
    %v3369 = vpop.f32.mrb[0].mxu0
    %v3370 = vadd.f32 %v3321, %v3369
    %v3371 = vpop.f32.mrb[0].mxu0
    %v3372 = vpop.f32.mrb[0].mxu0
    %v3373 = vadd.f32 %v3324, %v3372
    %v3374 = vpop.f32.mrb[0].mxu0
    %3375 = vdwg.mxu0
    %3376 = vmatprep.subr.bf16.mxu0 0
    %3377 = vmatpush1.bf16.msra.mxu0 %v2922
    %3378 = vmatprep.subr.bf16.mxu0 0
    %3379 = vmatpush1.bf16.msra.mxu0 %v2923
    %3380 = vmatprep.subr.bf16.mxu0 0
    %3381 = vmatpush1.bf16.msra.mxu0 %v2924
    %3382 = vmatprep.subr.bf16.mxu0 0
    %3383 = vmatpush1.bf16.msra.mxu0 %v2925
    %3384 = vmatprep.subr.bf16.mxu0 0
    %3385 = vmatpush1.bf16.msra.mxu0 %v2926
    %3386 = vmatprep.subr.bf16.mxu0 0
    %3387 = vmatpush1.bf16.msra.mxu0 %v2927
    %3388 = vmatprep.subr.bf16.mxu0 0
    %3389 = vmatpush1.bf16.msra.mxu0 %v2928
    %3390 = vmatprep.subr.bf16.mxu0 0
    %3391 = vmatpush1.bf16.msra.mxu0 %v2929
    %3392 = vmatprep.subr.bf16.mxu0 0
    %3393 = vmatpush1.bf16.msra.mxu0 %v2930
    %3394 = vmatprep.subr.bf16.mxu0 0
    %3395 = vmatpush1.bf16.msra.mxu0 %v2931
    %3396 = vmatprep.subr.bf16.mxu0 0
    %3397 = vmatpush1.bf16.msra.mxu0 %v2932
    %3398 = vmatprep.subr.bf16.mxu0 0
    %3399 = vmatpush1.bf16.msra.mxu0 %v2933
    %3400 = vmatprep.subr.bf16.mxu0 0
    %3401 = vmatpush1.bf16.msra.mxu0 %v2934
    %3402 = vmatprep.subr.bf16.mxu0 0
    %3403 = vmatpush1.bf16.msra.mxu0 %v2935
    %3404 = vmatprep.subr.bf16.mxu0 0
    %3405 = vmatpush1.bf16.msra.mxu0 %v2936
    %3406 = vmatprep.subr.bf16.mxu0 0
    %3407 = vmatpush1.bf16.msra.mxu0 %v2937
    %3408 = vmatprep.mubr.bf16.mxu0 %v2034
    %3409 = vmatmul.mubr.bf16.gmra.mrb[0].mxu0 %v2033
    %v3410 = vpop.f32.mrb[0].mxu0
    %v3411 = vadd.f32 %v3362, %v3410
    %v3412 = vpop.f32.mrb[0].mxu0
    %v3413 = vpop.f32.mrb[0].mxu0
    %v3414 = vadd.f32 %v3365, %v3413
    %v3415 = vpop.f32.mrb[0].mxu0
    %3416 = vmatprep.mubr.bf16.mxu0 %v2050
    %3417 = vmatmul.mubr.bf16.gmra.mrb[0].mxu0 %v2049
    %v3418 = vpop.f32.mrb[0].mxu0
    %v3419 = vadd.f32 %v3370, %v3418
    %v3420 = vpop.f32.mrb[0].mxu0
    %v3421 = vpop.f32.mrb[0].mxu0
    %v3422 = vadd.f32 %v3373, %v3421
    %v3423 = vpop.f32.mrb[0].mxu0
    %3424 = vdwg.mxu0
    %3425 = vmatprep.subr.bf16.mxu0 0
    %3426 = vmatpush1.bf16.msra.mxu0 %v2938
    %3427 = vmatprep.subr.bf16.mxu0 0
    %3428 = vmatpush1.bf16.msra.mxu0 %v2939
    %3429 = vmatprep.subr.bf16.mxu0 0
    %3430 = vmatpush1.bf16.msra.mxu0 %v2940
    %3431 = vmatprep.subr.bf16.mxu0 0
    %3432 = vmatpush1.bf16.msra.mxu0 %v2941
    %3433 = vmatprep.subr.bf16.mxu0 0
    %3434 = vmatpush1.bf16.msra.mxu0 %v2942
    %3435 = vmatprep.subr.bf16.mxu0 0
    %3436 = vmatpush1.bf16.msra.mxu0 %v2943
    %3437 = vmatprep.subr.bf16.mxu0 0
    %3438 = vmatpush1.bf16.msra.mxu0 %v2944
    %3439 = vmatprep.subr.bf16.mxu0 0
    %3440 = vmatpush1.bf16.msra.mxu0 %v2945
    %3441 = vmatprep.subr.bf16.mxu0 0
    %3442 = vmatpush1.bf16.msra.mxu0 %v2946
    %3443 = vmatprep.subr.bf16.mxu0 0
    %3444 = vmatpush1.bf16.msra.mxu0 %v2947
    %3445 = vmatprep.subr.bf16.mxu0 0
    %3446 = vmatpush1.bf16.msra.mxu0 %v2948
    %3447 = vmatprep.subr.bf16.mxu0 0
    %3448 = vmatpush1.bf16.msra.mxu0 %v2949
    %3449 = vmatprep.subr.bf16.mxu0 0
    %3450 = vmatpush1.bf16.msra.mxu0 %v2950
    %3451 = vmatprep.subr.bf16.mxu0 0
    %3452 = vmatpush1.bf16.msra.mxu0 %v2951
    %3453 = vmatprep.subr.bf16.mxu0 0
    %3454 = vmatpush1.bf16.msra.mxu0 %v2952
    %3455 = vmatprep.subr.bf16.mxu0 0
    %3456 = vmatpush1.bf16.msra.mxu0 %v2953
    %3457 = vmatprep.mubr.bf16.mxu0 %v2036
    %3458 = vmatmul.mubr.bf16.gmra.mrb[0].mxu0 %v2035
    %v3459 = vpop.f32.mrb[0].mxu0
    %v3460 = vadd.f32 %v3411, %v3459
    %v3461 = vpop.f32.mrb[0].mxu0
    %v3462 = vpop.f32.mrb[0].mxu0
    %v3463 = vadd.f32 %v3414, %v3462
    %v3464 = vpop.f32.mrb[0].mxu0
    %3465 = vmatprep.mubr.bf16.mxu0 %v2052
    %3466 = vmatmul.mubr.bf16.gmra.mrb[0].mxu0 %v2051
    %v3467 = vpop.f32.mrb[0].mxu0
    %v3468 = vadd.f32 %v3419, %v3467
    %v3469 = vpop.f32.mrb[0].mxu0
    %v3470 = vpop.f32.mrb[0].mxu0
    %v3471 = vadd.f32 %v3422, %v3470
    %v3472 = vpop.f32.mrb[0].mxu0
    %3473 = vdwg.mxu0
    %v3474 = vadd.f32 %v3460, %v1244
    %v3475 = vadd.f32 %v3463, %v1245
    %v3476 = vadd.f32 %v3468, %v1246
    %v3477 = vadd.f32 %v3471, %v1247
    %v3478 = vld [vmem:[%s1 + $0xb0] sm:$0x1]
    %v3479 = vld [vmem:[%s1 + $0xb8] sm:$0x1]
    %v3480 = vsel %vm283, %v3474, 0.0
    %3481 = vadd.xlane.f32.xlu0 %v3480
    %v3482 = vpop.xlane.xlu0 %3481
    %v3483 = vsel %vm283, %v3475, 0.0
    %3484 = vadd.xlane.f32.xlu0 %v3483
    %v3485 = vpop.xlane.xlu0 %3484
    %v3486 = vsel %vm283, %v3476, 0.0
    %3487 = vadd.xlane.f32.xlu0 %v3486
    %v3488 = vpop.xlane.xlu0 %3487
    %v3489 = vsel %vm283, %v3477, 0.0
    %3490 = vadd.xlane.f32.xlu0 %v3489
    %v3491 = vpop.xlane.xlu0 %3490
    %v3492 = vmul.f32 %v3482, %v1191
    %v3493 = vmul.f32 %v3485, %v1191
    %v3494 = vmul.f32 %v3488, %v1191
    %v3495 = vmul.f32 %v3491, %v1191
    %v3496 = vsub.f32 %v3474, %v3492
    %v3497 = vsub.f32 %v3475, %v3493
    %v3498 = vsub.f32 %v3476, %v3494
    %v3499 = vsub.f32 %v3477, %v3495
    %v3500 = vmul.f32 %v3496, %v3496
    %v3501 = vmul.f32 %v3497, %v3497
    %v3502 = vmul.f32 %v3498, %v3498
    %v3503 = vmul.f32 %v3499, %v3499
    %v3504 = vsel %vm283, %v3500, 0.0
    %3505 = vadd.xlane.f32.xlu0 %v3504
    %v3506 = vpop.xlane.xlu0 %3505
    %v3507 = vsel %vm283, %v3501, 0.0
    %3508 = vadd.xlane.f32.xlu0 %v3507
    %v3509 = vpop.xlane.xlu0 %3508
    %v3510 = vsel %vm283, %v3502, 0.0
    %3511 = vadd.xlane.f32.xlu0 %v3510
    %v3512 = vpop.xlane.xlu0 %3511
    %v3513 = vsel %vm283, %v3503, 0.0
    %3514 = vadd.xlane.f32.xlu0 %v3513
    %v3515 = vpop.xlane.xlu0 %3514
    %v3516 = vmul.f32 %v3506, %v1191
    %v3517 = vmul.f32 %v3509, %v1191
    %v3518 = vmul.f32 %v3512, %v1191
    %v3519 = vmul.f32 %v3515, %v1191
    %v3520 = vadd.f32 %v3516, 1e-05
    %v3521 = vadd.f32 %v3517, 1e-05
    %v3522 = vadd.f32 %v3518, 1e-05
    %v3523 = vadd.f32 %v3519, 1e-05
    %v3524 = vrsqrt.pop %v3520
    %v3525 = vrsqrt.pop %v3521
    %v3526 = vrsqrt.pop %v3522
    %v3527 = vrsqrt.pop %v3523
    %v3528 = vmul.f32 %v3496, %v3524
    %v3529 = vmul.f32 %v3497, %v3525
    %v3530 = vmul.f32 %v3498, %v3526
    %v3531 = vmul.f32 %v3499, %v3527
    %v3532 = vlaneseq
    %v3533 = vshrl.u32 %v3532, 7
    %v3534 = vsub.s32 0, %v3533
    %v3535 = vrot.slane %v3478, %v3534
    %v3536 = vmul.f32 %v3528, %v3535
    %v3537 = vmul.f32 %v3529, %v3535
    %v3538 = vmul.f32 %v3530, %v3535
    %v3539 = vmul.f32 %v3531, %v3535
    %v3540 = vlaneseq
    %v3541 = vshrl.u32 %v3540, 7
    %v3542 = vsub.s32 0, %v3541
    %v3543 = vrot.slane %v3479, %v3542
    %v3544 = vadd.f32 %v3536, %v3543
    %v3545 = vadd.f32 %v3537, %v3543
    %v3546 = vadd.f32 %v3538, %v3543
    %v3547 = vadd.f32 %v3539, %v3543
    %s3548 = scalar_lea.vmem %s2, 16
    %v3549 = vld [vmem:[%s3548] sm:$0xf]
    %v3550 = vld [vmem:[%s3548 + $0x4] sm:$0xf]
    %v3551 = vld [vmem:[%s3548 + $0x8] sm:$0xf]
    %v3552 = vld [vmem:[%s3548 + $0xc] sm:$0xf]
    %v3553 = vpack.c.bf16 %v3545, %v3544
    %v3554 = vpack.c.bf16 %v3547, %v3546
    %v3555 = vld [vmem:[%s1 + $0xc8] sm:$0x1]
    %v3556 = vlaneseq
    %v3557 = vshrl.u32 %v3556, 7
    %v3558 = vsub.s32 0, %v3557
    %v3559 = vrot.slane %v3555, %v3558
    %v3564 = vunpack.c.l.b16 %v3549
    %v3565 = vunpack.c.l.b16 %v3550
    %v3566 = vunpack.c.l.b16 %v3551
    %v3567 = vunpack.c.l.b16 %v3552
    %v3568 = vpack.c.b16 %v3565, %v3564
    %v3569 = vpack.c.b16 %v3567, %v3566
    %v3573 = vsel %vm283, %v3553, 0
    %v3576 = vsel %vm283, %v3554, 0
    %3578 = vmatprep.subr.bf16.mxu0 0
    %3579 = vmatpush1.bf16.msra.mxu0 %v3568
    %3580 = vmatprep.subr.bf16.mxu0 0
    %3581 = vmatpush1.bf16.msra.mxu0 %v3569
    %3582 = vmatprep.subr.bf16.mxu0 0
    %3583 = vmatpush1.bf16.msra.mxu0 0
    %3584 = vmatprep.subr.bf16.mxu0 0
    %3585 = vmatpush1.bf16.msra.mxu0 0
    %3586 = vmatprep.subr.bf16.mxu0 0
    %3587 = vmatpush1.bf16.msra.mxu0 0
    %3588 = vmatprep.subr.bf16.mxu0 0
    %3589 = vmatpush1.bf16.msra.mxu0 0
    %3590 = vmatprep.subr.bf16.mxu0 0
    %3591 = vmatpush1.bf16.msra.mxu0 0
    %3592 = vmatprep.subr.bf16.mxu0 0
    %3593 = vmatpush1.bf16.msra.mxu0 0
    %3594 = vmatprep.subr.bf16.mxu0 0
    %3595 = vmatpush1.bf16.msra.mxu0 0
    %3596 = vmatprep.subr.bf16.mxu0 0
    %3597 = vmatpush1.bf16.msra.mxu0 0
    %3598 = vmatprep.subr.bf16.mxu0 0
    %3599 = vmatpush1.bf16.msra.mxu0 0
    %3600 = vmatprep.subr.bf16.mxu0 0
    %3601 = vmatpush1.bf16.msra.mxu0 0
    %3602 = vmatprep.subr.bf16.mxu0 0
    %3603 = vmatpush1.bf16.msra.mxu0 0
    %3604 = vmatprep.subr.bf16.mxu0 0
    %3605 = vmatpush1.bf16.msra.mxu0 0
    %3606 = vmatprep.subr.bf16.mxu0 0
    %3607 = vmatpush1.bf16.msra.mxu0 0
    %3608 = vmatprep.subr.bf16.mxu0 0
    %3609 = vmatpush1.bf16.msra.mxu0 0
    %3610 = vmatprep.mubr.bf16.mxu0 0
    %3611 = vmatmul.mubr.bf16.gmra.mrb[0].mxu0 %v3573
    %v3612 = vpop.f32.mrb[0].mxu0
    %v3613 = vadd.f32 %v3559, %v3612
    %v3614 = vpop.f32.mrb[0].mxu0
    %v3615 = vpop.f32.mrb[0].mxu0
    %v3616 = vadd.f32 %v3559, %v3615
    %v3617 = vpop.f32.mrb[0].mxu0
    %3618 = vmatprep.mubr.bf16.mxu0 0
    %3619 = vmatmul.mubr.bf16.gmra.mrb[0].mxu0 %v3576
    %v3620 = vpop.f32.mrb[0].mxu0
    %v3621 = vadd.f32 %v3559, %v3620
    %v3622 = vpop.f32.mrb[0].mxu0
    %v3623 = vpop.f32.mrb[0].mxu0
    %v3624 = vadd.f32 %v3559, %v3623
    %v3625 = vpop.f32.mrb[0].mxu0
    %3626 = vdwg.mxu0
    %v3627 = vpack.c.bf16 %v3616, %v3613
    %v3628 = vpack.c.bf16 %v3624, %v3621
    %3631 = vrot.lane.b32.xlu0 %v3627, 96
    %v3632 = vpop.permute.xlu0 %3631
    %3633 = vrot.lane.b32.xlu0 %v3628, 96
    %v3634 = vpop.permute.xlu0 %3633
    %v3636 = vsel %vm347, %v3627, 0
    %v3639 = vsel %vm347, %v3628, 0
    %v3642 = vsel %vm347, %v3632, 0
    %v3645 = vsel %vm347, %v3634, 0
    %3647 = vmatprep.subr.bf16.mxu0 0
    %3648 = vmatpush1.bf16.xpose.msra.mxu0 %v3642
    %3649 = vmatprep.subr.bf16.mxu0 0
    %3650 = vmatpush1.bf16.xpose.msra.mxu0 %v3645
    %3651 = vmatprep.subr.bf16.mxu0 0
    %3652 = vmatpush1.bf16.xpose.msra.mxu0 0
    %3653 = vmatprep.subr.bf16.mxu0 0
    %3654 = vmatpush1.bf16.xpose.msra.mxu0 0
    %3655 = vmatprep.subr.bf16.mxu0 0
    %3656 = vmatpush1.bf16.xpose.msra.mxu0 0
    %3657 = vmatprep.subr.bf16.mxu0 0
    %3658 = vmatpush1.bf16.xpose.msra.mxu0 0
    %3659 = vmatprep.subr.bf16.mxu0 0
    %3660 = vmatpush1.bf16.xpose.msra.mxu0 0
    %3661 = vmatprep.subr.bf16.mxu0 0
    %3662 = vmatpush1.bf16.xpose.msra.mxu0 0
    %3663 = vmatprep.subr.bf16.mxu0 0
    %3664 = vmatpush1.bf16.xpose.msra.mxu0 0
    %3665 = vmatprep.subr.bf16.mxu0 0
    %3666 = vmatpush1.bf16.xpose.msra.mxu0 0
    %3667 = vmatprep.subr.bf16.mxu0 0
    %3668 = vmatpush1.bf16.xpose.msra.mxu0 0
    %3669 = vmatprep.subr.bf16.mxu0 0
    %3670 = vmatpush1.bf16.xpose.msra.mxu0 0
    %3671 = vmatprep.subr.bf16.mxu0 0
    %3672 = vmatpush1.bf16.xpose.msra.mxu0 0
    %3673 = vmatprep.subr.bf16.mxu0 0
    %3674 = vmatpush1.bf16.xpose.msra.mxu0 0
    %3675 = vmatprep.subr.bf16.mxu0 0
    %3676 = vmatpush1.bf16.xpose.msra.mxu0 0
    %3677 = vmatprep.subr.bf16.mxu0 0
    %3678 = vmatpush1.bf16.xpose.msra.mxu0 0
    %3679 = vmatprep.mubr.bf16.mxu0 0
    %3680 = vmatmul.mubr.bf16.gmra.mrb[0].mxu0 %v3636
    %v3681 = vpop.f32.mrb[0].mxu0
    %v3682 = vadd.f32 %v256, %v3681
    %v3683 = vpop.f32.mrb[0].mxu0
    %v3684 = vpop.f32.mrb[0].mxu0
    %v3685 = vadd.f32 %v257, %v3684
    %v3686 = vpop.f32.mrb[0].mxu0
    %3687 = vmatprep.mubr.bf16.mxu0 0
    %3688 = vmatmul.mubr.bf16.gmra.mrb[0].mxu0 %v3639
    %v3689 = vpop.f32.mrb[0].mxu0
    %v3690 = vadd.f32 %v258, %v3689
    %v3691 = vpop.f32.mrb[0].mxu0
    %v3692 = vpop.f32.mrb[0].mxu0
    %v3693 = vadd.f32 %v259, %v3692
    %v3694 = vpop.f32.mrb[0].mxu0
    %3695 = vdwg.mxu0
    %v3696 = vsel %vm283, %v3682, -inf
    %3697 = vmax.xlane.f32.xlu0 %v3696
    %v3698 = vpop.xlane.xlu0 %3697
    %v3699 = vsel %vm283, %v3685, -inf
    %3700 = vmax.xlane.f32.xlu0 %v3699
    %v3701 = vpop.xlane.xlu0 %3700
    %v3702 = vsel %vm283, %v3690, -inf
    %3703 = vmax.xlane.f32.xlu0 %v3702
    %v3704 = vpop.xlane.xlu0 %3703
    %v3705 = vsel %vm283, %v3693, -inf
    %3706 = vmax.xlane.f32.xlu0 %v3705
    %v3707 = vpop.xlane.xlu0 %3706
    %v3708 = vsub.f32 %v3682, %v3698
    %v3709 = vsub.f32 %v3685, %v3701
    %v3710 = vsub.f32 %v3690, %v3704
    %v3711 = vsub.f32 %v3693, %v3707
    %v3712 = vmul.f32 %v3708, 1.442695
    %v3713 = vpow.pop %v3712
    %v3714 = vmul.f32 %v3709, 1.442695
    %v3715 = vpow.pop %v3714
    %v3716 = vmul.f32 %v3710, 1.442695
    %v3717 = vpow.pop %v3716
    %v3718 = vmul.f32 %v3711, 1.442695
    %v3719 = vpow.pop %v3718
    %v3720 = vsel %vm283, %v3713, 0.0
    %3721 = vadd.xlane.f32.xlu0 %v3720
    %v3722 = vpop.xlane.xlu0 %3721
    %v3723 = vsel %vm283, %v3715, 0.0
    %3724 = vadd.xlane.f32.xlu0 %v3723
    %v3725 = vpop.xlane.xlu0 %3724
    %v3726 = vsel %vm283, %v3717, 0.0
    %3727 = vadd.xlane.f32.xlu0 %v3726
    %v3728 = vpop.xlane.xlu0 %3727
    %v3729 = vsel %vm283, %v3719, 0.0
    %3730 = vadd.xlane.f32.xlu0 %v3729
    %v3731 = vpop.xlane.xlu0 %3730
    %v3732 = vrcp.pop %v3722
    %v3733 = vrcp.pop %v3725
    %v3734 = vrcp.pop %v3728
    %v3735 = vrcp.pop %v3731
    %v3736 = vmul.f32 %v3713, %v3732
    %v3737 = vmul.f32 %v3715, %v3733
    %v3738 = vmul.f32 %v3717, %v3734
    %v3739 = vmul.f32 %v3719, %v3735
    %v3740 = vpack.c.bf16 %v3737, %v3736
    %v3741 = vpack.c.bf16 %v3739, %v3738
    %3742 = vrot.lane.b32.xlu0 %v3627, 64
    %v3743 = vpop.permute.xlu0 %3742
    %3744 = vrot.lane.b32.xlu0 %v3628, 64
    %v3745 = vpop.permute.xlu0 %3744
    %v3749 = vsel %vm283, %v3740, 0
    %v3752 = vsel %vm283, %v3741, 0
    %3754 = vmatprep.subr.bf16.mxu0 0
    %3755 = vmatpush1.bf16.msra.mxu0 %v3743
    %3756 = vmatprep.subr.bf16.mxu0 0
    %3757 = vmatpush1.bf16.msra.mxu0 %v3745
    %3758 = vmatprep.subr.bf16.mxu0 0
    %3759 = vmatpush1.bf16.msra.mxu0 0
    %3760 = vmatprep.subr.bf16.mxu0 0
    %3761 = vmatpush1.bf16.msra.mxu0 0
    %3762 = vmatprep.subr.bf16.mxu0 0
    %3763 = vmatpush1.bf16.msra.mxu0 0
    %3764 = vmatprep.subr.bf16.mxu0 0
    %3765 = vmatpush1.bf16.msra.mxu0 0
    %3766 = vmatprep.subr.bf16.mxu0 0
    %3767 = vmatpush1.bf16.msra.mxu0 0
    %3768 = vmatprep.subr.bf16.mxu0 0
    %3769 = vmatpush1.bf16.msra.mxu0 0
    %3770 = vmatprep.subr.bf16.mxu0 0
    %3771 = vmatpush1.bf16.msra.mxu0 0
    %3772 = vmatprep.subr.bf16.mxu0 0
    %3773 = vmatpush1.bf16.msra.mxu0 0
    %3774 = vmatprep.subr.bf16.mxu0 0
    %3775 = vmatpush1.bf16.msra.mxu0 0
    %3776 = vmatprep.subr.bf16.mxu0 0
    %3777 = vmatpush1.bf16.msra.mxu0 0
    %3778 = vmatprep.subr.bf16.mxu0 0
    %3779 = vmatpush1.bf16.msra.mxu0 0
    %3780 = vmatprep.subr.bf16.mxu0 0
    %3781 = vmatpush1.bf16.msra.mxu0 0
    %3782 = vmatprep.subr.bf16.mxu0 0
    %3783 = vmatpush1.bf16.msra.mxu0 0
    %3784 = vmatprep.subr.bf16.mxu0 0
    %3785 = vmatpush1.bf16.msra.mxu0 0
    %3786 = vmatprep.mubr.bf16.mxu0 0
    %3787 = vmatmul.mubr.bf16.gmra.mrb[0].mxu0 %v3749
    %v3788 = vpop.f32.mrb[0].mxu0
    %v3789 = vadd.f32 0.0, %v3788
    %v3790 = vpop.f32.mrb[0].mxu0
    %v3791 = vpop.f32.mrb[0].mxu0
    %v3792 = vadd.f32 0.0, %v3791
    %v3793 = vpop.f32.mrb[0].mxu0
    %3794 = vmatprep.mubr.bf16.mxu0 0
    %3795 = vmatmul.mubr.bf16.gmra.mrb[0].mxu0 %v3752
    %v3796 = vpop.f32.mrb[0].mxu0
    %v3797 = vadd.f32 0.0, %v3796
    %v3798 = vpop.f32.mrb[0].mxu0
    %v3799 = vpop.f32.mrb[0].mxu0
    %v3800 = vadd.f32 0.0, %v3799
    %v3801 = vpop.f32.mrb[0].mxu0
    %3802 = vdwg.mxu0
    %3803 = vrot.lane.b32.xlu0 %v3627, 120
    %v3804 = vpop.permute.xlu0 %3803
    %3805 = vrot.lane.b32.xlu0 %v3628, 120
    %v3806 = vpop.permute.xlu0 %3805
    %3807 = vrot.lane.b32.xlu0 %v3627, 88
    %v3808 = vpop.permute.xlu0 %3807
    %3809 = vrot.lane.b32.xlu0 %v3628, 88
    %v3810 = vpop.permute.xlu0 %3809
    %v3812 = vsel %vm347, %v3804, 0
    %v3815 = vsel %vm347, %v3806, 0
    %v3818 = vsel %vm347, %v3808, 0
    %v3821 = vsel %vm347, %v3810, 0
    %3823 = vmatprep.subr.bf16.mxu0 0
    %3824 = vmatpush1.bf16.xpose.msra.mxu0 %v3818
    %3825 = vmatprep.subr.bf16.mxu0 0
    %3826 = vmatpush1.bf16.xpose.msra.mxu0 %v3821
    %3827 = vmatprep.subr.bf16.mxu0 0
    %3828 = vmatpush1.bf16.xpose.msra.mxu0 0
    %3829 = vmatprep.subr.bf16.mxu0 0
    %3830 = vmatpush1.bf16.xpose.msra.mxu0 0
    %3831 = vmatprep.subr.bf16.mxu0 0
    %3832 = vmatpush1.bf16.xpose.msra.mxu0 0
    %3833 = vmatprep.subr.bf16.mxu0 0
    %3834 = vmatpush1.bf16.xpose.msra.mxu0 0
    %3835 = vmatprep.subr.bf16.mxu0 0
    %3836 = vmatpush1.bf16.xpose.msra.mxu0 0
    %3837 = vmatprep.subr.bf16.mxu0 0
    %3838 = vmatpush1.bf16.xpose.msra.mxu0 0
    %3839 = vmatprep.subr.bf16.mxu0 0
    %3840 = vmatpush1.bf16.xpose.msra.mxu0 0
    %3841 = vmatprep.subr.bf16.mxu0 0
    %3842 = vmatpush1.bf16.xpose.msra.mxu0 0
    %3843 = vmatprep.subr.bf16.mxu0 0
    %3844 = vmatpush1.bf16.xpose.msra.mxu0 0
    %3845 = vmatprep.subr.bf16.mxu0 0
    %3846 = vmatpush1.bf16.xpose.msra.mxu0 0
    %3847 = vmatprep.subr.bf16.mxu0 0
    %3848 = vmatpush1.bf16.xpose.msra.mxu0 0
    %3849 = vmatprep.subr.bf16.mxu0 0
    %3850 = vmatpush1.bf16.xpose.msra.mxu0 0
    %3851 = vmatprep.subr.bf16.mxu0 0
    %3852 = vmatpush1.bf16.xpose.msra.mxu0 0
    %3853 = vmatprep.subr.bf16.mxu0 0
    %3854 = vmatpush1.bf16.xpose.msra.mxu0 0
    %3855 = vmatprep.mubr.bf16.mxu0 0
    %3856 = vmatmul.mubr.bf16.gmra.mrb[0].mxu0 %v3812
    %v3857 = vpop.f32.mrb[0].mxu0
    %v3858 = vadd.f32 %v256, %v3857
    %v3859 = vpop.f32.mrb[0].mxu0
    %v3860 = vpop.f32.mrb[0].mxu0
    %v3861 = vadd.f32 %v257, %v3860
    %v3862 = vpop.f32.mrb[0].mxu0
    %3863 = vmatprep.mubr.bf16.mxu0 0
    %3864 = vmatmul.mubr.bf16.gmra.mrb[0].mxu0 %v3815
    %v3865 = vpop.f32.mrb[0].mxu0
    %v3866 = vadd.f32 %v258, %v3865
    %v3867 = vpop.f32.mrb[0].mxu0
    %v3868 = vpop.f32.mrb[0].mxu0
    %v3869 = vadd.f32 %v259, %v3868
    %v3870 = vpop.f32.mrb[0].mxu0
    %3871 = vdwg.mxu0
    %v3872 = vsel %vm283, %v3858, -inf
    %3873 = vmax.xlane.f32.xlu0 %v3872
    %v3874 = vpop.xlane.xlu0 %3873
    %v3875 = vsel %vm283, %v3861, -inf
    %3876 = vmax.xlane.f32.xlu0 %v3875
    %v3877 = vpop.xlane.xlu0 %3876
    %v3878 = vsel %vm283, %v3866, -inf
    %3879 = vmax.xlane.f32.xlu0 %v3878
    %v3880 = vpop.xlane.xlu0 %3879
    %v3881 = vsel %vm283, %v3869, -inf
    %3882 = vmax.xlane.f32.xlu0 %v3881
    %v3883 = vpop.xlane.xlu0 %3882
    %v3884 = vsub.f32 %v3858, %v3874
    %v3885 = vsub.f32 %v3861, %v3877
    %v3886 = vsub.f32 %v3866, %v3880
    %v3887 = vsub.f32 %v3869, %v3883
    %v3888 = vmul.f32 %v3884, 1.442695
    %v3889 = vpow.pop %v3888
    %v3890 = vmul.f32 %v3885, 1.442695
    %v3891 = vpow.pop %v3890
    %v3892 = vmul.f32 %v3886, 1.442695
    %v3893 = vpow.pop %v3892
    %v3894 = vmul.f32 %v3887, 1.442695
    %v3895 = vpow.pop %v3894
    %v3896 = vsel %vm283, %v3889, 0.0
    %3897 = vadd.xlane.f32.xlu0 %v3896
    %v3898 = vpop.xlane.xlu0 %3897
    %v3899 = vsel %vm283, %v3891, 0.0
    %3900 = vadd.xlane.f32.xlu0 %v3899
    %v3901 = vpop.xlane.xlu0 %3900
    %v3902 = vsel %vm283, %v3893, 0.0
    %3903 = vadd.xlane.f32.xlu0 %v3902
    %v3904 = vpop.xlane.xlu0 %3903
    %v3905 = vsel %vm283, %v3895, 0.0
    %3906 = vadd.xlane.f32.xlu0 %v3905
    %v3907 = vpop.xlane.xlu0 %3906
    %v3908 = vrcp.pop %v3898
    %v3909 = vrcp.pop %v3901
    %v3910 = vrcp.pop %v3904
    %v3911 = vrcp.pop %v3907
    %v3912 = vmul.f32 %v3889, %v3908
    %v3913 = vmul.f32 %v3891, %v3909
    %v3914 = vmul.f32 %v3893, %v3910
    %v3915 = vmul.f32 %v3895, %v3911
    %v3916 = vpack.c.bf16 %v3913, %v3912
    %v3917 = vpack.c.bf16 %v3915, %v3914
    %3918 = vrot.lane.b32.xlu0 %v3627, 56
    %v3919 = vpop.permute.xlu0 %3918
    %3920 = vrot.lane.b32.xlu0 %v3628, 56
    %v3921 = vpop.permute.xlu0 %3920
    %v3925 = vsel %vm283, %v3916, 0
    %v3928 = vsel %vm283, %v3917, 0
    %3930 = vmatprep.subr.bf16.mxu0 0
    %3931 = vmatpush1.bf16.msra.mxu0 %v3919
    %3932 = vmatprep.subr.bf16.mxu0 0
    %3933 = vmatpush1.bf16.msra.mxu0 %v3921
    %3934 = vmatprep.subr.bf16.mxu0 0
    %3935 = vmatpush1.bf16.msra.mxu0 0
    %3936 = vmatprep.subr.bf16.mxu0 0
    %3937 = vmatpush1.bf16.msra.mxu0 0
    %3938 = vmatprep.subr.bf16.mxu0 0
    %3939 = vmatpush1.bf16.msra.mxu0 0
    %3940 = vmatprep.subr.bf16.mxu0 0
    %3941 = vmatpush1.bf16.msra.mxu0 0
    %3942 = vmatprep.subr.bf16.mxu0 0
    %3943 = vmatpush1.bf16.msra.mxu0 0
    %3944 = vmatprep.subr.bf16.mxu0 0
    %3945 = vmatpush1.bf16.msra.mxu0 0
    %3946 = vmatprep.subr.bf16.mxu0 0
    %3947 = vmatpush1.bf16.msra.mxu0 0
    %3948 = vmatprep.subr.bf16.mxu0 0
    %3949 = vmatpush1.bf16.msra.mxu0 0
    %3950 = vmatprep.subr.bf16.mxu0 0
    %3951 = vmatpush1.bf16.msra.mxu0 0
    %3952 = vmatprep.subr.bf16.mxu0 0
    %3953 = vmatpush1.bf16.msra.mxu0 0
    %3954 = vmatprep.subr.bf16.mxu0 0
    %3955 = vmatpush1.bf16.msra.mxu0 0
    %3956 = vmatprep.subr.bf16.mxu0 0
    %3957 = vmatpush1.bf16.msra.mxu0 0
    %3958 = vmatprep.subr.bf16.mxu0 0
    %3959 = vmatpush1.bf16.msra.mxu0 0
    %3960 = vmatprep.subr.bf16.mxu0 0
    %3961 = vmatpush1.bf16.msra.mxu0 0
    %3962 = vmatprep.mubr.bf16.mxu0 0
    %3963 = vmatmul.mubr.bf16.gmra.mrb[0].mxu0 %v3925
    %v3964 = vpop.f32.mrb[0].mxu0
    %v3965 = vadd.f32 0.0, %v3964
    %v3966 = vpop.f32.mrb[0].mxu0
    %v3967 = vpop.f32.mrb[0].mxu0
    %v3968 = vadd.f32 0.0, %v3967
    %v3969 = vpop.f32.mrb[0].mxu0
    %3970 = vmatprep.mubr.bf16.mxu0 0
    %3971 = vmatmul.mubr.bf16.gmra.mrb[0].mxu0 %v3928
    %v3972 = vpop.f32.mrb[0].mxu0
    %v3973 = vadd.f32 0.0, %v3972
    %v3974 = vpop.f32.mrb[0].mxu0
    %v3975 = vpop.f32.mrb[0].mxu0
    %v3976 = vadd.f32 0.0, %v3975
    %v3977 = vpop.f32.mrb[0].mxu0
    %3978 = vdwg.mxu0
    %3979 = vrot.lane.b32.xlu0 %v3627, 112
    %v3980 = vpop.permute.xlu0 %3979
    %3981 = vrot.lane.b32.xlu0 %v3628, 112
    %v3982 = vpop.permute.xlu0 %3981
    %3983 = vrot.lane.b32.xlu0 %v3627, 80
    %v3984 = vpop.permute.xlu0 %3983
    %3985 = vrot.lane.b32.xlu0 %v3628, 80
    %v3986 = vpop.permute.xlu0 %3985
    %v3988 = vsel %vm347, %v3980, 0
    %v3991 = vsel %vm347, %v3982, 0
    %v3994 = vsel %vm347, %v3984, 0
    %v3997 = vsel %vm347, %v3986, 0
    %3999 = vmatprep.subr.bf16.mxu0 0
    %4000 = vmatpush1.bf16.xpose.msra.mxu0 %v3994
    %4001 = vmatprep.subr.bf16.mxu0 0
    %4002 = vmatpush1.bf16.xpose.msra.mxu0 %v3997
    %4003 = vmatprep.subr.bf16.mxu0 0
    %4004 = vmatpush1.bf16.xpose.msra.mxu0 0
    %4005 = vmatprep.subr.bf16.mxu0 0
    %4006 = vmatpush1.bf16.xpose.msra.mxu0 0
    %4007 = vmatprep.subr.bf16.mxu0 0
    %4008 = vmatpush1.bf16.xpose.msra.mxu0 0
    %4009 = vmatprep.subr.bf16.mxu0 0
    %4010 = vmatpush1.bf16.xpose.msra.mxu0 0
    %4011 = vmatprep.subr.bf16.mxu0 0
    %4012 = vmatpush1.bf16.xpose.msra.mxu0 0
    %4013 = vmatprep.subr.bf16.mxu0 0
    %4014 = vmatpush1.bf16.xpose.msra.mxu0 0
    %4015 = vmatprep.subr.bf16.mxu0 0
    %4016 = vmatpush1.bf16.xpose.msra.mxu0 0
    %4017 = vmatprep.subr.bf16.mxu0 0
    %4018 = vmatpush1.bf16.xpose.msra.mxu0 0
    %4019 = vmatprep.subr.bf16.mxu0 0
    %4020 = vmatpush1.bf16.xpose.msra.mxu0 0
    %4021 = vmatprep.subr.bf16.mxu0 0
    %4022 = vmatpush1.bf16.xpose.msra.mxu0 0
    %4023 = vmatprep.subr.bf16.mxu0 0
    %4024 = vmatpush1.bf16.xpose.msra.mxu0 0
    %4025 = vmatprep.subr.bf16.mxu0 0
    %4026 = vmatpush1.bf16.xpose.msra.mxu0 0
    %4027 = vmatprep.subr.bf16.mxu0 0
    %4028 = vmatpush1.bf16.xpose.msra.mxu0 0
    %4029 = vmatprep.subr.bf16.mxu0 0
    %4030 = vmatpush1.bf16.xpose.msra.mxu0 0
    %4031 = vmatprep.mubr.bf16.mxu0 0
    %4032 = vmatmul.mubr.bf16.gmra.mrb[0].mxu0 %v3988
    %v4033 = vpop.f32.mrb[0].mxu0
    %v4034 = vadd.f32 %v256, %v4033
    %v4035 = vpop.f32.mrb[0].mxu0
    %v4036 = vpop.f32.mrb[0].mxu0
    %v4037 = vadd.f32 %v257, %v4036
    %v4038 = vpop.f32.mrb[0].mxu0
    %4039 = vmatprep.mubr.bf16.mxu0 0
    %4040 = vmatmul.mubr.bf16.gmra.mrb[0].mxu0 %v3991
    %v4041 = vpop.f32.mrb[0].mxu0
    %v4042 = vadd.f32 %v258, %v4041
    %v4043 = vpop.f32.mrb[0].mxu0
    %v4044 = vpop.f32.mrb[0].mxu0
    %v4045 = vadd.f32 %v259, %v4044
    %v4046 = vpop.f32.mrb[0].mxu0
    %4047 = vdwg.mxu0
    %v4048 = vsel %vm283, %v4034, -inf
    %4049 = vmax.xlane.f32.xlu0 %v4048
    %v4050 = vpop.xlane.xlu0 %4049
    %v4051 = vsel %vm283, %v4037, -inf
    %4052 = vmax.xlane.f32.xlu0 %v4051
    %v4053 = vpop.xlane.xlu0 %4052
    %v4054 = vsel %vm283, %v4042, -inf
    %4055 = vmax.xlane.f32.xlu0 %v4054
    %v4056 = vpop.xlane.xlu0 %4055
    %v4057 = vsel %vm283, %v4045, -inf
    %4058 = vmax.xlane.f32.xlu0 %v4057
    %v4059 = vpop.xlane.xlu0 %4058
    %v4060 = vsub.f32 %v4034, %v4050
    %v4061 = vsub.f32 %v4037, %v4053
    %v4062 = vsub.f32 %v4042, %v4056
    %v4063 = vsub.f32 %v4045, %v4059
    %v4064 = vmul.f32 %v4060, 1.442695
    %v4065 = vpow.pop %v4064
    %v4066 = vmul.f32 %v4061, 1.442695
    %v4067 = vpow.pop %v4066
    %v4068 = vmul.f32 %v4062, 1.442695
    %v4069 = vpow.pop %v4068
    %v4070 = vmul.f32 %v4063, 1.442695
    %v4071 = vpow.pop %v4070
    %v4072 = vsel %vm283, %v4065, 0.0
    %4073 = vadd.xlane.f32.xlu0 %v4072
    %v4074 = vpop.xlane.xlu0 %4073
    %v4075 = vsel %vm283, %v4067, 0.0
    %4076 = vadd.xlane.f32.xlu0 %v4075
    %v4077 = vpop.xlane.xlu0 %4076
    %v4078 = vsel %vm283, %v4069, 0.0
    %4079 = vadd.xlane.f32.xlu0 %v4078
    %v4080 = vpop.xlane.xlu0 %4079
    %v4081 = vsel %vm283, %v4071, 0.0
    %4082 = vadd.xlane.f32.xlu0 %v4081
    %v4083 = vpop.xlane.xlu0 %4082
    %v4084 = vrcp.pop %v4074
    %v4085 = vrcp.pop %v4077
    %v4086 = vrcp.pop %v4080
    %v4087 = vrcp.pop %v4083
    %v4088 = vmul.f32 %v4065, %v4084
    %v4089 = vmul.f32 %v4067, %v4085
    %v4090 = vmul.f32 %v4069, %v4086
    %v4091 = vmul.f32 %v4071, %v4087
    %v4092 = vpack.c.bf16 %v4089, %v4088
    %v4093 = vpack.c.bf16 %v4091, %v4090
    %4094 = vrot.lane.b32.xlu0 %v3627, 48
    %v4095 = vpop.permute.xlu0 %4094
    %4096 = vrot.lane.b32.xlu0 %v3628, 48
    %v4097 = vpop.permute.xlu0 %4096
    %v4101 = vsel %vm283, %v4092, 0
    %v4104 = vsel %vm283, %v4093, 0
    %4106 = vmatprep.subr.bf16.mxu0 0
    %4107 = vmatpush1.bf16.msra.mxu0 %v4095
    %4108 = vmatprep.subr.bf16.mxu0 0
    %4109 = vmatpush1.bf16.msra.mxu0 %v4097
    %4110 = vmatprep.subr.bf16.mxu0 0
    %4111 = vmatpush1.bf16.msra.mxu0 0
    %4112 = vmatprep.subr.bf16.mxu0 0
    %4113 = vmatpush1.bf16.msra.mxu0 0
    %4114 = vmatprep.subr.bf16.mxu0 0
    %4115 = vmatpush1.bf16.msra.mxu0 0
    %4116 = vmatprep.subr.bf16.mxu0 0
    %4117 = vmatpush1.bf16.msra.mxu0 0
    %4118 = vmatprep.subr.bf16.mxu0 0
    %4119 = vmatpush1.bf16.msra.mxu0 0
    %4120 = vmatprep.subr.bf16.mxu0 0
    %4121 = vmatpush1.bf16.msra.mxu0 0
    %4122 = vmatprep.subr.bf16.mxu0 0
    %4123 = vmatpush1.bf16.msra.mxu0 0
    %4124 = vmatprep.subr.bf16.mxu0 0
    %4125 = vmatpush1.bf16.msra.mxu0 0
    %4126 = vmatprep.subr.bf16.mxu0 0
    %4127 = vmatpush1.bf16.msra.mxu0 0
    %4128 = vmatprep.subr.bf16.mxu0 0
    %4129 = vmatpush1.bf16.msra.mxu0 0
    %4130 = vmatprep.subr.bf16.mxu0 0
    %4131 = vmatpush1.bf16.msra.mxu0 0
    %4132 = vmatprep.subr.bf16.mxu0 0
    %4133 = vmatpush1.bf16.msra.mxu0 0
    %4134 = vmatprep.subr.bf16.mxu0 0
    %4135 = vmatpush1.bf16.msra.mxu0 0
    %4136 = vmatprep.subr.bf16.mxu0 0
    %4137 = vmatpush1.bf16.msra.mxu0 0
    %4138 = vmatprep.mubr.bf16.mxu0 0
    %4139 = vmatmul.mubr.bf16.gmra.mrb[0].mxu0 %v4101
    %v4140 = vpop.f32.mrb[0].mxu0
    %v4141 = vadd.f32 0.0, %v4140
    %v4142 = vpop.f32.mrb[0].mxu0
    %v4143 = vpop.f32.mrb[0].mxu0
    %v4144 = vadd.f32 0.0, %v4143
    %v4145 = vpop.f32.mrb[0].mxu0
    %4146 = vmatprep.mubr.bf16.mxu0 0
    %4147 = vmatmul.mubr.bf16.gmra.mrb[0].mxu0 %v4104
    %v4148 = vpop.f32.mrb[0].mxu0
    %v4149 = vadd.f32 0.0, %v4148
    %v4150 = vpop.f32.mrb[0].mxu0
    %v4151 = vpop.f32.mrb[0].mxu0
    %v4152 = vadd.f32 0.0, %v4151
    %v4153 = vpop.f32.mrb[0].mxu0
    %4154 = vdwg.mxu0
    %4155 = vrot.lane.b32.xlu0 %v3627, 104
    %v4156 = vpop.permute.xlu0 %4155
    %4157 = vrot.lane.b32.xlu0 %v3628, 104
    %v4158 = vpop.permute.xlu0 %4157
    %4159 = vrot.lane.b32.xlu0 %v3627, 72
    %v4160 = vpop.permute.xlu0 %4159
    %4161 = vrot.lane.b32.xlu0 %v3628, 72
    %v4162 = vpop.permute.xlu0 %4161
    %v4164 = vsel %vm347, %v4156, 0
    %v4167 = vsel %vm347, %v4158, 0
    %v4170 = vsel %vm347, %v4160, 0
    %v4173 = vsel %vm347, %v4162, 0
    %4175 = vmatprep.subr.bf16.mxu0 0
    %4176 = vmatpush1.bf16.xpose.msra.mxu0 %v4170
    %4177 = vmatprep.subr.bf16.mxu0 0
    %4178 = vmatpush1.bf16.xpose.msra.mxu0 %v4173
    %4179 = vmatprep.subr.bf16.mxu0 0
    %4180 = vmatpush1.bf16.xpose.msra.mxu0 0
    %4181 = vmatprep.subr.bf16.mxu0 0
    %4182 = vmatpush1.bf16.xpose.msra.mxu0 0
    %4183 = vmatprep.subr.bf16.mxu0 0
    %4184 = vmatpush1.bf16.xpose.msra.mxu0 0
    %4185 = vmatprep.subr.bf16.mxu0 0
    %4186 = vmatpush1.bf16.xpose.msra.mxu0 0
    %4187 = vmatprep.subr.bf16.mxu0 0
    %4188 = vmatpush1.bf16.xpose.msra.mxu0 0
    %4189 = vmatprep.subr.bf16.mxu0 0
    %4190 = vmatpush1.bf16.xpose.msra.mxu0 0
    %4191 = vmatprep.subr.bf16.mxu0 0
    %4192 = vmatpush1.bf16.xpose.msra.mxu0 0
    %4193 = vmatprep.subr.bf16.mxu0 0
    %4194 = vmatpush1.bf16.xpose.msra.mxu0 0
    %4195 = vmatprep.subr.bf16.mxu0 0
    %4196 = vmatpush1.bf16.xpose.msra.mxu0 0
    %4197 = vmatprep.subr.bf16.mxu0 0
    %4198 = vmatpush1.bf16.xpose.msra.mxu0 0
    %4199 = vmatprep.subr.bf16.mxu0 0
    %4200 = vmatpush1.bf16.xpose.msra.mxu0 0
    %4201 = vmatprep.subr.bf16.mxu0 0
    %4202 = vmatpush1.bf16.xpose.msra.mxu0 0
    %4203 = vmatprep.subr.bf16.mxu0 0
    %4204 = vmatpush1.bf16.xpose.msra.mxu0 0
    %4205 = vmatprep.subr.bf16.mxu0 0
    %4206 = vmatpush1.bf16.xpose.msra.mxu0 0
    %4207 = vmatprep.mubr.bf16.mxu0 0
    %4208 = vmatmul.mubr.bf16.gmra.mrb[0].mxu0 %v4164
    %v4209 = vpop.f32.mrb[0].mxu0
    %v4210 = vadd.f32 %v256, %v4209
    %v4211 = vpop.f32.mrb[0].mxu0
    %v4212 = vpop.f32.mrb[0].mxu0
    %v4213 = vadd.f32 %v257, %v4212
    %v4214 = vpop.f32.mrb[0].mxu0
    %4215 = vmatprep.mubr.bf16.mxu0 0
    %4216 = vmatmul.mubr.bf16.gmra.mrb[0].mxu0 %v4167
    %v4217 = vpop.f32.mrb[0].mxu0
    %v4218 = vadd.f32 %v258, %v4217
    %v4219 = vpop.f32.mrb[0].mxu0
    %v4220 = vpop.f32.mrb[0].mxu0
    %v4221 = vadd.f32 %v259, %v4220
    %v4222 = vpop.f32.mrb[0].mxu0
    %4223 = vdwg.mxu0
    %v4224 = vsel %vm283, %v4210, -inf
    %4225 = vmax.xlane.f32.xlu0 %v4224
    %v4226 = vpop.xlane.xlu0 %4225
    %v4227 = vsel %vm283, %v4213, -inf
    %4228 = vmax.xlane.f32.xlu0 %v4227
    %v4229 = vpop.xlane.xlu0 %4228
    %v4230 = vsel %vm283, %v4218, -inf
    %4231 = vmax.xlane.f32.xlu0 %v4230
    %v4232 = vpop.xlane.xlu0 %4231
    %v4233 = vsel %vm283, %v4221, -inf
    %4234 = vmax.xlane.f32.xlu0 %v4233
    %v4235 = vpop.xlane.xlu0 %4234
    %v4236 = vsub.f32 %v4210, %v4226
    %v4237 = vsub.f32 %v4213, %v4229
    %v4238 = vsub.f32 %v4218, %v4232
    %v4239 = vsub.f32 %v4221, %v4235
    %v4240 = vmul.f32 %v4236, 1.442695
    %v4241 = vpow.pop %v4240
    %v4242 = vmul.f32 %v4237, 1.442695
    %v4243 = vpow.pop %v4242
    %v4244 = vmul.f32 %v4238, 1.442695
    %v4245 = vpow.pop %v4244
    %v4246 = vmul.f32 %v4239, 1.442695
    %v4247 = vpow.pop %v4246
    %v4248 = vsel %vm283, %v4241, 0.0
    %4249 = vadd.xlane.f32.xlu0 %v4248
    %v4250 = vpop.xlane.xlu0 %4249
    %v4251 = vsel %vm283, %v4243, 0.0
    %4252 = vadd.xlane.f32.xlu0 %v4251
    %v4253 = vpop.xlane.xlu0 %4252
    %v4254 = vsel %vm283, %v4245, 0.0
    %4255 = vadd.xlane.f32.xlu0 %v4254
    %v4256 = vpop.xlane.xlu0 %4255
    %v4257 = vsel %vm283, %v4247, 0.0
    %4258 = vadd.xlane.f32.xlu0 %v4257
    %v4259 = vpop.xlane.xlu0 %4258
    %v4260 = vrcp.pop %v4250
    %v4261 = vrcp.pop %v4253
    %v4262 = vrcp.pop %v4256
    %v4263 = vrcp.pop %v4259
    %v4264 = vmul.f32 %v4241, %v4260
    %v4265 = vmul.f32 %v4243, %v4261
    %v4266 = vmul.f32 %v4245, %v4262
    %v4267 = vmul.f32 %v4247, %v4263
    %v4268 = vpack.c.bf16 %v4265, %v4264
    %v4269 = vpack.c.bf16 %v4267, %v4266
    %4270 = vrot.lane.b32.xlu0 %v3627, 40
    %v4271 = vpop.permute.xlu0 %4270
    %4272 = vrot.lane.b32.xlu0 %v3628, 40
    %v4273 = vpop.permute.xlu0 %4272
    %v4277 = vsel %vm283, %v4268, 0
    %v4280 = vsel %vm283, %v4269, 0
    %4282 = vmatprep.subr.bf16.mxu0 0
    %4283 = vmatpush1.bf16.msra.mxu0 %v4271
    %4284 = vmatprep.subr.bf16.mxu0 0
    %4285 = vmatpush1.bf16.msra.mxu0 %v4273
    %4286 = vmatprep.subr.bf16.mxu0 0
    %4287 = vmatpush1.bf16.msra.mxu0 0
    %4288 = vmatprep.subr.bf16.mxu0 0
    %4289 = vmatpush1.bf16.msra.mxu0 0
    %4290 = vmatprep.subr.bf16.mxu0 0
    %4291 = vmatpush1.bf16.msra.mxu0 0
    %4292 = vmatprep.subr.bf16.mxu0 0
    %4293 = vmatpush1.bf16.msra.mxu0 0
    %4294 = vmatprep.subr.bf16.mxu0 0
    %4295 = vmatpush1.bf16.msra.mxu0 0
    %4296 = vmatprep.subr.bf16.mxu0 0
    %4297 = vmatpush1.bf16.msra.mxu0 0
    %4298 = vmatprep.subr.bf16.mxu0 0
    %4299 = vmatpush1.bf16.msra.mxu0 0
    %4300 = vmatprep.subr.bf16.mxu0 0
    %4301 = vmatpush1.bf16.msra.mxu0 0
    %4302 = vmatprep.subr.bf16.mxu0 0
    %4303 = vmatpush1.bf16.msra.mxu0 0
    %4304 = vmatprep.subr.bf16.mxu0 0
    %4305 = vmatpush1.bf16.msra.mxu0 0
    %4306 = vmatprep.subr.bf16.mxu0 0
    %4307 = vmatpush1.bf16.msra.mxu0 0
    %4308 = vmatprep.subr.bf16.mxu0 0
    %4309 = vmatpush1.bf16.msra.mxu0 0
    %4310 = vmatprep.subr.bf16.mxu0 0
    %4311 = vmatpush1.bf16.msra.mxu0 0
    %4312 = vmatprep.subr.bf16.mxu0 0
    %4313 = vmatpush1.bf16.msra.mxu0 0
    %4314 = vmatprep.mubr.bf16.mxu0 0
    %4315 = vmatmul.mubr.bf16.gmra.mrb[0].mxu0 %v4277
    %v4316 = vpop.f32.mrb[0].mxu0
    %v4317 = vadd.f32 0.0, %v4316
    %v4318 = vpop.f32.mrb[0].mxu0
    %v4319 = vpop.f32.mrb[0].mxu0
    %v4320 = vadd.f32 0.0, %v4319
    %v4321 = vpop.f32.mrb[0].mxu0
    %4322 = vmatprep.mubr.bf16.mxu0 0
    %4323 = vmatmul.mubr.bf16.gmra.mrb[0].mxu0 %v4280
    %v4324 = vpop.f32.mrb[0].mxu0
    %v4325 = vadd.f32 0.0, %v4324
    %v4326 = vpop.f32.mrb[0].mxu0
    %v4327 = vpop.f32.mrb[0].mxu0
    %v4328 = vadd.f32 0.0, %v4327
    %v4329 = vpop.f32.mrb[0].mxu0
    %4330 = vdwg.mxu0
    %4335 = vrot.lane.b32.xlu0 %v3965, 8
    %v4336 = vpop.permute.xlu0 %4335
    %4337 = vrot.lane.b32.xlu0 %v3968, 8
    %v4338 = vpop.permute.xlu0 %4337
    %4339 = vrot.lane.b32.xlu0 %v3973, 8
    %v4340 = vpop.permute.xlu0 %4339
    %4341 = vrot.lane.b32.xlu0 %v3976, 8
    %v4342 = vpop.permute.xlu0 %4341
    %4351 = vrot.lane.b32.xlu0 %v4141, 16
    %v4352 = vpop.permute.xlu0 %4351
    %4353 = vrot.lane.b32.xlu0 %v4144, 16
    %v4354 = vpop.permute.xlu0 %4353
    %4355 = vrot.lane.b32.xlu0 %v4149, 16
    %v4356 = vpop.permute.xlu0 %4355
    %4357 = vrot.lane.b32.xlu0 %v4152, 16
    %v4358 = vpop.permute.xlu0 %4357
    %4367 = vrot.lane.b32.xlu0 %v4317, 24
    %v4368 = vpop.permute.xlu0 %4367
    %4369 = vrot.lane.b32.xlu0 %v4320, 24
    %v4370 = vpop.permute.xlu0 %4369
    %4371 = vrot.lane.b32.xlu0 %v4325, 24
    %v4372 = vpop.permute.xlu0 %4371
    %4373 = vrot.lane.b32.xlu0 %v4328, 24
    %v4374 = vpop.permute.xlu0 %4373
    %v4379 = vsel %vm347, %v3789, %v4336
    %v4380 = vsel %vm347, %v3792, %v4338
    %v4381 = vsel %vm347, %v3797, %v4340
    %v4382 = vsel %vm347, %v3800, %v4342
    %v4383 = vsel %vm150, %v4379, %v4352
    %v4384 = vsel %vm150, %v4380, %v4354
    %v4385 = vsel %vm150, %v4381, %v4356
    %v4386 = vsel %vm150, %v4382, %v4358
    %v4387 = vsel %vm1100, %v4383, %v4368
    %v4388 = vsel %vm1100, %v4384, %v4370
    %v4389 = vsel %vm1100, %v4385, %v4372
    %v4390 = vsel %vm1100, %v4386, %v4374
    %v4391 = vpack.c.bf16 %v4388, %v4387
    %v4392 = vpack.c.bf16 %v4390, %v4389
    %v4393 = vld [vmem:[%s1 + $0xd0] sm:$0x1]
    %v4394 = vlaneseq
    %v4395 = vshrl.u32 %v4394, 7
    %v4396 = vsub.s32 0, %v4395
    %v4397 = vrot.slane %v4393, %v4396
    %4398 = vrot.lane.b32.xlu0 %v3568, 32
    %v4399 = vpop.permute.xlu0 %4398
    %4400 = vrot.lane.b32.xlu0 %v3569, 32
    %v4401 = vpop.permute.xlu0 %4400
    %v4405 = vsel %vm283, %v4391, 0
    %v4408 = vsel %vm283, %v4392, 0
    %4410 = vmatprep.subr.bf16.mxu0 0
    %4411 = vmatpush1.bf16.msra.mxu0 %v4399
    %4412 = vmatprep.subr.bf16.mxu0 0
    %4413 = vmatpush1.bf16.msra.mxu0 %v4401
    %4414 = vmatprep.subr.bf16.mxu0 0
    %4415 = vmatpush1.bf16.msra.mxu0 0
    %4416 = vmatprep.subr.bf16.mxu0 0
    %4417 = vmatpush1.bf16.msra.mxu0 0
    %4418 = vmatprep.subr.bf16.mxu0 0
    %4419 = vmatpush1.bf16.msra.mxu0 0
    %4420 = vmatprep.subr.bf16.mxu0 0
    %4421 = vmatpush1.bf16.msra.mxu0 0
    %4422 = vmatprep.subr.bf16.mxu0 0
    %4423 = vmatpush1.bf16.msra.mxu0 0
    %4424 = vmatprep.subr.bf16.mxu0 0
    %4425 = vmatpush1.bf16.msra.mxu0 0
    %4426 = vmatprep.subr.bf16.mxu0 0
    %4427 = vmatpush1.bf16.msra.mxu0 0
    %4428 = vmatprep.subr.bf16.mxu0 0
    %4429 = vmatpush1.bf16.msra.mxu0 0
    %4430 = vmatprep.subr.bf16.mxu0 0
    %4431 = vmatpush1.bf16.msra.mxu0 0
    %4432 = vmatprep.subr.bf16.mxu0 0
    %4433 = vmatpush1.bf16.msra.mxu0 0
    %4434 = vmatprep.subr.bf16.mxu0 0
    %4435 = vmatpush1.bf16.msra.mxu0 0
    %4436 = vmatprep.subr.bf16.mxu0 0
    %4437 = vmatpush1.bf16.msra.mxu0 0
    %4438 = vmatprep.subr.bf16.mxu0 0
    %4439 = vmatpush1.bf16.msra.mxu0 0
    %4440 = vmatprep.subr.bf16.mxu0 0
    %4441 = vmatpush1.bf16.msra.mxu0 0
    %4442 = vmatprep.mubr.bf16.mxu0 0
    %4443 = vmatmul.mubr.bf16.gmra.mrb[0].mxu0 %v4405
    %v4444 = vpop.f32.mrb[0].mxu0
    %v4445 = vadd.f32 %v4397, %v4444
    %v4446 = vpop.f32.mrb[0].mxu0
    %v4447 = vpop.f32.mrb[0].mxu0
    %v4448 = vadd.f32 %v4397, %v4447
    %v4449 = vpop.f32.mrb[0].mxu0
    %4450 = vmatprep.mubr.bf16.mxu0 0
    %4451 = vmatmul.mubr.bf16.gmra.mrb[0].mxu0 %v4408
    %v4452 = vpop.f32.mrb[0].mxu0
    %v4453 = vadd.f32 %v4397, %v4452
    %v4454 = vpop.f32.mrb[0].mxu0
    %v4455 = vpop.f32.mrb[0].mxu0
    %v4456 = vadd.f32 %v4397, %v4455
    %v4457 = vpop.f32.mrb[0].mxu0
    %4458 = vdwg.mxu0
    %v4459 = vadd.f32 %v4445, %v3544
    %v4460 = vadd.f32 %v4448, %v3545
    %v4461 = vadd.f32 %v4453, %v3546
    %v4462 = vadd.f32 %v4456, %v3547
    %v4463 = vld [vmem:[%s1 + $0xd8] sm:$0x1]
    %v4464 = vld [vmem:[%s1 + $0xe0] sm:$0x1]
    %v4465 = vsel %vm283, %v4459, 0.0
    %4466 = vadd.xlane.f32.xlu0 %v4465
    %v4467 = vpop.xlane.xlu0 %4466
    %v4468 = vsel %vm283, %v4460, 0.0
    %4469 = vadd.xlane.f32.xlu0 %v4468
    %v4470 = vpop.xlane.xlu0 %4469
    %v4471 = vsel %vm283, %v4461, 0.0
    %4472 = vadd.xlane.f32.xlu0 %v4471
    %v4473 = vpop.xlane.xlu0 %4472
    %v4474 = vsel %vm283, %v4462, 0.0
    %4475 = vadd.xlane.f32.xlu0 %v4474
    %v4476 = vpop.xlane.xlu0 %4475
    %v4477 = vmul.f32 %v4467, %v1191
    %v4478 = vmul.f32 %v4470, %v1191
    %v4479 = vmul.f32 %v4473, %v1191
    %v4480 = vmul.f32 %v4476, %v1191
    %v4481 = vsub.f32 %v4459, %v4477
    %v4482 = vsub.f32 %v4460, %v4478
    %v4483 = vsub.f32 %v4461, %v4479
    %v4484 = vsub.f32 %v4462, %v4480
    %v4485 = vmul.f32 %v4481, %v4481
    %v4486 = vmul.f32 %v4482, %v4482
    %v4487 = vmul.f32 %v4483, %v4483
    %v4488 = vmul.f32 %v4484, %v4484
    %v4489 = vsel %vm283, %v4485, 0.0
    %4490 = vadd.xlane.f32.xlu0 %v4489
    %v4491 = vpop.xlane.xlu0 %4490
    %v4492 = vsel %vm283, %v4486, 0.0
    %4493 = vadd.xlane.f32.xlu0 %v4492
    %v4494 = vpop.xlane.xlu0 %4493
    %v4495 = vsel %vm283, %v4487, 0.0
    %4496 = vadd.xlane.f32.xlu0 %v4495
    %v4497 = vpop.xlane.xlu0 %4496
    %v4498 = vsel %vm283, %v4488, 0.0
    %4499 = vadd.xlane.f32.xlu0 %v4498
    %v4500 = vpop.xlane.xlu0 %4499
    %v4501 = vmul.f32 %v4491, %v1191
    %v4502 = vmul.f32 %v4494, %v1191
    %v4503 = vmul.f32 %v4497, %v1191
    %v4504 = vmul.f32 %v4500, %v1191
    %v4505 = vadd.f32 %v4501, 1e-05
    %v4506 = vadd.f32 %v4502, 1e-05
    %v4507 = vadd.f32 %v4503, 1e-05
    %v4508 = vadd.f32 %v4504, 1e-05
    %v4509 = vrsqrt.pop %v4505
    %v4510 = vrsqrt.pop %v4506
    %v4511 = vrsqrt.pop %v4507
    %v4512 = vrsqrt.pop %v4508
    %v4513 = vmul.f32 %v4481, %v4509
    %v4514 = vmul.f32 %v4482, %v4510
    %v4515 = vmul.f32 %v4483, %v4511
    %v4516 = vmul.f32 %v4484, %v4512
    %v4517 = vlaneseq
    %v4518 = vshrl.u32 %v4517, 7
    %v4519 = vsub.s32 0, %v4518
    %v4520 = vrot.slane %v4463, %v4519
    %v4521 = vmul.f32 %v4513, %v4520
    %v4522 = vmul.f32 %v4514, %v4520
    %v4523 = vmul.f32 %v4515, %v4520
    %v4524 = vmul.f32 %v4516, %v4520
    %v4525 = vlaneseq
    %v4526 = vshrl.u32 %v4525, 7
    %v4527 = vsub.s32 0, %v4526
    %v4528 = vrot.slane %v4464, %v4527
    %v4529 = vadd.f32 %v4521, %v4528
    %v4530 = vadd.f32 %v4522, %v4528
    %v4531 = vadd.f32 %v4523, %v4528
    %v4532 = vadd.f32 %v4524, %v4528
    %v4533 = vpack.c.bf16 %v4530, %v4529
    %v4534 = vpack.c.bf16 %v4532, %v4531
    %s4535 = scalar_lea.vmem %s4, 256
    %v4536 = vld [vmem:[%s4535] sm:$0xff]
    %v4537 = vld [vmem:[%s4535 + $0x8] sm:$0xff]
    %v4538 = vld [vmem:[%s4535 + $0x10] sm:$0xff]
    %v4539 = vld [vmem:[%s4535 + $0x18] sm:$0xff]
    %v4540 = vld [vmem:[%s4535 + $0x20] sm:$0xff]
    %v4541 = vld [vmem:[%s4535 + $0x28] sm:$0xff]
    %v4542 = vld [vmem:[%s4535 + $0x30] sm:$0xff]
    %v4543 = vld [vmem:[%s4535 + $0x38] sm:$0xff]
    %v4544 = vld [vmem:[%s4535 + $0x40] sm:$0xff]
    %v4545 = vld [vmem:[%s4535 + $0x48] sm:$0xff]
    %v4546 = vld [vmem:[%s4535 + $0x50] sm:$0xff]
    %v4547 = vld [vmem:[%s4535 + $0x58] sm:$0xff]
    %v4548 = vld [vmem:[%s4535 + $0x60] sm:$0xff]
    %v4549 = vld [vmem:[%s4535 + $0x68] sm:$0xff]
    %v4550 = vld [vmem:[%s4535 + $0x70] sm:$0xff]
    %v4551 = vld [vmem:[%s4535 + $0x78] sm:$0xff]
    %v4552 = vld [vmem:[%s4535 + $0x80] sm:$0xff]
    %v4553 = vld [vmem:[%s4535 + $0x88] sm:$0xff]
    %v4554 = vld [vmem:[%s4535 + $0x90] sm:$0xff]
    %v4555 = vld [vmem:[%s4535 + $0x98] sm:$0xff]
    %v4556 = vld [vmem:[%s4535 + $0xa0] sm:$0xff]
    %v4557 = vld [vmem:[%s4535 + $0xa8] sm:$0xff]
    %v4558 = vld [vmem:[%s4535 + $0xb0] sm:$0xff]
    %v4559 = vld [vmem:[%s4535 + $0xb8] sm:$0xff]
    %v4560 = vld [vmem:[%s4535 + $0xc0] sm:$0xff]
    %v4561 = vld [vmem:[%s4535 + $0xc8] sm:$0xff]
    %v4562 = vld [vmem:[%s4535 + $0xd0] sm:$0xff]
    %v4563 = vld [vmem:[%s4535 + $0xd8] sm:$0xff]
    %v4564 = vld [vmem:[%s4535 + $0xe0] sm:$0xff]
    %v4565 = vld [vmem:[%s4535 + $0xe8] sm:$0xff]
    %v4566 = vld [vmem:[%s4535 + $0xf0] sm:$0xff]
    %v4567 = vld [vmem:[%s4535 + $0xf8] sm:$0xff]
    %s4568 = scalar_lea.vmem %s3, 1
    %v4569 = vld [vmem:[%s4568] ss:$2 sm:$0xff]
    %s4570 = scalar_lea.vmem %s3, 17
    %v4571 = vld [vmem:[%s4570] ss:$2 sm:$0xff]
    %v4574 = vlaneseq
    %v4575 = vshrl.u32 %v4574, 7
    %v4576 = vsub.s32 0, %v4575
    %v4577 = vrot.slane %v4569, %v4576
    %v4578 = vlaneseq
    %v4579 = vshrl.u32 %v4578, 7
    %v4580 = vsub.s32 1, %v4579
    %v4581 = vrot.slane %v4569, %v4580
    %v4582 = vlaneseq
    %v4583 = vshrl.u32 %v4582, 7
    %v4584 = vsub.s32 2, %v4583
    %v4585 = vrot.slane %v4569, %v4584
    %v4586 = vlaneseq
    %v4587 = vshrl.u32 %v4586, 7
    %v4588 = vsub.s32 3, %v4587
    %v4589 = vrot.slane %v4569, %v4588
    %v4590 = vlaneseq
    %v4591 = vshrl.u32 %v4590, 7
    %v4592 = vsub.s32 4, %v4591
    %v4593 = vrot.slane %v4569, %v4592
    %v4594 = vlaneseq
    %v4595 = vshrl.u32 %v4594, 7
    %v4596 = vsub.s32 5, %v4595
    %v4597 = vrot.slane %v4569, %v4596
    %v4598 = vlaneseq
    %v4599 = vshrl.u32 %v4598, 7
    %v4600 = vsub.s32 6, %v4599
    %v4601 = vrot.slane %v4569, %v4600
    %v4602 = vlaneseq
    %v4603 = vshrl.u32 %v4602, 7
    %v4604 = vsub.s32 7, %v4603
    %v4605 = vrot.slane %v4569, %v4604
    %v4606 = vlaneseq
    %v4607 = vshrl.u32 %v4606, 7
    %v4608 = vsub.s32 0, %v4607
    %v4609 = vrot.slane %v4571, %v4608
    %v4610 = vlaneseq
    %v4611 = vshrl.u32 %v4610, 7
    %v4612 = vsub.s32 1, %v4611
    %v4613 = vrot.slane %v4571, %v4612
    %v4614 = vlaneseq
    %v4615 = vshrl.u32 %v4614, 7
    %v4616 = vsub.s32 2, %v4615
    %v4617 = vrot.slane %v4571, %v4616
    %v4618 = vlaneseq
    %v4619 = vshrl.u32 %v4618, 7
    %v4620 = vsub.s32 3, %v4619
    %v4621 = vrot.slane %v4571, %v4620
    %v4622 = vlaneseq
    %v4623 = vshrl.u32 %v4622, 7
    %v4624 = vsub.s32 4, %v4623
    %v4625 = vrot.slane %v4571, %v4624
    %v4626 = vlaneseq
    %v4627 = vshrl.u32 %v4626, 7
    %v4628 = vsub.s32 5, %v4627
    %v4629 = vrot.slane %v4571, %v4628
    %v4630 = vlaneseq
    %v4631 = vshrl.u32 %v4630, 7
    %v4632 = vsub.s32 6, %v4631
    %v4633 = vrot.slane %v4571, %v4632
    %v4634 = vlaneseq
    %v4635 = vshrl.u32 %v4634, 7
    %v4636 = vsub.s32 7, %v4635
    %v4637 = vrot.slane %v4571, %v4636
    %v4686 = vunpack.c.l.b16 %v4536
    %v4687 = vunpack.c.h.b16 %v4536
    %v4688 = vunpack.c.l.b16 %v4537
    %v4689 = vunpack.c.h.b16 %v4537
    %v4690 = vunpack.c.l.b16 %v4538
    %v4691 = vunpack.c.h.b16 %v4538
    %v4692 = vunpack.c.l.b16 %v4539
    %v4693 = vunpack.c.h.b16 %v4539
    %v4694 = vunpack.c.l.b16 %v4540
    %v4695 = vunpack.c.h.b16 %v4540
    %v4696 = vunpack.c.l.b16 %v4541
    %v4697 = vunpack.c.h.b16 %v4541
    %v4698 = vunpack.c.l.b16 %v4542
    %v4699 = vunpack.c.h.b16 %v4542
    %v4700 = vunpack.c.l.b16 %v4543
    %v4701 = vunpack.c.h.b16 %v4543
    %v4702 = vunpack.c.l.b16 %v4544
    %v4703 = vunpack.c.h.b16 %v4544
    %v4704 = vunpack.c.l.b16 %v4545
    %v4705 = vunpack.c.h.b16 %v4545
    %v4706 = vunpack.c.l.b16 %v4546
    %v4707 = vunpack.c.h.b16 %v4546
    %v4708 = vunpack.c.l.b16 %v4547
    %v4709 = vunpack.c.h.b16 %v4547
    %v4710 = vunpack.c.l.b16 %v4548
    %v4711 = vunpack.c.h.b16 %v4548
    %v4712 = vunpack.c.l.b16 %v4549
    %v4713 = vunpack.c.h.b16 %v4549
    %v4714 = vunpack.c.l.b16 %v4550
    %v4715 = vunpack.c.h.b16 %v4550
    %v4716 = vunpack.c.l.b16 %v4551
    %v4717 = vunpack.c.h.b16 %v4551
    %v4718 = vunpack.c.l.b16 %v4552
    %v4719 = vunpack.c.h.b16 %v4552
    %v4720 = vunpack.c.l.b16 %v4553
    %v4721 = vunpack.c.h.b16 %v4553
    %v4722 = vunpack.c.l.b16 %v4554
    %v4723 = vunpack.c.h.b16 %v4554
    %v4724 = vunpack.c.l.b16 %v4555
    %v4725 = vunpack.c.h.b16 %v4555
    %v4726 = vunpack.c.l.b16 %v4556
    %v4727 = vunpack.c.h.b16 %v4556
    %v4728 = vunpack.c.l.b16 %v4557
    %v4729 = vunpack.c.h.b16 %v4557
    %v4730 = vunpack.c.l.b16 %v4558
    %v4731 = vunpack.c.h.b16 %v4558
    %v4732 = vunpack.c.l.b16 %v4559
    %v4733 = vunpack.c.h.b16 %v4559
    %v4734 = vunpack.c.l.b16 %v4560
    %v4735 = vunpack.c.h.b16 %v4560
    %v4736 = vunpack.c.l.b16 %v4561
    %v4737 = vunpack.c.h.b16 %v4561
    %v4738 = vunpack.c.l.b16 %v4562
    %v4739 = vunpack.c.h.b16 %v4562
    %v4740 = vunpack.c.l.b16 %v4563
    %v4741 = vunpack.c.h.b16 %v4563
    %v4742 = vunpack.c.l.b16 %v4564
    %v4743 = vunpack.c.h.b16 %v4564
    %v4744 = vunpack.c.l.b16 %v4565
    %v4745 = vunpack.c.h.b16 %v4565
    %v4746 = vunpack.c.l.b16 %v4566
    %v4747 = vunpack.c.h.b16 %v4566
    %v4748 = vunpack.c.l.b16 %v4567
    %v4749 = vunpack.c.h.b16 %v4567
    %v4750 = vpack.c.b16 %v4702, %v4686
    %v4751 = vpack.c.b16 %v4703, %v4687
    %v4752 = vpack.c.b16 %v4704, %v4688
    %v4753 = vpack.c.b16 %v4705, %v4689
    %v4754 = vpack.c.b16 %v4706, %v4690
    %v4755 = vpack.c.b16 %v4707, %v4691
    %v4756 = vpack.c.b16 %v4708, %v4692
    %v4757 = vpack.c.b16 %v4709, %v4693
    %v4758 = vpack.c.b16 %v4710, %v4694
    %v4759 = vpack.c.b16 %v4711, %v4695
    %v4760 = vpack.c.b16 %v4712, %v4696
    %v4761 = vpack.c.b16 %v4713, %v4697
    %v4762 = vpack.c.b16 %v4714, %v4698
    %v4763 = vpack.c.b16 %v4715, %v4699
    %v4764 = vpack.c.b16 %v4716, %v4700
    %v4765 = vpack.c.b16 %v4717, %v4701
    %v4766 = vpack.c.b16 %v4734, %v4718
    %v4767 = vpack.c.b16 %v4735, %v4719
    %v4768 = vpack.c.b16 %v4736, %v4720
    %v4769 = vpack.c.b16 %v4737, %v4721
    %v4770 = vpack.c.b16 %v4738, %v4722
    %v4771 = vpack.c.b16 %v4739, %v4723
    %v4772 = vpack.c.b16 %v4740, %v4724
    %v4773 = vpack.c.b16 %v4741, %v4725
    %v4774 = vpack.c.b16 %v4742, %v4726
    %v4775 = vpack.c.b16 %v4743, %v4727
    %v4776 = vpack.c.b16 %v4744, %v4728
    %v4777 = vpack.c.b16 %v4745, %v4729
    %v4778 = vpack.c.b16 %v4746, %v4730
    %v4779 = vpack.c.b16 %v4747, %v4731
    %v4780 = vpack.c.b16 %v4748, %v4732
    %v4781 = vpack.c.b16 %v4749, %v4733
    %v4815 = vsel %vm283, %v4533, 0
    %v4818 = vsel %vm283, %v4534, 0
    %4820 = vmatprep.subr.bf16.mxu0 %v4751
    %4821 = vmatpush1.bf16.msra.mxu0 %v4750
    %4822 = vmatprep.subr.bf16.mxu0 %v4767
    %4823 = vmatpush1.bf16.msra.mxu0 %v4766
    %4824 = vmatprep.subr.bf16.mxu0 0
    %4825 = vmatpush1.bf16.msra.mxu0 0
    %4826 = vmatprep.subr.bf16.mxu0 0
    %4827 = vmatpush1.bf16.msra.mxu0 0
    %4828 = vmatprep.subr.bf16.mxu0 0
    %4829 = vmatpush1.bf16.msra.mxu0 0
    %4830 = vmatprep.subr.bf16.mxu0 0
    %4831 = vmatpush1.bf16.msra.mxu0 0
    %4832 = vmatprep.subr.bf16.mxu0 0
    %4833 = vmatpush1.bf16.msra.mxu0 0
    %4834 = vmatprep.subr.bf16.mxu0 0
    %4835 = vmatpush1.bf16.msra.mxu0 0
    %4836 = vmatprep.subr.bf16.mxu0 0
    %4837 = vmatpush1.bf16.msra.mxu0 0
    %4838 = vmatprep.subr.bf16.mxu0 0
    %4839 = vmatpush1.bf16.msra.mxu0 0
    %4840 = vmatprep.subr.bf16.mxu0 0
    %4841 = vmatpush1.bf16.msra.mxu0 0
    %4842 = vmatprep.subr.bf16.mxu0 0
    %4843 = vmatpush1.bf16.msra.mxu0 0
    %4844 = vmatprep.subr.bf16.mxu0 0
    %4845 = vmatpush1.bf16.msra.mxu0 0
    %4846 = vmatprep.subr.bf16.mxu0 0
    %4847 = vmatpush1.bf16.msra.mxu0 0
    %4848 = vmatprep.subr.bf16.mxu0 0
    %4849 = vmatpush1.bf16.msra.mxu0 0
    %4850 = vmatprep.subr.bf16.mxu0 0
    %4851 = vmatpush1.bf16.msra.mxu0 0
    %4852 = vmatprep.mubr.bf16.mxu0 0
    %4853 = vmatmul.mubr.bf16.gmra.mrb[0].mxu0 %v4815
    %v4854 = vpop.f32.mrb[0].mxu0
    %v4855 = vadd.f32 %v4577, %v4854
    %v4856 = vpop.f32.mrb[0].mxu0
    %v4857 = vadd.f32 %v4581, %v4856
    %v4858 = vpop.f32.mrb[0].mxu0
    %v4859 = vadd.f32 %v4577, %v4858
    %v4860 = vpop.f32.mrb[0].mxu0
    %v4861 = vadd.f32 %v4581, %v4860
    %4862 = vmatprep.mubr.bf16.mxu0 0
    %4863 = vmatmul.mubr.bf16.gmra.mrb[0].mxu0 %v4818
    %v4864 = vpop.f32.mrb[0].mxu0
    %v4865 = vadd.f32 %v4577, %v4864
    %v4866 = vpop.f32.mrb[0].mxu0
    %v4867 = vadd.f32 %v4581, %v4866
    %v4868 = vpop.f32.mrb[0].mxu0
    %v4869 = vadd.f32 %v4577, %v4868
    %v4870 = vpop.f32.mrb[0].mxu0
    %v4871 = vadd.f32 %v4581, %v4870
    %4872 = vdwg.mxu0
    %4873 = vmatprep.subr.bf16.mxu0 %v4753
    %4874 = vmatpush1.bf16.msra.mxu0 %v4752
    %4875 = vmatprep.subr.bf16.mxu0 %v4769
    %4876 = vmatpush1.bf16.msra.mxu0 %v4768
    %4877 = vmatprep.subr.bf16.mxu0 0
    %4878 = vmatpush1.bf16.msra.mxu0 0
    %4879 = vmatprep.subr.bf16.mxu0 0
    %4880 = vmatpush1.bf16.msra.mxu0 0
    %4881 = vmatprep.subr.bf16.mxu0 0
    %4882 = vmatpush1.bf16.msra.mxu0 0
    %4883 = vmatprep.subr.bf16.mxu0 0
    %4884 = vmatpush1.bf16.msra.mxu0 0
    %4885 = vmatprep.subr.bf16.mxu0 0
    %4886 = vmatpush1.bf16.msra.mxu0 0
    %4887 = vmatprep.subr.bf16.mxu0 0
    %4888 = vmatpush1.bf16.msra.mxu0 0
    %4889 = vmatprep.subr.bf16.mxu0 0
    %4890 = vmatpush1.bf16.msra.mxu0 0
    %4891 = vmatprep.subr.bf16.mxu0 0
    %4892 = vmatpush1.bf16.msra.mxu0 0
    %4893 = vmatprep.subr.bf16.mxu0 0
    %4894 = vmatpush1.bf16.msra.mxu0 0
    %4895 = vmatprep.subr.bf16.mxu0 0
    %4896 = vmatpush1.bf16.msra.mxu0 0
    %4897 = vmatprep.subr.bf16.mxu0 0
    %4898 = vmatpush1.bf16.msra.mxu0 0
    %4899 = vmatprep.subr.bf16.mxu0 0
    %4900 = vmatpush1.bf16.msra.mxu0 0
    %4901 = vmatprep.subr.bf16.mxu0 0
    %4902 = vmatpush1.bf16.msra.mxu0 0
    %4903 = vmatprep.subr.bf16.mxu0 0
    %4904 = vmatpush1.bf16.msra.mxu0 0
    %4905 = vmatprep.mubr.bf16.mxu0 0
    %4906 = vmatmul.mubr.bf16.gmra.mrb[0].mxu0 %v4815
    %v4907 = vpop.f32.mrb[0].mxu0
    %v4908 = vadd.f32 %v4585, %v4907
    %v4909 = vpop.f32.mrb[0].mxu0
    %v4910 = vadd.f32 %v4589, %v4909
    %v4911 = vpop.f32.mrb[0].mxu0
    %v4912 = vadd.f32 %v4585, %v4911
    %v4913 = vpop.f32.mrb[0].mxu0
    %v4914 = vadd.f32 %v4589, %v4913
    %4915 = vmatprep.mubr.bf16.mxu0 0
    %4916 = vmatmul.mubr.bf16.gmra.mrb[0].mxu0 %v4818
    %v4917 = vpop.f32.mrb[0].mxu0
    %v4918 = vadd.f32 %v4585, %v4917
    %v4919 = vpop.f32.mrb[0].mxu0
    %v4920 = vadd.f32 %v4589, %v4919
    %v4921 = vpop.f32.mrb[0].mxu0
    %v4922 = vadd.f32 %v4585, %v4921
    %v4923 = vpop.f32.mrb[0].mxu0
    %v4924 = vadd.f32 %v4589, %v4923
    %4925 = vdwg.mxu0
    %4926 = vmatprep.subr.bf16.mxu0 %v4755
    %4927 = vmatpush1.bf16.msra.mxu0 %v4754
    %4928 = vmatprep.subr.bf16.mxu0 %v4771
    %4929 = vmatpush1.bf16.msra.mxu0 %v4770
    %4930 = vmatprep.subr.bf16.mxu0 0
    %4931 = vmatpush1.bf16.msra.mxu0 0
    %4932 = vmatprep.subr.bf16.mxu0 0
    %4933 = vmatpush1.bf16.msra.mxu0 0
    %4934 = vmatprep.subr.bf16.mxu0 0
    %4935 = vmatpush1.bf16.msra.mxu0 0
    %4936 = vmatprep.subr.bf16.mxu0 0
    %4937 = vmatpush1.bf16.msra.mxu0 0
    %4938 = vmatprep.subr.bf16.mxu0 0
    %4939 = vmatpush1.bf16.msra.mxu0 0
    %4940 = vmatprep.subr.bf16.mxu0 0
    %4941 = vmatpush1.bf16.msra.mxu0 0
    %4942 = vmatprep.subr.bf16.mxu0 0
    %4943 = vmatpush1.bf16.msra.mxu0 0
    %4944 = vmatprep.subr.bf16.mxu0 0
    %4945 = vmatpush1.bf16.msra.mxu0 0
    %4946 = vmatprep.subr.bf16.mxu0 0
    %4947 = vmatpush1.bf16.msra.mxu0 0
    %4948 = vmatprep.subr.bf16.mxu0 0
    %4949 = vmatpush1.bf16.msra.mxu0 0
    %4950 = vmatprep.subr.bf16.mxu0 0
    %4951 = vmatpush1.bf16.msra.mxu0 0
    %4952 = vmatprep.subr.bf16.mxu0 0
    %4953 = vmatpush1.bf16.msra.mxu0 0
    %4954 = vmatprep.subr.bf16.mxu0 0
    %4955 = vmatpush1.bf16.msra.mxu0 0
    %4956 = vmatprep.subr.bf16.mxu0 0
    %4957 = vmatpush1.bf16.msra.mxu0 0
    %4958 = vmatprep.mubr.bf16.mxu0 0
    %4959 = vmatmul.mubr.bf16.gmra.mrb[0].mxu0 %v4815
    %v4960 = vpop.f32.mrb[0].mxu0
    %v4961 = vadd.f32 %v4593, %v4960
    %v4962 = vpop.f32.mrb[0].mxu0
    %v4963 = vadd.f32 %v4597, %v4962
    %v4964 = vpop.f32.mrb[0].mxu0
    %v4965 = vadd.f32 %v4593, %v4964
    %v4966 = vpop.f32.mrb[0].mxu0
    %v4967 = vadd.f32 %v4597, %v4966
    %4968 = vmatprep.mubr.bf16.mxu0 0
    %4969 = vmatmul.mubr.bf16.gmra.mrb[0].mxu0 %v4818
    %v4970 = vpop.f32.mrb[0].mxu0
    %v4971 = vadd.f32 %v4593, %v4970
    %v4972 = vpop.f32.mrb[0].mxu0
    %v4973 = vadd.f32 %v4597, %v4972
    %v4974 = vpop.f32.mrb[0].mxu0
    %v4975 = vadd.f32 %v4593, %v4974
    %v4976 = vpop.f32.mrb[0].mxu0
    %v4977 = vadd.f32 %v4597, %v4976
    %4978 = vdwg.mxu0
    %4979 = vmatprep.subr.bf16.mxu0 %v4757
    %4980 = vmatpush1.bf16.msra.mxu0 %v4756
    %4981 = vmatprep.subr.bf16.mxu0 %v4773
    %4982 = vmatpush1.bf16.msra.mxu0 %v4772
    %4983 = vmatprep.subr.bf16.mxu0 0
    %4984 = vmatpush1.bf16.msra.mxu0 0
    %4985 = vmatprep.subr.bf16.mxu0 0
    %4986 = vmatpush1.bf16.msra.mxu0 0
    %4987 = vmatprep.subr.bf16.mxu0 0
    %4988 = vmatpush1.bf16.msra.mxu0 0
    %4989 = vmatprep.subr.bf16.mxu0 0
    %4990 = vmatpush1.bf16.msra.mxu0 0
    %4991 = vmatprep.subr.bf16.mxu0 0
    %4992 = vmatpush1.bf16.msra.mxu0 0
    %4993 = vmatprep.subr.bf16.mxu0 0
    %4994 = vmatpush1.bf16.msra.mxu0 0
    %4995 = vmatprep.subr.bf16.mxu0 0
    %4996 = vmatpush1.bf16.msra.mxu0 0
    %4997 = vmatprep.subr.bf16.mxu0 0
    %4998 = vmatpush1.bf16.msra.mxu0 0
    %4999 = vmatprep.subr.bf16.mxu0 0
    %5000 = vmatpush1.bf16.msra.mxu0 0
    %5001 = vmatprep.subr.bf16.mxu0 0
    %5002 = vmatpush1.bf16.msra.mxu0 0
    %5003 = vmatprep.subr.bf16.mxu0 0
    %5004 = vmatpush1.bf16.msra.mxu0 0
    %5005 = vmatprep.subr.bf16.mxu0 0
    %5006 = vmatpush1.bf16.msra.mxu0 0
    %5007 = vmatprep.subr.bf16.mxu0 0
    %5008 = vmatpush1.bf16.msra.mxu0 0
    %5009 = vmatprep.subr.bf16.mxu0 0
    %5010 = vmatpush1.bf16.msra.mxu0 0
    %5011 = vmatprep.mubr.bf16.mxu0 0
    %5012 = vmatmul.mubr.bf16.gmra.mrb[0].mxu0 %v4815
    %v5013 = vpop.f32.mrb[0].mxu0
    %v5014 = vadd.f32 %v4601, %v5013
    %v5015 = vpop.f32.mrb[0].mxu0
    %v5016 = vadd.f32 %v4605, %v5015
    %v5017 = vpop.f32.mrb[0].mxu0
    %v5018 = vadd.f32 %v4601, %v5017
    %v5019 = vpop.f32.mrb[0].mxu0
    %v5020 = vadd.f32 %v4605, %v5019
    %5021 = vmatprep.mubr.bf16.mxu0 0
    %5022 = vmatmul.mubr.bf16.gmra.mrb[0].mxu0 %v4818
    %v5023 = vpop.f32.mrb[0].mxu0
    %v5024 = vadd.f32 %v4601, %v5023
    %v5025 = vpop.f32.mrb[0].mxu0
    %v5026 = vadd.f32 %v4605, %v5025
    %v5027 = vpop.f32.mrb[0].mxu0
    %v5028 = vadd.f32 %v4601, %v5027
    %v5029 = vpop.f32.mrb[0].mxu0
    %v5030 = vadd.f32 %v4605, %v5029
    %5031 = vdwg.mxu0
    %5032 = vmatprep.subr.bf16.mxu0 %v4759
    %5033 = vmatpush1.bf16.msra.mxu0 %v4758
    %5034 = vmatprep.subr.bf16.mxu0 %v4775
    %5035 = vmatpush1.bf16.msra.mxu0 %v4774
    %5036 = vmatprep.subr.bf16.mxu0 0
    %5037 = vmatpush1.bf16.msra.mxu0 0
    %5038 = vmatprep.subr.bf16.mxu0 0
    %5039 = vmatpush1.bf16.msra.mxu0 0
    %5040 = vmatprep.subr.bf16.mxu0 0
    %5041 = vmatpush1.bf16.msra.mxu0 0
    %5042 = vmatprep.subr.bf16.mxu0 0
    %5043 = vmatpush1.bf16.msra.mxu0 0
    %5044 = vmatprep.subr.bf16.mxu0 0
    %5045 = vmatpush1.bf16.msra.mxu0 0
    %5046 = vmatprep.subr.bf16.mxu0 0
    %5047 = vmatpush1.bf16.msra.mxu0 0
    %5048 = vmatprep.subr.bf16.mxu0 0
    %5049 = vmatpush1.bf16.msra.mxu0 0
    %5050 = vmatprep.subr.bf16.mxu0 0
    %5051 = vmatpush1.bf16.msra.mxu0 0
    %5052 = vmatprep.subr.bf16.mxu0 0
    %5053 = vmatpush1.bf16.msra.mxu0 0
    %5054 = vmatprep.subr.bf16.mxu0 0
    %5055 = vmatpush1.bf16.msra.mxu0 0
    %5056 = vmatprep.subr.bf16.mxu0 0
    %5057 = vmatpush1.bf16.msra.mxu0 0
    %5058 = vmatprep.subr.bf16.mxu0 0
    %5059 = vmatpush1.bf16.msra.mxu0 0
    %5060 = vmatprep.subr.bf16.mxu0 0
    %5061 = vmatpush1.bf16.msra.mxu0 0
    %5062 = vmatprep.subr.bf16.mxu0 0
    %5063 = vmatpush1.bf16.msra.mxu0 0
    %5064 = vmatprep.mubr.bf16.mxu0 0
    %5065 = vmatmul.mubr.bf16.gmra.mrb[0].mxu0 %v4815
    %v5066 = vpop.f32.mrb[0].mxu0
    %v5067 = vadd.f32 %v4609, %v5066
    %v5068 = vpop.f32.mrb[0].mxu0
    %v5069 = vadd.f32 %v4613, %v5068
    %v5070 = vpop.f32.mrb[0].mxu0
    %v5071 = vadd.f32 %v4609, %v5070
    %v5072 = vpop.f32.mrb[0].mxu0
    %v5073 = vadd.f32 %v4613, %v5072
    %5074 = vmatprep.mubr.bf16.mxu0 0
    %5075 = vmatmul.mubr.bf16.gmra.mrb[0].mxu0 %v4818
    %v5076 = vpop.f32.mrb[0].mxu0
    %v5077 = vadd.f32 %v4609, %v5076
    %v5078 = vpop.f32.mrb[0].mxu0
    %v5079 = vadd.f32 %v4613, %v5078
    %v5080 = vpop.f32.mrb[0].mxu0
    %v5081 = vadd.f32 %v4609, %v5080
    %v5082 = vpop.f32.mrb[0].mxu0
    %v5083 = vadd.f32 %v4613, %v5082
    %5084 = vdwg.mxu0
    %5085 = vmatprep.subr.bf16.mxu0 %v4761
    %5086 = vmatpush1.bf16.msra.mxu0 %v4760
    %5087 = vmatprep.subr.bf16.mxu0 %v4777
    %5088 = vmatpush1.bf16.msra.mxu0 %v4776
    %5089 = vmatprep.subr.bf16.mxu0 0
    %5090 = vmatpush1.bf16.msra.mxu0 0
    %5091 = vmatprep.subr.bf16.mxu0 0
    %5092 = vmatpush1.bf16.msra.mxu0 0
    %5093 = vmatprep.subr.bf16.mxu0 0
    %5094 = vmatpush1.bf16.msra.mxu0 0
    %5095 = vmatprep.subr.bf16.mxu0 0
    %5096 = vmatpush1.bf16.msra.mxu0 0
    %5097 = vmatprep.subr.bf16.mxu0 0
    %5098 = vmatpush1.bf16.msra.mxu0 0
    %5099 = vmatprep.subr.bf16.mxu0 0
    %5100 = vmatpush1.bf16.msra.mxu0 0
    %5101 = vmatprep.subr.bf16.mxu0 0
    %5102 = vmatpush1.bf16.msra.mxu0 0
    %5103 = vmatprep.subr.bf16.mxu0 0
    %5104 = vmatpush1.bf16.msra.mxu0 0
    %5105 = vmatprep.subr.bf16.mxu0 0
    %5106 = vmatpush1.bf16.msra.mxu0 0
    %5107 = vmatprep.subr.bf16.mxu0 0
    %5108 = vmatpush1.bf16.msra.mxu0 0
    %5109 = vmatprep.subr.bf16.mxu0 0
    %5110 = vmatpush1.bf16.msra.mxu0 0
    %5111 = vmatprep.subr.bf16.mxu0 0
    %5112 = vmatpush1.bf16.msra.mxu0 0
    %5113 = vmatprep.subr.bf16.mxu0 0
    %5114 = vmatpush1.bf16.msra.mxu0 0
    %5115 = vmatprep.subr.bf16.mxu0 0
    %5116 = vmatpush1.bf16.msra.mxu0 0
    %5117 = vmatprep.mubr.bf16.mxu0 0
    %5118 = vmatmul.mubr.bf16.gmra.mrb[0].mxu0 %v4815
    %v5119 = vpop.f32.mrb[0].mxu0
    %v5120 = vadd.f32 %v4617, %v5119
    %v5121 = vpop.f32.mrb[0].mxu0
    %v5122 = vadd.f32 %v4621, %v5121
    %v5123 = vpop.f32.mrb[0].mxu0
    %v5124 = vadd.f32 %v4617, %v5123
    %v5125 = vpop.f32.mrb[0].mxu0
    %v5126 = vadd.f32 %v4621, %v5125
    %5127 = vmatprep.mubr.bf16.mxu0 0
    %5128 = vmatmul.mubr.bf16.gmra.mrb[0].mxu0 %v4818
    %v5129 = vpop.f32.mrb[0].mxu0
    %v5130 = vadd.f32 %v4617, %v5129
    %v5131 = vpop.f32.mrb[0].mxu0
    %v5132 = vadd.f32 %v4621, %v5131
    %v5133 = vpop.f32.mrb[0].mxu0
    %v5134 = vadd.f32 %v4617, %v5133
    %v5135 = vpop.f32.mrb[0].mxu0
    %v5136 = vadd.f32 %v4621, %v5135
    %5137 = vdwg.mxu0
    %5138 = vmatprep.subr.bf16.mxu0 %v4763
    %5139 = vmatpush1.bf16.msra.mxu0 %v4762
    %5140 = vmatprep.subr.bf16.mxu0 %v4779
    %5141 = vmatpush1.bf16.msra.mxu0 %v4778
    %5142 = vmatprep.subr.bf16.mxu0 0
    %5143 = vmatpush1.bf16.msra.mxu0 0
    %5144 = vmatprep.subr.bf16.mxu0 0
    %5145 = vmatpush1.bf16.msra.mxu0 0
    %5146 = vmatprep.subr.bf16.mxu0 0
    %5147 = vmatpush1.bf16.msra.mxu0 0
    %5148 = vmatprep.subr.bf16.mxu0 0
    %5149 = vmatpush1.bf16.msra.mxu0 0
    %5150 = vmatprep.subr.bf16.mxu0 0
    %5151 = vmatpush1.bf16.msra.mxu0 0
    %5152 = vmatprep.subr.bf16.mxu0 0
    %5153 = vmatpush1.bf16.msra.mxu0 0
    %5154 = vmatprep.subr.bf16.mxu0 0
    %5155 = vmatpush1.bf16.msra.mxu0 0
    %5156 = vmatprep.subr.bf16.mxu0 0
    %5157 = vmatpush1.bf16.msra.mxu0 0
    %5158 = vmatprep.subr.bf16.mxu0 0
    %5159 = vmatpush1.bf16.msra.mxu0 0
    %5160 = vmatprep.subr.bf16.mxu0 0
    %5161 = vmatpush1.bf16.msra.mxu0 0
    %5162 = vmatprep.subr.bf16.mxu0 0
    %5163 = vmatpush1.bf16.msra.mxu0 0
    %5164 = vmatprep.subr.bf16.mxu0 0
    %5165 = vmatpush1.bf16.msra.mxu0 0
    %5166 = vmatprep.subr.bf16.mxu0 0
    %5167 = vmatpush1.bf16.msra.mxu0 0
    %5168 = vmatprep.subr.bf16.mxu0 0
    %5169 = vmatpush1.bf16.msra.mxu0 0
    %5170 = vmatprep.mubr.bf16.mxu0 0
    %5171 = vmatmul.mubr.bf16.gmra.mrb[0].mxu0 %v4815
    %v5172 = vpop.f32.mrb[0].mxu0
    %v5173 = vadd.f32 %v4625, %v5172
    %v5174 = vpop.f32.mrb[0].mxu0
    %v5175 = vadd.f32 %v4629, %v5174
    %v5176 = vpop.f32.mrb[0].mxu0
    %v5177 = vadd.f32 %v4625, %v5176
    %v5178 = vpop.f32.mrb[0].mxu0
    %v5179 = vadd.f32 %v4629, %v5178
    %5180 = vmatprep.mubr.bf16.mxu0 0
    %5181 = vmatmul.mubr.bf16.gmra.mrb[0].mxu0 %v4818
    %v5182 = vpop.f32.mrb[0].mxu0
    %v5183 = vadd.f32 %v4625, %v5182
    %v5184 = vpop.f32.mrb[0].mxu0
    %v5185 = vadd.f32 %v4629, %v5184
    %v5186 = vpop.f32.mrb[0].mxu0
    %v5187 = vadd.f32 %v4625, %v5186
    %v5188 = vpop.f32.mrb[0].mxu0
    %v5189 = vadd.f32 %v4629, %v5188
    %5190 = vdwg.mxu0
    %5191 = vmatprep.subr.bf16.mxu0 %v4765
    %5192 = vmatpush1.bf16.msra.mxu0 %v4764
    %5193 = vmatprep.subr.bf16.mxu0 %v4781
    %5194 = vmatpush1.bf16.msra.mxu0 %v4780
    %5195 = vmatprep.subr.bf16.mxu0 0
    %5196 = vmatpush1.bf16.msra.mxu0 0
    %5197 = vmatprep.subr.bf16.mxu0 0
    %5198 = vmatpush1.bf16.msra.mxu0 0
    %5199 = vmatprep.subr.bf16.mxu0 0
    %5200 = vmatpush1.bf16.msra.mxu0 0
    %5201 = vmatprep.subr.bf16.mxu0 0
    %5202 = vmatpush1.bf16.msra.mxu0 0
    %5203 = vmatprep.subr.bf16.mxu0 0
    %5204 = vmatpush1.bf16.msra.mxu0 0
    %5205 = vmatprep.subr.bf16.mxu0 0
    %5206 = vmatpush1.bf16.msra.mxu0 0
    %5207 = vmatprep.subr.bf16.mxu0 0
    %5208 = vmatpush1.bf16.msra.mxu0 0
    %5209 = vmatprep.subr.bf16.mxu0 0
    %5210 = vmatpush1.bf16.msra.mxu0 0
    %5211 = vmatprep.subr.bf16.mxu0 0
    %5212 = vmatpush1.bf16.msra.mxu0 0
    %5213 = vmatprep.subr.bf16.mxu0 0
    %5214 = vmatpush1.bf16.msra.mxu0 0
    %5215 = vmatprep.subr.bf16.mxu0 0
    %5216 = vmatpush1.bf16.msra.mxu0 0
    %5217 = vmatprep.subr.bf16.mxu0 0
    %5218 = vmatpush1.bf16.msra.mxu0 0
    %5219 = vmatprep.subr.bf16.mxu0 0
    %5220 = vmatpush1.bf16.msra.mxu0 0
    %5221 = vmatprep.subr.bf16.mxu0 0
    %5222 = vmatpush1.bf16.msra.mxu0 0
    %5223 = vmatprep.mubr.bf16.mxu0 0
    %5224 = vmatmul.mubr.bf16.gmra.mrb[0].mxu0 %v4815
    %v5225 = vpop.f32.mrb[0].mxu0
    %v5226 = vadd.f32 %v4633, %v5225
    %v5227 = vpop.f32.mrb[0].mxu0
    %v5228 = vadd.f32 %v4637, %v5227
    %v5229 = vpop.f32.mrb[0].mxu0
    %v5230 = vadd.f32 %v4633, %v5229
    %v5231 = vpop.f32.mrb[0].mxu0
    %v5232 = vadd.f32 %v4637, %v5231
    %5233 = vmatprep.mubr.bf16.mxu0 0
    %5234 = vmatmul.mubr.bf16.gmra.mrb[0].mxu0 %v4818
    %v5235 = vpop.f32.mrb[0].mxu0
    %v5236 = vadd.f32 %v4633, %v5235
    %v5237 = vpop.f32.mrb[0].mxu0
    %v5238 = vadd.f32 %v4637, %v5237
    %v5239 = vpop.f32.mrb[0].mxu0
    %v5240 = vadd.f32 %v4633, %v5239
    %v5241 = vpop.f32.mrb[0].mxu0
    %v5242 = vadd.f32 %v4637, %v5241
    %5243 = vdwg.mxu0
    %v5244 = vmax.f32 %v4855, 0.0
    %v5245 = vmax.f32 %v4857, 0.0
    %v5246 = vmax.f32 %v4908, 0.0
    %v5247 = vmax.f32 %v4910, 0.0
    %v5248 = vmax.f32 %v4961, 0.0
    %v5249 = vmax.f32 %v4963, 0.0
    %v5250 = vmax.f32 %v5014, 0.0
    %v5251 = vmax.f32 %v5016, 0.0
    %v5252 = vmax.f32 %v5067, 0.0
    %v5253 = vmax.f32 %v5069, 0.0
    %v5254 = vmax.f32 %v5120, 0.0
    %v5255 = vmax.f32 %v5122, 0.0
    %v5256 = vmax.f32 %v5173, 0.0
    %v5257 = vmax.f32 %v5175, 0.0
    %v5258 = vmax.f32 %v5226, 0.0
    %v5259 = vmax.f32 %v5228, 0.0
    %v5260 = vmax.f32 %v4859, 0.0
    %v5261 = vmax.f32 %v4861, 0.0
    %v5262 = vmax.f32 %v4912, 0.0
    %v5263 = vmax.f32 %v4914, 0.0
    %v5264 = vmax.f32 %v4965, 0.0
    %v5265 = vmax.f32 %v4967, 0.0
    %v5266 = vmax.f32 %v5018, 0.0
    %v5267 = vmax.f32 %v5020, 0.0
    %v5268 = vmax.f32 %v5071, 0.0
    %v5269 = vmax.f32 %v5073, 0.0
    %v5270 = vmax.f32 %v5124, 0.0
    %v5271 = vmax.f32 %v5126, 0.0
    %v5272 = vmax.f32 %v5177, 0.0
    %v5273 = vmax.f32 %v5179, 0.0
    %v5274 = vmax.f32 %v5230, 0.0
    %v5275 = vmax.f32 %v5232, 0.0
    %v5276 = vmax.f32 %v4865, 0.0
    %v5277 = vmax.f32 %v4867, 0.0
    %v5278 = vmax.f32 %v4918, 0.0
    %v5279 = vmax.f32 %v4920, 0.0
    %v5280 = vmax.f32 %v4971, 0.0
    %v5281 = vmax.f32 %v4973, 0.0
    %v5282 = vmax.f32 %v5024, 0.0
    %v5283 = vmax.f32 %v5026, 0.0
    %v5284 = vmax.f32 %v5077, 0.0
    %v5285 = vmax.f32 %v5079, 0.0
    %v5286 = vmax.f32 %v5130, 0.0
    %v5287 = vmax.f32 %v5132, 0.0
    %v5288 = vmax.f32 %v5183, 0.0
    %v5289 = vmax.f32 %v5185, 0.0
    %v5290 = vmax.f32 %v5236, 0.0
    %v5291 = vmax.f32 %v5238, 0.0
    %v5292 = vmax.f32 %v4869, 0.0
    %v5293 = vmax.f32 %v4871, 0.0
    %v5294 = vmax.f32 %v4922, 0.0
    %v5295 = vmax.f32 %v4924, 0.0
    %v5296 = vmax.f32 %v4975, 0.0
    %v5297 = vmax.f32 %v4977, 0.0
    %v5298 = vmax.f32 %v5028, 0.0
    %v5299 = vmax.f32 %v5030, 0.0
    %v5300 = vmax.f32 %v5081, 0.0
    %v5301 = vmax.f32 %v5083, 0.0
    %v5302 = vmax.f32 %v5134, 0.0
    %v5303 = vmax.f32 %v5136, 0.0
    %v5304 = vmax.f32 %v5187, 0.0
    %v5305 = vmax.f32 %v5189, 0.0
    %v5306 = vmax.f32 %v5240, 0.0
    %v5307 = vmax.f32 %v5242, 0.0
    %v5308 = vpack.c.bf16 %v5260, %v5244
    %v5309 = vpack.c.bf16 %v5261, %v5245
    %v5310 = vpack.c.bf16 %v5262, %v5246
    %v5311 = vpack.c.bf16 %v5263, %v5247
    %v5312 = vpack.c.bf16 %v5264, %v5248
    %v5313 = vpack.c.bf16 %v5265, %v5249
    %v5314 = vpack.c.bf16 %v5266, %v5250
    %v5315 = vpack.c.bf16 %v5267, %v5251
    %v5316 = vpack.c.bf16 %v5268, %v5252
    %v5317 = vpack.c.bf16 %v5269, %v5253
    %v5318 = vpack.c.bf16 %v5270, %v5254
    %v5319 = vpack.c.bf16 %v5271, %v5255
    %v5320 = vpack.c.bf16 %v5272, %v5256
    %v5321 = vpack.c.bf16 %v5273, %v5257
    %v5322 = vpack.c.bf16 %v5274, %v5258
    %v5323 = vpack.c.bf16 %v5275, %v5259
    %v5324 = vpack.c.bf16 %v5292, %v5276
    %v5325 = vpack.c.bf16 %v5293, %v5277
    %v5326 = vpack.c.bf16 %v5294, %v5278
    %v5327 = vpack.c.bf16 %v5295, %v5279
    %v5328 = vpack.c.bf16 %v5296, %v5280
    %v5329 = vpack.c.bf16 %v5297, %v5281
    %v5330 = vpack.c.bf16 %v5298, %v5282
    %v5331 = vpack.c.bf16 %v5299, %v5283
    %v5332 = vpack.c.bf16 %v5300, %v5284
    %v5333 = vpack.c.bf16 %v5301, %v5285
    %v5334 = vpack.c.bf16 %v5302, %v5286
    %v5335 = vpack.c.bf16 %v5303, %v5287
    %v5336 = vpack.c.bf16 %v5304, %v5288
    %v5337 = vpack.c.bf16 %v5305, %v5289
    %v5338 = vpack.c.bf16 %v5306, %v5290
    %v5339 = vpack.c.bf16 %v5307, %v5291
    %s5340 = scalar_lea.vmem %s5, 1024
    %v5341 = vld [vmem:[%s5340] sm:$0xf]
    %v5342 = vld [vmem:[%s5340 + $0x4] sm:$0xf]
    %v5343 = vld [vmem:[%s5340 + $0x8] sm:$0xf]
    %v5344 = vld [vmem:[%s5340 + $0xc] sm:$0xf]
    %v5345 = vld [vmem:[%s5340 + $0x10] sm:$0xf]
    %v5346 = vld [vmem:[%s5340 + $0x14] sm:$0xf]
    %v5347 = vld [vmem:[%s5340 + $0x18] sm:$0xf]
    %v5348 = vld [vmem:[%s5340 + $0x1c] sm:$0xf]
    %v5349 = vld [vmem:[%s5340 + $0x20] sm:$0xf]
    %v5350 = vld [vmem:[%s5340 + $0x24] sm:$0xf]
    %v5351 = vld [vmem:[%s5340 + $0x28] sm:$0xf]
    %v5352 = vld [vmem:[%s5340 + $0x2c] sm:$0xf]
    %v5353 = vld [vmem:[%s5340 + $0x30] sm:$0xf]
    %v5354 = vld [vmem:[%s5340 + $0x34] sm:$0xf]
    %v5355 = vld [vmem:[%s5340 + $0x38] sm:$0xf]
    %v5356 = vld [vmem:[%s5340 + $0x3c] sm:$0xf]
    %v5357 = vld [vmem:[%s5340 + $0x40] sm:$0xf]
    %v5358 = vld [vmem:[%s5340 + $0x44] sm:$0xf]
    %v5359 = vld [vmem:[%s5340 + $0x48] sm:$0xf]
    %v5360 = vld [vmem:[%s5340 + $0x4c] sm:$0xf]
    %v5361 = vld [vmem:[%s5340 + $0x50] sm:$0xf]
    %v5362 = vld [vmem:[%s5340 + $0x54] sm:$0xf]
    %v5363 = vld [vmem:[%s5340 + $0x58] sm:$0xf]
    %v5364 = vld [vmem:[%s5340 + $0x5c] sm:$0xf]
    %v5365 = vld [vmem:[%s5340 + $0x60] sm:$0xf]
    %v5366 = vld [vmem:[%s5340 + $0x64] sm:$0xf]
    %v5367 = vld [vmem:[%s5340 + $0x68] sm:$0xf]
    %v5368 = vld [vmem:[%s5340 + $0x6c] sm:$0xf]
    %v5369 = vld [vmem:[%s5340 + $0x70] sm:$0xf]
    %v5370 = vld [vmem:[%s5340 + $0x74] sm:$0xf]
    %v5371 = vld [vmem:[%s5340 + $0x78] sm:$0xf]
    %v5372 = vld [vmem:[%s5340 + $0x7c] sm:$0xf]
    %v5373 = vld [vmem:[%s5340 + $0x80] sm:$0xf]
    %v5374 = vld [vmem:[%s5340 + $0x84] sm:$0xf]
    %v5375 = vld [vmem:[%s5340 + $0x88] sm:$0xf]
    %v5376 = vld [vmem:[%s5340 + $0x8c] sm:$0xf]
    %v5377 = vld [vmem:[%s5340 + $0x90] sm:$0xf]
    %v5378 = vld [vmem:[%s5340 + $0x94] sm:$0xf]
    %v5379 = vld [vmem:[%s5340 + $0x98] sm:$0xf]
    %v5380 = vld [vmem:[%s5340 + $0x9c] sm:$0xf]
    %v5381 = vld [vmem:[%s5340 + $0xa0] sm:$0xf]
    %v5382 = vld [vmem:[%s5340 + $0xa4] sm:$0xf]
    %v5383 = vld [vmem:[%s5340 + $0xa8] sm:$0xf]
    %v5384 = vld [vmem:[%s5340 + $0xac] sm:$0xf]
    %v5385 = vld [vmem:[%s5340 + $0xb0] sm:$0xf]
    %v5386 = vld [vmem:[%s5340 + $0xb4] sm:$0xf]
    %v5387 = vld [vmem:[%s5340 + $0xb8] sm:$0xf]
    %v5388 = vld [vmem:[%s5340 + $0xbc] sm:$0xf]
    %v5389 = vld [vmem:[%s5340 + $0xc0] sm:$0xf]
    %v5390 = vld [vmem:[%s5340 + $0xc4] sm:$0xf]
    %v5391 = vld [vmem:[%s5340 + $0xc8] sm:$0xf]
    %v5392 = vld [vmem:[%s5340 + $0xcc] sm:$0xf]
    %v5393 = vld [vmem:[%s5340 + $0xd0] sm:$0xf]
    %v5394 = vld [vmem:[%s5340 + $0xd4] sm:$0xf]
    %v5395 = vld [vmem:[%s5340 + $0xd8] sm:$0xf]
    %v5396 = vld [vmem:[%s5340 + $0xdc] sm:$0xf]
    %v5397 = vld [vmem:[%s5340 + $0xe0] sm:$0xf]
    %v5398 = vld [vmem:[%s5340 + $0xe4] sm:$0xf]
    %v5399 = vld [vmem:[%s5340 + $0xe8] sm:$0xf]
    %v5400 = vld [vmem:[%s5340 + $0xec] sm:$0xf]
    %v5401 = vld [vmem:[%s5340 + $0xf0] sm:$0xf]
    %v5402 = vld [vmem:[%s5340 + $0xf4] sm:$0xf]
    %v5403 = vld [vmem:[%s5340 + $0xf8] sm:$0xf]
    %v5404 = vld [vmem:[%s5340 + $0xfc] sm:$0xf]
    %v5405 = vld [vmem:[%s5340 + $0x100] sm:$0xf]
    %v5406 = vld [vmem:[%s5340 + $0x104] sm:$0xf]
    %v5407 = vld [vmem:[%s5340 + $0x108] sm:$0xf]
    %v5408 = vld [vmem:[%s5340 + $0x10c] sm:$0xf]
    %v5409 = vld [vmem:[%s5340 + $0x110] sm:$0xf]
    %v5410 = vld [vmem:[%s5340 + $0x114] sm:$0xf]
    %v5411 = vld [vmem:[%s5340 + $0x118] sm:$0xf]
    %v5412 = vld [vmem:[%s5340 + $0x11c] sm:$0xf]
    %v5413 = vld [vmem:[%s5340 + $0x120] sm:$0xf]
    %v5414 = vld [vmem:[%s5340 + $0x124] sm:$0xf]
    %v5415 = vld [vmem:[%s5340 + $0x128] sm:$0xf]
    %v5416 = vld [vmem:[%s5340 + $0x12c] sm:$0xf]
    %v5417 = vld [vmem:[%s5340 + $0x130] sm:$0xf]
    %v5418 = vld [vmem:[%s5340 + $0x134] sm:$0xf]
    %v5419 = vld [vmem:[%s5340 + $0x138] sm:$0xf]
    %v5420 = vld [vmem:[%s5340 + $0x13c] sm:$0xf]
    %v5421 = vld [vmem:[%s5340 + $0x140] sm:$0xf]
    %v5422 = vld [vmem:[%s5340 + $0x144] sm:$0xf]
    %v5423 = vld [vmem:[%s5340 + $0x148] sm:$0xf]
    %v5424 = vld [vmem:[%s5340 + $0x14c] sm:$0xf]
    %v5425 = vld [vmem:[%s5340 + $0x150] sm:$0xf]
    %v5426 = vld [vmem:[%s5340 + $0x154] sm:$0xf]
    %v5427 = vld [vmem:[%s5340 + $0x158] sm:$0xf]
    %v5428 = vld [vmem:[%s5340 + $0x15c] sm:$0xf]
    %v5429 = vld [vmem:[%s5340 + $0x160] sm:$0xf]
    %v5430 = vld [vmem:[%s5340 + $0x164] sm:$0xf]
    %v5431 = vld [vmem:[%s5340 + $0x168] sm:$0xf]
    %v5432 = vld [vmem:[%s5340 + $0x16c] sm:$0xf]
    %v5433 = vld [vmem:[%s5340 + $0x170] sm:$0xf]
    %v5434 = vld [vmem:[%s5340 + $0x174] sm:$0xf]
    %v5435 = vld [vmem:[%s5340 + $0x178] sm:$0xf]
    %v5436 = vld [vmem:[%s5340 + $0x17c] sm:$0xf]
    %v5437 = vld [vmem:[%s5340 + $0x180] sm:$0xf]
    %v5438 = vld [vmem:[%s5340 + $0x184] sm:$0xf]
    %v5439 = vld [vmem:[%s5340 + $0x188] sm:$0xf]
    %v5440 = vld [vmem:[%s5340 + $0x18c] sm:$0xf]
    %v5441 = vld [vmem:[%s5340 + $0x190] sm:$0xf]
    %v5442 = vld [vmem:[%s5340 + $0x194] sm:$0xf]
    %v5443 = vld [vmem:[%s5340 + $0x198] sm:$0xf]
    %v5444 = vld [vmem:[%s5340 + $0x19c] sm:$0xf]
    %v5445 = vld [vmem:[%s5340 + $0x1a0] sm:$0xf]
    %v5446 = vld [vmem:[%s5340 + $0x1a4] sm:$0xf]
    %v5447 = vld [vmem:[%s5340 + $0x1a8] sm:$0xf]
    %v5448 = vld [vmem:[%s5340 + $0x1ac] sm:$0xf]
    %v5449 = vld [vmem:[%s5340 + $0x1b0] sm:$0xf]
    %v5450 = vld [vmem:[%s5340 + $0x1b4] sm:$0xf]
    %v5451 = vld [vmem:[%s5340 + $0x1b8] sm:$0xf]
    %v5452 = vld [vmem:[%s5340 + $0x1bc] sm:$0xf]
    %v5453 = vld [vmem:[%s5340 + $0x1c0] sm:$0xf]
    %v5454 = vld [vmem:[%s5340 + $0x1c4] sm:$0xf]
    %v5455 = vld [vmem:[%s5340 + $0x1c8] sm:$0xf]
    %v5456 = vld [vmem:[%s5340 + $0x1cc] sm:$0xf]
    %v5457 = vld [vmem:[%s5340 + $0x1d0] sm:$0xf]
    %v5458 = vld [vmem:[%s5340 + $0x1d4] sm:$0xf]
    %v5459 = vld [vmem:[%s5340 + $0x1d8] sm:$0xf]
    %v5460 = vld [vmem:[%s5340 + $0x1dc] sm:$0xf]
    %v5461 = vld [vmem:[%s5340 + $0x1e0] sm:$0xf]
    %v5462 = vld [vmem:[%s5340 + $0x1e4] sm:$0xf]
    %v5463 = vld [vmem:[%s5340 + $0x1e8] sm:$0xf]
    %v5464 = vld [vmem:[%s5340 + $0x1ec] sm:$0xf]
    %v5465 = vld [vmem:[%s5340 + $0x1f0] sm:$0xf]
    %v5466 = vld [vmem:[%s5340 + $0x1f4] sm:$0xf]
    %v5467 = vld [vmem:[%s5340 + $0x1f8] sm:$0xf]
    %v5468 = vld [vmem:[%s5340 + $0x1fc] sm:$0xf]
    %v5469 = vld [vmem:[%s5340 + $0x200] sm:$0xf]
    %v5470 = vld [vmem:[%s5340 + $0x204] sm:$0xf]
    %v5471 = vld [vmem:[%s5340 + $0x208] sm:$0xf]
    %v5472 = vld [vmem:[%s5340 + $0x20c] sm:$0xf]
    %v5473 = vld [vmem:[%s5340 + $0x210] sm:$0xf]
    %v5474 = vld [vmem:[%s5340 + $0x214] sm:$0xf]
    %v5475 = vld [vmem:[%s5340 + $0x218] sm:$0xf]
    %v5476 = vld [vmem:[%s5340 + $0x21c] sm:$0xf]
    %v5477 = vld [vmem:[%s5340 + $0x220] sm:$0xf]
    %v5478 = vld [vmem:[%s5340 + $0x224] sm:$0xf]
    %v5479 = vld [vmem:[%s5340 + $0x228] sm:$0xf]
    %v5480 = vld [vmem:[%s5340 + $0x22c] sm:$0xf]
    %v5481 = vld [vmem:[%s5340 + $0x230] sm:$0xf]
    %v5482 = vld [vmem:[%s5340 + $0x234] sm:$0xf]
    %v5483 = vld [vmem:[%s5340 + $0x238] sm:$0xf]
    %v5484 = vld [vmem:[%s5340 + $0x23c] sm:$0xf]
    %v5485 = vld [vmem:[%s5340 + $0x240] sm:$0xf]
    %v5486 = vld [vmem:[%s5340 + $0x244] sm:$0xf]
    %v5487 = vld [vmem:[%s5340 + $0x248] sm:$0xf]
    %v5488 = vld [vmem:[%s5340 + $0x24c] sm:$0xf]
    %v5489 = vld [vmem:[%s5340 + $0x250] sm:$0xf]
    %v5490 = vld [vmem:[%s5340 + $0x254] sm:$0xf]
    %v5491 = vld [vmem:[%s5340 + $0x258] sm:$0xf]
    %v5492 = vld [vmem:[%s5340 + $0x25c] sm:$0xf]
    %v5493 = vld [vmem:[%s5340 + $0x260] sm:$0xf]
    %v5494 = vld [vmem:[%s5340 + $0x264] sm:$0xf]
    %v5495 = vld [vmem:[%s5340 + $0x268] sm:$0xf]
    %v5496 = vld [vmem:[%s5340 + $0x26c] sm:$0xf]
    %v5497 = vld [vmem:[%s5340 + $0x270] sm:$0xf]
    %v5498 = vld [vmem:[%s5340 + $0x274] sm:$0xf]
    %v5499 = vld [vmem:[%s5340 + $0x278] sm:$0xf]
    %v5500 = vld [vmem:[%s5340 + $0x27c] sm:$0xf]
    %v5501 = vld [vmem:[%s5340 + $0x280] sm:$0xf]
    %v5502 = vld [vmem:[%s5340 + $0x284] sm:$0xf]
    %v5503 = vld [vmem:[%s5340 + $0x288] sm:$0xf]
    %v5504 = vld [vmem:[%s5340 + $0x28c] sm:$0xf]
    %v5505 = vld [vmem:[%s5340 + $0x290] sm:$0xf]
    %v5506 = vld [vmem:[%s5340 + $0x294] sm:$0xf]
    %v5507 = vld [vmem:[%s5340 + $0x298] sm:$0xf]
    %v5508 = vld [vmem:[%s5340 + $0x29c] sm:$0xf]
    %v5509 = vld [vmem:[%s5340 + $0x2a0] sm:$0xf]
    %v5510 = vld [vmem:[%s5340 + $0x2a4] sm:$0xf]
    %v5511 = vld [vmem:[%s5340 + $0x2a8] sm:$0xf]
    %v5512 = vld [vmem:[%s5340 + $0x2ac] sm:$0xf]
    %v5513 = vld [vmem:[%s5340 + $0x2b0] sm:$0xf]
    %v5514 = vld [vmem:[%s5340 + $0x2b4] sm:$0xf]
    %v5515 = vld [vmem:[%s5340 + $0x2b8] sm:$0xf]
    %v5516 = vld [vmem:[%s5340 + $0x2bc] sm:$0xf]
    %v5517 = vld [vmem:[%s5340 + $0x2c0] sm:$0xf]
    %v5518 = vld [vmem:[%s5340 + $0x2c4] sm:$0xf]
    %v5519 = vld [vmem:[%s5340 + $0x2c8] sm:$0xf]
    %v5520 = vld [vmem:[%s5340 + $0x2cc] sm:$0xf]
    %v5521 = vld [vmem:[%s5340 + $0x2d0] sm:$0xf]
    %v5522 = vld [vmem:[%s5340 + $0x2d4] sm:$0xf]
    %v5523 = vld [vmem:[%s5340 + $0x2d8] sm:$0xf]
    %v5524 = vld [vmem:[%s5340 + $0x2dc] sm:$0xf]
    %v5525 = vld [vmem:[%s5340 + $0x2e0] sm:$0xf]
    %v5526 = vld [vmem:[%s5340 + $0x2e4] sm:$0xf]
    %v5527 = vld [vmem:[%s5340 + $0x2e8] sm:$0xf]
    %v5528 = vld [vmem:[%s5340 + $0x2ec] sm:$0xf]
    %v5529 = vld [vmem:[%s5340 + $0x2f0] sm:$0xf]
    %v5530 = vld [vmem:[%s5340 + $0x2f4] sm:$0xf]
    %v5531 = vld [vmem:[%s5340 + $0x2f8] sm:$0xf]
    %v5532 = vld [vmem:[%s5340 + $0x2fc] sm:$0xf]
    %v5533 = vld [vmem:[%s5340 + $0x300] sm:$0xf]
    %v5534 = vld [vmem:[%s5340 + $0x304] sm:$0xf]
    %v5535 = vld [vmem:[%s5340 + $0x308] sm:$0xf]
    %v5536 = vld [vmem:[%s5340 + $0x30c] sm:$0xf]
    %v5537 = vld [vmem:[%s5340 + $0x310] sm:$0xf]
    %v5538 = vld [vmem:[%s5340 + $0x314] sm:$0xf]
    %v5539 = vld [vmem:[%s5340 + $0x318] sm:$0xf]
    %v5540 = vld [vmem:[%s5340 + $0x31c] sm:$0xf]
    %v5541 = vld [vmem:[%s5340 + $0x320] sm:$0xf]
    %v5542 = vld [vmem:[%s5340 + $0x324] sm:$0xf]
    %v5543 = vld [vmem:[%s5340 + $0x328] sm:$0xf]
    %v5544 = vld [vmem:[%s5340 + $0x32c] sm:$0xf]
    %v5545 = vld [vmem:[%s5340 + $0x330] sm:$0xf]
    %v5546 = vld [vmem:[%s5340 + $0x334] sm:$0xf]
    %v5547 = vld [vmem:[%s5340 + $0x338] sm:$0xf]
    %v5548 = vld [vmem:[%s5340 + $0x33c] sm:$0xf]
    %v5549 = vld [vmem:[%s5340 + $0x340] sm:$0xf]
    %v5550 = vld [vmem:[%s5340 + $0x344] sm:$0xf]
    %v5551 = vld [vmem:[%s5340 + $0x348] sm:$0xf]
    %v5552 = vld [vmem:[%s5340 + $0x34c] sm:$0xf]
    %v5553 = vld [vmem:[%s5340 + $0x350] sm:$0xf]
    %v5554 = vld [vmem:[%s5340 + $0x354] sm:$0xf]
    %v5555 = vld [vmem:[%s5340 + $0x358] sm:$0xf]
    %v5556 = vld [vmem:[%s5340 + $0x35c] sm:$0xf]
    %v5557 = vld [vmem:[%s5340 + $0x360] sm:$0xf]
    %v5558 = vld [vmem:[%s5340 + $0x364] sm:$0xf]
    %v5559 = vld [vmem:[%s5340 + $0x368] sm:$0xf]
    %v5560 = vld [vmem:[%s5340 + $0x36c] sm:$0xf]
    %v5561 = vld [vmem:[%s5340 + $0x370] sm:$0xf]
    %v5562 = vld [vmem:[%s5340 + $0x374] sm:$0xf]
    %v5563 = vld [vmem:[%s5340 + $0x378] sm:$0xf]
    %v5564 = vld [vmem:[%s5340 + $0x37c] sm:$0xf]
    %v5565 = vld [vmem:[%s5340 + $0x380] sm:$0xf]
    %v5566 = vld [vmem:[%s5340 + $0x384] sm:$0xf]
    %v5567 = vld [vmem:[%s5340 + $0x388] sm:$0xf]
    %v5568 = vld [vmem:[%s5340 + $0x38c] sm:$0xf]
    %v5569 = vld [vmem:[%s5340 + $0x390] sm:$0xf]
    %v5570 = vld [vmem:[%s5340 + $0x394] sm:$0xf]
    %v5571 = vld [vmem:[%s5340 + $0x398] sm:$0xf]
    %v5572 = vld [vmem:[%s5340 + $0x39c] sm:$0xf]
    %v5573 = vld [vmem:[%s5340 + $0x3a0] sm:$0xf]
    %v5574 = vld [vmem:[%s5340 + $0x3a4] sm:$0xf]
    %v5575 = vld [vmem:[%s5340 + $0x3a8] sm:$0xf]
    %v5576 = vld [vmem:[%s5340 + $0x3ac] sm:$0xf]
    %v5577 = vld [vmem:[%s5340 + $0x3b0] sm:$0xf]
    %v5578 = vld [vmem:[%s5340 + $0x3b4] sm:$0xf]
    %v5579 = vld [vmem:[%s5340 + $0x3b8] sm:$0xf]
    %v5580 = vld [vmem:[%s5340 + $0x3bc] sm:$0xf]
    %v5581 = vld [vmem:[%s5340 + $0x3c0] sm:$0xf]
    %v5582 = vld [vmem:[%s5340 + $0x3c4] sm:$0xf]
    %v5583 = vld [vmem:[%s5340 + $0x3c8] sm:$0xf]
    %v5584 = vld [vmem:[%s5340 + $0x3cc] sm:$0xf]
    %v5585 = vld [vmem:[%s5340 + $0x3d0] sm:$0xf]
    %v5586 = vld [vmem:[%s5340 + $0x3d4] sm:$0xf]
    %v5587 = vld [vmem:[%s5340 + $0x3d8] sm:$0xf]
    %v5588 = vld [vmem:[%s5340 + $0x3dc] sm:$0xf]
    %v5589 = vld [vmem:[%s5340 + $0x3e0] sm:$0xf]
    %v5590 = vld [vmem:[%s5340 + $0x3e4] sm:$0xf]
    %v5591 = vld [vmem:[%s5340 + $0x3e8] sm:$0xf]
    %v5592 = vld [vmem:[%s5340 + $0x3ec] sm:$0xf]
    %v5593 = vld [vmem:[%s5340 + $0x3f0] sm:$0xf]
    %v5594 = vld [vmem:[%s5340 + $0x3f4] sm:$0xf]
    %v5595 = vld [vmem:[%s5340 + $0x3f8] sm:$0xf]
    %v5596 = vld [vmem:[%s5340 + $0x3fc] sm:$0xf]
    %v5597 = vld [vmem:[%s1 + $0xf8] sm:$0x1]
    %v5598 = vlaneseq
    %v5599 = vshrl.u32 %v5598, 7
    %v5600 = vsub.s32 0, %v5599
    %v5601 = vrot.slane %v5597, %v5600
    %v5858 = vunpack.c.l.b16 %v5341
    %v5859 = vunpack.c.l.b16 %v5342
    %v5860 = vunpack.c.l.b16 %v5343
    %v5861 = vunpack.c.l.b16 %v5344
    %v5862 = vunpack.c.l.b16 %v5345
    %v5863 = vunpack.c.l.b16 %v5346
    %v5864 = vunpack.c.l.b16 %v5347
    %v5865 = vunpack.c.l.b16 %v5348
    %v5866 = vunpack.c.l.b16 %v5349
    %v5867 = vunpack.c.l.b16 %v5350
    %v5868 = vunpack.c.l.b16 %v5351
    %v5869 = vunpack.c.l.b16 %v5352
    %v5870 = vunpack.c.l.b16 %v5353
    %v5871 = vunpack.c.l.b16 %v5354
    %v5872 = vunpack.c.l.b16 %v5355
    %v5873 = vunpack.c.l.b16 %v5356
    %v5874 = vunpack.c.l.b16 %v5357
    %v5875 = vunpack.c.l.b16 %v5358
    %v5876 = vunpack.c.l.b16 %v5359
    %v5877 = vunpack.c.l.b16 %v5360
    %v5878 = vunpack.c.l.b16 %v5361
    %v5879 = vunpack.c.l.b16 %v5362
    %v5880 = vunpack.c.l.b16 %v5363
    %v5881 = vunpack.c.l.b16 %v5364
    %v5882 = vunpack.c.l.b16 %v5365
    %v5883 = vunpack.c.l.b16 %v5366
    %v5884 = vunpack.c.l.b16 %v5367
    %v5885 = vunpack.c.l.b16 %v5368
    %v5886 = vunpack.c.l.b16 %v5369
    %v5887 = vunpack.c.l.b16 %v5370
    %v5888 = vunpack.c.l.b16 %v5371
    %v5889 = vunpack.c.l.b16 %v5372
    %v5890 = vunpack.c.l.b16 %v5373
    %v5891 = vunpack.c.l.b16 %v5374
    %v5892 = vunpack.c.l.b16 %v5375
    %v5893 = vunpack.c.l.b16 %v5376
    %v5894 = vunpack.c.l.b16 %v5377
    %v5895 = vunpack.c.l.b16 %v5378
    %v5896 = vunpack.c.l.b16 %v5379
    %v5897 = vunpack.c.l.b16 %v5380
    %v5898 = vunpack.c.l.b16 %v5381
    %v5899 = vunpack.c.l.b16 %v5382
    %v5900 = vunpack.c.l.b16 %v5383
    %v5901 = vunpack.c.l.b16 %v5384
    %v5902 = vunpack.c.l.b16 %v5385
    %v5903 = vunpack.c.l.b16 %v5386
    %v5904 = vunpack.c.l.b16 %v5387
    %v5905 = vunpack.c.l.b16 %v5388
    %v5906 = vunpack.c.l.b16 %v5389
    %v5907 = vunpack.c.l.b16 %v5390
    %v5908 = vunpack.c.l.b16 %v5391
    %v5909 = vunpack.c.l.b16 %v5392
    %v5910 = vunpack.c.l.b16 %v5393
    %v5911 = vunpack.c.l.b16 %v5394
    %v5912 = vunpack.c.l.b16 %v5395
    %v5913 = vunpack.c.l.b16 %v5396
    %v5914 = vunpack.c.l.b16 %v5397
    %v5915 = vunpack.c.l.b16 %v5398
    %v5916 = vunpack.c.l.b16 %v5399
    %v5917 = vunpack.c.l.b16 %v5400
    %v5918 = vunpack.c.l.b16 %v5401
    %v5919 = vunpack.c.l.b16 %v5402
    %v5920 = vunpack.c.l.b16 %v5403
    %v5921 = vunpack.c.l.b16 %v5404
    %v5922 = vunpack.c.l.b16 %v5405
    %v5923 = vunpack.c.l.b16 %v5406
    %v5924 = vunpack.c.l.b16 %v5407
    %v5925 = vunpack.c.l.b16 %v5408
    %v5926 = vunpack.c.l.b16 %v5409
    %v5927 = vunpack.c.l.b16 %v5410
    %v5928 = vunpack.c.l.b16 %v5411
    %v5929 = vunpack.c.l.b16 %v5412
    %v5930 = vunpack.c.l.b16 %v5413
    %v5931 = vunpack.c.l.b16 %v5414
    %v5932 = vunpack.c.l.b16 %v5415
    %v5933 = vunpack.c.l.b16 %v5416
    %v5934 = vunpack.c.l.b16 %v5417
    %v5935 = vunpack.c.l.b16 %v5418
    %v5936 = vunpack.c.l.b16 %v5419
    %v5937 = vunpack.c.l.b16 %v5420
    %v5938 = vunpack.c.l.b16 %v5421
    %v5939 = vunpack.c.l.b16 %v5422
    %v5940 = vunpack.c.l.b16 %v5423
    %v5941 = vunpack.c.l.b16 %v5424
    %v5942 = vunpack.c.l.b16 %v5425
    %v5943 = vunpack.c.l.b16 %v5426
    %v5944 = vunpack.c.l.b16 %v5427
    %v5945 = vunpack.c.l.b16 %v5428
    %v5946 = vunpack.c.l.b16 %v5429
    %v5947 = vunpack.c.l.b16 %v5430
    %v5948 = vunpack.c.l.b16 %v5431
    %v5949 = vunpack.c.l.b16 %v5432
    %v5950 = vunpack.c.l.b16 %v5433
    %v5951 = vunpack.c.l.b16 %v5434
    %v5952 = vunpack.c.l.b16 %v5435
    %v5953 = vunpack.c.l.b16 %v5436
    %v5954 = vunpack.c.l.b16 %v5437
    %v5955 = vunpack.c.l.b16 %v5438
    %v5956 = vunpack.c.l.b16 %v5439
    %v5957 = vunpack.c.l.b16 %v5440
    %v5958 = vunpack.c.l.b16 %v5441
    %v5959 = vunpack.c.l.b16 %v5442
    %v5960 = vunpack.c.l.b16 %v5443
    %v5961 = vunpack.c.l.b16 %v5444
    %v5962 = vunpack.c.l.b16 %v5445
    %v5963 = vunpack.c.l.b16 %v5446
    %v5964 = vunpack.c.l.b16 %v5447
    %v5965 = vunpack.c.l.b16 %v5448
    %v5966 = vunpack.c.l.b16 %v5449
    %v5967 = vunpack.c.l.b16 %v5450
    %v5968 = vunpack.c.l.b16 %v5451
    %v5969 = vunpack.c.l.b16 %v5452
    %v5970 = vunpack.c.l.b16 %v5453
    %v5971 = vunpack.c.l.b16 %v5454
    %v5972 = vunpack.c.l.b16 %v5455
    %v5973 = vunpack.c.l.b16 %v5456
    %v5974 = vunpack.c.l.b16 %v5457
    %v5975 = vunpack.c.l.b16 %v5458
    %v5976 = vunpack.c.l.b16 %v5459
    %v5977 = vunpack.c.l.b16 %v5460
    %v5978 = vunpack.c.l.b16 %v5461
    %v5979 = vunpack.c.l.b16 %v5462
    %v5980 = vunpack.c.l.b16 %v5463
    %v5981 = vunpack.c.l.b16 %v5464
    %v5982 = vunpack.c.l.b16 %v5465
    %v5983 = vunpack.c.l.b16 %v5466
    %v5984 = vunpack.c.l.b16 %v5467
    %v5985 = vunpack.c.l.b16 %v5468
    %v5986 = vunpack.c.l.b16 %v5469
    %v5987 = vunpack.c.l.b16 %v5470
    %v5988 = vunpack.c.l.b16 %v5471
    %v5989 = vunpack.c.l.b16 %v5472
    %v5990 = vunpack.c.l.b16 %v5473
    %v5991 = vunpack.c.l.b16 %v5474
    %v5992 = vunpack.c.l.b16 %v5475
    %v5993 = vunpack.c.l.b16 %v5476
    %v5994 = vunpack.c.l.b16 %v5477
    %v5995 = vunpack.c.l.b16 %v5478
    %v5996 = vunpack.c.l.b16 %v5479
    %v5997 = vunpack.c.l.b16 %v5480
    %v5998 = vunpack.c.l.b16 %v5481
    %v5999 = vunpack.c.l.b16 %v5482
    %v6000 = vunpack.c.l.b16 %v5483
    %v6001 = vunpack.c.l.b16 %v5484
    %v6002 = vunpack.c.l.b16 %v5485
    %v6003 = vunpack.c.l.b16 %v5486
    %v6004 = vunpack.c.l.b16 %v5487
    %v6005 = vunpack.c.l.b16 %v5488
    %v6006 = vunpack.c.l.b16 %v5489
    %v6007 = vunpack.c.l.b16 %v5490
    %v6008 = vunpack.c.l.b16 %v5491
    %v6009 = vunpack.c.l.b16 %v5492
    %v6010 = vunpack.c.l.b16 %v5493
    %v6011 = vunpack.c.l.b16 %v5494
    %v6012 = vunpack.c.l.b16 %v5495
    %v6013 = vunpack.c.l.b16 %v5496
    %v6014 = vunpack.c.l.b16 %v5497
    %v6015 = vunpack.c.l.b16 %v5498
    %v6016 = vunpack.c.l.b16 %v5499
    %v6017 = vunpack.c.l.b16 %v5500
    %v6018 = vunpack.c.l.b16 %v5501
    %v6019 = vunpack.c.l.b16 %v5502
    %v6020 = vunpack.c.l.b16 %v5503
    %v6021 = vunpack.c.l.b16 %v5504
    %v6022 = vunpack.c.l.b16 %v5505
    %v6023 = vunpack.c.l.b16 %v5506
    %v6024 = vunpack.c.l.b16 %v5507
    %v6025 = vunpack.c.l.b16 %v5508
    %v6026 = vunpack.c.l.b16 %v5509
    %v6027 = vunpack.c.l.b16 %v5510
    %v6028 = vunpack.c.l.b16 %v5511
    %v6029 = vunpack.c.l.b16 %v5512
    %v6030 = vunpack.c.l.b16 %v5513
    %v6031 = vunpack.c.l.b16 %v5514
    %v6032 = vunpack.c.l.b16 %v5515
    %v6033 = vunpack.c.l.b16 %v5516
    %v6034 = vunpack.c.l.b16 %v5517
    %v6035 = vunpack.c.l.b16 %v5518
    %v6036 = vunpack.c.l.b16 %v5519
    %v6037 = vunpack.c.l.b16 %v5520
    %v6038 = vunpack.c.l.b16 %v5521
    %v6039 = vunpack.c.l.b16 %v5522
    %v6040 = vunpack.c.l.b16 %v5523
    %v6041 = vunpack.c.l.b16 %v5524
    %v6042 = vunpack.c.l.b16 %v5525
    %v6043 = vunpack.c.l.b16 %v5526
    %v6044 = vunpack.c.l.b16 %v5527
    %v6045 = vunpack.c.l.b16 %v5528
    %v6046 = vunpack.c.l.b16 %v5529
    %v6047 = vunpack.c.l.b16 %v5530
    %v6048 = vunpack.c.l.b16 %v5531
    %v6049 = vunpack.c.l.b16 %v5532
    %v6050 = vunpack.c.l.b16 %v5533
    %v6051 = vunpack.c.l.b16 %v5534
    %v6052 = vunpack.c.l.b16 %v5535
    %v6053 = vunpack.c.l.b16 %v5536
    %v6054 = vunpack.c.l.b16 %v5537
    %v6055 = vunpack.c.l.b16 %v5538
    %v6056 = vunpack.c.l.b16 %v5539
    %v6057 = vunpack.c.l.b16 %v5540
    %v6058 = vunpack.c.l.b16 %v5541
    %v6059 = vunpack.c.l.b16 %v5542
    %v6060 = vunpack.c.l.b16 %v5543
    %v6061 = vunpack.c.l.b16 %v5544
    %v6062 = vunpack.c.l.b16 %v5545
    %v6063 = vunpack.c.l.b16 %v5546
    %v6064 = vunpack.c.l.b16 %v5547
    %v6065 = vunpack.c.l.b16 %v5548
    %v6066 = vunpack.c.l.b16 %v5549
    %v6067 = vunpack.c.l.b16 %v5550
    %v6068 = vunpack.c.l.b16 %v5551
    %v6069 = vunpack.c.l.b16 %v5552
    %v6070 = vunpack.c.l.b16 %v5553
    %v6071 = vunpack.c.l.b16 %v5554
    %v6072 = vunpack.c.l.b16 %v5555
    %v6073 = vunpack.c.l.b16 %v5556
    %v6074 = vunpack.c.l.b16 %v5557
    %v6075 = vunpack.c.l.b16 %v5558
    %v6076 = vunpack.c.l.b16 %v5559
    %v6077 = vunpack.c.l.b16 %v5560
    %v6078 = vunpack.c.l.b16 %v5561
    %v6079 = vunpack.c.l.b16 %v5562
    %v6080 = vunpack.c.l.b16 %v5563
    %v6081 = vunpack.c.l.b16 %v5564
    %v6082 = vunpack.c.l.b16 %v5565
    %v6083 = vunpack.c.l.b16 %v5566
    %v6084 = vunpack.c.l.b16 %v5567
    %v6085 = vunpack.c.l.b16 %v5568
    %v6086 = vunpack.c.l.b16 %v5569
    %v6087 = vunpack.c.l.b16 %v5570
    %v6088 = vunpack.c.l.b16 %v5571
    %v6089 = vunpack.c.l.b16 %v5572
    %v6090 = vunpack.c.l.b16 %v5573
    %v6091 = vunpack.c.l.b16 %v5574
    %v6092 = vunpack.c.l.b16 %v5575
    %v6093 = vunpack.c.l.b16 %v5576
    %v6094 = vunpack.c.l.b16 %v5577
    %v6095 = vunpack.c.l.b16 %v5578
    %v6096 = vunpack.c.l.b16 %v5579
    %v6097 = vunpack.c.l.b16 %v5580
    %v6098 = vunpack.c.l.b16 %v5581
    %v6099 = vunpack.c.l.b16 %v5582
    %v6100 = vunpack.c.l.b16 %v5583
    %v6101 = vunpack.c.l.b16 %v5584
    %v6102 = vunpack.c.l.b16 %v5585
    %v6103 = vunpack.c.l.b16 %v5586
    %v6104 = vunpack.c.l.b16 %v5587
    %v6105 = vunpack.c.l.b16 %v5588
    %v6106 = vunpack.c.l.b16 %v5589
    %v6107 = vunpack.c.l.b16 %v5590
    %v6108 = vunpack.c.l.b16 %v5591
    %v6109 = vunpack.c.l.b16 %v5592
    %v6110 = vunpack.c.l.b16 %v5593
    %v6111 = vunpack.c.l.b16 %v5594
    %v6112 = vunpack.c.l.b16 %v5595
    %v6113 = vunpack.c.l.b16 %v5596
    %v6114 = vpack.c.b16 %v5859, %v5858
    %v6115 = vpack.c.b16 %v5861, %v5860
    %v6116 = vpack.c.b16 %v5863, %v5862
    %v6117 = vpack.c.b16 %v5865, %v5864
    %v6118 = vpack.c.b16 %v5867, %v5866
    %v6119 = vpack.c.b16 %v5869, %v5868
    %v6120 = vpack.c.b16 %v5871, %v5870
    %v6121 = vpack.c.b16 %v5873, %v5872
    %v6122 = vpack.c.b16 %v5875, %v5874
    %v6123 = vpack.c.b16 %v5877, %v5876
    %v6124 = vpack.c.b16 %v5879, %v5878
    %v6125 = vpack.c.b16 %v5881, %v5880
    %v6126 = vpack.c.b16 %v5883, %v5882
    %v6127 = vpack.c.b16 %v5885, %v5884
    %v6128 = vpack.c.b16 %v5887, %v5886
    %v6129 = vpack.c.b16 %v5889, %v5888
    %v6130 = vpack.c.b16 %v5891, %v5890
    %v6131 = vpack.c.b16 %v5893, %v5892
    %v6132 = vpack.c.b16 %v5895, %v5894
    %v6133 = vpack.c.b16 %v5897, %v5896
    %v6134 = vpack.c.b16 %v5899, %v5898
    %v6135 = vpack.c.b16 %v5901, %v5900
    %v6136 = vpack.c.b16 %v5903, %v5902
    %v6137 = vpack.c.b16 %v5905, %v5904
    %v6138 = vpack.c.b16 %v5907, %v5906
    %v6139 = vpack.c.b16 %v5909, %v5908
    %v6140 = vpack.c.b16 %v5911, %v5910
    %v6141 = vpack.c.b16 %v5913, %v5912
    %v6142 = vpack.c.b16 %v5915, %v5914
    %v6143 = vpack.c.b16 %v5917, %v5916
    %v6144 = vpack.c.b16 %v5919, %v5918
    %v6145 = vpack.c.b16 %v5921, %v5920
    %v6146 = vpack.c.b16 %v5923, %v5922
    %v6147 = vpack.c.b16 %v5925, %v5924
    %v6148 = vpack.c.b16 %v5927, %v5926
    %v6149 = vpack.c.b16 %v5929, %v5928
    %v6150 = vpack.c.b16 %v5931, %v5930
    %v6151 = vpack.c.b16 %v5933, %v5932
    %v6152 = vpack.c.b16 %v5935, %v5934
    %v6153 = vpack.c.b16 %v5937, %v5936
    %v6154 = vpack.c.b16 %v5939, %v5938
    %v6155 = vpack.c.b16 %v5941, %v5940
    %v6156 = vpack.c.b16 %v5943, %v5942
    %v6157 = vpack.c.b16 %v5945, %v5944
    %v6158 = vpack.c.b16 %v5947, %v5946
    %v6159 = vpack.c.b16 %v5949, %v5948
    %v6160 = vpack.c.b16 %v5951, %v5950
    %v6161 = vpack.c.b16 %v5953, %v5952
    %v6162 = vpack.c.b16 %v5955, %v5954
    %v6163 = vpack.c.b16 %v5957, %v5956
    %v6164 = vpack.c.b16 %v5959, %v5958
    %v6165 = vpack.c.b16 %v5961, %v5960
    %v6166 = vpack.c.b16 %v5963, %v5962
    %v6167 = vpack.c.b16 %v5965, %v5964
    %v6168 = vpack.c.b16 %v5967, %v5966
    %v6169 = vpack.c.b16 %v5969, %v5968
    %v6170 = vpack.c.b16 %v5971, %v5970
    %v6171 = vpack.c.b16 %v5973, %v5972
    %v6172 = vpack.c.b16 %v5975, %v5974
    %v6173 = vpack.c.b16 %v5977, %v5976
    %v6174 = vpack.c.b16 %v5979, %v5978
    %v6175 = vpack.c.b16 %v5981, %v5980
    %v6176 = vpack.c.b16 %v5983, %v5982
    %v6177 = vpack.c.b16 %v5985, %v5984
    %v6178 = vpack.c.b16 %v5987, %v5986
    %v6179 = vpack.c.b16 %v5989, %v5988
    %v6180 = vpack.c.b16 %v5991, %v5990
    %v6181 = vpack.c.b16 %v5993, %v5992
    %v6182 = vpack.c.b16 %v5995, %v5994
    %v6183 = vpack.c.b16 %v5997, %v5996
    %v6184 = vpack.c.b16 %v5999, %v5998
    %v6185 = vpack.c.b16 %v6001, %v6000
    %v6186 = vpack.c.b16 %v6003, %v6002
    %v6187 = vpack.c.b16 %v6005, %v6004
    %v6188 = vpack.c.b16 %v6007, %v6006
    %v6189 = vpack.c.b16 %v6009, %v6008
    %v6190 = vpack.c.b16 %v6011, %v6010
    %v6191 = vpack.c.b16 %v6013, %v6012
    %v6192 = vpack.c.b16 %v6015, %v6014
    %v6193 = vpack.c.b16 %v6017, %v6016
    %v6194 = vpack.c.b16 %v6019, %v6018
    %v6195 = vpack.c.b16 %v6021, %v6020
    %v6196 = vpack.c.b16 %v6023, %v6022
    %v6197 = vpack.c.b16 %v6025, %v6024
    %v6198 = vpack.c.b16 %v6027, %v6026
    %v6199 = vpack.c.b16 %v6029, %v6028
    %v6200 = vpack.c.b16 %v6031, %v6030
    %v6201 = vpack.c.b16 %v6033, %v6032
    %v6202 = vpack.c.b16 %v6035, %v6034
    %v6203 = vpack.c.b16 %v6037, %v6036
    %v6204 = vpack.c.b16 %v6039, %v6038
    %v6205 = vpack.c.b16 %v6041, %v6040
    %v6206 = vpack.c.b16 %v6043, %v6042
    %v6207 = vpack.c.b16 %v6045, %v6044
    %v6208 = vpack.c.b16 %v6047, %v6046
    %v6209 = vpack.c.b16 %v6049, %v6048
    %v6210 = vpack.c.b16 %v6051, %v6050
    %v6211 = vpack.c.b16 %v6053, %v6052
    %v6212 = vpack.c.b16 %v6055, %v6054
    %v6213 = vpack.c.b16 %v6057, %v6056
    %v6214 = vpack.c.b16 %v6059, %v6058
    %v6215 = vpack.c.b16 %v6061, %v6060
    %v6216 = vpack.c.b16 %v6063, %v6062
    %v6217 = vpack.c.b16 %v6065, %v6064
    %v6218 = vpack.c.b16 %v6067, %v6066
    %v6219 = vpack.c.b16 %v6069, %v6068
    %v6220 = vpack.c.b16 %v6071, %v6070
    %v6221 = vpack.c.b16 %v6073, %v6072
    %v6222 = vpack.c.b16 %v6075, %v6074
    %v6223 = vpack.c.b16 %v6077, %v6076
    %v6224 = vpack.c.b16 %v6079, %v6078
    %v6225 = vpack.c.b16 %v6081, %v6080
    %v6226 = vpack.c.b16 %v6083, %v6082
    %v6227 = vpack.c.b16 %v6085, %v6084
    %v6228 = vpack.c.b16 %v6087, %v6086
    %v6229 = vpack.c.b16 %v6089, %v6088
    %v6230 = vpack.c.b16 %v6091, %v6090
    %v6231 = vpack.c.b16 %v6093, %v6092
    %v6232 = vpack.c.b16 %v6095, %v6094
    %v6233 = vpack.c.b16 %v6097, %v6096
    %v6234 = vpack.c.b16 %v6099, %v6098
    %v6235 = vpack.c.b16 %v6101, %v6100
    %v6236 = vpack.c.b16 %v6103, %v6102
    %v6237 = vpack.c.b16 %v6105, %v6104
    %v6238 = vpack.c.b16 %v6107, %v6106
    %v6239 = vpack.c.b16 %v6109, %v6108
    %v6240 = vpack.c.b16 %v6111, %v6110
    %v6241 = vpack.c.b16 %v6113, %v6112
    %6370 = vmatprep.subr.bf16.mxu0 0
    %6371 = vmatpush1.bf16.msra.mxu0 %v6114
    %6372 = vmatprep.subr.bf16.mxu0 0
    %6373 = vmatpush1.bf16.msra.mxu0 %v6115
    %6374 = vmatprep.subr.bf16.mxu0 0
    %6375 = vmatpush1.bf16.msra.mxu0 %v6116
    %6376 = vmatprep.subr.bf16.mxu0 0
    %6377 = vmatpush1.bf16.msra.mxu0 %v6117
    %6378 = vmatprep.subr.bf16.mxu0 0
    %6379 = vmatpush1.bf16.msra.mxu0 %v6118
    %6380 = vmatprep.subr.bf16.mxu0 0
    %6381 = vmatpush1.bf16.msra.mxu0 %v6119
    %6382 = vmatprep.subr.bf16.mxu0 0
    %6383 = vmatpush1.bf16.msra.mxu0 %v6120
    %6384 = vmatprep.subr.bf16.mxu0 0
    %6385 = vmatpush1.bf16.msra.mxu0 %v6121
    %6386 = vmatprep.subr.bf16.mxu0 0
    %6387 = vmatpush1.bf16.msra.mxu0 %v6122
    %6388 = vmatprep.subr.bf16.mxu0 0
    %6389 = vmatpush1.bf16.msra.mxu0 %v6123
    %6390 = vmatprep.subr.bf16.mxu0 0
    %6391 = vmatpush1.bf16.msra.mxu0 %v6124
    %6392 = vmatprep.subr.bf16.mxu0 0
    %6393 = vmatpush1.bf16.msra.mxu0 %v6125
    %6394 = vmatprep.subr.bf16.mxu0 0
    %6395 = vmatpush1.bf16.msra.mxu0 %v6126
    %6396 = vmatprep.subr.bf16.mxu0 0
    %6397 = vmatpush1.bf16.msra.mxu0 %v6127
    %6398 = vmatprep.subr.bf16.mxu0 0
    %6399 = vmatpush1.bf16.msra.mxu0 %v6128
    %6400 = vmatprep.subr.bf16.mxu0 0
    %6401 = vmatpush1.bf16.msra.mxu0 %v6129
    %6402 = vmatprep.mubr.bf16.mxu0 %v5309
    %6403 = vmatmul.mubr.bf16.gmra.mrb[0].mxu0 %v5308
    %v6404 = vpop.f32.mrb[0].mxu0
    %v6405 = vadd.f32 %v5601, %v6404
    %v6406 = vpop.f32.mrb[0].mxu0
    %v6407 = vpop.f32.mrb[0].mxu0
    %v6408 = vadd.f32 %v5601, %v6407
    %v6409 = vpop.f32.mrb[0].mxu0
    %6410 = vmatprep.mubr.bf16.mxu0 %v5325
    %6411 = vmatmul.mubr.bf16.gmra.mrb[0].mxu0 %v5324
    %v6412 = vpop.f32.mrb[0].mxu0
    %v6413 = vadd.f32 %v5601, %v6412
    %v6414 = vpop.f32.mrb[0].mxu0
    %v6415 = vpop.f32.mrb[0].mxu0
    %v6416 = vadd.f32 %v5601, %v6415
    %v6417 = vpop.f32.mrb[0].mxu0
    %6418 = vdwg.mxu0
    %6419 = vmatprep.subr.bf16.mxu0 0
    %6420 = vmatpush1.bf16.msra.mxu0 %v6130
    %6421 = vmatprep.subr.bf16.mxu0 0
    %6422 = vmatpush1.bf16.msra.mxu0 %v6131
    %6423 = vmatprep.subr.bf16.mxu0 0
    %6424 = vmatpush1.bf16.msra.mxu0 %v6132
    %6425 = vmatprep.subr.bf16.mxu0 0
    %6426 = vmatpush1.bf16.msra.mxu0 %v6133
    %6427 = vmatprep.subr.bf16.mxu0 0
    %6428 = vmatpush1.bf16.msra.mxu0 %v6134
    %6429 = vmatprep.subr.bf16.mxu0 0
    %6430 = vmatpush1.bf16.msra.mxu0 %v6135
    %6431 = vmatprep.subr.bf16.mxu0 0
    %6432 = vmatpush1.bf16.msra.mxu0 %v6136
    %6433 = vmatprep.subr.bf16.mxu0 0
    %6434 = vmatpush1.bf16.msra.mxu0 %v6137
    %6435 = vmatprep.subr.bf16.mxu0 0
    %6436 = vmatpush1.bf16.msra.mxu0 %v6138
    %6437 = vmatprep.subr.bf16.mxu0 0
    %6438 = vmatpush1.bf16.msra.mxu0 %v6139
    %6439 = vmatprep.subr.bf16.mxu0 0
    %6440 = vmatpush1.bf16.msra.mxu0 %v6140
    %6441 = vmatprep.subr.bf16.mxu0 0
    %6442 = vmatpush1.bf16.msra.mxu0 %v6141
    %6443 = vmatprep.subr.bf16.mxu0 0
    %6444 = vmatpush1.bf16.msra.mxu0 %v6142
    %6445 = vmatprep.subr.bf16.mxu0 0
    %6446 = vmatpush1.bf16.msra.mxu0 %v6143
    %6447 = vmatprep.subr.bf16.mxu0 0
    %6448 = vmatpush1.bf16.msra.mxu0 %v6144
    %6449 = vmatprep.subr.bf16.mxu0 0
    %6450 = vmatpush1.bf16.msra.mxu0 %v6145
    %6451 = vmatprep.mubr.bf16.mxu0 %v5311
    %6452 = vmatmul.mubr.bf16.gmra.mrb[0].mxu0 %v5310
    %v6453 = vpop.f32.mrb[0].mxu0
    %v6454 = vadd.f32 %v6405, %v6453
    %v6455 = vpop.f32.mrb[0].mxu0
    %v6456 = vpop.f32.mrb[0].mxu0
    %v6457 = vadd.f32 %v6408, %v6456
    %v6458 = vpop.f32.mrb[0].mxu0
    %6459 = vmatprep.mubr.bf16.mxu0 %v5327
    %6460 = vmatmul.mubr.bf16.gmra.mrb[0].mxu0 %v5326
    %v6461 = vpop.f32.mrb[0].mxu0
    %v6462 = vadd.f32 %v6413, %v6461
    %v6463 = vpop.f32.mrb[0].mxu0
    %v6464 = vpop.f32.mrb[0].mxu0
    %v6465 = vadd.f32 %v6416, %v6464
    %v6466 = vpop.f32.mrb[0].mxu0
    %6467 = vdwg.mxu0
    %6468 = vmatprep.subr.bf16.mxu0 0
    %6469 = vmatpush1.bf16.msra.mxu0 %v6146
    %6470 = vmatprep.subr.bf16.mxu0 0
    %6471 = vmatpush1.bf16.msra.mxu0 %v6147
    %6472 = vmatprep.subr.bf16.mxu0 0
    %6473 = vmatpush1.bf16.msra.mxu0 %v6148
    %6474 = vmatprep.subr.bf16.mxu0 0
    %6475 = vmatpush1.bf16.msra.mxu0 %v6149
    %6476 = vmatprep.subr.bf16.mxu0 0
    %6477 = vmatpush1.bf16.msra.mxu0 %v6150
    %6478 = vmatprep.subr.bf16.mxu0 0
    %6479 = vmatpush1.bf16.msra.mxu0 %v6151
    %6480 = vmatprep.subr.bf16.mxu0 0
    %6481 = vmatpush1.bf16.msra.mxu0 %v6152
    %6482 = vmatprep.subr.bf16.mxu0 0
    %6483 = vmatpush1.bf16.msra.mxu0 %v6153
    %6484 = vmatprep.subr.bf16.mxu0 0
    %6485 = vmatpush1.bf16.msra.mxu0 %v6154
    %6486 = vmatprep.subr.bf16.mxu0 0
    %6487 = vmatpush1.bf16.msra.mxu0 %v6155
    %6488 = vmatprep.subr.bf16.mxu0 0
    %6489 = vmatpush1.bf16.msra.mxu0 %v6156
    %6490 = vmatprep.subr.bf16.mxu0 0
    %6491 = vmatpush1.bf16.msra.mxu0 %v6157
    %6492 = vmatprep.subr.bf16.mxu0 0
    %6493 = vmatpush1.bf16.msra.mxu0 %v6158
    %6494 = vmatprep.subr.bf16.mxu0 0
    %6495 = vmatpush1.bf16.msra.mxu0 %v6159
    %6496 = vmatprep.subr.bf16.mxu0 0
    %6497 = vmatpush1.bf16.msra.mxu0 %v6160
    %6498 = vmatprep.subr.bf16.mxu0 0
    %6499 = vmatpush1.bf16.msra.mxu0 %v6161
    %6500 = vmatprep.mubr.bf16.mxu0 %v5313
    %6501 = vmatmul.mubr.bf16.gmra.mrb[0].mxu0 %v5312
    %v6502 = vpop.f32.mrb[0].mxu0
    %v6503 = vadd.f32 %v6454, %v6502
    %v6504 = vpop.f32.mrb[0].mxu0
    %v6505 = vpop.f32.mrb[0].mxu0
    %v6506 = vadd.f32 %v6457, %v6505
    %v6507 = vpop.f32.mrb[0].mxu0
    %6508 = vmatprep.mubr.bf16.mxu0 %v5329
    %6509 = vmatmul.mubr.bf16.gmra.mrb[0].mxu0 %v5328
    %v6510 = vpop.f32.mrb[0].mxu0
    %v6511 = vadd.f32 %v6462, %v6510
    %v6512 = vpop.f32.mrb[0].mxu0
    %v6513 = vpop.f32.mrb[0].mxu0
    %v6514 = vadd.f32 %v6465, %v6513
    %v6515 = vpop.f32.mrb[0].mxu0
    %6516 = vdwg.mxu0
    %6517 = vmatprep.subr.bf16.mxu0 0
    %6518 = vmatpush1.bf16.msra.mxu0 %v6162
    %6519 = vmatprep.subr.bf16.mxu0 0
    %6520 = vmatpush1.bf16.msra.mxu0 %v6163
    %6521 = vmatprep.subr.bf16.mxu0 0
    %6522 = vmatpush1.bf16.msra.mxu0 %v6164
    %6523 = vmatprep.subr.bf16.mxu0 0
    %6524 = vmatpush1.bf16.msra.mxu0 %v6165
    %6525 = vmatprep.subr.bf16.mxu0 0
    %6526 = vmatpush1.bf16.msra.mxu0 %v6166
    %6527 = vmatprep.subr.bf16.mxu0 0
    %6528 = vmatpush1.bf16.msra.mxu0 %v6167
    %6529 = vmatprep.subr.bf16.mxu0 0
    %6530 = vmatpush1.bf16.msra.mxu0 %v6168
    %6531 = vmatprep.subr.bf16.mxu0 0
    %6532 = vmatpush1.bf16.msra.mxu0 %v6169
    %6533 = vmatprep.subr.bf16.mxu0 0
    %6534 = vmatpush1.bf16.msra.mxu0 %v6170
    %6535 = vmatprep.subr.bf16.mxu0 0
    %6536 = vmatpush1.bf16.msra.mxu0 %v6171
    %6537 = vmatprep.subr.bf16.mxu0 0
    %6538 = vmatpush1.bf16.msra.mxu0 %v6172
    %6539 = vmatprep.subr.bf16.mxu0 0
    %6540 = vmatpush1.bf16.msra.mxu0 %v6173
    %6541 = vmatprep.subr.bf16.mxu0 0
    %6542 = vmatpush1.bf16.msra.mxu0 %v6174
    %6543 = vmatprep.subr.bf16.mxu0 0
    %6544 = vmatpush1.bf16.msra.mxu0 %v6175
    %6545 = vmatprep.subr.bf16.mxu0 0
    %6546 = vmatpush1.bf16.msra.mxu0 %v6176
    %6547 = vmatprep.subr.bf16.mxu0 0
    %6548 = vmatpush1.bf16.msra.mxu0 %v6177
    %6549 = vmatprep.mubr.bf16.mxu0 %v5315
    %6550 = vmatmul.mubr.bf16.gmra.mrb[0].mxu0 %v5314
    %v6551 = vpop.f32.mrb[0].mxu0
    %v6552 = vadd.f32 %v6503, %v6551
    %v6553 = vpop.f32.mrb[0].mxu0
    %v6554 = vpop.f32.mrb[0].mxu0
    %v6555 = vadd.f32 %v6506, %v6554
    %v6556 = vpop.f32.mrb[0].mxu0
    %6557 = vmatprep.mubr.bf16.mxu0 %v5331
    %6558 = vmatmul.mubr.bf16.gmra.mrb[0].mxu0 %v5330
    %v6559 = vpop.f32.mrb[0].mxu0
    %v6560 = vadd.f32 %v6511, %v6559
    %v6561 = vpop.f32.mrb[0].mxu0
    %v6562 = vpop.f32.mrb[0].mxu0
    %v6563 = vadd.f32 %v6514, %v6562
    %v6564 = vpop.f32.mrb[0].mxu0
    %6565 = vdwg.mxu0
    %6566 = vmatprep.subr.bf16.mxu0 0
    %6567 = vmatpush1.bf16.msra.mxu0 %v6178
    %6568 = vmatprep.subr.bf16.mxu0 0
    %6569 = vmatpush1.bf16.msra.mxu0 %v6179
    %6570 = vmatprep.subr.bf16.mxu0 0
    %6571 = vmatpush1.bf16.msra.mxu0 %v6180
    %6572 = vmatprep.subr.bf16.mxu0 0
    %6573 = vmatpush1.bf16.msra.mxu0 %v6181
    %6574 = vmatprep.subr.bf16.mxu0 0
    %6575 = vmatpush1.bf16.msra.mxu0 %v6182
    %6576 = vmatprep.subr.bf16.mxu0 0
    %6577 = vmatpush1.bf16.msra.mxu0 %v6183
    %6578 = vmatprep.subr.bf16.mxu0 0
    %6579 = vmatpush1.bf16.msra.mxu0 %v6184
    %6580 = vmatprep.subr.bf16.mxu0 0
    %6581 = vmatpush1.bf16.msra.mxu0 %v6185
    %6582 = vmatprep.subr.bf16.mxu0 0
    %6583 = vmatpush1.bf16.msra.mxu0 %v6186
    %6584 = vmatprep.subr.bf16.mxu0 0
    %6585 = vmatpush1.bf16.msra.mxu0 %v6187
    %6586 = vmatprep.subr.bf16.mxu0 0
    %6587 = vmatpush1.bf16.msra.mxu0 %v6188
    %6588 = vmatprep.subr.bf16.mxu0 0
    %6589 = vmatpush1.bf16.msra.mxu0 %v6189
    %6590 = vmatprep.subr.bf16.mxu0 0
    %6591 = vmatpush1.bf16.msra.mxu0 %v6190
    %6592 = vmatprep.subr.bf16.mxu0 0
    %6593 = vmatpush1.bf16.msra.mxu0 %v6191
    %6594 = vmatprep.subr.bf16.mxu0 0
    %6595 = vmatpush1.bf16.msra.mxu0 %v6192
    %6596 = vmatprep.subr.bf16.mxu0 0
    %6597 = vmatpush1.bf16.msra.mxu0 %v6193
    %6598 = vmatprep.mubr.bf16.mxu0 %v5317
    %6599 = vmatmul.mubr.bf16.gmra.mrb[0].mxu0 %v5316
    %v6600 = vpop.f32.mrb[0].mxu0
    %v6601 = vadd.f32 %v6552, %v6600
    %v6602 = vpop.f32.mrb[0].mxu0
    %v6603 = vpop.f32.mrb[0].mxu0
    %v6604 = vadd.f32 %v6555, %v6603
    %v6605 = vpop.f32.mrb[0].mxu0
    %6606 = vmatprep.mubr.bf16.mxu0 %v5333
    %6607 = vmatmul.mubr.bf16.gmra.mrb[0].mxu0 %v5332
    %v6608 = vpop.f32.mrb[0].mxu0
    %v6609 = vadd.f32 %v6560, %v6608
    %v6610 = vpop.f32.mrb[0].mxu0
    %v6611 = vpop.f32.mrb[0].mxu0
    %v6612 = vadd.f32 %v6563, %v6611
    %v6613 = vpop.f32.mrb[0].mxu0
    %6614 = vdwg.mxu0
    %6615 = vmatprep.subr.bf16.mxu0 0
    %6616 = vmatpush1.bf16.msra.mxu0 %v6194
    %6617 = vmatprep.subr.bf16.mxu0 0
    %6618 = vmatpush1.bf16.msra.mxu0 %v6195
    %6619 = vmatprep.subr.bf16.mxu0 0
    %6620 = vmatpush1.bf16.msra.mxu0 %v6196
    %6621 = vmatprep.subr.bf16.mxu0 0
    %6622 = vmatpush1.bf16.msra.mxu0 %v6197
    %6623 = vmatprep.subr.bf16.mxu0 0
    %6624 = vmatpush1.bf16.msra.mxu0 %v6198
    %6625 = vmatprep.subr.bf16.mxu0 0
    %6626 = vmatpush1.bf16.msra.mxu0 %v6199
    %6627 = vmatprep.subr.bf16.mxu0 0
    %6628 = vmatpush1.bf16.msra.mxu0 %v6200
    %6629 = vmatprep.subr.bf16.mxu0 0
    %6630 = vmatpush1.bf16.msra.mxu0 %v6201
    %6631 = vmatprep.subr.bf16.mxu0 0
    %6632 = vmatpush1.bf16.msra.mxu0 %v6202
    %6633 = vmatprep.subr.bf16.mxu0 0
    %6634 = vmatpush1.bf16.msra.mxu0 %v6203
    %6635 = vmatprep.subr.bf16.mxu0 0
    %6636 = vmatpush1.bf16.msra.mxu0 %v6204
    %6637 = vmatprep.subr.bf16.mxu0 0
    %6638 = vmatpush1.bf16.msra.mxu0 %v6205
    %6639 = vmatprep.subr.bf16.mxu0 0
    %6640 = vmatpush1.bf16.msra.mxu0 %v6206
    %6641 = vmatprep.subr.bf16.mxu0 0
    %6642 = vmatpush1.bf16.msra.mxu0 %v6207
    %6643 = vmatprep.subr.bf16.mxu0 0
    %6644 = vmatpush1.bf16.msra.mxu0 %v6208
    %6645 = vmatprep.subr.bf16.mxu0 0
    %6646 = vmatpush1.bf16.msra.mxu0 %v6209
    %6647 = vmatprep.mubr.bf16.mxu0 %v5319
    %6648 = vmatmul.mubr.bf16.gmra.mrb[0].mxu0 %v5318
    %v6649 = vpop.f32.mrb[0].mxu0
    %v6650 = vadd.f32 %v6601, %v6649
    %v6651 = vpop.f32.mrb[0].mxu0
    %v6652 = vpop.f32.mrb[0].mxu0
    %v6653 = vadd.f32 %v6604, %v6652
    %v6654 = vpop.f32.mrb[0].mxu0
    %6655 = vmatprep.mubr.bf16.mxu0 %v5335
    %6656 = vmatmul.mubr.bf16.gmra.mrb[0].mxu0 %v5334
    %v6657 = vpop.f32.mrb[0].mxu0
    %v6658 = vadd.f32 %v6609, %v6657
    %v6659 = vpop.f32.mrb[0].mxu0
    %v6660 = vpop.f32.mrb[0].mxu0
    %v6661 = vadd.f32 %v6612, %v6660
    %v6662 = vpop.f32.mrb[0].mxu0
    %6663 = vdwg.mxu0
    %6664 = vmatprep.subr.bf16.mxu0 0
    %6665 = vmatpush1.bf16.msra.mxu0 %v6210
    %6666 = vmatprep.subr.bf16.mxu0 0
    %6667 = vmatpush1.bf16.msra.mxu0 %v6211
    %6668 = vmatprep.subr.bf16.mxu0 0
    %6669 = vmatpush1.bf16.msra.mxu0 %v6212
    %6670 = vmatprep.subr.bf16.mxu0 0
    %6671 = vmatpush1.bf16.msra.mxu0 %v6213
    %6672 = vmatprep.subr.bf16.mxu0 0
    %6673 = vmatpush1.bf16.msra.mxu0 %v6214
    %6674 = vmatprep.subr.bf16.mxu0 0
    %6675 = vmatpush1.bf16.msra.mxu0 %v6215
    %6676 = vmatprep.subr.bf16.mxu0 0
    %6677 = vmatpush1.bf16.msra.mxu0 %v6216
    %6678 = vmatprep.subr.bf16.mxu0 0
    %6679 = vmatpush1.bf16.msra.mxu0 %v6217
    %6680 = vmatprep.subr.bf16.mxu0 0
    %6681 = vmatpush1.bf16.msra.mxu0 %v6218
    %6682 = vmatprep.subr.bf16.mxu0 0
    %6683 = vmatpush1.bf16.msra.mxu0 %v6219
    %6684 = vmatprep.subr.bf16.mxu0 0
    %6685 = vmatpush1.bf16.msra.mxu0 %v6220
    %6686 = vmatprep.subr.bf16.mxu0 0
    %6687 = vmatpush1.bf16.msra.mxu0 %v6221
    %6688 = vmatprep.subr.bf16.mxu0 0
    %6689 = vmatpush1.bf16.msra.mxu0 %v6222
    %6690 = vmatprep.subr.bf16.mxu0 0
    %6691 = vmatpush1.bf16.msra.mxu0 %v6223
    %6692 = vmatprep.subr.bf16.mxu0 0
    %6693 = vmatpush1.bf16.msra.mxu0 %v6224
    %6694 = vmatprep.subr.bf16.mxu0 0
    %6695 = vmatpush1.bf16.msra.mxu0 %v6225
    %6696 = vmatprep.mubr.bf16.mxu0 %v5321
    %6697 = vmatmul.mubr.bf16.gmra.mrb[0].mxu0 %v5320
    %v6698 = vpop.f32.mrb[0].mxu0
    %v6699 = vadd.f32 %v6650, %v6698
    %v6700 = vpop.f32.mrb[0].mxu0
    %v6701 = vpop.f32.mrb[0].mxu0
    %v6702 = vadd.f32 %v6653, %v6701
    %v6703 = vpop.f32.mrb[0].mxu0
    %6704 = vmatprep.mubr.bf16.mxu0 %v5337
    %6705 = vmatmul.mubr.bf16.gmra.mrb[0].mxu0 %v5336
    %v6706 = vpop.f32.mrb[0].mxu0
    %v6707 = vadd.f32 %v6658, %v6706
    %v6708 = vpop.f32.mrb[0].mxu0
    %v6709 = vpop.f32.mrb[0].mxu0
    %v6710 = vadd.f32 %v6661, %v6709
    %v6711 = vpop.f32.mrb[0].mxu0
    %6712 = vdwg.mxu0
    %6713 = vmatprep.subr.bf16.mxu0 0
    %6714 = vmatpush1.bf16.msra.mxu0 %v6226
    %6715 = vmatprep.subr.bf16.mxu0 0
    %6716 = vmatpush1.bf16.msra.mxu0 %v6227
    %6717 = vmatprep.subr.bf16.mxu0 0
    %6718 = vmatpush1.bf16.msra.mxu0 %v6228
    %6719 = vmatprep.subr.bf16.mxu0 0
    %6720 = vmatpush1.bf16.msra.mxu0 %v6229
    %6721 = vmatprep.subr.bf16.mxu0 0
    %6722 = vmatpush1.bf16.msra.mxu0 %v6230
    %6723 = vmatprep.subr.bf16.mxu0 0
    %6724 = vmatpush1.bf16.msra.mxu0 %v6231
    %6725 = vmatprep.subr.bf16.mxu0 0
    %6726 = vmatpush1.bf16.msra.mxu0 %v6232
    %6727 = vmatprep.subr.bf16.mxu0 0
    %6728 = vmatpush1.bf16.msra.mxu0 %v6233
    %6729 = vmatprep.subr.bf16.mxu0 0
    %6730 = vmatpush1.bf16.msra.mxu0 %v6234
    %6731 = vmatprep.subr.bf16.mxu0 0
    %6732 = vmatpush1.bf16.msra.mxu0 %v6235
    %6733 = vmatprep.subr.bf16.mxu0 0
    %6734 = vmatpush1.bf16.msra.mxu0 %v6236
    %6735 = vmatprep.subr.bf16.mxu0 0
    %6736 = vmatpush1.bf16.msra.mxu0 %v6237
    %6737 = vmatprep.subr.bf16.mxu0 0
    %6738 = vmatpush1.bf16.msra.mxu0 %v6238
    %6739 = vmatprep.subr.bf16.mxu0 0
    %6740 = vmatpush1.bf16.msra.mxu0 %v6239
    %6741 = vmatprep.subr.bf16.mxu0 0
    %6742 = vmatpush1.bf16.msra.mxu0 %v6240
    %6743 = vmatprep.subr.bf16.mxu0 0
    %6744 = vmatpush1.bf16.msra.mxu0 %v6241
    %6745 = vmatprep.mubr.bf16.mxu0 %v5323
    %6746 = vmatmul.mubr.bf16.gmra.mrb[0].mxu0 %v5322
    %v6747 = vpop.f32.mrb[0].mxu0
    %v6748 = vadd.f32 %v6699, %v6747
    %v6749 = vpop.f32.mrb[0].mxu0
    %v6750 = vpop.f32.mrb[0].mxu0
    %v6751 = vadd.f32 %v6702, %v6750
    %v6752 = vpop.f32.mrb[0].mxu0
    %6753 = vmatprep.mubr.bf16.mxu0 %v5339
    %6754 = vmatmul.mubr.bf16.gmra.mrb[0].mxu0 %v5338
    %v6755 = vpop.f32.mrb[0].mxu0
    %v6756 = vadd.f32 %v6707, %v6755
    %v6757 = vpop.f32.mrb[0].mxu0
    %v6758 = vpop.f32.mrb[0].mxu0
    %v6759 = vadd.f32 %v6710, %v6758
    %v6760 = vpop.f32.mrb[0].mxu0
    %6761 = vdwg.mxu0
    %v6762 = vadd.f32 %v6748, %v4529
    %v6763 = vadd.f32 %v6751, %v4530
    %v6764 = vadd.f32 %v6756, %v4531
    %v6765 = vadd.f32 %v6759, %v4532
    %v6766 = vld [vmem:[%s1 + $0xe8] sm:$0x1]
    %v6767 = vld [vmem:[%s1 + $0xf0] sm:$0x1]
    %v6768 = vsel %vm283, %v6762, 0.0
    %6769 = vadd.xlane.f32.xlu0 %v6768
    %v6770 = vpop.xlane.xlu0 %6769
    %v6771 = vsel %vm283, %v6763, 0.0
    %6772 = vadd.xlane.f32.xlu0 %v6771
    %v6773 = vpop.xlane.xlu0 %6772
    %v6774 = vsel %vm283, %v6764, 0.0
    %6775 = vadd.xlane.f32.xlu0 %v6774
    %v6776 = vpop.xlane.xlu0 %6775
    %v6777 = vsel %vm283, %v6765, 0.0
    %6778 = vadd.xlane.f32.xlu0 %v6777
    %v6779 = vpop.xlane.xlu0 %6778
    %v6780 = vmul.f32 %v6770, %v1191
    %v6781 = vmul.f32 %v6773, %v1191
    %v6782 = vmul.f32 %v6776, %v1191
    %v6783 = vmul.f32 %v6779, %v1191
    %v6784 = vsub.f32 %v6762, %v6780
    %v6785 = vsub.f32 %v6763, %v6781
    %v6786 = vsub.f32 %v6764, %v6782
    %v6787 = vsub.f32 %v6765, %v6783
    %v6788 = vmul.f32 %v6784, %v6784
    %v6789 = vmul.f32 %v6785, %v6785
    %v6790 = vmul.f32 %v6786, %v6786
    %v6791 = vmul.f32 %v6787, %v6787
    %v6792 = vsel %vm283, %v6788, 0.0
    %6793 = vadd.xlane.f32.xlu0 %v6792
    %v6794 = vpop.xlane.xlu0 %6793
    %v6795 = vsel %vm283, %v6789, 0.0
    %6796 = vadd.xlane.f32.xlu0 %v6795
    %v6797 = vpop.xlane.xlu0 %6796
    %v6798 = vsel %vm283, %v6790, 0.0
    %6799 = vadd.xlane.f32.xlu0 %v6798
    %v6800 = vpop.xlane.xlu0 %6799
    %v6801 = vsel %vm283, %v6791, 0.0
    %6802 = vadd.xlane.f32.xlu0 %v6801
    %v6803 = vpop.xlane.xlu0 %6802
    %v6804 = vmul.f32 %v6794, %v1191
    %v6805 = vmul.f32 %v6797, %v1191
    %v6806 = vmul.f32 %v6800, %v1191
    %v6807 = vmul.f32 %v6803, %v1191
    %v6808 = vadd.f32 %v6804, 1e-05
    %v6809 = vadd.f32 %v6805, 1e-05
    %v6810 = vadd.f32 %v6806, 1e-05
    %v6811 = vadd.f32 %v6807, 1e-05
    %v6812 = vrsqrt.pop %v6808
    %v6813 = vrsqrt.pop %v6809
    %v6814 = vrsqrt.pop %v6810
    %v6815 = vrsqrt.pop %v6811
    %v6816 = vmul.f32 %v6784, %v6812
    %v6817 = vmul.f32 %v6785, %v6813
    %v6818 = vmul.f32 %v6786, %v6814
    %v6819 = vmul.f32 %v6787, %v6815
    %v6820 = vlaneseq
    %v6821 = vshrl.u32 %v6820, 7
    %v6822 = vsub.s32 0, %v6821
    %v6823 = vrot.slane %v6766, %v6822
    %v6824 = vmul.f32 %v6816, %v6823
    %v6825 = vmul.f32 %v6817, %v6823
    %v6826 = vmul.f32 %v6818, %v6823
    %v6827 = vmul.f32 %v6819, %v6823
    %v6828 = vlaneseq
    %v6829 = vshrl.u32 %v6828, 7
    %v6830 = vsub.s32 0, %v6829
    %v6831 = vrot.slane %v6767, %v6830
    %v6832 = vadd.f32 %v6824, %v6831
    %v6833 = vadd.f32 %v6825, %v6831
    %v6834 = vadd.f32 %v6826, %v6831
    %v6835 = vadd.f32 %v6827, %v6831
    %v6836 = vld [vmem:[%s1 + $0x68] sm:$0xff]
    %v6837 = vld [vmem:[%s1 + $0x70] sm:$0xff]
    %v6838 = vld [vmem:[%s1 + $0x78] sm:$0xff]
    %v6839 = vld [vmem:[%s1 + $0x80] sm:$0xff]
    %v6840 = vld [vmem:[%s1 + $0x88] sm:$0x1]
    %v6841 = vlaneseq
    %v6842 = vshrl.u32 %v6841, 7
    %v6843 = vsub.s32 0, %v6842
    %v6844 = vrot.slane %v6840, %v6843
    %v6846 = vsel %vm283, %v6832, 0
    %v6849 = vsel %vm283, %v6833, 0
    %v6852 = vsel %vm283, %v6834, 0
    %v6855 = vsel %vm283, %v6835, 0
    %6857 = vmatprep.subr.mxu0 0.0
    %6858 = vmatpush1.msra.mxu0 %v6836
    %6859 = vmatprep.subr.mxu0 0.0
    %6860 = vmatpush1.msra.mxu0 %v6837
    %6861 = vmatprep.subr.mxu0 0.0
    %6862 = vmatpush1.msra.mxu0 %v6838
    %6863 = vmatprep.subr.mxu0 0.0
    %6864 = vmatpush1.msra.mxu0 %v6839
    %6865 = vmatprep.subr.mxu0 0.0
    %6866 = vmatpush1.msra.mxu0 0.0
    %6867 = vmatprep.subr.mxu0 0.0
    %6868 = vmatpush1.msra.mxu0 0.0
    %6869 = vmatprep.subr.mxu0 0.0
    %6870 = vmatpush1.msra.mxu0 0.0
    %6871 = vmatprep.subr.mxu0 0.0
    %6872 = vmatpush1.msra.mxu0 0.0
    %6873 = vmatprep.subr.mxu0 0.0
    %6874 = vmatpush1.msra.mxu0 0.0
    %6875 = vmatprep.subr.mxu0 0.0
    %6876 = vmatpush1.msra.mxu0 0.0
    %6877 = vmatprep.subr.mxu0 0.0
    %6878 = vmatpush1.msra.mxu0 0.0
    %6879 = vmatprep.subr.mxu0 0.0
    %6880 = vmatpush1.msra.mxu0 0.0
    %6881 = vmatprep.subr.mxu0 0.0
    %6882 = vmatpush1.msra.mxu0 0.0
    %6883 = vmatprep.subr.mxu0 0.0
    %6884 = vmatpush1.msra.mxu0 0.0
    %6885 = vmatprep.subr.mxu0 0.0
    %6886 = vmatpush1.msra.mxu0 0.0
    %6887 = vmatprep.subr.mxu0 0.0
    %6888 = vmatpush1.msra.mxu0 0.0
    %6889 = vmatprep.subr.mxu0 0.0
    %6890 = vmatpush1.msra.mxu0 0.0
    %6891 = vmatprep.subr.mxu0 0.0
    %6892 = vmatpush1.msra.mxu0 0.0
    %6893 = vmatprep.subr.mxu0 0.0
    %6894 = vmatpush1.msra.mxu0 0.0
    %6895 = vmatprep.subr.mxu0 0.0
    %6896 = vmatpush1.msra.mxu0 0.0
    %6897 = vmatprep.subr.mxu0 0.0
    %6898 = vmatpush1.msra.mxu0 0.0
    %6899 = vmatprep.subr.mxu0 0.0
    %6900 = vmatpush1.msra.mxu0 0.0
    %6901 = vmatprep.subr.mxu0 0.0
    %6902 = vmatpush1.msra.mxu0 0.0
    %6903 = vmatprep.subr.mxu0 0.0
    %6904 = vmatpush1.msra.mxu0 0.0
    %6905 = vmatprep.subr.mxu0 0.0
    %6906 = vmatpush1.msra.mxu0 0.0
    %6907 = vmatprep.subr.mxu0 0.0
    %6908 = vmatpush1.msra.mxu0 0.0
    %6909 = vmatprep.subr.mxu0 0.0
    %6910 = vmatpush1.msra.mxu0 0.0
    %6911 = vmatprep.subr.mxu0 0.0
    %6912 = vmatpush1.msra.mxu0 0.0
    %6913 = vmatprep.subr.mxu0 0.0
    %6914 = vmatpush1.msra.mxu0 0.0
    %6915 = vmatprep.subr.mxu0 0.0
    %6916 = vmatpush1.msra.mxu0 0.0
    %6917 = vmatprep.subr.mxu0 0.0
    %6918 = vmatpush1.msra.mxu0 0.0
    %6919 = vmatprep.subr.mxu0 0.0
    %6920 = vmatpush1.msra.mxu0 0.0
    %6921 = vmatprep.mubr.f32.mxu0 0.0
    %6922 = vmatmul.mubr.f32.gmra.mrb[0].mxu0 %v6846
    %v6923 = vpop.f32.mrb[0].mxu0
    %v6924 = vadd.f32 %v6844, %v6923
    %v6925 = vpop.f32.mrb[0].mxu0
    %6926 = vmatprep.mubr.f32.mxu0 0.0
    %6927 = vmatmul.mubr.f32.gmra.mrb[0].mxu0 %v6849
    %v6928 = vpop.f32.mrb[0].mxu0
    %v6929 = vadd.f32 %v6844, %v6928
    %v6930 = vpop.f32.mrb[0].mxu0
    %6931 = vmatprep.mubr.f32.mxu0 0.0
    %6932 = vmatmul.mubr.f32.gmra.mrb[0].mxu0 %v6852
    %v6933 = vpop.f32.mrb[0].mxu0
    %v6934 = vadd.f32 %v6844, %v6933
    %v6935 = vpop.f32.mrb[0].mxu0
    %6936 = vmatprep.mubr.f32.mxu0 0.0
    %6937 = vmatmul.mubr.f32.gmra.mrb[0].mxu0 %v6855
    %v6938 = vpop.f32.mrb[0].mxu0
    %v6939 = vadd.f32 %v6844, %v6938
    %v6940 = vpop.f32.mrb[0].mxu0
    %6941 = vdwg.mxu0
    %6942 = vst.msk [vmem:[%s6] sm:$0xff] %vm37, %v6924
    %6943 = vst.msk [vmem:[%s6 + $0x8] sm:$0xff] %vm37, %v6929
    %6944 = vst.msk [vmem:[%s6 + $0x10] sm:$0xff] %vm37, %v6934
    %6945 = vst.msk [vmem:[%s6 + $0x18] sm:$0xff] %vm37, %v6939
    %6946 = vrot.lane.b32.xlu0 %v27, 126
    %v6947 = vpop.permute.xlu0 %6946
    %6948 = vrot.lane.b32.xlu0 %v28, 126
    %v6949 = vpop.permute.xlu0 %6948
    %6950 = vrot.lane.b32.xlu0 %v29, 126
    %v6951 = vpop.permute.xlu0 %6950
    %6952 = vrot.lane.b32.xlu0 %v30, 126
    %v6953 = vpop.permute.xlu0 %6952
    %v6958 = vsub.f32 %v6924, %v6947
    %v6959 = vsub.f32 %v6929, %v6949
    %v6960 = vsub.f32 %v6934, %v6951
    %v6961 = vsub.f32 %v6939, %v6953
    %v6962 = vmul.f32 %v6958, %v6958
    %v6963 = vmul.f32 %v6959, %v6959
    %v6964 = vmul.f32 %v6960, %v6960
    %v6965 = vmul.f32 %v6961, %v6961
    %v6966 = vsel %vm37, %v6962, 0.0
    %6967 = vadd.xlane.f32.xlu0 %v6966
    %v6968 = vpop.xlane.xlu0 %6967
    %v6969 = vsel %vm37, %v6963, 0.0
    %6970 = vadd.xlane.f32.xlu0 %v6969
    %v6971 = vpop.xlane.xlu0 %6970
    %v6972 = vsel %vm37, %v6964, 0.0
    %6973 = vadd.xlane.f32.xlu0 %v6972
    %v6974 = vpop.xlane.xlu0 %6973
    %v6975 = vsel %vm37, %v6965, 0.0
    %6976 = vadd.xlane.f32.xlu0 %v6975
    %v6977 = vpop.xlane.xlu0 %6976
    %v6978 = vrsqrt.pop %v6968
    %v6979 = vmul.f32 %v6968, %v6978
    %vm6980 = vcmp.eq.f32.partialorder %v6968, inf
    %v6981 = vsel %vm6980, %v6968, %v6979
    %vm6982 = vcmp.eq.f32.partialorder %v6968, 0.0
    %v6983 = vand.u32 %v6968, 2147483648
    %v6984 = vsel %vm6982, %v6983, %v6981
    %v6985 = vrsqrt.pop %v6971
    %v6986 = vmul.f32 %v6971, %v6985
    %vm6987 = vcmp.eq.f32.partialorder %v6971, inf
    %v6988 = vsel %vm6987, %v6971, %v6986
    %vm6989 = vcmp.eq.f32.partialorder %v6971, 0.0
    %v6990 = vand.u32 %v6971, 2147483648
    %v6991 = vsel %vm6989, %v6990, %v6988
    %v6992 = vrsqrt.pop %v6974
    %v6993 = vmul.f32 %v6974, %v6992
    %vm6994 = vcmp.eq.f32.partialorder %v6974, inf
    %v6995 = vsel %vm6994, %v6974, %v6993
    %vm6996 = vcmp.eq.f32.partialorder %v6974, 0.0
    %v6997 = vand.u32 %v6974, 2147483648
    %v6998 = vsel %vm6996, %v6997, %v6995
    %v6999 = vrsqrt.pop %v6977
    %v7000 = vmul.f32 %v6977, %v6999
    %vm7001 = vcmp.eq.f32.partialorder %v6977, inf
    %v7002 = vsel %vm7001, %v6977, %v7000
    %vm7003 = vcmp.eq.f32.partialorder %v6977, 0.0
    %v7004 = vand.u32 %v6977, 2147483648
    %v7005 = vsel %vm7003, %v7004, %v7002
    %v7006 = vadd.f32 %v6984, %v6991
    %v7007 = vadd.f32 %v7006, %v6998
    %v7008 = vadd.f32 %v7007, %v7005
    %v7009 = vrot.slane %v7008, 4
    %v7010 = vadd.f32 %v7008, %v7009
    %v7011 = vrot.slane %v7010, 2
    %v7012 = vadd.f32 %v7010, %v7011
    %v7013 = vrot.slane %v7012, 1
    %v7014 = vadd.f32 %v7012, %v7013
    %v7015 = vmul.f32 %v7014, 0.03125
    %vm7016 = vcmask 0
    %7017 = vst.msk [vmem:[#allocation2] sm:$0x1] %vm7016, %v7015
    // Predicated region
    $region26: #{trans_forward.1} parent=1 // pred_check
      _
    $region27: #{trans_forward.1} parent=1 // pred_check_branch
      %7019 = sbr.rel (0) target = $region29
    $region28: #{trans_forward.1} parent=1 // pred_region
      _
    $region29: #{trans_forward.1} parent=1 // pred_fallthru
      _
    // Predicated region
    $region30: #{trans_forward.1} parent=1 // pred_check
      _
    $region31: #{trans_forward.1} parent=1 // pred_check_branch
      %7021 = sbr.rel (0) target = $region33
    $region32: #{trans_forward.1} parent=1 // pred_region
      %s7023 = ssub.s32 16, 16
      %7024 = vsyncadd [#allocation3], %s7023
      %s7026 = sshll.u32 [#allocation2], 4
      %s7027 = int_to_ptr.vmem [resolvable:$true] %s7026
      %7029 = dma.vmem_to_hbm [thread:$0]  %s7027, 16, %s7, [#allocation3]
    $region33: #{trans_forward.1} parent=1 // pred_fallthru
      _
    // Predicated region
    $region34: #{trans_forward.1} parent=1 // pred_check
      _
    $region35: #{trans_forward.1} parent=1 // pred_check_branch
      %7031 = sbr.rel (0) target = $region37
    $region36: #{trans_forward.1} parent=1 // pred_region
      _
    $region37: #{trans_forward.1} parent=1 // pred_fallthru
      _
    // Predicated region
    $region38: #{trans_forward.1} parent=1 // pred_check
      _
    $region39: #{trans_forward.1} parent=1 // pred_check_branch
      %7033 = sbr.rel (0) target = $region41
    $region40: #{trans_forward.1} parent=1 // pred_region
      %7034 = dma.done [#allocation3], 16
    $region41: #{trans_forward.1} parent=1 // pred_fallthru
      _
    %7035 = vsyncpa [#allocation3], 1

</llo_original>
